<compile_context>
chip_gen: v7x
topology: tpu7x:2x2x1
jax: 0.10.0
libtpu: 0.0.40
codegen_flags: <defaults>
</compile_context>

<pallas_src>
import jax
import jax.numpy as jnp
from jax.experimental import pallas as pl
from jax.experimental.pallas import tpu as pltpu

BATCH = 128
EPS = 1e-5          # nn.BatchNorm default eps
NEG_SLOPE = 0.1     # LeakyReLU(0.1)


def fold_bn(gamma, beta, mean, var):
    """Eval-mode BatchNorm folded into per-channel scale/shift."""
    scale = gamma / jnp.sqrt(var + EPS)
    return scale, beta - mean * scale


# ---------------------------------------------------------------------------
# Kernel 1: fc1(label) = label @ W1 + b1            (128,10)->(128,784)
# ---------------------------------------------------------------------------
def _fc1_kernel(lab_ref, w_ref, b_ref, o_ref):
    o_ref[...] = (jnp.dot(lab_ref[...], w_ref[...],
                          preferred_element_type=jnp.float32) + b_ref[...])


def fc1(label, w, b):
    vm = lambda: pl.BlockSpec(memory_space=pltpu.MemorySpace.VMEM)
    return pl.pallas_call(
        _fc1_kernel,
        out_shape=jax.ShapeDtypeStruct((BATCH, w.shape[1]), jnp.float32),
        in_specs=[vm(), vm(), vm()],
        out_specs=vm(),
    )(label, w, b.reshape(1, -1))


# ---------------------------------------------------------------------------
# Kernel 2: conv1 as a single GEMM + folded BN + LeakyReLU
#   cols (M, 18) @ w (18, 32) -> (M, 32)
# ---------------------------------------------------------------------------
def _conv_bn_lrelu_kernel(cols_ref, w_ref, scale_ref, shift_ref, o_ref):
    y = jnp.dot(cols_ref[...], w_ref[...], preferred_element_type=jnp.float32)
    y = y * scale_ref[...] + shift_ref[...]
    o_ref[...] = jnp.maximum(y, NEG_SLOPE * y)        # LeakyReLU(0.1); Dropout = id


def conv_bn_lrelu(cols, w_mat, scale, shift, *, tm):
    M, Kc = cols.shape
    Co = w_mat.shape[1]
    return pl.pallas_call(
        _conv_bn_lrelu_kernel,
        out_shape=jax.ShapeDtypeStruct((M, Co), jnp.float32),
        grid=(M // tm,),
        in_specs=[
            pl.BlockSpec((tm, Kc), lambda m: (m, 0)),
            pl.BlockSpec((Kc, Co), lambda m: (0, 0)),   # resident (constant index)
            pl.BlockSpec((1, Co), lambda m: (0, 0)),
            pl.BlockSpec((1, Co), lambda m: (0, 0)),
        ],
        out_specs=pl.BlockSpec((tm, Co), lambda m: (m, 0)),
        compiler_params=pltpu.CompilerParams(dimension_semantics=("parallel",)),
    )(cols, w_mat, scale.reshape(1, -1), shift.reshape(1, -1))


# ---------------------------------------------------------------------------
# Kernel 3: conv2 GEMM + BN + LeakyReLU + Flatten + Linear(6272,1) + Sigmoid
#   cols (M, 288) @ w (288, 128); then per-image reduction against the fc
#   weight (pre-permuted to NHWC and tiled per block) via a 0/1 selector matmul.
# ---------------------------------------------------------------------------
def _conv2_head_kernel(cols_ref, w_ref, scale_ref, shift_ref,
                       wfc_ref, sel_ref, bfc_ref, o_ref):
    y = jnp.dot(cols_ref[...], w_ref[...],
                preferred_element_type=jnp.float32)          # (784, 128)
    y = y * scale_ref[...] + shift_ref[...]                  # folded BN2
    y = jnp.maximum(y, NEG_SLOPE * y)                        # LeakyReLU(0.1)
    z = y * wfc_ref[...]                                     # * fc weight (tiled)
    t = jnp.dot(sel_ref[...], z,
                preferred_element_type=jnp.float32)          # (16, 128) per-image partials
    logits = jnp.sum(t, axis=-1, keepdims=True) + bfc_ref[...]
    o_ref[...] = 1.0 / (1.0 + jnp.exp(-logits))              # sigmoid


def conv2_head(cols, w_mat, scale, shift, wfc_tiled, sel, b_fc,
               *, rows_per_img, imgs_per_blk):
    M, Kc = cols.shape
    Co = w_mat.shape[1]
    tm = rows_per_img * imgs_per_blk          # 49 * 16 = 784 rows / block
    n_img = M // rows_per_img                 # 128 images
    return pl.pallas_call(
        _conv2_head_kernel,
        out_shape=jax.ShapeDtypeStruct((n_img, 1), jnp.float32),
        grid=(M // tm,),
        in_specs=[
            pl.BlockSpec((tm, Kc), lambda m: (m, 0)),
            pl.BlockSpec((Kc, Co), lambda m: (0, 0)),        # resident
            pl.BlockSpec((1, Co), lambda m: (0, 0)),
            pl.BlockSpec((1, Co), lambda m: (0, 0)),
            pl.BlockSpec((tm, Co), lambda m: (0, 0)),        # tiled fc weight, resident
            pl.BlockSpec((imgs_per_blk, tm), lambda m: (0, 0)),  # selector, resident
            pl.BlockSpec((1, 1), lambda m: (0, 0)),
        ],
        out_specs=pl.BlockSpec((imgs_per_blk, 1), lambda m: (m, 0)),
        compiler_params=pltpu.CompilerParams(dimension_semantics=("parallel",)),
    )(cols, w_mat, scale.reshape(1, -1), shift.reshape(1, -1),
      wfc_tiled, sel, b_fc.reshape(1, 1))


# ---------------------------------------------------------------------------
# JAX glue: NHWC im2col (built once per layer; K*K folded into contraction dim)
# ---------------------------------------------------------------------------
def im2col(x_nhwc, K, stride, pad):
    N, H, W, Ci = x_nhwc.shape
    xp = jnp.pad(x_nhwc, ((0, 0), (pad, pad), (pad, pad), (0, 0)))
    OH = (H + 2 * pad - K) // stride + 1
    OW = (W + 2 * pad - K) // stride + 1
    patches = [xp[:, i:i + stride * (OH - 1) + 1:stride,
                  j:j + stride * (OW - 1) + 1:stride, :]
               for i in range(K) for j in range(K)]
    cols = jnp.concatenate(patches, axis=-1)          # (N, OH, OW, K*K*Ci)
    return cols.reshape(N * OH * OW, K * K * Ci), OH, OW


def conv_weight_to_mat(w_oihw):
    """(Co, Ci, K, K) -> (K*K*Ci, Co) matching im2col column order."""
    Co, Ci, K, _ = w_oihw.shape
    return jnp.transpose(w_oihw, (2, 3, 1, 0)).reshape(K * K * Ci, Co)


# ---------------------------------------------------------------------------
# Full Discriminator forward
# ---------------------------------------------------------------------------
@jax.jit
def discriminator_forward(image_nchw, label, params):
    # fc1(label) -> (128, 784) -> label plane; concat with image along channels.
    lab_plane = fc1(label, params["w_fc1"], params["b_fc1"]).reshape(BATCH, 28, 28, 1)
    img = jnp.transpose(image_nchw, (0, 2, 3, 1))                 # NHWC (128,28,28,1)
    x = jnp.concatenate([img, lab_plane], axis=-1)                # (128,28,28,2)

    # Conv1 + BN1 + LeakyReLU  ->  (128,14,14,32)
    s1, t1 = fold_bn(*params["bn1"])
    cols1, OH1, OW1 = im2col(x, 3, 2, 1)                          # (25088, 18)
    w1 = conv_weight_to_mat(params["w_conv1"])                    # (18, 32)
    a1 = conv_bn_lrelu(cols1, w1, s1, t1, tm=3136)                # (25088, 32), 8 blocks
    a1 = a1.reshape(BATCH, OH1, OW1, 32)

    # Conv2 + BN2 + LeakyReLU + Flatten + Linear(6272,1) + Sigmoid (fused)
    s2, t2 = fold_bn(*params["bn2"])
    cols2, OH2, OW2 = im2col(a1, 3, 2, 1)                         # (6272, 288)
    w2 = conv_weight_to_mat(params["w_conv2"])                    # (288, 128)

    # Final fc weight (1, 6272) is indexed by PyTorch NCHW flatten (c*49+h*7+w);
    # permute to NHWC (49, 128) and tile per 16-image block.
    rows_per_img = OH2 * OW2                                      # 49
    imgs_per_blk = 16
    w_fc2_nhwc = params["w_fc2"].reshape(128, OH2, OW2).transpose(1, 2, 0)
    w_fc2_nhwc = w_fc2_nhwc.reshape(rows_per_img, 128)
    wfc_tiled = jnp.tile(w_fc2_nhwc, (imgs_per_blk, 1))           # (784, 128)
    sel = jnp.repeat(jnp.eye(imgs_per_blk, dtype=jnp.float32),
                     rows_per_img, axis=1)                        # (16, 784)

    out = conv2_head(cols2, w2, s2, t2, wfc_tiled, sel, params["b_fc2"],
                     rows_per_img=rows_per_img, imgs_per_blk=imgs_per_blk)
    return out                                                    # (128, 1)


# ---------------------------------------------------------------------------
# Pure-JAX reference (same math, no Pallas) for correctness cross-check
# ---------------------------------------------------------------------------
@jax.jit
def ref_forward(image_nchw, label, params):
    lab = label @ params["w_fc1"] + params["b_fc1"]               # (128, 784)
    x = jnp.concatenate([image_nchw, lab.reshape(BATCH, 1, 28, 28)], axis=1)

    def conv(x, w):
        return jax.lax.conv_general_dilated(
            x, w, (2, 2), [(1, 1), (1, 1)],
            dimension_numbers=("NCHW", "OIHW", "NCHW"),
            precision=jax.lax.Precision.HIGHEST)

    def bn(x, gamma, beta, mean, var):
        s = gamma / jnp.sqrt(var + EPS)
        return x * s[None, :, None, None] + (beta - mean * s)[None, :, None, None]

    x = conv(x, params["w_conv1"])
    x = bn(x, *params["bn1"])
    x = jnp.maximum(x, NEG_SLOPE * x)
    x = conv(x, params["w_conv2"])
    x = bn(x, *params["bn2"])
    x = jnp.maximum(x, NEG_SLOPE * x)
    x = x.reshape(BATCH, -1)                                      # NCHW flatten (128, 6272)
    logits = jnp.dot(x, params["w_fc2"].T,
                     precision=jax.lax.Precision.HIGHEST) + params["b_fc2"]
    return jax.nn.sigmoid(logits)


# ---------------------------------------------------------------------------
# Deterministic synthetic parameters (shapes from Discriminator.__init__)
# ---------------------------------------------------------------------------
def init_params(key):
    keys = iter(jax.random.split(key, 16))

    def rnd(shape, s):
        return s * jax.random.normal(next(keys), shape, jnp.float32)

    def bn(c):
        gamma = 1.0 + rnd((c,), 0.1)
        beta = rnd((c,), 0.1)
        mean = rnd((c,), 0.1)
        var = 1.0 + 0.1 * jax.random.uniform(next(keys), (c,), jnp.float32)
        return (gamma, beta, mean, var)

    p = {}
    p["w_fc1"] = rnd((10, 784), 0.2)          # Linear(10, 784) weight, stored (in, out)
    p["b_fc1"] = rnd((784,), 0.1)
    p["w_conv1"] = rnd((32, 2, 3, 3), 0.2)    # Conv2d(2, 32, 3, 2, 1, bias=False), OIHW
    p["bn1"] = bn(32)                         # BatchNorm2d(32)  (eval-mode running stats)
    p["w_conv2"] = rnd((128, 32, 3, 3), 0.05) # Conv2d(32, 128, 3, 2, 1, bias=False)
    p["bn2"] = bn(128)                        # BatchNorm2d(128)
    p["w_fc2"] = rnd((1, 6272), 0.02)         # Linear(6272, 1) weight, PyTorch (out, in)
    p["b_fc2"] = rnd((1,), 0.1)
    return p


if __name__ == "__main__":
    key = jax.random.PRNGKey(0)
    k_img, k_lab = jax.random.split(key)
    image = jax.random.normal(k_img, (BATCH, 1, 28, 28), jnp.float32)
    label = jax.nn.one_hot(jax.random.randint(k_lab, (BATCH,), 0, 10), 10,
                           dtype=jnp.float32)
    params = init_params(jax.random.PRNGKey(42))

    out = jax.block_until_ready(discriminator_forward(image, label, params))
    ref = jax.block_until_ready(ref_forward(image, label, params))

    assert out.shape == (BATCH, 1), out.shape
    assert bool(jnp.all(jnp.isfinite(out)))
    max_err = float(jnp.max(jnp.abs(out - ref)))
    assert max_err < 2e-3, max_err
    print("KERNEL_OK")
</pallas_src>

<mosaic_0001>
module attributes {stable_mosaic.version = 11 : i64} {
  func.func @_fc1_kernel(%arg0: memref<128x10xf32, #tpu.memory_space<vmem>>, %arg1: memref<10x784xf32, #tpu.memory_space<vmem>>, %arg2: memref<1x784xf32, #tpu.memory_space<vmem>>, %arg3: memref<128x784xf32, #tpu.memory_space<vmem>>) attributes {dimension_semantics = [], scalar_prefetch = 0 : i64, scratch_operands = 0 : i64, tpu.core_type = #tpu.core_type<tc>} {
    %c0 = arith.constant 0 : index
    %c0_0 = arith.constant 0 : index
    %0 = vector.load %arg0[%c0, %c0_0] : memref<128x10xf32, #tpu.memory_space<vmem>>, vector<128x10xf32>
    %c0_1 = arith.constant 0 : index
    %c0_2 = arith.constant 0 : index
    %1 = vector.load %arg1[%c0_1, %c0_2] : memref<10x784xf32, #tpu.memory_space<vmem>>, vector<10x784xf32>
    %cst = arith.constant dense<0.000000e+00> : vector<128x784xf32>
    %2 = tpu.matmul %0, %1, %cst {dimension_numbers = #tpu.dot_dimension_numbers<[1], [0], [0], [1], [0, 0, 1, 1], [], []>} : vector<128x10xf32>, vector<10x784xf32>, vector<128x784xf32> -> vector<128x784xf32>
    %c0_3 = arith.constant 0 : index
    %c0_4 = arith.constant 0 : index
    %3 = vector.load %arg2[%c0_3, %c0_4] : memref<1x784xf32, #tpu.memory_space<vmem>>, vector<1x784xf32>
    %4 = vector.broadcast %3 : vector<1x784xf32> to vector<128x784xf32>
    %5 = arith.addf %2, %4 : vector<128x784xf32>
    %c0_5 = arith.constant 0 : index
    %c0_6 = arith.constant 0 : index
    %6 = vector.load %arg3[%c0_5, %c0_6] : memref<128x784xf32, #tpu.memory_space<vmem>>, vector<128x784xf32>
    tpu.vector_store %arg3[%c0_5, %c0_6], %5 {strides = array<i32>} : memref<128x784xf32, #tpu.memory_space<vmem>>, vector<128x784xf32>,
    return
  }
}

module attributes {stable_mosaic.version = 11 : i64} {
  func.func @_conv_bn_lrelu_kernel(%arg0: i32, %arg1: memref<3136x18xf32, #tpu.memory_space<vmem>>, %arg2: memref<18x32xf32, #tpu.memory_space<vmem>>, %arg3: memref<1x32xf32, #tpu.memory_space<vmem>>, %arg4: memref<1x32xf32, #tpu.memory_space<vmem>>, %arg5: memref<3136x32xf32, #tpu.memory_space<vmem>>) attributes {dimension_semantics = [#tpu.dimension_semantics<parallel>], iteration_bounds = array<i64: 8>, scalar_prefetch = 0 : i64, scratch_operands = 0 : i64, tpu.core_type = #tpu.core_type<tc>, window_params = [{transform_indices = @transform_0, window_bounds = array<i64: 3136, 18>}, {pipeline_mode = #tpu.pipeline_mode<synchronous>, transform_indices = @transform_1, window_bounds = array<i64: 18, 32>}, {pipeline_mode = #tpu.pipeline_mode<synchronous>, transform_indices = @transform_2, window_bounds = array<i64: 1, 32>}, {pipeline_mode = #tpu.pipeline_mode<synchronous>, transform_indices = @transform_3, window_bounds = array<i64: 1, 32>}, {transform_indices = @transform_4, window_bounds = array<i64: 3136, 32>}]} {
    %c0 = arith.constant 0 : index
    %c0_0 = arith.constant 0 : index
    %0 = vector.load %arg1[%c0, %c0_0] : memref<3136x18xf32, #tpu.memory_space<vmem>>, vector<3136x18xf32>
    %c0_1 = arith.constant 0 : index
    %c0_2 = arith.constant 0 : index
    %1 = vector.load %arg2[%c0_1, %c0_2] : memref<18x32xf32, #tpu.memory_space<vmem>>, vector<18x32xf32>
    %cst = arith.constant dense<0.000000e+00> : vector<3136x32xf32>
    %2 = tpu.matmul %0, %1, %cst {dimension_numbers = #tpu.dot_dimension_numbers<[1], [0], [0], [1], [0, 0, 1, 1], [], []>} : vector<3136x18xf32>, vector<18x32xf32>, vector<3136x32xf32> -> vector<3136x32xf32>
    %c0_3 = arith.constant 0 : index
    %c0_4 = arith.constant 0 : index
    %3 = vector.load %arg3[%c0_3, %c0_4] : memref<1x32xf32, #tpu.memory_space<vmem>>, vector<1x32xf32>
    %4 = vector.broadcast %3 : vector<1x32xf32> to vector<3136x32xf32>
    %5 = arith.mulf %2, %4 : vector<3136x32xf32>
    %c0_5 = arith.constant 0 : index
    %c0_6 = arith.constant 0 : index
    %6 = vector.load %arg4[%c0_5, %c0_6] : memref<1x32xf32, #tpu.memory_space<vmem>>, vector<1x32xf32>
    %7 = vector.broadcast %6 : vector<1x32xf32> to vector<3136x32xf32>
    %8 = arith.addf %5, %7 : vector<3136x32xf32>
    %cst_7 = arith.constant 1.000000e-01 : f32
    %9 = vector.broadcast %cst_7 : f32 to vector<3136x32xf32>
    %10 = arith.mulf %9, %8 : vector<3136x32xf32>
    %11 = arith.maximumf %8, %10 : vector<3136x32xf32>
    %c0_8 = arith.constant 0 : index
    %c0_9 = arith.constant 0 : index
    %12 = vector.load %arg5[%c0_8, %c0_9] : memref<3136x32xf32, #tpu.memory_space<vmem>>, vector<3136x32xf32>
    tpu.vector_store %arg5[%c0_8, %c0_9], %11 {strides = array<i32>} : memref<3136x32xf32, #tpu.memory_space<vmem>>, vector<3136x32xf32>,
    return
  }
  func.func @transform_0(%arg0: i32) -> (i32, i32) {
    %c0_i32 = arith.constant 0 : i32
    %c0_i32_0 = arith.constant 0 : i32
    return %arg0, %c0_i32 : i32, i32
  }
  func.func @transform_1(%arg0: i32) -> (i32, i32) {
    %c0_i32 = arith.constant 0 : i32
    %c0_i32_0 = arith.constant 0 : i32
    %c0_i32_1 = arith.constant 0 : i32
    return %c0_i32, %c0_i32_0 : i32, i32
  }
  func.func @transform_2(%arg0: i32) -> (i32, i32) {
    %c0_i32 = arith.constant 0 : i32
    %c0_i32_0 = arith.constant 0 : i32
    %c0_i32_1 = arith.constant 0 : i32
    return %c0_i32, %c0_i32_0 : i32, i32
  }
  func.func @transform_3(%arg0: i32) -> (i32, i32) {
    %c0_i32 = arith.constant 0 : i32
    %c0_i32_0 = arith.constant 0 : i32
    %c0_i32_1 = arith.constant 0 : i32
    return %c0_i32, %c0_i32_0 : i32, i32
  }
  func.func @transform_4(%arg0: i32) -> (i32, i32) {
    %c0_i32 = arith.constant 0 : i32
    %c0_i32_0 = arith.constant 0 : i32
    return %arg0, %c0_i32 : i32, i32
  }
}

module attributes {stable_mosaic.version = 11 : i64} {
  func.func @_conv2_head_kernel(%arg0: i32, %arg1: memref<784x288xf32, #tpu.memory_space<vmem>>, %arg2: memref<288x128xf32, #tpu.memory_space<vmem>>, %arg3: memref<1x128xf32, #tpu.memory_space<vmem>>, %arg4: memref<1x128xf32, #tpu.memory_space<vmem>>, %arg5: memref<784x128xf32, #tpu.memory_space<vmem>>, %arg6: memref<16x784xf32, #tpu.memory_space<vmem>>, %arg7: memref<1x1xf32, #tpu.memory_space<vmem>>, %arg8: memref<16x1xf32, #tpu.memory_space<vmem>>) attributes {dimension_semantics = [#tpu.dimension_semantics<parallel>], iteration_bounds = array<i64: 8>, scalar_prefetch = 0 : i64, scratch_operands = 0 : i64, tpu.core_type = #tpu.core_type<tc>, window_params = [{transform_indices = @transform_0, window_bounds = array<i64: 784, 288>}, {pipeline_mode = #tpu.pipeline_mode<synchronous>, transform_indices = @transform_1, window_bounds = array<i64: 288, 128>}, {pipeline_mode = #tpu.pipeline_mode<synchronous>, transform_indices = @transform_2, window_bounds = array<i64: 1, 128>}, {pipeline_mode = #tpu.pipeline_mode<synchronous>, transform_indices = @transform_3, window_bounds = array<i64: 1, 128>}, {pipeline_mode = #tpu.pipeline_mode<synchronous>, transform_indices = @transform_4, window_bounds = array<i64: 784, 128>}, {pipeline_mode = #tpu.pipeline_mode<synchronous>, transform_indices = @transform_5, window_bounds = array<i64: 16, 784>}, {pipeline_mode = #tpu.pipeline_mode<synchronous>, transform_indices = @transform_6, window_bounds = array<i64: 1, 1>}, {transform_indices = @transform_7, window_bounds = array<i64: 16, 1>}]} {
    %c0 = arith.constant 0 : index
    %c0_0 = arith.constant 0 : index
    %0 = vector.load %arg1[%c0, %c0_0] : memref<784x288xf32, #tpu.memory_space<vmem>>, vector<784x288xf32>
    %c0_1 = arith.constant 0 : index
    %c0_2 = arith.constant 0 : index
    %1 = vector.load %arg2[%c0_1, %c0_2] : memref<288x128xf32, #tpu.memory_space<vmem>>, vector<288x128xf32>
    %cst = arith.constant dense<0.000000e+00> : vector<784x128xf32>
    %2 = tpu.matmul %0, %1, %cst {dimension_numbers = #tpu.dot_dimension_numbers<[1], [0], [0], [1], [0, 0, 1, 1], [], []>} : vector<784x288xf32>, vector<288x128xf32>, vector<784x128xf32> -> vector<784x128xf32>
    %c0_3 = arith.constant 0 : index
    %c0_4 = arith.constant 0 : index
    %3 = vector.load %arg3[%c0_3, %c0_4] : memref<1x128xf32, #tpu.memory_space<vmem>>, vector<1x128xf32>
    %4 = vector.broadcast %3 : vector<1x128xf32> to vector<784x128xf32>
    %5 = arith.mulf %2, %4 : vector<784x128xf32>
    %c0_5 = arith.constant 0 : index
    %c0_6 = arith.constant 0 : index
    %6 = vector.load %arg4[%c0_5, %c0_6] : memref<1x128xf32, #tpu.memory_space<vmem>>, vector<1x128xf32>
    %7 = vector.broadcast %6 : vector<1x128xf32> to vector<784x128xf32>
    %8 = arith.addf %5, %7 : vector<784x128xf32>
    %cst_7 = arith.constant 1.000000e-01 : f32
    %9 = vector.broadcast %cst_7 : f32 to vector<784x128xf32>
    %10 = arith.mulf %9, %8 : vector<784x128xf32>
    %11 = arith.maximumf %8, %10 : vector<784x128xf32>
    %c0_8 = arith.constant 0 : index
    %c0_9 = arith.constant 0 : index
    %12 = vector.load %arg5[%c0_8, %c0_9] : memref<784x128xf32, #tpu.memory_space<vmem>>, vector<784x128xf32>
    %13 = arith.mulf %11, %12 : vector<784x128xf32>
    %c0_10 = arith.constant 0 : index
    %c0_11 = arith.constant 0 : index
    %14 = vector.load %arg6[%c0_10, %c0_11] : memref<16x784xf32, #tpu.memory_space<vmem>>, vector<16x784xf32>
    %cst_12 = arith.constant dense<0.000000e+00> : vector<16x128xf32>
    %15 = tpu.matmul %14, %13, %cst_12 {dimension_numbers = #tpu.dot_dimension_numbers<[1], [0], [0], [1], [0, 0, 1, 1], [], []>} : vector<16x784xf32>, vector<784x128xf32>, vector<16x128xf32> -> vector<16x128xf32>
    %cst_13 = arith.constant dense<0.000000e+00> : vector<16xf32>
    %16 = vector.multi_reduction <add>, %15, %cst_13 [1] : vector<16x128xf32> to vector<16xf32>
    %17 = vector.shape_cast %16 : vector<16xf32> to vector<16x1xf32>
    %c0_14 = arith.constant 0 : index
    %c0_15 = arith.constant 0 : index
    %18 = vector.load %arg7[%c0_14, %c0_15] : memref<1x1xf32, #tpu.memory_space<vmem>>, vector<1x1xf32>
    %19 = vector.broadcast %18 : vector<1x1xf32> to vector<16x1xf32>
    %20 = arith.addf %17, %19 : vector<16x1xf32>
    %cst_16 = arith.constant 0.000000e+00 : f32
    %21 = vector.broadcast %cst_16 : f32 to vector<16x1xf32>
    %22 = arith.subf %21, %20 : vector<16x1xf32>
    %23 = math.exp %22 : vector<16x1xf32>
    %cst_17 = arith.constant 1.000000e+00 : f32
    %24 = vector.broadcast %cst_17 : f32 to vector<16x1xf32>
    %25 = arith.addf %24, %23 : vector<16x1xf32>
    %cst_18 = arith.constant 1.000000e+00 : f32
    %26 = vector.broadcast %cst_18 : f32 to vector<16x1xf32>
    %27 = arith.divf %26, %25 : vector<16x1xf32>
    %c0_19 = arith.constant 0 : index
    %c0_20 = arith.constant 0 : index
    %28 = vector.load %arg8[%c0_19, %c0_20] : memref<16x1xf32, #tpu.memory_space<vmem>>, vector<16x1xf32>
    tpu.vector_store %arg8[%c0_19, %c0_20], %27 {strides = array<i32>} : memref<16x1xf32, #tpu.memory_space<vmem>>, vector<16x1xf32>,
    return
  }
  func.func @transform_0(%arg0: i32) -> (i32, i32) {
    %c0_i32 = arith.constant 0 : i32
    %c0_i32_0 = arith.constant 0 : i32
    return %arg0, %c0_i32 : i32, i32
  }
  func.func @transform_1(%arg0: i32) -> (i32, i32) {
    %c0_i32 = arith.constant 0 : i32
    %c0_i32_0 = arith.constant 0 : i32
    %c0_i32_1 = arith.constant 0 : i32
    return %c0_i32, %c0_i32_0 : i32, i32
  }
  func.func @transform_2(%arg0: i32) -> (i32, i32) {
    %c0_i32 = arith.constant 0 : i32
    %c0_i32_0 = arith.constant 0 : i32
    %c0_i32_1 = arith.constant 0 : i32
    return %c0_i32, %c0_i32_0 : i32, i32
  }
  func.func @transform_3(%arg0: i32) -> (i32, i32) {
    %c0_i32 = arith.constant 0 : i32
    %c0_i32_0 = arith.constant 0 : i32
    %c0_i32_1 = arith.constant 0 : i32
    return %c0_i32, %c0_i32_0 : i32, i32
  }
  func.func @transform_4(%arg0: i32) -> (i32, i32) {
    %c0_i32 = arith.constant 0 : i32
    %c0_i32_0 = arith.constant 0 : i32
    %c0_i32_1 = arith.constant 0 : i32
    return %c0_i32, %c0_i32_0 : i32, i32
  }
  func.func @transform_5(%arg0: i32) -> (i32, i32) {
    %c0_i32 = arith.constant 0 : i32
    %c0_i32_0 = arith.constant 0 : i32
    %c0_i32_1 = arith.constant 0 : i32
    return %c0_i32, %c0_i32_0 : i32, i32
  }
  func.func @transform_6(%arg0: i32) -> (i32, i32) {
    %c0_i32 = arith.constant 0 : i32
    %c0_i32_0 = arith.constant 0 : i32
    %c0_i32_1 = arith.constant 0 : i32
    return %c0_i32, %c0_i32_0 : i32, i32
  }
  func.func @transform_7(%arg0: i32) -> (i32, i32) {
    %c0_i32 = arith.constant 0 : i32
    %c0_i32_0 = arith.constant 0 : i32
    return %arg0, %c0_i32 : i32, i32
  }
}

</mosaic_0001>

<llo_original>
// kernel: discriminator_forward.3
$region0: #{discriminator_forward.3}
  #allocation0 [shape = 'u32[]', space=smem, size = 0x4, offset = 0x4, fixed_abs, tag = 'smem constant byte address 0x4 - core index']
  #allocation1 [shape = 'u32[144,128]{1,0:T(1,128)}', space=vmem, size = 0x12000, scoped, tag = 'internal scratch']
  %s0 = inlined_call_operand.vmem [shape: f32[128,10], index: 0, kind: input, shape index: {}]
  %s1 = inlined_call_operand.hbm [shape: f32[10,784], index: 1, kind: input, shape index: {}]
  %s2 = inlined_call_operand.vmem [shape: f32[1,784], index: 2, kind: input, shape index: {}]
  %s3 = inlined_call_operand.vmem [shape: f32[128,784], index: 3, kind: output, shape index: {}]
  %s4 = sld [smem:[#allocation0]]
  $region26: #{discriminator_forward.3} parent=0
    _
  %s6 = ssub.s32 1, %s4
  %s7 = scalar_select 0, %s6, %s4
  $region1: #{discriminator_forward.3} parent=0
    #allocation2 [shape = 'u8[57344]{0}', space=vmem, size = 0xe000, scoped, tag = 'input window, operand 1, single buffered']
    #allocation3 [shape = 's32[1]{0}', space=sflag, size = 0x4, scoped, tag = 'scoped memory for discriminator_forward.3']
    %8 = vsyncpa [#allocation3], 0
    // Predicated region
    $region2: #{discriminator_forward.3} parent=1 // pred_check
      _
    $region3: #{discriminator_forward.3} parent=1 // pred_check_branch
      %10 = sbr.rel (0) target = $region5
    $region4: #{discriminator_forward.3} parent=1 // pred_region
      _
    $region5: #{discriminator_forward.3} parent=1 // pred_fallthru
      _
    // Predicated region
    $region6: #{discriminator_forward.3} parent=1 // pred_check
      _
    $region7: #{discriminator_forward.3} parent=1 // pred_check_branch
      %12 = sbr.rel (0) target = $region9
    $region8: #{discriminator_forward.3} parent=1 // pred_region
      %s14 = ssub.s32 1792, 1792
      %15 = vsyncadd [#allocation3], %s14
      %s16 = sshll.u32 [#allocation2], 4
      %s17 = int_to_ptr.vmem [resolvable:$true] %s16
      %22 = dma.hbm_to_vmem [thread:$0]  %s1, 1792, %s17, [#allocation3], 896, 896, 56
    $region9: #{discriminator_forward.3} parent=1 // pred_fallthru
      _
    // Predicated region
    $region10: #{discriminator_forward.3} parent=1 // pred_check
      _
    $region11: #{discriminator_forward.3} parent=1 // pred_check_branch
      %24 = sbr.rel (0) target = $region13
    $region12: #{discriminator_forward.3} parent=1 // pred_region
      _
    $region13: #{discriminator_forward.3} parent=1 // pred_fallthru
      _
    // Predicated region
    $region14: #{discriminator_forward.3} parent=1 // pred_check
      _
    $region15: #{discriminator_forward.3} parent=1 // pred_check_branch
      %26 = sbr.rel (0) target = $region17
    $region16: #{discriminator_forward.3} parent=1 // pred_region
      %27 = dma.done [#allocation3], 1792
    $region17: #{discriminator_forward.3} parent=1 // pred_fallthru
      _
    %v28 = vld [vmem:[%s0] sm:$0xff]
    %v29 = vld [vmem:[%s0 + $0x8] sm:$0xff]
    %v30 = vld [vmem:[%s0 + $0x10] sm:$0xff]
    %v31 = vld [vmem:[%s0 + $0x18] sm:$0xff]
    %v32 = vld [vmem:[%s0 + $0x20] sm:$0xff]
    %v33 = vld [vmem:[%s0 + $0x28] sm:$0xff]
    %v34 = vld [vmem:[%s0 + $0x30] sm:$0xff]
    %v35 = vld [vmem:[%s0 + $0x38] sm:$0xff]
    %v36 = vld [vmem:[%s0 + $0x40] sm:$0xff]
    %v37 = vld [vmem:[%s0 + $0x48] sm:$0xff]
    %v38 = vld [vmem:[%s0 + $0x50] sm:$0xff]
    %v39 = vld [vmem:[%s0 + $0x58] sm:$0xff]
    %v40 = vld [vmem:[%s0 + $0x60] sm:$0xff]
    %v41 = vld [vmem:[%s0 + $0x68] sm:$0xff]
    %v42 = vld [vmem:[%s0 + $0x70] sm:$0xff]
    %v43 = vld [vmem:[%s0 + $0x78] sm:$0xff]
    %v44 = vld [vmem:[#allocation2] sm:$0xff]
    %v45 = vld [vmem:[#allocation2 + $0x8] sm:$0xff]
    %v46 = vld [vmem:[#allocation2 + $0x10] sm:$0xff]
    %v47 = vld [vmem:[#allocation2 + $0x18] sm:$0xff]
    %v48 = vld [vmem:[#allocation2 + $0x20] sm:$0xff]
    %v49 = vld [vmem:[#allocation2 + $0x28] sm:$0xff]
    %v50 = vld [vmem:[#allocation2 + $0x30] sm:$0xff]
    %v51 = vld [vmem:[#allocation2 + $0x38] sm:$0x3]
    %v52 = vld [vmem:[#allocation2 + $0x40] sm:$0x3]
    %v53 = vld [vmem:[#allocation2 + $0x48] sm:$0x3]
    %v54 = vld [vmem:[#allocation2 + $0x50] sm:$0x3]
    %v55 = vld [vmem:[#allocation2 + $0x58] sm:$0x3]
    %v56 = vld [vmem:[#allocation2 + $0x60] sm:$0x3]
    %v57 = vld [vmem:[#allocation2 + $0x68] sm:$0x3]
    %v58 = vld [vmem:[%s2] sm:$0x7f]
    %v60 = vlaneseq
    %v61 = vshrl.u32 %v60, 7
    %v62 = vsub.s32 0, %v61
    %v63 = vrot.slane %v58, %v62
    %v64 = vlaneseq
    %v65 = vshrl.u32 %v64, 7
    %v66 = vsub.s32 1, %v65
    %v67 = vrot.slane %v58, %v66
    %v68 = vlaneseq
    %v69 = vshrl.u32 %v68, 7
    %v70 = vsub.s32 2, %v69
    %v71 = vrot.slane %v58, %v70
    %v72 = vlaneseq
    %v73 = vshrl.u32 %v72, 7
    %v74 = vsub.s32 3, %v73
    %v75 = vrot.slane %v58, %v74
    %v76 = vlaneseq
    %v77 = vshrl.u32 %v76, 7
    %v78 = vsub.s32 4, %v77
    %v79 = vrot.slane %v58, %v78
    %v80 = vlaneseq
    %v81 = vshrl.u32 %v80, 7
    %v82 = vsub.s32 5, %v81
    %v83 = vrot.slane %v58, %v82
    %v84 = vlaneseq
    %v85 = vshrl.u32 %v84, 7
    %v86 = vsub.s32 6, %v85
    %v87 = vrot.slane %v58, %v86
    %vm95 = vcmask 80896
    %v97 = vsel %vm95, %v28, 0
    %v100 = vsel %vm95, %v29, 0
    %v103 = vsel %vm95, %v30, 0
    %v106 = vsel %vm95, %v31, 0
    %v109 = vsel %vm95, %v32, 0
    %v112 = vsel %vm95, %v33, 0
    %v115 = vsel %vm95, %v34, 0
    %v118 = vsel %vm95, %v35, 0
    %v121 = vsel %vm95, %v36, 0
    %v124 = vsel %vm95, %v37, 0
    %v127 = vsel %vm95, %v38, 0
    %v130 = vsel %vm95, %v39, 0
    %v133 = vsel %vm95, %v40, 0
    %v136 = vsel %vm95, %v41, 0
    %v139 = vsel %vm95, %v42, 0
    %v142 = vsel %vm95, %v43, 0
    %vm144 = vcmask 1041408
    %v146 = vsel %vm144, %v51, 0
    %v149 = vsel %vm144, %v52, 0
    %v152 = vsel %vm144, %v53, 0
    %v155 = vsel %vm144, %v54, 0
    %v158 = vsel %vm144, %v55, 0
    %v161 = vsel %vm144, %v56, 0
    %v164 = vsel %vm144, %v57, 0
    %166 = vmatprep.subr.mxu0 %v45
    %167 = vmatpush1.msra.mxu0 %v44
    %168 = vmatprep.subr.mxu0 %v149
    %169 = vmatpush1.msra.mxu0 %v146
    %170 = vmatprep.subr.mxu0 0.0
    %171 = vmatpush1.msra.mxu0 0.0
    %172 = vmatprep.subr.mxu0 0.0
    %173 = vmatpush1.msra.mxu0 0.0
    %174 = vmatprep.subr.mxu0 0.0
    %175 = vmatpush1.msra.mxu0 0.0
    %176 = vmatprep.subr.mxu0 0.0
    %177 = vmatpush1.msra.mxu0 0.0
    %178 = vmatprep.subr.mxu0 0.0
    %179 = vmatpush1.msra.mxu0 0.0
    %180 = vmatprep.subr.mxu0 0.0
    %181 = vmatpush1.msra.mxu0 0.0
    %182 = vmatprep.subr.mxu0 0.0
    %183 = vmatpush1.msra.mxu0 0.0
    %184 = vmatprep.subr.mxu0 0.0
    %185 = vmatpush1.msra.mxu0 0.0
    %186 = vmatprep.subr.mxu0 0.0
    %187 = vmatpush1.msra.mxu0 0.0
    %188 = vmatprep.subr.mxu0 0.0
    %189 = vmatpush1.msra.mxu0 0.0
    %190 = vmatprep.subr.mxu0 0.0
    %191 = vmatpush1.msra.mxu0 0.0
    %192 = vmatprep.subr.mxu0 0.0
    %193 = vmatpush1.msra.mxu0 0.0
    %194 = vmatprep.subr.mxu0 0.0
    %195 = vmatpush1.msra.mxu0 0.0
    %196 = vmatprep.subr.mxu0 0.0
    %197 = vmatpush1.msra.mxu0 0.0
    %198 = vmatprep.subr.mxu0 0.0
    %199 = vmatpush1.msra.mxu0 0.0
    %200 = vmatprep.subr.mxu0 0.0
    %201 = vmatpush1.msra.mxu0 0.0
    %202 = vmatprep.subr.mxu0 0.0
    %203 = vmatpush1.msra.mxu0 0.0
    %204 = vmatprep.subr.mxu0 0.0
    %205 = vmatpush1.msra.mxu0 0.0
    %206 = vmatprep.subr.mxu0 0.0
    %207 = vmatpush1.msra.mxu0 0.0
    %208 = vmatprep.subr.mxu0 0.0
    %209 = vmatpush1.msra.mxu0 0.0
    %210 = vmatprep.subr.mxu0 0.0
    %211 = vmatpush1.msra.mxu0 0.0
    %212 = vmatprep.subr.mxu0 0.0
    %213 = vmatpush1.msra.mxu0 0.0
    %214 = vmatprep.subr.mxu0 0.0
    %215 = vmatpush1.msra.mxu0 0.0
    %216 = vmatprep.subr.mxu0 0.0
    %217 = vmatpush1.msra.mxu0 0.0
    %218 = vmatprep.subr.mxu0 0.0
    %219 = vmatpush1.msra.mxu0 0.0
    %220 = vmatprep.subr.mxu0 0.0
    %221 = vmatpush1.msra.mxu0 0.0
    %222 = vmatprep.subr.mxu0 0.0
    %223 = vmatpush1.msra.mxu0 0.0
    %224 = vmatprep.subr.mxu0 0.0
    %225 = vmatpush1.msra.mxu0 0.0
    %226 = vmatprep.subr.mxu0 0.0
    %227 = vmatpush1.msra.mxu0 0.0
    %228 = vmatprep.subr.mxu0 0.0
    %229 = vmatpush1.msra.mxu0 0.0
    %230 = vmatprep.mubr.f32.mxu0 0.0
    %231 = vmatmul.mubr.f32.gmra.mrb[0].mxu0 %v97
    %v232 = vpop.f32.mrb[0].mxu0
    %v233 = vadd.f32 %v63, %v232
    %v234 = vpop.f32.mrb[0].mxu0
    %v235 = vadd.f32 %v67, %v234
    %236 = vmatprep.mubr.f32.mxu0 0.0
    %237 = vmatmul.mubr.f32.gmra.mrb[0].mxu0 %v100
    %v238 = vpop.f32.mrb[0].mxu0
    %v239 = vadd.f32 %v63, %v238
    %v240 = vpop.f32.mrb[0].mxu0
    %v241 = vadd.f32 %v67, %v240
    %242 = vmatprep.mubr.f32.mxu0 0.0
    %243 = vmatmul.mubr.f32.gmra.mrb[0].mxu0 %v103
    %v244 = vpop.f32.mrb[0].mxu0
    %v245 = vadd.f32 %v63, %v244
    %v246 = vpop.f32.mrb[0].mxu0
    %v247 = vadd.f32 %v67, %v246
    %248 = vmatprep.mubr.f32.mxu0 0.0
    %249 = vmatmul.mubr.f32.gmra.mrb[0].mxu0 %v106
    %v250 = vpop.f32.mrb[0].mxu0
    %v251 = vadd.f32 %v63, %v250
    %v252 = vpop.f32.mrb[0].mxu0
    %v253 = vadd.f32 %v67, %v252
    %254 = vmatprep.mubr.f32.mxu0 0.0
    %255 = vmatmul.mubr.f32.gmra.mrb[0].mxu0 %v109
    %v256 = vpop.f32.mrb[0].mxu0
    %v257 = vadd.f32 %v63, %v256
    %v258 = vpop.f32.mrb[0].mxu0
    %v259 = vadd.f32 %v67, %v258
    %260 = vmatprep.mubr.f32.mxu0 0.0
    %261 = vmatmul.mubr.f32.gmra.mrb[0].mxu0 %v112
    %v262 = vpop.f32.mrb[0].mxu0
    %v263 = vadd.f32 %v63, %v262
    %v264 = vpop.f32.mrb[0].mxu0
    %v265 = vadd.f32 %v67, %v264
    %266 = vmatprep.mubr.f32.mxu0 0.0
    %267 = vmatmul.mubr.f32.gmra.mrb[0].mxu0 %v115
    %v268 = vpop.f32.mrb[0].mxu0
    %v269 = vadd.f32 %v63, %v268
    %v270 = vpop.f32.mrb[0].mxu0
    %v271 = vadd.f32 %v67, %v270
    %272 = vmatprep.mubr.f32.mxu0 0.0
    %273 = vmatmul.mubr.f32.gmra.mrb[0].mxu0 %v118
    %v274 = vpop.f32.mrb[0].mxu0
    %v275 = vadd.f32 %v63, %v274
    %v276 = vpop.f32.mrb[0].mxu0
    %v277 = vadd.f32 %v67, %v276
    %278 = vmatprep.mubr.f32.mxu0 0.0
    %279 = vmatmul.mubr.f32.gmra.mrb[0].mxu0 %v121
    %v280 = vpop.f32.mrb[0].mxu0
    %v281 = vadd.f32 %v63, %v280
    %v282 = vpop.f32.mrb[0].mxu0
    %v283 = vadd.f32 %v67, %v282
    %284 = vmatprep.mubr.f32.mxu0 0.0
    %285 = vmatmul.mubr.f32.gmra.mrb[0].mxu0 %v124
    %v286 = vpop.f32.mrb[0].mxu0
    %v287 = vadd.f32 %v63, %v286
    %v288 = vpop.f32.mrb[0].mxu0
    %v289 = vadd.f32 %v67, %v288
    %290 = vmatprep.mubr.f32.mxu0 0.0
    %291 = vmatmul.mubr.f32.gmra.mrb[0].mxu0 %v127
    %v292 = vpop.f32.mrb[0].mxu0
    %v293 = vadd.f32 %v63, %v292
    %v294 = vpop.f32.mrb[0].mxu0
    %v295 = vadd.f32 %v67, %v294
    %296 = vmatprep.mubr.f32.mxu0 0.0
    %297 = vmatmul.mubr.f32.gmra.mrb[0].mxu0 %v130
    %v298 = vpop.f32.mrb[0].mxu0
    %v299 = vadd.f32 %v63, %v298
    %v300 = vpop.f32.mrb[0].mxu0
    %v301 = vadd.f32 %v67, %v300
    %302 = vmatprep.mubr.f32.mxu0 0.0
    %303 = vmatmul.mubr.f32.gmra.mrb[0].mxu0 %v133
    %v304 = vpop.f32.mrb[0].mxu0
    %v305 = vadd.f32 %v63, %v304
    %v306 = vpop.f32.mrb[0].mxu0
    %v307 = vadd.f32 %v67, %v306
    %308 = vmatprep.mubr.f32.mxu0 0.0
    %309 = vmatmul.mubr.f32.gmra.mrb[0].mxu0 %v136
    %v310 = vpop.f32.mrb[0].mxu0
    %v311 = vadd.f32 %v63, %v310
    %v312 = vpop.f32.mrb[0].mxu0
    %v313 = vadd.f32 %v67, %v312
    %314 = vmatprep.mubr.f32.mxu0 0.0
    %315 = vmatmul.mubr.f32.gmra.mrb[0].mxu0 %v139
    %v316 = vpop.f32.mrb[0].mxu0
    %v317 = vadd.f32 %v63, %v316
    %v318 = vpop.f32.mrb[0].mxu0
    %v319 = vadd.f32 %v67, %v318
    %320 = vmatprep.mubr.f32.mxu0 0.0
    %321 = vmatmul.mubr.f32.gmra.mrb[0].mxu0 %v142
    %v322 = vpop.f32.mrb[0].mxu0
    %v323 = vadd.f32 %v63, %v322
    %v324 = vpop.f32.mrb[0].mxu0
    %v325 = vadd.f32 %v67, %v324
    %326 = vdwg.mxu0
    %327 = vmatprep.subr.mxu0 %v47
    %328 = vmatpush1.msra.mxu0 %v46
    %329 = vmatprep.subr.mxu0 %v155
    %330 = vmatpush1.msra.mxu0 %v152
    %331 = vmatprep.subr.mxu0 0.0
    %332 = vmatpush1.msra.mxu0 0.0
    %333 = vmatprep.subr.mxu0 0.0
    %334 = vmatpush1.msra.mxu0 0.0
    %335 = vmatprep.subr.mxu0 0.0
    %336 = vmatpush1.msra.mxu0 0.0
    %337 = vmatprep.subr.mxu0 0.0
    %338 = vmatpush1.msra.mxu0 0.0
    %339 = vmatprep.subr.mxu0 0.0
    %340 = vmatpush1.msra.mxu0 0.0
    %341 = vmatprep.subr.mxu0 0.0
    %342 = vmatpush1.msra.mxu0 0.0
    %343 = vmatprep.subr.mxu0 0.0
    %344 = vmatpush1.msra.mxu0 0.0
    %345 = vmatprep.subr.mxu0 0.0
    %346 = vmatpush1.msra.mxu0 0.0
    %347 = vmatprep.subr.mxu0 0.0
    %348 = vmatpush1.msra.mxu0 0.0
    %349 = vmatprep.subr.mxu0 0.0
    %350 = vmatpush1.msra.mxu0 0.0
    %351 = vmatprep.subr.mxu0 0.0
    %352 = vmatpush1.msra.mxu0 0.0
    %353 = vmatprep.subr.mxu0 0.0
    %354 = vmatpush1.msra.mxu0 0.0
    %355 = vmatprep.subr.mxu0 0.0
    %356 = vmatpush1.msra.mxu0 0.0
    %357 = vmatprep.subr.mxu0 0.0
    %358 = vmatpush1.msra.mxu0 0.0
    %359 = vmatprep.subr.mxu0 0.0
    %360 = vmatpush1.msra.mxu0 0.0
    %361 = vmatprep.subr.mxu0 0.0
    %362 = vmatpush1.msra.mxu0 0.0
    %363 = vmatprep.subr.mxu0 0.0
    %364 = vmatpush1.msra.mxu0 0.0
    %365 = vmatprep.subr.mxu0 0.0
    %366 = vmatpush1.msra.mxu0 0.0
    %367 = vmatprep.subr.mxu0 0.0
    %368 = vmatpush1.msra.mxu0 0.0
    %369 = vmatprep.subr.mxu0 0.0
    %370 = vmatpush1.msra.mxu0 0.0
    %371 = vmatprep.subr.mxu0 0.0
    %372 = vmatpush1.msra.mxu0 0.0
    %373 = vmatprep.subr.mxu0 0.0
    %374 = vmatpush1.msra.mxu0 0.0
    %375 = vmatprep.subr.mxu0 0.0
    %376 = vmatpush1.msra.mxu0 0.0
    %377 = vmatprep.subr.mxu0 0.0
    %378 = vmatpush1.msra.mxu0 0.0
    %379 = vmatprep.subr.mxu0 0.0
    %380 = vmatpush1.msra.mxu0 0.0
    %381 = vmatprep.subr.mxu0 0.0
    %382 = vmatpush1.msra.mxu0 0.0
    %383 = vmatprep.subr.mxu0 0.0
    %384 = vmatpush1.msra.mxu0 0.0
    %385 = vmatprep.subr.mxu0 0.0
    %386 = vmatpush1.msra.mxu0 0.0
    %387 = vmatprep.subr.mxu0 0.0
    %388 = vmatpush1.msra.mxu0 0.0
    %389 = vmatprep.subr.mxu0 0.0
    %390 = vmatpush1.msra.mxu0 0.0
    %391 = vmatprep.mubr.f32.mxu0 0.0
    %392 = vmatmul.mubr.f32.gmra.mrb[0].mxu0 %v97
    %v393 = vpop.f32.mrb[0].mxu0
    %v394 = vadd.f32 %v71, %v393
    %v395 = vpop.f32.mrb[0].mxu0
    %v396 = vadd.f32 %v75, %v395
    %397 = vmatprep.mubr.f32.mxu0 0.0
    %398 = vmatmul.mubr.f32.gmra.mrb[0].mxu0 %v100
    %v399 = vpop.f32.mrb[0].mxu0
    %v400 = vadd.f32 %v71, %v399
    %v401 = vpop.f32.mrb[0].mxu0
    %v402 = vadd.f32 %v75, %v401
    %403 = vmatprep.mubr.f32.mxu0 0.0
    %404 = vmatmul.mubr.f32.gmra.mrb[0].mxu0 %v103
    %v405 = vpop.f32.mrb[0].mxu0
    %v406 = vadd.f32 %v71, %v405
    %v407 = vpop.f32.mrb[0].mxu0
    %v408 = vadd.f32 %v75, %v407
    %409 = vmatprep.mubr.f32.mxu0 0.0
    %410 = vmatmul.mubr.f32.gmra.mrb[0].mxu0 %v106
    %v411 = vpop.f32.mrb[0].mxu0
    %v412 = vadd.f32 %v71, %v411
    %v413 = vpop.f32.mrb[0].mxu0
    %v414 = vadd.f32 %v75, %v413
    %415 = vmatprep.mubr.f32.mxu0 0.0
    %416 = vmatmul.mubr.f32.gmra.mrb[0].mxu0 %v109
    %v417 = vpop.f32.mrb[0].mxu0
    %v418 = vadd.f32 %v71, %v417
    %v419 = vpop.f32.mrb[0].mxu0
    %v420 = vadd.f32 %v75, %v419
    %421 = vmatprep.mubr.f32.mxu0 0.0
    %422 = vmatmul.mubr.f32.gmra.mrb[0].mxu0 %v112
    %v423 = vpop.f32.mrb[0].mxu0
    %v424 = vadd.f32 %v71, %v423
    %v425 = vpop.f32.mrb[0].mxu0
    %v426 = vadd.f32 %v75, %v425
    %427 = vmatprep.mubr.f32.mxu0 0.0
    %428 = vmatmul.mubr.f32.gmra.mrb[0].mxu0 %v115
    %v429 = vpop.f32.mrb[0].mxu0
    %v430 = vadd.f32 %v71, %v429
    %v431 = vpop.f32.mrb[0].mxu0
    %v432 = vadd.f32 %v75, %v431
    %433 = vmatprep.mubr.f32.mxu0 0.0
    %434 = vmatmul.mubr.f32.gmra.mrb[0].mxu0 %v118
    %v435 = vpop.f32.mrb[0].mxu0
    %v436 = vadd.f32 %v71, %v435
    %v437 = vpop.f32.mrb[0].mxu0
    %v438 = vadd.f32 %v75, %v437
    %439 = vmatprep.mubr.f32.mxu0 0.0
    %440 = vmatmul.mubr.f32.gmra.mrb[0].mxu0 %v121
    %v441 = vpop.f32.mrb[0].mxu0
    %v442 = vadd.f32 %v71, %v441
    %v443 = vpop.f32.mrb[0].mxu0
    %v444 = vadd.f32 %v75, %v443
    %445 = vmatprep.mubr.f32.mxu0 0.0
    %446 = vmatmul.mubr.f32.gmra.mrb[0].mxu0 %v124
    %v447 = vpop.f32.mrb[0].mxu0
    %v448 = vadd.f32 %v71, %v447
    %v449 = vpop.f32.mrb[0].mxu0
    %v450 = vadd.f32 %v75, %v449
    %451 = vmatprep.mubr.f32.mxu0 0.0
    %452 = vmatmul.mubr.f32.gmra.mrb[0].mxu0 %v127
    %v453 = vpop.f32.mrb[0].mxu0
    %v454 = vadd.f32 %v71, %v453
    %v455 = vpop.f32.mrb[0].mxu0
    %v456 = vadd.f32 %v75, %v455
    %457 = vmatprep.mubr.f32.mxu0 0.0
    %458 = vmatmul.mubr.f32.gmra.mrb[0].mxu0 %v130
    %v459 = vpop.f32.mrb[0].mxu0
    %v460 = vadd.f32 %v71, %v459
    %v461 = vpop.f32.mrb[0].mxu0
    %v462 = vadd.f32 %v75, %v461
    %463 = vmatprep.mubr.f32.mxu0 0.0
    %464 = vmatmul.mubr.f32.gmra.mrb[0].mxu0 %v133
    %v465 = vpop.f32.mrb[0].mxu0
    %v466 = vadd.f32 %v71, %v465
    %v467 = vpop.f32.mrb[0].mxu0
    %v468 = vadd.f32 %v75, %v467
    %469 = vmatprep.mubr.f32.mxu0 0.0
    %470 = vmatmul.mubr.f32.gmra.mrb[0].mxu0 %v136
    %v471 = vpop.f32.mrb[0].mxu0
    %v472 = vadd.f32 %v71, %v471
    %v473 = vpop.f32.mrb[0].mxu0
    %v474 = vadd.f32 %v75, %v473
    %475 = vmatprep.mubr.f32.mxu0 0.0
    %476 = vmatmul.mubr.f32.gmra.mrb[0].mxu0 %v139
    %v477 = vpop.f32.mrb[0].mxu0
    %v478 = vadd.f32 %v71, %v477
    %v479 = vpop.f32.mrb[0].mxu0
    %v480 = vadd.f32 %v75, %v479
    %481 = vmatprep.mubr.f32.mxu0 0.0
    %482 = vmatmul.mubr.f32.gmra.mrb[0].mxu0 %v142
    %v483 = vpop.f32.mrb[0].mxu0
    %v484 = vadd.f32 %v71, %v483
    %v485 = vpop.f32.mrb[0].mxu0
    %v486 = vadd.f32 %v75, %v485
    %487 = vdwg.mxu0
    %488 = vmatprep.subr.mxu0 %v49
    %489 = vmatpush1.msra.mxu0 %v48
    %490 = vmatprep.subr.mxu0 %v161
    %491 = vmatpush1.msra.mxu0 %v158
    %492 = vmatprep.subr.mxu0 0.0
    %493 = vmatpush1.msra.mxu0 0.0
    %494 = vmatprep.subr.mxu0 0.0
    %495 = vmatpush1.msra.mxu0 0.0
    %496 = vmatprep.subr.mxu0 0.0
    %497 = vmatpush1.msra.mxu0 0.0
    %498 = vmatprep.subr.mxu0 0.0
    %499 = vmatpush1.msra.mxu0 0.0
    %500 = vmatprep.subr.mxu0 0.0
    %501 = vmatpush1.msra.mxu0 0.0
    %502 = vmatprep.subr.mxu0 0.0
    %503 = vmatpush1.msra.mxu0 0.0
    %504 = vmatprep.subr.mxu0 0.0
    %505 = vmatpush1.msra.mxu0 0.0
    %506 = vmatprep.subr.mxu0 0.0
    %507 = vmatpush1.msra.mxu0 0.0
    %508 = vmatprep.subr.mxu0 0.0
    %509 = vmatpush1.msra.mxu0 0.0
    %510 = vmatprep.subr.mxu0 0.0
    %511 = vmatpush1.msra.mxu0 0.0
    %512 = vmatprep.subr.mxu0 0.0
    %513 = vmatpush1.msra.mxu0 0.0
    %514 = vmatprep.subr.mxu0 0.0
    %515 = vmatpush1.msra.mxu0 0.0
    %516 = vmatprep.subr.mxu0 0.0
    %517 = vmatpush1.msra.mxu0 0.0
    %518 = vmatprep.subr.mxu0 0.0
    %519 = vmatpush1.msra.mxu0 0.0
    %520 = vmatprep.subr.mxu0 0.0
    %521 = vmatpush1.msra.mxu0 0.0
    %522 = vmatprep.subr.mxu0 0.0
    %523 = vmatpush1.msra.mxu0 0.0
    %524 = vmatprep.subr.mxu0 0.0
    %525 = vmatpush1.msra.mxu0 0.0
    %526 = vmatprep.subr.mxu0 0.0
    %527 = vmatpush1.msra.mxu0 0.0
    %528 = vmatprep.subr.mxu0 0.0
    %529 = vmatpush1.msra.mxu0 0.0
    %530 = vmatprep.subr.mxu0 0.0
    %531 = vmatpush1.msra.mxu0 0.0
    %532 = vmatprep.subr.mxu0 0.0
    %533 = vmatpush1.msra.mxu0 0.0
    %534 = vmatprep.subr.mxu0 0.0
    %535 = vmatpush1.msra.mxu0 0.0
    %536 = vmatprep.subr.mxu0 0.0
    %537 = vmatpush1.msra.mxu0 0.0
    %538 = vmatprep.subr.mxu0 0.0
    %539 = vmatpush1.msra.mxu0 0.0
    %540 = vmatprep.subr.mxu0 0.0
    %541 = vmatpush1.msra.mxu0 0.0
    %542 = vmatprep.subr.mxu0 0.0
    %543 = vmatpush1.msra.mxu0 0.0
    %544 = vmatprep.subr.mxu0 0.0
    %545 = vmatpush1.msra.mxu0 0.0
    %546 = vmatprep.subr.mxu0 0.0
    %547 = vmatpush1.msra.mxu0 0.0
    %548 = vmatprep.subr.mxu0 0.0
    %549 = vmatpush1.msra.mxu0 0.0
    %550 = vmatprep.subr.mxu0 0.0
    %551 = vmatpush1.msra.mxu0 0.0
    %552 = vmatprep.mubr.f32.mxu0 0.0
    %553 = vmatmul.mubr.f32.gmra.mrb[0].mxu0 %v97
    %v554 = vpop.f32.mrb[0].mxu0
    %v555 = vadd.f32 %v79, %v554
    %v556 = vpop.f32.mrb[0].mxu0
    %v557 = vadd.f32 %v83, %v556
    %558 = vmatprep.mubr.f32.mxu0 0.0
    %559 = vmatmul.mubr.f32.gmra.mrb[0].mxu0 %v100
    %v560 = vpop.f32.mrb[0].mxu0
    %v561 = vadd.f32 %v79, %v560
    %v562 = vpop.f32.mrb[0].mxu0
    %v563 = vadd.f32 %v83, %v562
    %564 = vmatprep.mubr.f32.mxu0 0.0
    %565 = vmatmul.mubr.f32.gmra.mrb[0].mxu0 %v103
    %v566 = vpop.f32.mrb[0].mxu0
    %v567 = vadd.f32 %v79, %v566
    %v568 = vpop.f32.mrb[0].mxu0
    %v569 = vadd.f32 %v83, %v568
    %570 = vmatprep.mubr.f32.mxu0 0.0
    %571 = vmatmul.mubr.f32.gmra.mrb[0].mxu0 %v106
    %v572 = vpop.f32.mrb[0].mxu0
    %v573 = vadd.f32 %v79, %v572
    %v574 = vpop.f32.mrb[0].mxu0
    %v575 = vadd.f32 %v83, %v574
    %576 = vmatprep.mubr.f32.mxu0 0.0
    %577 = vmatmul.mubr.f32.gmra.mrb[0].mxu0 %v109
    %v578 = vpop.f32.mrb[0].mxu0
    %v579 = vadd.f32 %v79, %v578
    %v580 = vpop.f32.mrb[0].mxu0
    %v581 = vadd.f32 %v83, %v580
    %582 = vmatprep.mubr.f32.mxu0 0.0
    %583 = vmatmul.mubr.f32.gmra.mrb[0].mxu0 %v112
    %v584 = vpop.f32.mrb[0].mxu0
    %v585 = vadd.f32 %v79, %v584
    %v586 = vpop.f32.mrb[0].mxu0
    %v587 = vadd.f32 %v83, %v586
    %588 = vmatprep.mubr.f32.mxu0 0.0
    %589 = vmatmul.mubr.f32.gmra.mrb[0].mxu0 %v115
    %v590 = vpop.f32.mrb[0].mxu0
    %v591 = vadd.f32 %v79, %v590
    %v592 = vpop.f32.mrb[0].mxu0
    %v593 = vadd.f32 %v83, %v592
    %594 = vmatprep.mubr.f32.mxu0 0.0
    %595 = vmatmul.mubr.f32.gmra.mrb[0].mxu0 %v118
    %v596 = vpop.f32.mrb[0].mxu0
    %v597 = vadd.f32 %v79, %v596
    %v598 = vpop.f32.mrb[0].mxu0
    %v599 = vadd.f32 %v83, %v598
    %600 = vmatprep.mubr.f32.mxu0 0.0
    %601 = vmatmul.mubr.f32.gmra.mrb[0].mxu0 %v121
    %v602 = vpop.f32.mrb[0].mxu0
    %v603 = vadd.f32 %v79, %v602
    %v604 = vpop.f32.mrb[0].mxu0
    %v605 = vadd.f32 %v83, %v604
    %606 = vmatprep.mubr.f32.mxu0 0.0
    %607 = vmatmul.mubr.f32.gmra.mrb[0].mxu0 %v124
    %v608 = vpop.f32.mrb[0].mxu0
    %v609 = vadd.f32 %v79, %v608
    %v610 = vpop.f32.mrb[0].mxu0
    %v611 = vadd.f32 %v83, %v610
    %612 = vmatprep.mubr.f32.mxu0 0.0
    %613 = vmatmul.mubr.f32.gmra.mrb[0].mxu0 %v127
    %v614 = vpop.f32.mrb[0].mxu0
    %v615 = vadd.f32 %v79, %v614
    %v616 = vpop.f32.mrb[0].mxu0
    %v617 = vadd.f32 %v83, %v616
    %618 = vmatprep.mubr.f32.mxu0 0.0
    %619 = vmatmul.mubr.f32.gmra.mrb[0].mxu0 %v130
    %v620 = vpop.f32.mrb[0].mxu0
    %v621 = vadd.f32 %v79, %v620
    %v622 = vpop.f32.mrb[0].mxu0
    %v623 = vadd.f32 %v83, %v622
    %624 = vmatprep.mubr.f32.mxu0 0.0
    %625 = vmatmul.mubr.f32.gmra.mrb[0].mxu0 %v133
    %v626 = vpop.f32.mrb[0].mxu0
    %v627 = vadd.f32 %v79, %v626
    %v628 = vpop.f32.mrb[0].mxu0
    %v629 = vadd.f32 %v83, %v628
    %630 = vmatprep.mubr.f32.mxu0 0.0
    %631 = vmatmul.mubr.f32.gmra.mrb[0].mxu0 %v136
    %v632 = vpop.f32.mrb[0].mxu0
    %v633 = vadd.f32 %v79, %v632
    %v634 = vpop.f32.mrb[0].mxu0
    %v635 = vadd.f32 %v83, %v634
    %636 = vmatprep.mubr.f32.mxu0 0.0
    %637 = vmatmul.mubr.f32.gmra.mrb[0].mxu0 %v139
    %v638 = vpop.f32.mrb[0].mxu0
    %v639 = vadd.f32 %v79, %v638
    %v640 = vpop.f32.mrb[0].mxu0
    %v641 = vadd.f32 %v83, %v640
    %642 = vmatprep.mubr.f32.mxu0 0.0
    %643 = vmatmul.mubr.f32.gmra.mrb[0].mxu0 %v142
    %v644 = vpop.f32.mrb[0].mxu0
    %v645 = vadd.f32 %v79, %v644
    %v646 = vpop.f32.mrb[0].mxu0
    %v647 = vadd.f32 %v83, %v646
    %648 = vdwg.mxu0
    %649 = vmatprep.subr.mxu0 0.0
    %650 = vmatpush1.msra.mxu0 %v50
    %651 = vmatprep.subr.mxu0 0.0
    %652 = vmatpush1.msra.mxu0 %v164
    %653 = vmatprep.subr.mxu0 0.0
    %654 = vmatpush1.msra.mxu0 0.0
    %655 = vmatprep.subr.mxu0 0.0
    %656 = vmatpush1.msra.mxu0 0.0
    %657 = vmatprep.subr.mxu0 0.0
    %658 = vmatpush1.msra.mxu0 0.0
    %659 = vmatprep.subr.mxu0 0.0
    %660 = vmatpush1.msra.mxu0 0.0
    %661 = vmatprep.subr.mxu0 0.0
    %662 = vmatpush1.msra.mxu0 0.0
    %663 = vmatprep.subr.mxu0 0.0
    %664 = vmatpush1.msra.mxu0 0.0
    %665 = vmatprep.subr.mxu0 0.0
    %666 = vmatpush1.msra.mxu0 0.0
    %667 = vmatprep.subr.mxu0 0.0
    %668 = vmatpush1.msra.mxu0 0.0
    %669 = vmatprep.subr.mxu0 0.0
    %670 = vmatpush1.msra.mxu0 0.0
    %671 = vmatprep.subr.mxu0 0.0
    %672 = vmatpush1.msra.mxu0 0.0
    %673 = vmatprep.subr.mxu0 0.0
    %674 = vmatpush1.msra.mxu0 0.0
    %675 = vmatprep.subr.mxu0 0.0
    %676 = vmatpush1.msra.mxu0 0.0
    %677 = vmatprep.subr.mxu0 0.0
    %678 = vmatpush1.msra.mxu0 0.0
    %679 = vmatprep.subr.mxu0 0.0
    %680 = vmatpush1.msra.mxu0 0.0
    %681 = vmatprep.subr.mxu0 0.0
    %682 = vmatpush1.msra.mxu0 0.0
    %683 = vmatprep.subr.mxu0 0.0
    %684 = vmatpush1.msra.mxu0 0.0
    %685 = vmatprep.subr.mxu0 0.0
    %686 = vmatpush1.msra.mxu0 0.0
    %687 = vmatprep.subr.mxu0 0.0
    %688 = vmatpush1.msra.mxu0 0.0
    %689 = vmatprep.subr.mxu0 0.0
    %690 = vmatpush1.msra.mxu0 0.0
    %691 = vmatprep.subr.mxu0 0.0
    %692 = vmatpush1.msra.mxu0 0.0
    %693 = vmatprep.subr.mxu0 0.0
    %694 = vmatpush1.msra.mxu0 0.0
    %695 = vmatprep.subr.mxu0 0.0
    %696 = vmatpush1.msra.mxu0 0.0
    %697 = vmatprep.subr.mxu0 0.0
    %698 = vmatpush1.msra.mxu0 0.0
    %699 = vmatprep.subr.mxu0 0.0
    %700 = vmatpush1.msra.mxu0 0.0
    %701 = vmatprep.subr.mxu0 0.0
    %702 = vmatpush1.msra.mxu0 0.0
    %703 = vmatprep.subr.mxu0 0.0
    %704 = vmatpush1.msra.mxu0 0.0
    %705 = vmatprep.subr.mxu0 0.0
    %706 = vmatpush1.msra.mxu0 0.0
    %707 = vmatprep.subr.mxu0 0.0
    %708 = vmatpush1.msra.mxu0 0.0
    %709 = vmatprep.subr.mxu0 0.0
    %710 = vmatpush1.msra.mxu0 0.0
    %711 = vmatprep.subr.mxu0 0.0
    %712 = vmatpush1.msra.mxu0 0.0
    %713 = vmatprep.mubr.f32.mxu0 0.0
    %714 = vmatmul.mubr.f32.gmra.mrb[0].mxu0 %v97
    %v715 = vpop.f32.mrb[0].mxu0
    %v716 = vadd.f32 %v87, %v715
    %v717 = vpop.f32.mrb[0].mxu0
    %718 = vmatprep.mubr.f32.mxu0 0.0
    %719 = vmatmul.mubr.f32.gmra.mrb[0].mxu0 %v100
    %v720 = vpop.f32.mrb[0].mxu0
    %v721 = vadd.f32 %v87, %v720
    %v722 = vpop.f32.mrb[0].mxu0
    %723 = vmatprep.mubr.f32.mxu0 0.0
    %724 = vmatmul.mubr.f32.gmra.mrb[0].mxu0 %v103
    %v725 = vpop.f32.mrb[0].mxu0
    %v726 = vadd.f32 %v87, %v725
    %v727 = vpop.f32.mrb[0].mxu0
    %728 = vmatprep.mubr.f32.mxu0 0.0
    %729 = vmatmul.mubr.f32.gmra.mrb[0].mxu0 %v106
    %v730 = vpop.f32.mrb[0].mxu0
    %v731 = vadd.f32 %v87, %v730
    %v732 = vpop.f32.mrb[0].mxu0
    %733 = vmatprep.mubr.f32.mxu0 0.0
    %734 = vmatmul.mubr.f32.gmra.mrb[0].mxu0 %v109
    %v735 = vpop.f32.mrb[0].mxu0
    %v736 = vadd.f32 %v87, %v735
    %v737 = vpop.f32.mrb[0].mxu0
    %738 = vmatprep.mubr.f32.mxu0 0.0
    %739 = vmatmul.mubr.f32.gmra.mrb[0].mxu0 %v112
    %v740 = vpop.f32.mrb[0].mxu0
    %v741 = vadd.f32 %v87, %v740
    %v742 = vpop.f32.mrb[0].mxu0
    %743 = vmatprep.mubr.f32.mxu0 0.0
    %744 = vmatmul.mubr.f32.gmra.mrb[0].mxu0 %v115
    %v745 = vpop.f32.mrb[0].mxu0
    %v746 = vadd.f32 %v87, %v745
    %v747 = vpop.f32.mrb[0].mxu0
    %748 = vmatprep.mubr.f32.mxu0 0.0
    %749 = vmatmul.mubr.f32.gmra.mrb[0].mxu0 %v118
    %v750 = vpop.f32.mrb[0].mxu0
    %v751 = vadd.f32 %v87, %v750
    %v752 = vpop.f32.mrb[0].mxu0
    %753 = vmatprep.mubr.f32.mxu0 0.0
    %754 = vmatmul.mubr.f32.gmra.mrb[0].mxu0 %v121
    %v755 = vpop.f32.mrb[0].mxu0
    %v756 = vadd.f32 %v87, %v755
    %v757 = vpop.f32.mrb[0].mxu0
    %758 = vmatprep.mubr.f32.mxu0 0.0
    %759 = vmatmul.mubr.f32.gmra.mrb[0].mxu0 %v124
    %v760 = vpop.f32.mrb[0].mxu0
    %v761 = vadd.f32 %v87, %v760
    %v762 = vpop.f32.mrb[0].mxu0
    %763 = vmatprep.mubr.f32.mxu0 0.0
    %764 = vmatmul.mubr.f32.gmra.mrb[0].mxu0 %v127
    %v765 = vpop.f32.mrb[0].mxu0
    %v766 = vadd.f32 %v87, %v765
    %v767 = vpop.f32.mrb[0].mxu0
    %768 = vmatprep.mubr.f32.mxu0 0.0
    %769 = vmatmul.mubr.f32.gmra.mrb[0].mxu0 %v130
    %v770 = vpop.f32.mrb[0].mxu0
    %v771 = vadd.f32 %v87, %v770
    %v772 = vpop.f32.mrb[0].mxu0
    %773 = vmatprep.mubr.f32.mxu0 0.0
    %774 = vmatmul.mubr.f32.gmra.mrb[0].mxu0 %v133
    %v775 = vpop.f32.mrb[0].mxu0
    %v776 = vadd.f32 %v87, %v775
    %v777 = vpop.f32.mrb[0].mxu0
    %778 = vmatprep.mubr.f32.mxu0 0.0
    %779 = vmatmul.mubr.f32.gmra.mrb[0].mxu0 %v136
    %v780 = vpop.f32.mrb[0].mxu0
    %v781 = vadd.f32 %v87, %v780
    %v782 = vpop.f32.mrb[0].mxu0
    %783 = vmatprep.mubr.f32.mxu0 0.0
    %784 = vmatmul.mubr.f32.gmra.mrb[0].mxu0 %v139
    %v785 = vpop.f32.mrb[0].mxu0
    %v786 = vadd.f32 %v87, %v785
    %v787 = vpop.f32.mrb[0].mxu0
    %788 = vmatprep.mubr.f32.mxu0 0.0
    %789 = vmatmul.mubr.f32.gmra.mrb[0].mxu0 %v142
    %v790 = vpop.f32.mrb[0].mxu0
    %v791 = vadd.f32 %v87, %v790
    %v792 = vpop.f32.mrb[0].mxu0
    %793 = vdwg.mxu0
    %794 = vst [vmem:[%s3] sm:$0xff] %v233
    %795 = vst [vmem:[%s3 + $0x8] sm:$0xff] %v235
    %796 = vst [vmem:[%s3 + $0x10] sm:$0xff] %v394
    %797 = vst [vmem:[%s3 + $0x18] sm:$0xff] %v396
    %798 = vst [vmem:[%s3 + $0x20] sm:$0xff] %v555
    %799 = vst [vmem:[%s3 + $0x28] sm:$0xff] %v557
    %vm800 = vcmask 130048
    %801 = vst.msk [vmem:[%s3 + $0x30] sm:$0xff] %vm800, %v716
    %802 = vst [vmem:[%s3 + $0x38] sm:$0xff] %v239
    %803 = vst [vmem:[%s3 + $0x40] sm:$0xff] %v241
    %804 = vst [vmem:[%s3 + $0x48] sm:$0xff] %v400
    %805 = vst [vmem:[%s3 + $0x50] sm:$0xff] %v402
    %806 = vst [vmem:[%s3 + $0x58] sm:$0xff] %v561
    %807 = vst [vmem:[%s3 + $0x60] sm:$0xff] %v563
    %808 = vst.msk [vmem:[%s3 + $0x68] sm:$0xff] %vm800, %v721
    %809 = vst [vmem:[%s3 + $0x70] sm:$0xff] %v245
    %810 = vst [vmem:[%s3 + $0x78] sm:$0xff] %v247
    %811 = vst [vmem:[%s3 + $0x80] sm:$0xff] %v406
    %812 = vst [vmem:[%s3 + $0x88] sm:$0xff] %v408
    %813 = vst [vmem:[%s3 + $0x90] sm:$0xff] %v567
    %814 = vst [vmem:[%s3 + $0x98] sm:$0xff] %v569
    %815 = vst.msk [vmem:[%s3 + $0xa0] sm:$0xff] %vm800, %v726
    %816 = vst [vmem:[%s3 + $0xa8] sm:$0xff] %v251
    %817 = vst [vmem:[%s3 + $0xb0] sm:$0xff] %v253
    %818 = vst [vmem:[%s3 + $0xb8] sm:$0xff] %v412
    %819 = vst [vmem:[%s3 + $0xc0] sm:$0xff] %v414
    %820 = vst [vmem:[%s3 + $0xc8] sm:$0xff] %v573
    %821 = vst [vmem:[%s3 + $0xd0] sm:$0xff] %v575
    %822 = vst.msk [vmem:[%s3 + $0xd8] sm:$0xff] %vm800, %v731
    %823 = vst [vmem:[%s3 + $0xe0] sm:$0xff] %v257
    %824 = vst [vmem:[%s3 + $0xe8] sm:$0xff] %v259
    %825 = vst [vmem:[%s3 + $0xf0] sm:$0xff] %v418
    %826 = vst [vmem:[%s3 + $0xf8] sm:$0xff] %v420
    %827 = vst [vmem:[%s3 + $0x100] sm:$0xff] %v579
    %828 = vst [vmem:[%s3 + $0x108] sm:$0xff] %v581
    %829 = vst.msk [vmem:[%s3 + $0x110] sm:$0xff] %vm800, %v736
    %830 = vst [vmem:[%s3 + $0x118] sm:$0xff] %v263
    %831 = vst [vmem:[%s3 + $0x120] sm:$0xff] %v265
    %832 = vst [vmem:[%s3 + $0x128] sm:$0xff] %v424
    %833 = vst [vmem:[%s3 + $0x130] sm:$0xff] %v426
    %834 = vst [vmem:[%s3 + $0x138] sm:$0xff] %v585
    %835 = vst [vmem:[%s3 + $0x140] sm:$0xff] %v587
    %836 = vst.msk [vmem:[%s3 + $0x148] sm:$0xff] %vm800, %v741
    %837 = vst [vmem:[%s3 + $0x150] sm:$0xff] %v269
    %838 = vst [vmem:[%s3 + $0x158] sm:$0xff] %v271
    %839 = vst [vmem:[%s3 + $0x160] sm:$0xff] %v430
    %840 = vst [vmem:[%s3 + $0x168] sm:$0xff] %v432
    %841 = vst [vmem:[%s3 + $0x170] sm:$0xff] %v591
    %842 = vst [vmem:[%s3 + $0x178] sm:$0xff] %v593
    %843 = vst.msk [vmem:[%s3 + $0x180] sm:$0xff] %vm800, %v746
    %844 = vst [vmem:[%s3 + $0x188] sm:$0xff] %v275
    %845 = vst [vmem:[%s3 + $0x190] sm:$0xff] %v277
    %846 = vst [vmem:[%s3 + $0x198] sm:$0xff] %v436
    %847 = vst [vmem:[%s3 + $0x1a0] sm:$0xff] %v438
    %848 = vst [vmem:[%s3 + $0x1a8] sm:$0xff] %v597
    %849 = vst [vmem:[%s3 + $0x1b0] sm:$0xff] %v599
    %850 = vst.msk [vmem:[%s3 + $0x1b8] sm:$0xff] %vm800, %v751
    %851 = vst [vmem:[%s3 + $0x1c0] sm:$0xff] %v281
    %852 = vst [vmem:[%s3 + $0x1c8] sm:$0xff] %v283
    %853 = vst [vmem:[%s3 + $0x1d0] sm:$0xff] %v442
    %854 = vst [vmem:[%s3 + $0x1d8] sm:$0xff] %v444
    %855 = vst [vmem:[%s3 + $0x1e0] sm:$0xff] %v603
    %856 = vst [vmem:[%s3 + $0x1e8] sm:$0xff] %v605
    %857 = vst.msk [vmem:[%s3 + $0x1f0] sm:$0xff] %vm800, %v756
    %858 = vst [vmem:[%s3 + $0x1f8] sm:$0xff] %v287
    %859 = vst [vmem:[%s3 + $0x200] sm:$0xff] %v289
    %860 = vst [vmem:[%s3 + $0x208] sm:$0xff] %v448
    %861 = vst [vmem:[%s3 + $0x210] sm:$0xff] %v450
    %862 = vst [vmem:[%s3 + $0x218] sm:$0xff] %v609
    %863 = vst [vmem:[%s3 + $0x220] sm:$0xff] %v611
    %864 = vst.msk [vmem:[%s3 + $0x228] sm:$0xff] %vm800, %v761
    %865 = vst [vmem:[%s3 + $0x230] sm:$0xff] %v293
    %866 = vst [vmem:[%s3 + $0x238] sm:$0xff] %v295
    %867 = vst [vmem:[%s3 + $0x240] sm:$0xff] %v454
    %868 = vst [vmem:[%s3 + $0x248] sm:$0xff] %v456
    %869 = vst [vmem:[%s3 + $0x250] sm:$0xff] %v615
    %870 = vst [vmem:[%s3 + $0x258] sm:$0xff] %v617
    %871 = vst.msk [vmem:[%s3 + $0x260] sm:$0xff] %vm800, %v766
    %872 = vst [vmem:[%s3 + $0x268] sm:$0xff] %v299
    %873 = vst [vmem:[%s3 + $0x270] sm:$0xff] %v301
    %874 = vst [vmem:[%s3 + $0x278] sm:$0xff] %v460
    %875 = vst [vmem:[%s3 + $0x280] sm:$0xff] %v462
    %876 = vst [vmem:[%s3 + $0x288] sm:$0xff] %v621
    %877 = vst [vmem:[%s3 + $0x290] sm:$0xff] %v623
    %878 = vst.msk [vmem:[%s3 + $0x298] sm:$0xff] %vm800, %v771
    %879 = vst [vmem:[%s3 + $0x2a0] sm:$0xff] %v305
    %880 = vst [vmem:[%s3 + $0x2a8] sm:$0xff] %v307
    %881 = vst [vmem:[%s3 + $0x2b0] sm:$0xff] %v466
    %882 = vst [vmem:[%s3 + $0x2b8] sm:$0xff] %v468
    %883 = vst [vmem:[%s3 + $0x2c0] sm:$0xff] %v627
    %884 = vst [vmem:[%s3 + $0x2c8] sm:$0xff] %v629
    %885 = vst.msk [vmem:[%s3 + $0x2d0] sm:$0xff] %vm800, %v776
    %886 = vst [vmem:[%s3 + $0x2d8] sm:$0xff] %v311
    %887 = vst [vmem:[%s3 + $0x2e0] sm:$0xff] %v313
    %888 = vst [vmem:[%s3 + $0x2e8] sm:$0xff] %v472
    %889 = vst [vmem:[%s3 + $0x2f0] sm:$0xff] %v474
    %890 = vst [vmem:[%s3 + $0x2f8] sm:$0xff] %v633
    %891 = vst [vmem:[%s3 + $0x300] sm:$0xff] %v635
    %892 = vst.msk [vmem:[%s3 + $0x308] sm:$0xff] %vm800, %v781
    %893 = vst [vmem:[%s3 + $0x310] sm:$0xff] %v317
    %894 = vst [vmem:[%s3 + $0x318] sm:$0xff] %v319
    %895 = vst [vmem:[%s3 + $0x320] sm:$0xff] %v478
    %896 = vst [vmem:[%s3 + $0x328] sm:$0xff] %v480
    %897 = vst [vmem:[%s3 + $0x330] sm:$0xff] %v639
    %898 = vst [vmem:[%s3 + $0x338] sm:$0xff] %v641
    %899 = vst.msk [vmem:[%s3 + $0x340] sm:$0xff] %vm800, %v786
    %900 = vst [vmem:[%s3 + $0x348] sm:$0xff] %v323
    %901 = vst [vmem:[%s3 + $0x350] sm:$0xff] %v325
    %902 = vst [vmem:[%s3 + $0x358] sm:$0xff] %v484
    %903 = vst [vmem:[%s3 + $0x360] sm:$0xff] %v486
    %904 = vst [vmem:[%s3 + $0x368] sm:$0xff] %v645
    %905 = vst [vmem:[%s3 + $0x370] sm:$0xff] %v647
    %906 = vst.msk [vmem:[%s3 + $0x378] sm:$0xff] %vm800, %v791
    // Predicated region
    $region18: #{discriminator_forward.3} parent=1 // pred_check
      _
    $region19: #{discriminator_forward.3} parent=1 // pred_check_branch
      %908 = sbr.rel (0) target = $region21
    $region20: #{discriminator_forward.3} parent=1 // pred_region
      _
    $region21: #{discriminator_forward.3} parent=1 // pred_fallthru
      _
    // Predicated region
    $region22: #{discriminator_forward.3} parent=1 // pred_check
      _
    $region23: #{discriminator_forward.3} parent=1 // pred_check_branch
      %910 = sbr.rel (0) target = $region25
    $region24: #{discriminator_forward.3} parent=1 // pred_region
      _
    $region25: #{discriminator_forward.3} parent=1 // pred_fallthru
      _
    %911 = vsyncpa [#allocation3], 1

// kernel: discriminator_forward.4
$region0: #{discriminator_forward.4}
  #allocation0 [shape = 'u32[]', space=smem, size = 0x4, offset = 0x4, fixed_abs, tag = 'smem constant byte address 0x4 - core index']
  #allocation1 [shape = 'u32[144,128]{1,0:T(1,128)}', space=vmem, size = 0x12000, scoped, tag = 'internal scratch']
  %s0 = inlined_call_operand.vmem [shape: f32[25088,18], index: 0, kind: input, shape index: {}]
  %s1 = inlined_call_operand.vmem [shape: f32[18,32], index: 1, kind: input, shape index: {}]
  %s2 = inlined_call_operand.vmem [shape: f32[1,32], index: 2, kind: input, shape index: {}]
  %s3 = inlined_call_operand.vmem [shape: f32[1,32], index: 3, kind: input, shape index: {}]
  %s4 = inlined_call_operand.vmem [shape: f32[25088,32], index: 4, kind: output, shape index: {}]
  %s5 = sld [smem:[#allocation0]]
  $region49: #{discriminator_forward.4} parent=0
    _
  %s7 = ssub.s32 1, %s5
  %s8 = scalar_select 0, %s7, %s5
  loop: start=0, step=1, limit=10
  $region2: #{discriminator_forward.4} parent=0 // loop_pre_header
    _
  $region3: #{discriminator_forward.4} parent=0 // loop_header
    %s10 = sphi 0, %s14
    %p11 = scmp.ge.s32.totalorder %s10, 10
    %s20 = sphi 0, %s22
    %s23 = sphi 0, %s20
    %s24 = sphi 0, %s23
    %s40 = sphi 0, %s24
    %s44 = sphi 0, %s44
    %s46 = sphi 0, %s44
    %s47 = sphi 0, %s46
    %s61 = sphi 0, %s47
    %s65 = sphi 0, %s65
    %s67 = sphi 0, %s65
    %s68 = sphi 0, %s67
    %s82 = sphi 0, %s68
    %s86 = sphi 0, %s86
    %s88 = sphi 0, %s86
    %s89 = sphi 0, %s88
    %s103 = sphi 0, %s89
    %s109 = sphi 0, %s111
    %s112 = sphi 0, %s109
    %s113 = sphi 0, %s112
    %s129 = sphi 0, %s113
  $region4: #{discriminator_forward.4} parent=0 // loop_header_branch
    %13 = sbr.rel (%p11) target = $region8
  $region5: #{discriminator_forward.4} parent=0 // loop_body
    %s15 = ssub.s32 %s10, 1
    %s16 = ssub.s32 %s10, 2
    %s17 = sadd.s32 %s10, 1
    %s18 = ssub.s32 %s10, %s17
    %p19 = scmp.eq.s32.totalorder %s18, 0
    %s21 = sadd.s32 %s20, 1
    %s22 = scalar_select %p19, %s20, %s21
    %p25 = pneg %p19
    %p26 = scmp.eq.s32.totalorder %s10, 7
    %p27 = por %p25, %p26
    %p28 = scmp.ne.s32.totalorder %s20, %s23
    %p29 = scmp.eq.s32.totalorder %s10, 0
    %p30 = por %p28, %p29
    %p31 = scmp.ne.s32.totalorder %s20, %s23
    %p32 = scmp.eq.s32.totalorder %s15, 7
    %p33 = por %p31, %p32
    %p34 = scmp.ne.s32.totalorder %s23, %s24
    %p35 = scmp.eq.s32.totalorder %s15, 0
    %p36 = por %p34, %p35
    %p37 = scmp.ne.s32.totalorder %s23, %s24
    %p38 = scmp.eq.s32.totalorder %s16, 7
    %p39 = por %p37, %p38
    %p41 = scmp.ne.s32.totalorder %s24, %s40
    %p42 = scmp.eq.s32.totalorder %s16, 0
    %p43 = por %p41, %p42
    %s45 = sadd.s32 %s44, 1
    %p48 = scmp.eq.s32.totalorder %s10, 7
    %p49 = scmp.ne.s32.totalorder %s44, %s46
    %p50 = scmp.eq.s32.totalorder %s10, 0
    %p51 = por %p49, %p50
    %p52 = scmp.ne.s32.totalorder %s44, %s46
    %p53 = scmp.eq.s32.totalorder %s15, 7
    %p54 = por %p52, %p53
    %p55 = scmp.ne.s32.totalorder %s46, %s47
    %p56 = scmp.eq.s32.totalorder %s15, 0
    %p57 = por %p55, %p56
    %p58 = scmp.ne.s32.totalorder %s46, %s47
    %p59 = scmp.eq.s32.totalorder %s16, 7
    %p60 = por %p58, %p59
    %p62 = scmp.ne.s32.totalorder %s47, %s61
    %p63 = scmp.eq.s32.totalorder %s16, 0
    %p64 = por %p62, %p63
    %s66 = sadd.s32 %s65, 1
    %p69 = scmp.eq.s32.totalorder %s10, 7
    %p70 = scmp.ne.s32.totalorder %s65, %s67
    %p71 = scmp.eq.s32.totalorder %s10, 0
    %p72 = por %p70, %p71
    %p73 = scmp.ne.s32.totalorder %s65, %s67
    %p74 = scmp.eq.s32.totalorder %s15, 7
    %p75 = por %p73, %p74
    %p76 = scmp.ne.s32.totalorder %s67, %s68
    %p77 = scmp.eq.s32.totalorder %s15, 0
    %p78 = por %p76, %p77
    %p79 = scmp.ne.s32.totalorder %s67, %s68
    %p80 = scmp.eq.s32.totalorder %s16, 7
    %p81 = por %p79, %p80
    %p83 = scmp.ne.s32.totalorder %s68, %s82
    %p84 = scmp.eq.s32.totalorder %s16, 0
    %p85 = por %p83, %p84
    %s87 = sadd.s32 %s86, 1
    %p90 = scmp.eq.s32.totalorder %s10, 7
    %p91 = scmp.ne.s32.totalorder %s86, %s88
    %p92 = scmp.eq.s32.totalorder %s10, 0
    %p93 = por %p91, %p92
    %p94 = scmp.ne.s32.totalorder %s86, %s88
    %p95 = scmp.eq.s32.totalorder %s15, 7
    %p96 = por %p94, %p95
    %p97 = scmp.ne.s32.totalorder %s88, %s89
    %p98 = scmp.eq.s32.totalorder %s15, 0
    %p99 = por %p97, %p98
    %p100 = scmp.ne.s32.totalorder %s88, %s89
    %p101 = scmp.eq.s32.totalorder %s16, 7
    %p102 = por %p100, %p101
    %p104 = scmp.ne.s32.totalorder %s89, %s103
    %p105 = scmp.eq.s32.totalorder %s16, 0
    %p106 = por %p104, %p105
    %s107 = ssub.s32 %s10, %s17
    %p108 = scmp.eq.s32.totalorder %s107, 0
    %s110 = sadd.s32 %s109, 1
    %s111 = scalar_select %p108, %s109, %s110
    %p114 = pneg %p108
    %p115 = scmp.eq.s32.totalorder %s10, 7
    %p116 = por %p114, %p115
    %p117 = scmp.ne.s32.totalorder %s109, %s112
    %p118 = scmp.eq.s32.totalorder %s10, 0
    %p119 = por %p117, %p118
    %p120 = scmp.ne.s32.totalorder %s109, %s112
    %p121 = scmp.eq.s32.totalorder %s15, 7
    %p122 = por %p120, %p121
    %p123 = scmp.ne.s32.totalorder %s112, %s113
    %p124 = scmp.eq.s32.totalorder %s15, 0
    %p125 = por %p123, %p124
    %p126 = scmp.ne.s32.totalorder %s112, %s113
    %p127 = scmp.eq.s32.totalorder %s16, 7
    %p128 = por %p126, %p127
    %p130 = scmp.ne.s32.totalorder %s113, %s129
    %p131 = scmp.eq.s32.totalorder %s16, 0
    %p132 = por %p130, %p131
    %p133 = scmp.le.s32.totalorder 1, %s10
    %p134 = scmp.lt.s32.totalorder %s10, 9
    %p135 = pnand %p133, %p134
    %p136 = pneg %p135
    // Predicated region
    $region9: #{discriminator_forward.4} parent=5 // pred_check
      _
    $region10: #{discriminator_forward.4} parent=5 // pred_check_branch
      %138 = sbr.rel (%p135) target = $region12
    $region11: #{discriminator_forward.4} parent=5 // pred_region
      %s139 = ssub.s32 %s10, 1
      // Predicated region
      $region13: #{discriminator_forward.4} parent=11 // pred_check
        %p140 = pneg %p57
      $region14: #{discriminator_forward.4} parent=11 // pred_check_branch
        %142 = sbr.rel (%p140) target = $region16
      $region15: #{discriminator_forward.4} parent=11 // pred_region
        _
      $region16: #{discriminator_forward.4} parent=11 // pred_fallthru
        _
      // Predicated region
      $region17: #{discriminator_forward.4} parent=11 // pred_check
        %p143 = pneg %p78
      $region18: #{discriminator_forward.4} parent=11 // pred_check_branch
        %145 = sbr.rel (%p143) target = $region20
      $region19: #{discriminator_forward.4} parent=11 // pred_region
        _
      $region20: #{discriminator_forward.4} parent=11 // pred_fallthru
        _
      // Predicated region
      $region21: #{discriminator_forward.4} parent=11 // pred_check
        %p146 = pneg %p99
      $region22: #{discriminator_forward.4} parent=11 // pred_check_branch
        %148 = sbr.rel (%p146) target = $region24
      $region23: #{discriminator_forward.4} parent=11 // pred_region
        _
      $region24: #{discriminator_forward.4} parent=11 // pred_fallthru
        _
    $region12: #{discriminator_forward.4} parent=5 // pred_fallthru
      _
    %p149 = scmp.lt.s32.totalorder %s10, 8
    // Predicated region
    $region25: #{discriminator_forward.4} parent=5 // pred_check
      %p150 = pneg %p149
    $region26: #{discriminator_forward.4} parent=5 // pred_check_branch
      %152 = sbr.rel (%p150) target = $region28
    $region27: #{discriminator_forward.4} parent=5 // pred_region
      // Predicated region
      $region29: #{discriminator_forward.4} parent=27 // pred_check
        %p153 = pneg %p30
      $region30: #{discriminator_forward.4} parent=27 // pred_check_branch
        %155 = sbr.rel (%p153) target = $region32
      $region31: #{discriminator_forward.4} parent=27 // pred_region
        %s156 = smul.u32 392, %s10
        %p157 = scmp.lt.s32.totalorder %s156, 3135
        %s158 = scalar_select %p157, %s156, 3135
        %s159 = smul.addr %s158, 8
        %s160 = scalar_lea.vmem %s0, %s159
        %s161 = smul.u32 392, %s10
      $region32: #{discriminator_forward.4} parent=27 // pred_fallthru
        _
    $region28: #{discriminator_forward.4} parent=5 // pred_fallthru
      _
    %p162 = scmp.le.s32.totalorder 1, %s10
    %p163 = scmp.lt.s32.totalorder %s10, 9
    %p164 = pnand %p162, %p163
    %p165 = pneg %p164
    // Predicated region
    $region33: #{discriminator_forward.4} parent=5 // pred_check
      _
    $region34: #{discriminator_forward.4} parent=5 // pred_check_branch
      %167 = sbr.rel (%p164) target = $region36
    $region35: #{discriminator_forward.4} parent=5 // pred_region
      %s168 = ssub.s32 %s10, 1
      %s169 = smul.u32 392, %s15
      %p170 = scmp.lt.s32.totalorder %s169, 3135
      %s171 = scalar_select %p170, %s169, 3135
      %s172 = smul.addr %s171, 8
      %s173 = scalar_lea.vmem %s0, %s172
      %p174 = pneg %p36
      %p175 = pneg %p33
      %p176 = pneg %p57
      %p177 = pneg %p54
      %p178 = pneg %p78
      %p179 = pneg %p75
      %p180 = pneg %p99
      %p181 = pneg %p96
      %p182 = pneg %p125
      %p183 = pneg %p122
      %s184 = smul.u32 392, %s15
      %p185 = scmp.lt.s32.totalorder %s184, 3135
      %s186 = scalar_select %p185, %s184, 3135
      %s187 = smul.addr %s186, 8
      %s188 = scalar_lea.vmem %s4, %s187
      %s189 = smul.u32 392, %s15
      %p190 = scmp.lt.s32.totalorder %s189, 3135
      %s191 = scalar_select %p190, %s189, 3135
      %s192 = smul.addr %s191, 8
      %s193 = scalar_lea.vmem %s0, %s192
      %s194 = smul.u32 392, %s15
      %s195 = smul.u32 392, %s15
      %p196 = scmp.lt.s32.totalorder %s195, 3135
      %s197 = scalar_select %p196, %s195, 3135
      %s198 = smul.addr %s197, 8
      %s199 = scalar_lea.vmem %s4, %s198
      %s200 = smul.u32 392, %s15
      %v201 = vld [vmem:[%s193] sm:$0xff]
      %v202 = vld [vmem:[%s193 + $0x8] sm:$0xff]
      %v203 = vld [vmem:[%s193 + $0x10] sm:$0xff]
      %v204 = vld [vmem:[%s193 + $0x18] sm:$0xff]
      %v205 = vld [vmem:[%s193 + $0x20] sm:$0xff]
      %v206 = vld [vmem:[%s193 + $0x28] sm:$0xff]
      %v207 = vld [vmem:[%s193 + $0x30] sm:$0xff]
      %v208 = vld [vmem:[%s193 + $0x38] sm:$0xff]
      %v209 = vld [vmem:[%s193 + $0x40] sm:$0xff]
      %v210 = vld [vmem:[%s193 + $0x48] sm:$0xff]
      %v211 = vld [vmem:[%s193 + $0x50] sm:$0xff]
      %v212 = vld [vmem:[%s193 + $0x58] sm:$0xff]
      %v213 = vld [vmem:[%s193 + $0x60] sm:$0xff]
      %v214 = vld [vmem:[%s193 + $0x68] sm:$0xff]
      %v215 = vld [vmem:[%s193 + $0x70] sm:$0xff]
      %v216 = vld [vmem:[%s193 + $0x78] sm:$0xff]
      %v217 = vld [vmem:[%s193 + $0x80] sm:$0xff]
      %v218 = vld [vmem:[%s193 + $0x88] sm:$0xff]
      %v219 = vld [vmem:[%s193 + $0x90] sm:$0xff]
      %v220 = vld [vmem:[%s193 + $0x98] sm:$0xff]
      %v221 = vld [vmem:[%s193 + $0xa0] sm:$0xff]
      %v222 = vld [vmem:[%s193 + $0xa8] sm:$0xff]
      %v223 = vld [vmem:[%s193 + $0xb0] sm:$0xff]
      %v224 = vld [vmem:[%s193 + $0xb8] sm:$0xff]
      %v225 = vld [vmem:[%s193 + $0xc0] sm:$0xff]
      %v226 = vld [vmem:[%s193 + $0xc8] sm:$0xff]
      %v227 = vld [vmem:[%s193 + $0xd0] sm:$0xff]
      %v228 = vld [vmem:[%s193 + $0xd8] sm:$0xff]
      %v229 = vld [vmem:[%s193 + $0xe0] sm:$0xff]
      %v230 = vld [vmem:[%s193 + $0xe8] sm:$0xff]
      %v231 = vld [vmem:[%s193 + $0xf0] sm:$0xff]
      %v232 = vld [vmem:[%s193 + $0xf8] sm:$0xff]
      %v233 = vld [vmem:[%s193 + $0x100] sm:$0xff]
      %v234 = vld [vmem:[%s193 + $0x108] sm:$0xff]
      %v235 = vld [vmem:[%s193 + $0x110] sm:$0xff]
      %v236 = vld [vmem:[%s193 + $0x118] sm:$0xff]
      %v237 = vld [vmem:[%s193 + $0x120] sm:$0xff]
      %v238 = vld [vmem:[%s193 + $0x128] sm:$0xff]
      %v239 = vld [vmem:[%s193 + $0x130] sm:$0xff]
      %v240 = vld [vmem:[%s193 + $0x138] sm:$0xff]
      %v241 = vld [vmem:[%s193 + $0x140] sm:$0xff]
      %v242 = vld [vmem:[%s193 + $0x148] sm:$0xff]
      %v243 = vld [vmem:[%s193 + $0x150] sm:$0xff]
      %v244 = vld [vmem:[%s193 + $0x158] sm:$0xff]
      %v245 = vld [vmem:[%s193 + $0x160] sm:$0xff]
      %v246 = vld [vmem:[%s193 + $0x168] sm:$0xff]
      %v247 = vld [vmem:[%s193 + $0x170] sm:$0xff]
      %v248 = vld [vmem:[%s193 + $0x178] sm:$0xff]
      %v249 = vld [vmem:[%s193 + $0x180] sm:$0xff]
      %v250 = vld [vmem:[%s193 + $0x188] sm:$0xff]
      %v251 = vld [vmem:[%s193 + $0x190] sm:$0xff]
      %v252 = vld [vmem:[%s193 + $0x198] sm:$0xff]
      %v253 = vld [vmem:[%s193 + $0x1a0] sm:$0xff]
      %v254 = vld [vmem:[%s193 + $0x1a8] sm:$0xff]
      %v255 = vld [vmem:[%s193 + $0x1b0] sm:$0xff]
      %v256 = vld [vmem:[%s193 + $0x1b8] sm:$0xff]
      %v257 = vld [vmem:[%s193 + $0x1c0] sm:$0xff]
      %v258 = vld [vmem:[%s193 + $0x1c8] sm:$0xff]
      %v259 = vld [vmem:[%s193 + $0x1d0] sm:$0xff]
      %v260 = vld [vmem:[%s193 + $0x1d8] sm:$0xff]
      %v261 = vld [vmem:[%s193 + $0x1e0] sm:$0xff]
      %v262 = vld [vmem:[%s193 + $0x1e8] sm:$0xff]
      %v263 = vld [vmem:[%s193 + $0x1f0] sm:$0xff]
      %v264 = vld [vmem:[%s193 + $0x1f8] sm:$0xff]
      %v265 = vld [vmem:[%s193 + $0x200] sm:$0xff]
      %v266 = vld [vmem:[%s193 + $0x208] sm:$0xff]
      %v267 = vld [vmem:[%s193 + $0x210] sm:$0xff]
      %v268 = vld [vmem:[%s193 + $0x218] sm:$0xff]
      %v269 = vld [vmem:[%s193 + $0x220] sm:$0xff]
      %v270 = vld [vmem:[%s193 + $0x228] sm:$0xff]
      %v271 = vld [vmem:[%s193 + $0x230] sm:$0xff]
      %v272 = vld [vmem:[%s193 + $0x238] sm:$0xff]
      %v273 = vld [vmem:[%s193 + $0x240] sm:$0xff]
      %v274 = vld [vmem:[%s193 + $0x248] sm:$0xff]
      %v275 = vld [vmem:[%s193 + $0x250] sm:$0xff]
      %v276 = vld [vmem:[%s193 + $0x258] sm:$0xff]
      %v277 = vld [vmem:[%s193 + $0x260] sm:$0xff]
      %v278 = vld [vmem:[%s193 + $0x268] sm:$0xff]
      %v279 = vld [vmem:[%s193 + $0x270] sm:$0xff]
      %v280 = vld [vmem:[%s193 + $0x278] sm:$0xff]
      %v281 = vld [vmem:[%s193 + $0x280] sm:$0xff]
      %v282 = vld [vmem:[%s193 + $0x288] sm:$0xff]
      %v283 = vld [vmem:[%s193 + $0x290] sm:$0xff]
      %v284 = vld [vmem:[%s193 + $0x298] sm:$0xff]
      %v285 = vld [vmem:[%s193 + $0x2a0] sm:$0xff]
      %v286 = vld [vmem:[%s193 + $0x2a8] sm:$0xff]
      %v287 = vld [vmem:[%s193 + $0x2b0] sm:$0xff]
      %v288 = vld [vmem:[%s193 + $0x2b8] sm:$0xff]
      %v289 = vld [vmem:[%s193 + $0x2c0] sm:$0xff]
      %v290 = vld [vmem:[%s193 + $0x2c8] sm:$0xff]
      %v291 = vld [vmem:[%s193 + $0x2d0] sm:$0xff]
      %v292 = vld [vmem:[%s193 + $0x2d8] sm:$0xff]
      %v293 = vld [vmem:[%s193 + $0x2e0] sm:$0xff]
      %v294 = vld [vmem:[%s193 + $0x2e8] sm:$0xff]
      %v295 = vld [vmem:[%s193 + $0x2f0] sm:$0xff]
      %v296 = vld [vmem:[%s193 + $0x2f8] sm:$0xff]
      %v297 = vld [vmem:[%s193 + $0x300] sm:$0xff]
      %v298 = vld [vmem:[%s193 + $0x308] sm:$0xff]
      %v299 = vld [vmem:[%s193 + $0x310] sm:$0xff]
      %v300 = vld [vmem:[%s193 + $0x318] sm:$0xff]
      %v301 = vld [vmem:[%s193 + $0x320] sm:$0xff]
      %v302 = vld [vmem:[%s193 + $0x328] sm:$0xff]
      %v303 = vld [vmem:[%s193 + $0x330] sm:$0xff]
      %v304 = vld [vmem:[%s193 + $0x338] sm:$0xff]
      %v305 = vld [vmem:[%s193 + $0x340] sm:$0xff]
      %v306 = vld [vmem:[%s193 + $0x348] sm:$0xff]
      %v307 = vld [vmem:[%s193 + $0x350] sm:$0xff]
      %v308 = vld [vmem:[%s193 + $0x358] sm:$0xff]
      %v309 = vld [vmem:[%s193 + $0x360] sm:$0xff]
      %v310 = vld [vmem:[%s193 + $0x368] sm:$0xff]
      %v311 = vld [vmem:[%s193 + $0x370] sm:$0xff]
      %v312 = vld [vmem:[%s193 + $0x378] sm:$0xff]
      %v313 = vld [vmem:[%s193 + $0x380] sm:$0xff]
      %v314 = vld [vmem:[%s193 + $0x388] sm:$0xff]
      %v315 = vld [vmem:[%s193 + $0x390] sm:$0xff]
      %v316 = vld [vmem:[%s193 + $0x398] sm:$0xff]
      %v317 = vld [vmem:[%s193 + $0x3a0] sm:$0xff]
      %v318 = vld [vmem:[%s193 + $0x3a8] sm:$0xff]
      %v319 = vld [vmem:[%s193 + $0x3b0] sm:$0xff]
      %v320 = vld [vmem:[%s193 + $0x3b8] sm:$0xff]
      %v321 = vld [vmem:[%s193 + $0x3c0] sm:$0xff]
      %v322 = vld [vmem:[%s193 + $0x3c8] sm:$0xff]
      %v323 = vld [vmem:[%s193 + $0x3d0] sm:$0xff]
      %v324 = vld [vmem:[%s193 + $0x3d8] sm:$0xff]
      %v325 = vld [vmem:[%s193 + $0x3e0] sm:$0xff]
      %v326 = vld [vmem:[%s193 + $0x3e8] sm:$0xff]
      %v327 = vld [vmem:[%s193 + $0x3f0] sm:$0xff]
      %v328 = vld [vmem:[%s193 + $0x3f8] sm:$0xff]
      %v329 = vld [vmem:[%s193 + $0x400] sm:$0xff]
      %v330 = vld [vmem:[%s193 + $0x408] sm:$0xff]
      %v331 = vld [vmem:[%s193 + $0x410] sm:$0xff]
      %v332 = vld [vmem:[%s193 + $0x418] sm:$0xff]
      %v333 = vld [vmem:[%s193 + $0x420] sm:$0xff]
      %v334 = vld [vmem:[%s193 + $0x428] sm:$0xff]
      %v335 = vld [vmem:[%s193 + $0x430] sm:$0xff]
      %v336 = vld [vmem:[%s193 + $0x438] sm:$0xff]
      %v337 = vld [vmem:[%s193 + $0x440] sm:$0xff]
      %v338 = vld [vmem:[%s193 + $0x448] sm:$0xff]
      %v339 = vld [vmem:[%s193 + $0x450] sm:$0xff]
      %v340 = vld [vmem:[%s193 + $0x458] sm:$0xff]
      %v341 = vld [vmem:[%s193 + $0x460] sm:$0xff]
      %v342 = vld [vmem:[%s193 + $0x468] sm:$0xff]
      %v343 = vld [vmem:[%s193 + $0x470] sm:$0xff]
      %v344 = vld [vmem:[%s193 + $0x478] sm:$0xff]
      %v345 = vld [vmem:[%s193 + $0x480] sm:$0xff]
      %v346 = vld [vmem:[%s193 + $0x488] sm:$0xff]
      %v347 = vld [vmem:[%s193 + $0x490] sm:$0xff]
      %v348 = vld [vmem:[%s193 + $0x498] sm:$0xff]
      %v349 = vld [vmem:[%s193 + $0x4a0] sm:$0xff]
      %v350 = vld [vmem:[%s193 + $0x4a8] sm:$0xff]
      %v351 = vld [vmem:[%s193 + $0x4b0] sm:$0xff]
      %v352 = vld [vmem:[%s193 + $0x4b8] sm:$0xff]
      %v353 = vld [vmem:[%s193 + $0x4c0] sm:$0xff]
      %v354 = vld [vmem:[%s193 + $0x4c8] sm:$0xff]
      %v355 = vld [vmem:[%s193 + $0x4d0] sm:$0xff]
      %v356 = vld [vmem:[%s193 + $0x4d8] sm:$0xff]
      %v357 = vld [vmem:[%s193 + $0x4e0] sm:$0xff]
      %v358 = vld [vmem:[%s193 + $0x4e8] sm:$0xff]
      %v359 = vld [vmem:[%s193 + $0x4f0] sm:$0xff]
      %v360 = vld [vmem:[%s193 + $0x4f8] sm:$0xff]
      %v361 = vld [vmem:[%s193 + $0x500] sm:$0xff]
      %v362 = vld [vmem:[%s193 + $0x508] sm:$0xff]
      %v363 = vld [vmem:[%s193 + $0x510] sm:$0xff]
      %v364 = vld [vmem:[%s193 + $0x518] sm:$0xff]
      %v365 = vld [vmem:[%s193 + $0x520] sm:$0xff]
      %v366 = vld [vmem:[%s193 + $0x528] sm:$0xff]
      %v367 = vld [vmem:[%s193 + $0x530] sm:$0xff]
      %v368 = vld [vmem:[%s193 + $0x538] sm:$0xff]
      %v369 = vld [vmem:[%s193 + $0x540] sm:$0xff]
      %v370 = vld [vmem:[%s193 + $0x548] sm:$0xff]
      %v371 = vld [vmem:[%s193 + $0x550] sm:$0xff]
      %v372 = vld [vmem:[%s193 + $0x558] sm:$0xff]
      %v373 = vld [vmem:[%s193 + $0x560] sm:$0xff]
      %v374 = vld [vmem:[%s193 + $0x568] sm:$0xff]
      %v375 = vld [vmem:[%s193 + $0x570] sm:$0xff]
      %v376 = vld [vmem:[%s193 + $0x578] sm:$0xff]
      %v377 = vld [vmem:[%s193 + $0x580] sm:$0xff]
      %v378 = vld [vmem:[%s193 + $0x588] sm:$0xff]
      %v379 = vld [vmem:[%s193 + $0x590] sm:$0xff]
      %v380 = vld [vmem:[%s193 + $0x598] sm:$0xff]
      %v381 = vld [vmem:[%s193 + $0x5a0] sm:$0xff]
      %v382 = vld [vmem:[%s193 + $0x5a8] sm:$0xff]
      %v383 = vld [vmem:[%s193 + $0x5b0] sm:$0xff]
      %v384 = vld [vmem:[%s193 + $0x5b8] sm:$0xff]
      %v385 = vld [vmem:[%s193 + $0x5c0] sm:$0xff]
      %v386 = vld [vmem:[%s193 + $0x5c8] sm:$0xff]
      %v387 = vld [vmem:[%s193 + $0x5d0] sm:$0xff]
      %v388 = vld [vmem:[%s193 + $0x5d8] sm:$0xff]
      %v389 = vld [vmem:[%s193 + $0x5e0] sm:$0xff]
      %v390 = vld [vmem:[%s193 + $0x5e8] sm:$0xff]
      %v391 = vld [vmem:[%s193 + $0x5f0] sm:$0xff]
      %v392 = vld [vmem:[%s193 + $0x5f8] sm:$0xff]
      %v393 = vld [vmem:[%s193 + $0x600] sm:$0xff]
      %v394 = vld [vmem:[%s193 + $0x608] sm:$0xff]
      %v395 = vld [vmem:[%s193 + $0x610] sm:$0xff]
      %v396 = vld [vmem:[%s193 + $0x618] sm:$0xff]
      %v397 = vld [vmem:[%s193 + $0x620] sm:$0xff]
      %v398 = vld [vmem:[%s193 + $0x628] sm:$0xff]
      %v399 = vld [vmem:[%s193 + $0x630] sm:$0xff]
      %v400 = vld [vmem:[%s193 + $0x638] sm:$0xff]
      %v401 = vld [vmem:[%s193 + $0x640] sm:$0xff]
      %v402 = vld [vmem:[%s193 + $0x648] sm:$0xff]
      %v403 = vld [vmem:[%s193 + $0x650] sm:$0xff]
      %v404 = vld [vmem:[%s193 + $0x658] sm:$0xff]
      %v405 = vld [vmem:[%s193 + $0x660] sm:$0xff]
      %v406 = vld [vmem:[%s193 + $0x668] sm:$0xff]
      %v407 = vld [vmem:[%s193 + $0x670] sm:$0xff]
      %v408 = vld [vmem:[%s193 + $0x678] sm:$0xff]
      %v409 = vld [vmem:[%s193 + $0x680] sm:$0xff]
      %v410 = vld [vmem:[%s193 + $0x688] sm:$0xff]
      %v411 = vld [vmem:[%s193 + $0x690] sm:$0xff]
      %v412 = vld [vmem:[%s193 + $0x698] sm:$0xff]
      %v413 = vld [vmem:[%s193 + $0x6a0] sm:$0xff]
      %v414 = vld [vmem:[%s193 + $0x6a8] sm:$0xff]
      %v415 = vld [vmem:[%s193 + $0x6b0] sm:$0xff]
      %v416 = vld [vmem:[%s193 + $0x6b8] sm:$0xff]
      %v417 = vld [vmem:[%s193 + $0x6c0] sm:$0xff]
      %v418 = vld [vmem:[%s193 + $0x6c8] sm:$0xff]
      %v419 = vld [vmem:[%s193 + $0x6d0] sm:$0xff]
      %v420 = vld [vmem:[%s193 + $0x6d8] sm:$0xff]
      %v421 = vld [vmem:[%s193 + $0x6e0] sm:$0xff]
      %v422 = vld [vmem:[%s193 + $0x6e8] sm:$0xff]
      %v423 = vld [vmem:[%s193 + $0x6f0] sm:$0xff]
      %v424 = vld [vmem:[%s193 + $0x6f8] sm:$0xff]
      %v425 = vld [vmem:[%s193 + $0x700] sm:$0xff]
      %v426 = vld [vmem:[%s193 + $0x708] sm:$0xff]
      %v427 = vld [vmem:[%s193 + $0x710] sm:$0xff]
      %v428 = vld [vmem:[%s193 + $0x718] sm:$0xff]
      %v429 = vld [vmem:[%s193 + $0x720] sm:$0xff]
      %v430 = vld [vmem:[%s193 + $0x728] sm:$0xff]
      %v431 = vld [vmem:[%s193 + $0x730] sm:$0xff]
      %v432 = vld [vmem:[%s193 + $0x738] sm:$0xff]
      %v433 = vld [vmem:[%s193 + $0x740] sm:$0xff]
      %v434 = vld [vmem:[%s193 + $0x748] sm:$0xff]
      %v435 = vld [vmem:[%s193 + $0x750] sm:$0xff]
      %v436 = vld [vmem:[%s193 + $0x758] sm:$0xff]
      %v437 = vld [vmem:[%s193 + $0x760] sm:$0xff]
      %v438 = vld [vmem:[%s193 + $0x768] sm:$0xff]
      %v439 = vld [vmem:[%s193 + $0x770] sm:$0xff]
      %v440 = vld [vmem:[%s193 + $0x778] sm:$0xff]
      %v441 = vld [vmem:[%s193 + $0x780] sm:$0xff]
      %v442 = vld [vmem:[%s193 + $0x788] sm:$0xff]
      %v443 = vld [vmem:[%s193 + $0x790] sm:$0xff]
      %v444 = vld [vmem:[%s193 + $0x798] sm:$0xff]
      %v445 = vld [vmem:[%s193 + $0x7a0] sm:$0xff]
      %v446 = vld [vmem:[%s193 + $0x7a8] sm:$0xff]
      %v447 = vld [vmem:[%s193 + $0x7b0] sm:$0xff]
      %v448 = vld [vmem:[%s193 + $0x7b8] sm:$0xff]
      %v449 = vld [vmem:[%s193 + $0x7c0] sm:$0xff]
      %v450 = vld [vmem:[%s193 + $0x7c8] sm:$0xff]
      %v451 = vld [vmem:[%s193 + $0x7d0] sm:$0xff]
      %v452 = vld [vmem:[%s193 + $0x7d8] sm:$0xff]
      %v453 = vld [vmem:[%s193 + $0x7e0] sm:$0xff]
      %v454 = vld [vmem:[%s193 + $0x7e8] sm:$0xff]
      %v455 = vld [vmem:[%s193 + $0x7f0] sm:$0xff]
      %v456 = vld [vmem:[%s193 + $0x7f8] sm:$0xff]
      %v457 = vld [vmem:[%s193 + $0x800] sm:$0xff]
      %v458 = vld [vmem:[%s193 + $0x808] sm:$0xff]
      %v459 = vld [vmem:[%s193 + $0x810] sm:$0xff]
      %v460 = vld [vmem:[%s193 + $0x818] sm:$0xff]
      %v461 = vld [vmem:[%s193 + $0x820] sm:$0xff]
      %v462 = vld [vmem:[%s193 + $0x828] sm:$0xff]
      %v463 = vld [vmem:[%s193 + $0x830] sm:$0xff]
      %v464 = vld [vmem:[%s193 + $0x838] sm:$0xff]
      %v465 = vld [vmem:[%s193 + $0x840] sm:$0xff]
      %v466 = vld [vmem:[%s193 + $0x848] sm:$0xff]
      %v467 = vld [vmem:[%s193 + $0x850] sm:$0xff]
      %v468 = vld [vmem:[%s193 + $0x858] sm:$0xff]
      %v469 = vld [vmem:[%s193 + $0x860] sm:$0xff]
      %v470 = vld [vmem:[%s193 + $0x868] sm:$0xff]
      %v471 = vld [vmem:[%s193 + $0x870] sm:$0xff]
      %v472 = vld [vmem:[%s193 + $0x878] sm:$0xff]
      %v473 = vld [vmem:[%s193 + $0x880] sm:$0xff]
      %v474 = vld [vmem:[%s193 + $0x888] sm:$0xff]
      %v475 = vld [vmem:[%s193 + $0x890] sm:$0xff]
      %v476 = vld [vmem:[%s193 + $0x898] sm:$0xff]
      %v477 = vld [vmem:[%s193 + $0x8a0] sm:$0xff]
      %v478 = vld [vmem:[%s193 + $0x8a8] sm:$0xff]
      %v479 = vld [vmem:[%s193 + $0x8b0] sm:$0xff]
      %v480 = vld [vmem:[%s193 + $0x8b8] sm:$0xff]
      %v481 = vld [vmem:[%s193 + $0x8c0] sm:$0xff]
      %v482 = vld [vmem:[%s193 + $0x8c8] sm:$0xff]
      %v483 = vld [vmem:[%s193 + $0x8d0] sm:$0xff]
      %v484 = vld [vmem:[%s193 + $0x8d8] sm:$0xff]
      %v485 = vld [vmem:[%s193 + $0x8e0] sm:$0xff]
      %v486 = vld [vmem:[%s193 + $0x8e8] sm:$0xff]
      %v487 = vld [vmem:[%s193 + $0x8f0] sm:$0xff]
      %v488 = vld [vmem:[%s193 + $0x8f8] sm:$0xff]
      %v489 = vld [vmem:[%s193 + $0x900] sm:$0xff]
      %v490 = vld [vmem:[%s193 + $0x908] sm:$0xff]
      %v491 = vld [vmem:[%s193 + $0x910] sm:$0xff]
      %v492 = vld [vmem:[%s193 + $0x918] sm:$0xff]
      %v493 = vld [vmem:[%s193 + $0x920] sm:$0xff]
      %v494 = vld [vmem:[%s193 + $0x928] sm:$0xff]
      %v495 = vld [vmem:[%s193 + $0x930] sm:$0xff]
      %v496 = vld [vmem:[%s193 + $0x938] sm:$0xff]
      %v497 = vld [vmem:[%s193 + $0x940] sm:$0xff]
      %v498 = vld [vmem:[%s193 + $0x948] sm:$0xff]
      %v499 = vld [vmem:[%s193 + $0x950] sm:$0xff]
      %v500 = vld [vmem:[%s193 + $0x958] sm:$0xff]
      %v501 = vld [vmem:[%s193 + $0x960] sm:$0xff]
      %v502 = vld [vmem:[%s193 + $0x968] sm:$0xff]
      %v503 = vld [vmem:[%s193 + $0x970] sm:$0xff]
      %v504 = vld [vmem:[%s193 + $0x978] sm:$0xff]
      %v505 = vld [vmem:[%s193 + $0x980] sm:$0xff]
      %v506 = vld [vmem:[%s193 + $0x988] sm:$0xff]
      %v507 = vld [vmem:[%s193 + $0x990] sm:$0xff]
      %v508 = vld [vmem:[%s193 + $0x998] sm:$0xff]
      %v509 = vld [vmem:[%s193 + $0x9a0] sm:$0xff]
      %v510 = vld [vmem:[%s193 + $0x9a8] sm:$0xff]
      %v511 = vld [vmem:[%s193 + $0x9b0] sm:$0xff]
      %v512 = vld [vmem:[%s193 + $0x9b8] sm:$0xff]
      %v513 = vld [vmem:[%s193 + $0x9c0] sm:$0xff]
      %v514 = vld [vmem:[%s193 + $0x9c8] sm:$0xff]
      %v515 = vld [vmem:[%s193 + $0x9d0] sm:$0xff]
      %v516 = vld [vmem:[%s193 + $0x9d8] sm:$0xff]
      %v517 = vld [vmem:[%s193 + $0x9e0] sm:$0xff]
      %v518 = vld [vmem:[%s193 + $0x9e8] sm:$0xff]
      %v519 = vld [vmem:[%s193 + $0x9f0] sm:$0xff]
      %v520 = vld [vmem:[%s193 + $0x9f8] sm:$0xff]
      %v521 = vld [vmem:[%s193 + $0xa00] sm:$0xff]
      %v522 = vld [vmem:[%s193 + $0xa08] sm:$0xff]
      %v523 = vld [vmem:[%s193 + $0xa10] sm:$0xff]
      %v524 = vld [vmem:[%s193 + $0xa18] sm:$0xff]
      %v525 = vld [vmem:[%s193 + $0xa20] sm:$0xff]
      %v526 = vld [vmem:[%s193 + $0xa28] sm:$0xff]
      %v527 = vld [vmem:[%s193 + $0xa30] sm:$0xff]
      %v528 = vld [vmem:[%s193 + $0xa38] sm:$0xff]
      %v529 = vld [vmem:[%s193 + $0xa40] sm:$0xff]
      %v530 = vld [vmem:[%s193 + $0xa48] sm:$0xff]
      %v531 = vld [vmem:[%s193 + $0xa50] sm:$0xff]
      %v532 = vld [vmem:[%s193 + $0xa58] sm:$0xff]
      %v533 = vld [vmem:[%s193 + $0xa60] sm:$0xff]
      %v534 = vld [vmem:[%s193 + $0xa68] sm:$0xff]
      %v535 = vld [vmem:[%s193 + $0xa70] sm:$0xff]
      %v536 = vld [vmem:[%s193 + $0xa78] sm:$0xff]
      %v537 = vld [vmem:[%s193 + $0xa80] sm:$0xff]
      %v538 = vld [vmem:[%s193 + $0xa88] sm:$0xff]
      %v539 = vld [vmem:[%s193 + $0xa90] sm:$0xff]
      %v540 = vld [vmem:[%s193 + $0xa98] sm:$0xff]
      %v541 = vld [vmem:[%s193 + $0xaa0] sm:$0xff]
      %v542 = vld [vmem:[%s193 + $0xaa8] sm:$0xff]
      %v543 = vld [vmem:[%s193 + $0xab0] sm:$0xff]
      %v544 = vld [vmem:[%s193 + $0xab8] sm:$0xff]
      %v545 = vld [vmem:[%s193 + $0xac0] sm:$0xff]
      %v546 = vld [vmem:[%s193 + $0xac8] sm:$0xff]
      %v547 = vld [vmem:[%s193 + $0xad0] sm:$0xff]
      %v548 = vld [vmem:[%s193 + $0xad8] sm:$0xff]
      %v549 = vld [vmem:[%s193 + $0xae0] sm:$0xff]
      %v550 = vld [vmem:[%s193 + $0xae8] sm:$0xff]
      %v551 = vld [vmem:[%s193 + $0xaf0] sm:$0xff]
      %v552 = vld [vmem:[%s193 + $0xaf8] sm:$0xff]
      %v553 = vld [vmem:[%s193 + $0xb00] sm:$0xff]
      %v554 = vld [vmem:[%s193 + $0xb08] sm:$0xff]
      %v555 = vld [vmem:[%s193 + $0xb10] sm:$0xff]
      %v556 = vld [vmem:[%s193 + $0xb18] sm:$0xff]
      %v557 = vld [vmem:[%s193 + $0xb20] sm:$0xff]
      %v558 = vld [vmem:[%s193 + $0xb28] sm:$0xff]
      %v559 = vld [vmem:[%s193 + $0xb30] sm:$0xff]
      %v560 = vld [vmem:[%s193 + $0xb38] sm:$0xff]
      %v561 = vld [vmem:[%s193 + $0xb40] sm:$0xff]
      %v562 = vld [vmem:[%s193 + $0xb48] sm:$0xff]
      %v563 = vld [vmem:[%s193 + $0xb50] sm:$0xff]
      %v564 = vld [vmem:[%s193 + $0xb58] sm:$0xff]
      %v565 = vld [vmem:[%s193 + $0xb60] sm:$0xff]
      %v566 = vld [vmem:[%s193 + $0xb68] sm:$0xff]
      %v567 = vld [vmem:[%s193 + $0xb70] sm:$0xff]
      %v568 = vld [vmem:[%s193 + $0xb78] sm:$0xff]
      %v569 = vld [vmem:[%s193 + $0xb80] sm:$0xff]
      %v570 = vld [vmem:[%s193 + $0xb88] sm:$0xff]
      %v571 = vld [vmem:[%s193 + $0xb90] sm:$0xff]
      %v572 = vld [vmem:[%s193 + $0xb98] sm:$0xff]
      %v573 = vld [vmem:[%s193 + $0xba0] sm:$0xff]
      %v574 = vld [vmem:[%s193 + $0xba8] sm:$0xff]
      %v575 = vld [vmem:[%s193 + $0xbb0] sm:$0xff]
      %v576 = vld [vmem:[%s193 + $0xbb8] sm:$0xff]
      %v577 = vld [vmem:[%s193 + $0xbc0] sm:$0xff]
      %v578 = vld [vmem:[%s193 + $0xbc8] sm:$0xff]
      %v579 = vld [vmem:[%s193 + $0xbd0] sm:$0xff]
      %v580 = vld [vmem:[%s193 + $0xbd8] sm:$0xff]
      %v581 = vld [vmem:[%s193 + $0xbe0] sm:$0xff]
      %v582 = vld [vmem:[%s193 + $0xbe8] sm:$0xff]
      %v583 = vld [vmem:[%s193 + $0xbf0] sm:$0xff]
      %v584 = vld [vmem:[%s193 + $0xbf8] sm:$0xff]
      %v585 = vld [vmem:[%s193 + $0xc00] sm:$0xff]
      %v586 = vld [vmem:[%s193 + $0xc08] sm:$0xff]
      %v587 = vld [vmem:[%s193 + $0xc10] sm:$0xff]
      %v588 = vld [vmem:[%s193 + $0xc18] sm:$0xff]
      %v589 = vld [vmem:[%s193 + $0xc20] sm:$0xff]
      %v590 = vld [vmem:[%s193 + $0xc28] sm:$0xff]
      %v591 = vld [vmem:[%s193 + $0xc30] sm:$0xff]
      %v592 = vld [vmem:[%s193 + $0xc38] sm:$0xff]
      %v593 = vld [vmem:[%s1] sm:$0xff]
      %v594 = vld [vmem:[%s1 + $0x8] sm:$0xff]
      %v595 = vld [vmem:[%s1 + $0x10] sm:$0x3]
      %vm596 = vcmask 146432
      %v598 = vsel %vm596, %v201, 0
      %v601 = vsel %vm596, %v202, 0
      %v604 = vsel %vm596, %v203, 0
      %v607 = vsel %vm596, %v204, 0
      %v610 = vsel %vm596, %v205, 0
      %v613 = vsel %vm596, %v206, 0
      %v616 = vsel %vm596, %v207, 0
      %v619 = vsel %vm596, %v208, 0
      %v622 = vsel %vm596, %v209, 0
      %v625 = vsel %vm596, %v210, 0
      %v628 = vsel %vm596, %v211, 0
      %v631 = vsel %vm596, %v212, 0
      %v634 = vsel %vm596, %v213, 0
      %v637 = vsel %vm596, %v214, 0
      %v640 = vsel %vm596, %v215, 0
      %v643 = vsel %vm596, %v216, 0
      %v646 = vsel %vm596, %v217, 0
      %v649 = vsel %vm596, %v218, 0
      %v652 = vsel %vm596, %v219, 0
      %v655 = vsel %vm596, %v220, 0
      %v658 = vsel %vm596, %v221, 0
      %v661 = vsel %vm596, %v222, 0
      %v664 = vsel %vm596, %v223, 0
      %v667 = vsel %vm596, %v224, 0
      %v670 = vsel %vm596, %v225, 0
      %v673 = vsel %vm596, %v226, 0
      %v676 = vsel %vm596, %v227, 0
      %v679 = vsel %vm596, %v228, 0
      %v682 = vsel %vm596, %v229, 0
      %v685 = vsel %vm596, %v230, 0
      %v688 = vsel %vm596, %v231, 0
      %v691 = vsel %vm596, %v232, 0
      %v694 = vsel %vm596, %v233, 0
      %v697 = vsel %vm596, %v234, 0
      %v700 = vsel %vm596, %v235, 0
      %v703 = vsel %vm596, %v236, 0
      %v706 = vsel %vm596, %v237, 0
      %v709 = vsel %vm596, %v238, 0
      %v712 = vsel %vm596, %v239, 0
      %v715 = vsel %vm596, %v240, 0
      %v718 = vsel %vm596, %v241, 0
      %v721 = vsel %vm596, %v242, 0
      %v724 = vsel %vm596, %v243, 0
      %v727 = vsel %vm596, %v244, 0
      %v730 = vsel %vm596, %v245, 0
      %v733 = vsel %vm596, %v246, 0
      %v736 = vsel %vm596, %v247, 0
      %v739 = vsel %vm596, %v248, 0
      %v742 = vsel %vm596, %v249, 0
      %v745 = vsel %vm596, %v250, 0
      %v748 = vsel %vm596, %v251, 0
      %v751 = vsel %vm596, %v252, 0
      %v754 = vsel %vm596, %v253, 0
      %v757 = vsel %vm596, %v254, 0
      %v760 = vsel %vm596, %v255, 0
      %v763 = vsel %vm596, %v256, 0
      %v766 = vsel %vm596, %v257, 0
      %v769 = vsel %vm596, %v258, 0
      %v772 = vsel %vm596, %v259, 0
      %v775 = vsel %vm596, %v260, 0
      %v778 = vsel %vm596, %v261, 0
      %v781 = vsel %vm596, %v262, 0
      %v784 = vsel %vm596, %v263, 0
      %v787 = vsel %vm596, %v264, 0
      %v790 = vsel %vm596, %v265, 0
      %v793 = vsel %vm596, %v266, 0
      %v796 = vsel %vm596, %v267, 0
      %v799 = vsel %vm596, %v268, 0
      %v802 = vsel %vm596, %v269, 0
      %v805 = vsel %vm596, %v270, 0
      %v808 = vsel %vm596, %v271, 0
      %v811 = vsel %vm596, %v272, 0
      %v814 = vsel %vm596, %v273, 0
      %v817 = vsel %vm596, %v274, 0
      %v820 = vsel %vm596, %v275, 0
      %v823 = vsel %vm596, %v276, 0
      %v826 = vsel %vm596, %v277, 0
      %v829 = vsel %vm596, %v278, 0
      %v832 = vsel %vm596, %v279, 0
      %v835 = vsel %vm596, %v280, 0
      %v838 = vsel %vm596, %v281, 0
      %v841 = vsel %vm596, %v282, 0
      %v844 = vsel %vm596, %v283, 0
      %v847 = vsel %vm596, %v284, 0
      %v850 = vsel %vm596, %v285, 0
      %v853 = vsel %vm596, %v286, 0
      %v856 = vsel %vm596, %v287, 0
      %v859 = vsel %vm596, %v288, 0
      %v862 = vsel %vm596, %v289, 0
      %v865 = vsel %vm596, %v290, 0
      %v868 = vsel %vm596, %v291, 0
      %v871 = vsel %vm596, %v292, 0
      %v874 = vsel %vm596, %v293, 0
      %v877 = vsel %vm596, %v294, 0
      %v880 = vsel %vm596, %v295, 0
      %v883 = vsel %vm596, %v296, 0
      %v886 = vsel %vm596, %v297, 0
      %v889 = vsel %vm596, %v298, 0
      %v892 = vsel %vm596, %v299, 0
      %v895 = vsel %vm596, %v300, 0
      %v898 = vsel %vm596, %v301, 0
      %v901 = vsel %vm596, %v302, 0
      %v904 = vsel %vm596, %v303, 0
      %v907 = vsel %vm596, %v304, 0
      %v910 = vsel %vm596, %v305, 0
      %v913 = vsel %vm596, %v306, 0
      %v916 = vsel %vm596, %v307, 0
      %v919 = vsel %vm596, %v308, 0
      %v922 = vsel %vm596, %v309, 0
      %v925 = vsel %vm596, %v310, 0
      %v928 = vsel %vm596, %v311, 0
      %v931 = vsel %vm596, %v312, 0
      %v934 = vsel %vm596, %v313, 0
      %v937 = vsel %vm596, %v314, 0
      %v940 = vsel %vm596, %v315, 0
      %v943 = vsel %vm596, %v316, 0
      %v946 = vsel %vm596, %v317, 0
      %v949 = vsel %vm596, %v318, 0
      %v952 = vsel %vm596, %v319, 0
      %v955 = vsel %vm596, %v320, 0
      %v958 = vsel %vm596, %v321, 0
      %v961 = vsel %vm596, %v322, 0
      %v964 = vsel %vm596, %v323, 0
      %v967 = vsel %vm596, %v324, 0
      %v970 = vsel %vm596, %v325, 0
      %v973 = vsel %vm596, %v326, 0
      %v976 = vsel %vm596, %v327, 0
      %v979 = vsel %vm596, %v328, 0
      %v982 = vsel %vm596, %v329, 0
      %v985 = vsel %vm596, %v330, 0
      %v988 = vsel %vm596, %v331, 0
      %v991 = vsel %vm596, %v332, 0
      %v994 = vsel %vm596, %v333, 0
      %v997 = vsel %vm596, %v334, 0
      %v1000 = vsel %vm596, %v335, 0
      %v1003 = vsel %vm596, %v336, 0
      %v1006 = vsel %vm596, %v337, 0
      %v1009 = vsel %vm596, %v338, 0
      %v1012 = vsel %vm596, %v339, 0
      %v1015 = vsel %vm596, %v340, 0
      %v1018 = vsel %vm596, %v341, 0
      %v1021 = vsel %vm596, %v342, 0
      %v1024 = vsel %vm596, %v343, 0
      %v1027 = vsel %vm596, %v344, 0
      %v1030 = vsel %vm596, %v345, 0
      %v1033 = vsel %vm596, %v346, 0
      %v1036 = vsel %vm596, %v347, 0
      %v1039 = vsel %vm596, %v348, 0
      %v1042 = vsel %vm596, %v349, 0
      %v1045 = vsel %vm596, %v350, 0
      %v1048 = vsel %vm596, %v351, 0
      %v1051 = vsel %vm596, %v352, 0
      %v1054 = vsel %vm596, %v353, 0
      %v1057 = vsel %vm596, %v354, 0
      %v1060 = vsel %vm596, %v355, 0
      %v1063 = vsel %vm596, %v356, 0
      %v1066 = vsel %vm596, %v357, 0
      %v1069 = vsel %vm596, %v358, 0
      %v1072 = vsel %vm596, %v359, 0
      %v1075 = vsel %vm596, %v360, 0
      %v1078 = vsel %vm596, %v361, 0
      %v1081 = vsel %vm596, %v362, 0
      %v1084 = vsel %vm596, %v363, 0
      %v1087 = vsel %vm596, %v364, 0
      %v1090 = vsel %vm596, %v365, 0
      %v1093 = vsel %vm596, %v366, 0
      %v1096 = vsel %vm596, %v367, 0
      %v1099 = vsel %vm596, %v368, 0
      %v1102 = vsel %vm596, %v369, 0
      %v1105 = vsel %vm596, %v370, 0
      %v1108 = vsel %vm596, %v371, 0
      %v1111 = vsel %vm596, %v372, 0
      %v1114 = vsel %vm596, %v373, 0
      %v1117 = vsel %vm596, %v374, 0
      %v1120 = vsel %vm596, %v375, 0
      %v1123 = vsel %vm596, %v376, 0
      %v1126 = vsel %vm596, %v377, 0
      %v1129 = vsel %vm596, %v378, 0
      %v1132 = vsel %vm596, %v379, 0
      %v1135 = vsel %vm596, %v380, 0
      %v1138 = vsel %vm596, %v381, 0
      %v1141 = vsel %vm596, %v382, 0
      %v1144 = vsel %vm596, %v383, 0
      %v1147 = vsel %vm596, %v384, 0
      %v1150 = vsel %vm596, %v385, 0
      %v1153 = vsel %vm596, %v386, 0
      %v1156 = vsel %vm596, %v387, 0
      %v1159 = vsel %vm596, %v388, 0
      %v1162 = vsel %vm596, %v389, 0
      %v1165 = vsel %vm596, %v390, 0
      %v1168 = vsel %vm596, %v391, 0
      %v1171 = vsel %vm596, %v392, 0
      %v1174 = vsel %vm596, %v393, 0
      %v1177 = vsel %vm596, %v394, 0
      %v1180 = vsel %vm596, %v395, 0
      %v1183 = vsel %vm596, %v396, 0
      %v1186 = vsel %vm596, %v397, 0
      %v1189 = vsel %vm596, %v398, 0
      %v1192 = vsel %vm596, %v399, 0
      %v1195 = vsel %vm596, %v400, 0
      %v1198 = vsel %vm596, %v401, 0
      %v1201 = vsel %vm596, %v402, 0
      %v1204 = vsel %vm596, %v403, 0
      %v1207 = vsel %vm596, %v404, 0
      %v1210 = vsel %vm596, %v405, 0
      %v1213 = vsel %vm596, %v406, 0
      %v1216 = vsel %vm596, %v407, 0
      %v1219 = vsel %vm596, %v408, 0
      %v1222 = vsel %vm596, %v409, 0
      %v1225 = vsel %vm596, %v410, 0
      %v1228 = vsel %vm596, %v411, 0
      %v1231 = vsel %vm596, %v412, 0
      %v1234 = vsel %vm596, %v413, 0
      %v1237 = vsel %vm596, %v414, 0
      %v1240 = vsel %vm596, %v415, 0
      %v1243 = vsel %vm596, %v416, 0
      %v1246 = vsel %vm596, %v417, 0
      %v1249 = vsel %vm596, %v418, 0
      %v1252 = vsel %vm596, %v419, 0
      %v1255 = vsel %vm596, %v420, 0
      %v1258 = vsel %vm596, %v421, 0
      %v1261 = vsel %vm596, %v422, 0
      %v1264 = vsel %vm596, %v423, 0
      %v1267 = vsel %vm596, %v424, 0
      %v1270 = vsel %vm596, %v425, 0
      %v1273 = vsel %vm596, %v426, 0
      %v1276 = vsel %vm596, %v427, 0
      %v1279 = vsel %vm596, %v428, 0
      %v1282 = vsel %vm596, %v429, 0
      %v1285 = vsel %vm596, %v430, 0
      %v1288 = vsel %vm596, %v431, 0
      %v1291 = vsel %vm596, %v432, 0
      %v1294 = vsel %vm596, %v433, 0
      %v1297 = vsel %vm596, %v434, 0
      %v1300 = vsel %vm596, %v435, 0
      %v1303 = vsel %vm596, %v436, 0
      %v1306 = vsel %vm596, %v437, 0
      %v1309 = vsel %vm596, %v438, 0
      %v1312 = vsel %vm596, %v439, 0
      %v1315 = vsel %vm596, %v440, 0
      %v1318 = vsel %vm596, %v441, 0
      %v1321 = vsel %vm596, %v442, 0
      %v1324 = vsel %vm596, %v443, 0
      %v1327 = vsel %vm596, %v444, 0
      %v1330 = vsel %vm596, %v445, 0
      %v1333 = vsel %vm596, %v446, 0
      %v1336 = vsel %vm596, %v447, 0
      %v1339 = vsel %vm596, %v448, 0
      %v1342 = vsel %vm596, %v449, 0
      %v1345 = vsel %vm596, %v450, 0
      %v1348 = vsel %vm596, %v451, 0
      %v1351 = vsel %vm596, %v452, 0
      %v1354 = vsel %vm596, %v453, 0
      %v1357 = vsel %vm596, %v454, 0
      %v1360 = vsel %vm596, %v455, 0
      %v1363 = vsel %vm596, %v456, 0
      %v1366 = vsel %vm596, %v457, 0
      %v1369 = vsel %vm596, %v458, 0
      %v1372 = vsel %vm596, %v459, 0
      %v1375 = vsel %vm596, %v460, 0
      %v1378 = vsel %vm596, %v461, 0
      %v1381 = vsel %vm596, %v462, 0
      %v1384 = vsel %vm596, %v463, 0
      %v1387 = vsel %vm596, %v464, 0
      %v1390 = vsel %vm596, %v465, 0
      %v1393 = vsel %vm596, %v466, 0
      %v1396 = vsel %vm596, %v467, 0
      %v1399 = vsel %vm596, %v468, 0
      %v1402 = vsel %vm596, %v469, 0
      %v1405 = vsel %vm596, %v470, 0
      %v1408 = vsel %vm596, %v471, 0
      %v1411 = vsel %vm596, %v472, 0
      %v1414 = vsel %vm596, %v473, 0
      %v1417 = vsel %vm596, %v474, 0
      %v1420 = vsel %vm596, %v475, 0
      %v1423 = vsel %vm596, %v476, 0
      %v1426 = vsel %vm596, %v477, 0
      %v1429 = vsel %vm596, %v478, 0
      %v1432 = vsel %vm596, %v479, 0
      %v1435 = vsel %vm596, %v480, 0
      %v1438 = vsel %vm596, %v481, 0
      %v1441 = vsel %vm596, %v482, 0
      %v1444 = vsel %vm596, %v483, 0
      %v1447 = vsel %vm596, %v484, 0
      %v1450 = vsel %vm596, %v485, 0
      %v1453 = vsel %vm596, %v486, 0
      %v1456 = vsel %vm596, %v487, 0
      %v1459 = vsel %vm596, %v488, 0
      %v1462 = vsel %vm596, %v489, 0
      %v1465 = vsel %vm596, %v490, 0
      %v1468 = vsel %vm596, %v491, 0
      %v1471 = vsel %vm596, %v492, 0
      %v1474 = vsel %vm596, %v493, 0
      %v1477 = vsel %vm596, %v494, 0
      %v1480 = vsel %vm596, %v495, 0
      %v1483 = vsel %vm596, %v496, 0
      %v1486 = vsel %vm596, %v497, 0
      %v1489 = vsel %vm596, %v498, 0
      %v1492 = vsel %vm596, %v499, 0
      %v1495 = vsel %vm596, %v500, 0
      %v1498 = vsel %vm596, %v501, 0
      %v1501 = vsel %vm596, %v502, 0
      %v1504 = vsel %vm596, %v503, 0
      %v1507 = vsel %vm596, %v504, 0
      %v1510 = vsel %vm596, %v505, 0
      %v1513 = vsel %vm596, %v506, 0
      %v1516 = vsel %vm596, %v507, 0
      %v1519 = vsel %vm596, %v508, 0
      %v1522 = vsel %vm596, %v509, 0
      %v1525 = vsel %vm596, %v510, 0
      %v1528 = vsel %vm596, %v511, 0
      %v1531 = vsel %vm596, %v512, 0
      %v1534 = vsel %vm596, %v513, 0
      %v1537 = vsel %vm596, %v514, 0
      %v1540 = vsel %vm596, %v515, 0
      %v1543 = vsel %vm596, %v516, 0
      %v1546 = vsel %vm596, %v517, 0
      %v1549 = vsel %vm596, %v518, 0
      %v1552 = vsel %vm596, %v519, 0
      %v1555 = vsel %vm596, %v520, 0
      %v1558 = vsel %vm596, %v521, 0
      %v1561 = vsel %vm596, %v522, 0
      %v1564 = vsel %vm596, %v523, 0
      %v1567 = vsel %vm596, %v524, 0
      %v1570 = vsel %vm596, %v525, 0
      %v1573 = vsel %vm596, %v526, 0
      %v1576 = vsel %vm596, %v527, 0
      %v1579 = vsel %vm596, %v528, 0
      %v1582 = vsel %vm596, %v529, 0
      %v1585 = vsel %vm596, %v530, 0
      %v1588 = vsel %vm596, %v531, 0
      %v1591 = vsel %vm596, %v532, 0
      %v1594 = vsel %vm596, %v533, 0
      %v1597 = vsel %vm596, %v534, 0
      %v1600 = vsel %vm596, %v535, 0
      %v1603 = vsel %vm596, %v536, 0
      %v1606 = vsel %vm596, %v537, 0
      %v1609 = vsel %vm596, %v538, 0
      %v1612 = vsel %vm596, %v539, 0
      %v1615 = vsel %vm596, %v540, 0
      %v1618 = vsel %vm596, %v541, 0
      %v1621 = vsel %vm596, %v542, 0
      %v1624 = vsel %vm596, %v543, 0
      %v1627 = vsel %vm596, %v544, 0
      %v1630 = vsel %vm596, %v545, 0
      %v1633 = vsel %vm596, %v546, 0
      %v1636 = vsel %vm596, %v547, 0
      %v1639 = vsel %vm596, %v548, 0
      %v1642 = vsel %vm596, %v549, 0
      %v1645 = vsel %vm596, %v550, 0
      %v1648 = vsel %vm596, %v551, 0
      %v1651 = vsel %vm596, %v552, 0
      %v1654 = vsel %vm596, %v553, 0
      %v1657 = vsel %vm596, %v554, 0
      %v1660 = vsel %vm596, %v555, 0
      %v1663 = vsel %vm596, %v556, 0
      %v1666 = vsel %vm596, %v557, 0
      %v1669 = vsel %vm596, %v558, 0
      %v1672 = vsel %vm596, %v559, 0
      %v1675 = vsel %vm596, %v560, 0
      %v1678 = vsel %vm596, %v561, 0
      %v1681 = vsel %vm596, %v562, 0
      %v1684 = vsel %vm596, %v563, 0
      %v1687 = vsel %vm596, %v564, 0
      %v1690 = vsel %vm596, %v565, 0
      %v1693 = vsel %vm596, %v566, 0
      %v1696 = vsel %vm596, %v567, 0
      %v1699 = vsel %vm596, %v568, 0
      %v1702 = vsel %vm596, %v569, 0
      %v1705 = vsel %vm596, %v570, 0
      %v1708 = vsel %vm596, %v571, 0
      %v1711 = vsel %vm596, %v572, 0
      %v1714 = vsel %vm596, %v573, 0
      %v1717 = vsel %vm596, %v574, 0
      %v1720 = vsel %vm596, %v575, 0
      %v1723 = vsel %vm596, %v576, 0
      %v1726 = vsel %vm596, %v577, 0
      %v1729 = vsel %vm596, %v578, 0
      %v1732 = vsel %vm596, %v579, 0
      %v1735 = vsel %vm596, %v580, 0
      %v1738 = vsel %vm596, %v581, 0
      %v1741 = vsel %vm596, %v582, 0
      %v1744 = vsel %vm596, %v583, 0
      %v1747 = vsel %vm596, %v584, 0
      %v1750 = vsel %vm596, %v585, 0
      %v1753 = vsel %vm596, %v586, 0
      %v1756 = vsel %vm596, %v587, 0
      %v1759 = vsel %vm596, %v588, 0
      %v1762 = vsel %vm596, %v589, 0
      %v1765 = vsel %vm596, %v590, 0
      %v1768 = vsel %vm596, %v591, 0
      %v1771 = vsel %vm596, %v592, 0
      %vm1773 = vcmask 1041408
      %v1775 = vsel %vm1773, %v595, 0
      %1777 = vmatprep.subr.mxu0 0.0
      %1778 = vmatpush1.msra.mxu0 %v593
      %1779 = vmatprep.subr.mxu0 0.0
      %1780 = vmatpush1.msra.mxu0 %v594
      %1781 = vmatprep.subr.mxu0 0.0
      %1782 = vmatpush1.msra.mxu0 %v1775
      %1783 = vmatprep.subr.mxu0 0.0
      %1784 = vmatpush1.msra.mxu0 0.0
      %1785 = vmatprep.subr.mxu0 0.0
      %1786 = vmatpush1.msra.mxu0 0.0
      %1787 = vmatprep.subr.mxu0 0.0
      %1788 = vmatpush1.msra.mxu0 0.0
      %1789 = vmatprep.subr.mxu0 0.0
      %1790 = vmatpush1.msra.mxu0 0.0
      %1791 = vmatprep.subr.mxu0 0.0
      %1792 = vmatpush1.msra.mxu0 0.0
      %1793 = vmatprep.subr.mxu0 0.0
      %1794 = vmatpush1.msra.mxu0 0.0
      %1795 = vmatprep.subr.mxu0 0.0
      %1796 = vmatpush1.msra.mxu0 0.0
      %1797 = vmatprep.subr.mxu0 0.0
      %1798 = vmatpush1.msra.mxu0 0.0
      %1799 = vmatprep.subr.mxu0 0.0
      %1800 = vmatpush1.msra.mxu0 0.0
      %1801 = vmatprep.subr.mxu0 0.0
      %1802 = vmatpush1.msra.mxu0 0.0
      %1803 = vmatprep.subr.mxu0 0.0
      %1804 = vmatpush1.msra.mxu0 0.0
      %1805 = vmatprep.subr.mxu0 0.0
      %1806 = vmatpush1.msra.mxu0 0.0
      %1807 = vmatprep.subr.mxu0 0.0
      %1808 = vmatpush1.msra.mxu0 0.0
      %1809 = vmatprep.subr.mxu0 0.0
      %1810 = vmatpush1.msra.mxu0 0.0
      %1811 = vmatprep.subr.mxu0 0.0
      %1812 = vmatpush1.msra.mxu0 0.0
      %1813 = vmatprep.subr.mxu0 0.0
      %1814 = vmatpush1.msra.mxu0 0.0
      %1815 = vmatprep.subr.mxu0 0.0
      %1816 = vmatpush1.msra.mxu0 0.0
      %1817 = vmatprep.subr.mxu0 0.0
      %1818 = vmatpush1.msra.mxu0 0.0
      %1819 = vmatprep.subr.mxu0 0.0
      %1820 = vmatpush1.msra.mxu0 0.0
      %1821 = vmatprep.subr.mxu0 0.0
      %1822 = vmatpush1.msra.mxu0 0.0
      %1823 = vmatprep.subr.mxu0 0.0
      %1824 = vmatpush1.msra.mxu0 0.0
      %1825 = vmatprep.subr.mxu0 0.0
      %1826 = vmatpush1.msra.mxu0 0.0
      %1827 = vmatprep.subr.mxu0 0.0
      %1828 = vmatpush1.msra.mxu0 0.0
      %1829 = vmatprep.subr.mxu0 0.0
      %1830 = vmatpush1.msra.mxu0 0.0
      %1831 = vmatprep.subr.mxu0 0.0
      %1832 = vmatpush1.msra.mxu0 0.0
      %1833 = vmatprep.subr.mxu0 0.0
      %1834 = vmatpush1.msra.mxu0 0.0
      %1835 = vmatprep.subr.mxu0 0.0
      %1836 = vmatpush1.msra.mxu0 0.0
      %1837 = vmatprep.subr.mxu0 0.0
      %1838 = vmatpush1.msra.mxu0 0.0
      %1839 = vmatprep.subr.mxu0 0.0
      %1840 = vmatpush1.msra.mxu0 0.0
      %1841 = vmatprep.mubr.f32.mxu0 0.0
      %1842 = vmatmul.mubr.f32.gmra.mrb[0].mxu0 %v598
      %v1843 = vpop.f32.mrb[0].mxu0
      %v1844 = vadd.f32 0.0, %v1843
      %v1845 = vpop.f32.mrb[0].mxu0
      %1846 = vmatprep.mubr.f32.mxu0 0.0
      %1847 = vmatmul.mubr.f32.gmra.mrb[0].mxu0 %v601
      %v1848 = vpop.f32.mrb[0].mxu0
      %v1849 = vadd.f32 0.0, %v1848
      %v1850 = vpop.f32.mrb[0].mxu0
      %1851 = vmatprep.mubr.f32.mxu0 0.0
      %1852 = vmatmul.mubr.f32.gmra.mrb[0].mxu0 %v604
      %v1853 = vpop.f32.mrb[0].mxu0
      %v1854 = vadd.f32 0.0, %v1853
      %v1855 = vpop.f32.mrb[0].mxu0
      %1856 = vmatprep.mubr.f32.mxu0 0.0
      %1857 = vmatmul.mubr.f32.gmra.mrb[0].mxu0 %v607
      %v1858 = vpop.f32.mrb[0].mxu0
      %v1859 = vadd.f32 0.0, %v1858
      %v1860 = vpop.f32.mrb[0].mxu0
      %1861 = vmatprep.mubr.f32.mxu0 0.0
      %1862 = vmatmul.mubr.f32.gmra.mrb[0].mxu0 %v610
      %v1863 = vpop.f32.mrb[0].mxu0
      %v1864 = vadd.f32 0.0, %v1863
      %v1865 = vpop.f32.mrb[0].mxu0
      %1866 = vmatprep.mubr.f32.mxu0 0.0
      %1867 = vmatmul.mubr.f32.gmra.mrb[0].mxu0 %v613
      %v1868 = vpop.f32.mrb[0].mxu0
      %v1869 = vadd.f32 0.0, %v1868
      %v1870 = vpop.f32.mrb[0].mxu0
      %1871 = vmatprep.mubr.f32.mxu0 0.0
      %1872 = vmatmul.mubr.f32.gmra.mrb[0].mxu0 %v616
      %v1873 = vpop.f32.mrb[0].mxu0
      %v1874 = vadd.f32 0.0, %v1873
      %v1875 = vpop.f32.mrb[0].mxu0
      %1876 = vmatprep.mubr.f32.mxu0 0.0
      %1877 = vmatmul.mubr.f32.gmra.mrb[0].mxu0 %v619
      %v1878 = vpop.f32.mrb[0].mxu0
      %v1879 = vadd.f32 0.0, %v1878
      %v1880 = vpop.f32.mrb[0].mxu0
      %1881 = vmatprep.mubr.f32.mxu0 0.0
      %1882 = vmatmul.mubr.f32.gmra.mrb[0].mxu0 %v622
      %v1883 = vpop.f32.mrb[0].mxu0
      %v1884 = vadd.f32 0.0, %v1883
      %v1885 = vpop.f32.mrb[0].mxu0
      %1886 = vmatprep.mubr.f32.mxu0 0.0
      %1887 = vmatmul.mubr.f32.gmra.mrb[0].mxu0 %v625
      %v1888 = vpop.f32.mrb[0].mxu0
      %v1889 = vadd.f32 0.0, %v1888
      %v1890 = vpop.f32.mrb[0].mxu0
      %1891 = vmatprep.mubr.f32.mxu0 0.0
      %1892 = vmatmul.mubr.f32.gmra.mrb[0].mxu0 %v628
      %v1893 = vpop.f32.mrb[0].mxu0
      %v1894 = vadd.f32 0.0, %v1893
      %v1895 = vpop.f32.mrb[0].mxu0
      %1896 = vmatprep.mubr.f32.mxu0 0.0
      %1897 = vmatmul.mubr.f32.gmra.mrb[0].mxu0 %v631
      %v1898 = vpop.f32.mrb[0].mxu0
      %v1899 = vadd.f32 0.0, %v1898
      %v1900 = vpop.f32.mrb[0].mxu0
      %1901 = vmatprep.mubr.f32.mxu0 0.0
      %1902 = vmatmul.mubr.f32.gmra.mrb[0].mxu0 %v634
      %v1903 = vpop.f32.mrb[0].mxu0
      %v1904 = vadd.f32 0.0, %v1903
      %v1905 = vpop.f32.mrb[0].mxu0
      %1906 = vmatprep.mubr.f32.mxu0 0.0
      %1907 = vmatmul.mubr.f32.gmra.mrb[0].mxu0 %v637
      %v1908 = vpop.f32.mrb[0].mxu0
      %v1909 = vadd.f32 0.0, %v1908
      %v1910 = vpop.f32.mrb[0].mxu0
      %1911 = vmatprep.mubr.f32.mxu0 0.0
      %1912 = vmatmul.mubr.f32.gmra.mrb[0].mxu0 %v640
      %v1913 = vpop.f32.mrb[0].mxu0
      %v1914 = vadd.f32 0.0, %v1913
      %v1915 = vpop.f32.mrb[0].mxu0
      %1916 = vmatprep.mubr.f32.mxu0 0.0
      %1917 = vmatmul.mubr.f32.gmra.mrb[0].mxu0 %v643
      %v1918 = vpop.f32.mrb[0].mxu0
      %v1919 = vadd.f32 0.0, %v1918
      %v1920 = vpop.f32.mrb[0].mxu0
      %1921 = vmatprep.mubr.f32.mxu0 0.0
      %1922 = vmatmul.mubr.f32.gmra.mrb[0].mxu0 %v646
      %v1923 = vpop.f32.mrb[0].mxu0
      %v1924 = vadd.f32 0.0, %v1923
      %v1925 = vpop.f32.mrb[0].mxu0
      %1926 = vmatprep.mubr.f32.mxu0 0.0
      %1927 = vmatmul.mubr.f32.gmra.mrb[0].mxu0 %v649
      %v1928 = vpop.f32.mrb[0].mxu0
      %v1929 = vadd.f32 0.0, %v1928
      %v1930 = vpop.f32.mrb[0].mxu0
      %1931 = vmatprep.mubr.f32.mxu0 0.0
      %1932 = vmatmul.mubr.f32.gmra.mrb[0].mxu0 %v652
      %v1933 = vpop.f32.mrb[0].mxu0
      %v1934 = vadd.f32 0.0, %v1933
      %v1935 = vpop.f32.mrb[0].mxu0
      %1936 = vmatprep.mubr.f32.mxu0 0.0
      %1937 = vmatmul.mubr.f32.gmra.mrb[0].mxu0 %v655
      %v1938 = vpop.f32.mrb[0].mxu0
      %v1939 = vadd.f32 0.0, %v1938
      %v1940 = vpop.f32.mrb[0].mxu0
      %1941 = vmatprep.mubr.f32.mxu0 0.0
      %1942 = vmatmul.mubr.f32.gmra.mrb[0].mxu0 %v658
      %v1943 = vpop.f32.mrb[0].mxu0
      %v1944 = vadd.f32 0.0, %v1943
      %v1945 = vpop.f32.mrb[0].mxu0
      %1946 = vmatprep.mubr.f32.mxu0 0.0
      %1947 = vmatmul.mubr.f32.gmra.mrb[0].mxu0 %v661
      %v1948 = vpop.f32.mrb[0].mxu0
      %v1949 = vadd.f32 0.0, %v1948
      %v1950 = vpop.f32.mrb[0].mxu0
      %1951 = vmatprep.mubr.f32.mxu0 0.0
      %1952 = vmatmul.mubr.f32.gmra.mrb[0].mxu0 %v664
      %v1953 = vpop.f32.mrb[0].mxu0
      %v1954 = vadd.f32 0.0, %v1953
      %v1955 = vpop.f32.mrb[0].mxu0
      %1956 = vmatprep.mubr.f32.mxu0 0.0
      %1957 = vmatmul.mubr.f32.gmra.mrb[0].mxu0 %v667
      %v1958 = vpop.f32.mrb[0].mxu0
      %v1959 = vadd.f32 0.0, %v1958
      %v1960 = vpop.f32.mrb[0].mxu0
      %1961 = vmatprep.mubr.f32.mxu0 0.0
      %1962 = vmatmul.mubr.f32.gmra.mrb[0].mxu0 %v670
      %v1963 = vpop.f32.mrb[0].mxu0
      %v1964 = vadd.f32 0.0, %v1963
      %v1965 = vpop.f32.mrb[0].mxu0
      %1966 = vmatprep.mubr.f32.mxu0 0.0
      %1967 = vmatmul.mubr.f32.gmra.mrb[0].mxu0 %v673
      %v1968 = vpop.f32.mrb[0].mxu0
      %v1969 = vadd.f32 0.0, %v1968
      %v1970 = vpop.f32.mrb[0].mxu0
      %1971 = vmatprep.mubr.f32.mxu0 0.0
      %1972 = vmatmul.mubr.f32.gmra.mrb[0].mxu0 %v676
      %v1973 = vpop.f32.mrb[0].mxu0
      %v1974 = vadd.f32 0.0, %v1973
      %v1975 = vpop.f32.mrb[0].mxu0
      %1976 = vmatprep.mubr.f32.mxu0 0.0
      %1977 = vmatmul.mubr.f32.gmra.mrb[0].mxu0 %v679
      %v1978 = vpop.f32.mrb[0].mxu0
      %v1979 = vadd.f32 0.0, %v1978
      %v1980 = vpop.f32.mrb[0].mxu0
      %1981 = vmatprep.mubr.f32.mxu0 0.0
      %1982 = vmatmul.mubr.f32.gmra.mrb[0].mxu0 %v682
      %v1983 = vpop.f32.mrb[0].mxu0
      %v1984 = vadd.f32 0.0, %v1983
      %v1985 = vpop.f32.mrb[0].mxu0
      %1986 = vmatprep.mubr.f32.mxu0 0.0
      %1987 = vmatmul.mubr.f32.gmra.mrb[0].mxu0 %v685
      %v1988 = vpop.f32.mrb[0].mxu0
      %v1989 = vadd.f32 0.0, %v1988
      %v1990 = vpop.f32.mrb[0].mxu0
      %1991 = vmatprep.mubr.f32.mxu0 0.0
      %1992 = vmatmul.mubr.f32.gmra.mrb[0].mxu0 %v688
      %v1993 = vpop.f32.mrb[0].mxu0
      %v1994 = vadd.f32 0.0, %v1993
      %v1995 = vpop.f32.mrb[0].mxu0
      %1996 = vmatprep.mubr.f32.mxu0 0.0
      %1997 = vmatmul.mubr.f32.gmra.mrb[0].mxu0 %v691
      %v1998 = vpop.f32.mrb[0].mxu0
      %v1999 = vadd.f32 0.0, %v1998
      %v2000 = vpop.f32.mrb[0].mxu0
      %2001 = vmatprep.mubr.f32.mxu0 0.0
      %2002 = vmatmul.mubr.f32.gmra.mrb[0].mxu0 %v694
      %v2003 = vpop.f32.mrb[0].mxu0
      %v2004 = vadd.f32 0.0, %v2003
      %v2005 = vpop.f32.mrb[0].mxu0
      %2006 = vmatprep.mubr.f32.mxu0 0.0
      %2007 = vmatmul.mubr.f32.gmra.mrb[0].mxu0 %v697
      %v2008 = vpop.f32.mrb[0].mxu0
      %v2009 = vadd.f32 0.0, %v2008
      %v2010 = vpop.f32.mrb[0].mxu0
      %2011 = vmatprep.mubr.f32.mxu0 0.0
      %2012 = vmatmul.mubr.f32.gmra.mrb[0].mxu0 %v700
      %v2013 = vpop.f32.mrb[0].mxu0
      %v2014 = vadd.f32 0.0, %v2013
      %v2015 = vpop.f32.mrb[0].mxu0
      %2016 = vmatprep.mubr.f32.mxu0 0.0
      %2017 = vmatmul.mubr.f32.gmra.mrb[0].mxu0 %v703
      %v2018 = vpop.f32.mrb[0].mxu0
      %v2019 = vadd.f32 0.0, %v2018
      %v2020 = vpop.f32.mrb[0].mxu0
      %2021 = vmatprep.mubr.f32.mxu0 0.0
      %2022 = vmatmul.mubr.f32.gmra.mrb[0].mxu0 %v706
      %v2023 = vpop.f32.mrb[0].mxu0
      %v2024 = vadd.f32 0.0, %v2023
      %v2025 = vpop.f32.mrb[0].mxu0
      %2026 = vmatprep.mubr.f32.mxu0 0.0
      %2027 = vmatmul.mubr.f32.gmra.mrb[0].mxu0 %v709
      %v2028 = vpop.f32.mrb[0].mxu0
      %v2029 = vadd.f32 0.0, %v2028
      %v2030 = vpop.f32.mrb[0].mxu0
      %2031 = vmatprep.mubr.f32.mxu0 0.0
      %2032 = vmatmul.mubr.f32.gmra.mrb[0].mxu0 %v712
      %v2033 = vpop.f32.mrb[0].mxu0
      %v2034 = vadd.f32 0.0, %v2033
      %v2035 = vpop.f32.mrb[0].mxu0
      %2036 = vmatprep.mubr.f32.mxu0 0.0
      %2037 = vmatmul.mubr.f32.gmra.mrb[0].mxu0 %v715
      %v2038 = vpop.f32.mrb[0].mxu0
      %v2039 = vadd.f32 0.0, %v2038
      %v2040 = vpop.f32.mrb[0].mxu0
      %2041 = vmatprep.mubr.f32.mxu0 0.0
      %2042 = vmatmul.mubr.f32.gmra.mrb[0].mxu0 %v718
      %v2043 = vpop.f32.mrb[0].mxu0
      %v2044 = vadd.f32 0.0, %v2043
      %v2045 = vpop.f32.mrb[0].mxu0
      %2046 = vmatprep.mubr.f32.mxu0 0.0
      %2047 = vmatmul.mubr.f32.gmra.mrb[0].mxu0 %v721
      %v2048 = vpop.f32.mrb[0].mxu0
      %v2049 = vadd.f32 0.0, %v2048
      %v2050 = vpop.f32.mrb[0].mxu0
      %2051 = vmatprep.mubr.f32.mxu0 0.0
      %2052 = vmatmul.mubr.f32.gmra.mrb[0].mxu0 %v724
      %v2053 = vpop.f32.mrb[0].mxu0
      %v2054 = vadd.f32 0.0, %v2053
      %v2055 = vpop.f32.mrb[0].mxu0
      %2056 = vmatprep.mubr.f32.mxu0 0.0
      %2057 = vmatmul.mubr.f32.gmra.mrb[0].mxu0 %v727
      %v2058 = vpop.f32.mrb[0].mxu0
      %v2059 = vadd.f32 0.0, %v2058
      %v2060 = vpop.f32.mrb[0].mxu0
      %2061 = vmatprep.mubr.f32.mxu0 0.0
      %2062 = vmatmul.mubr.f32.gmra.mrb[0].mxu0 %v730
      %v2063 = vpop.f32.mrb[0].mxu0
      %v2064 = vadd.f32 0.0, %v2063
      %v2065 = vpop.f32.mrb[0].mxu0
      %2066 = vmatprep.mubr.f32.mxu0 0.0
      %2067 = vmatmul.mubr.f32.gmra.mrb[0].mxu0 %v733
      %v2068 = vpop.f32.mrb[0].mxu0
      %v2069 = vadd.f32 0.0, %v2068
      %v2070 = vpop.f32.mrb[0].mxu0
      %2071 = vmatprep.mubr.f32.mxu0 0.0
      %2072 = vmatmul.mubr.f32.gmra.mrb[0].mxu0 %v736
      %v2073 = vpop.f32.mrb[0].mxu0
      %v2074 = vadd.f32 0.0, %v2073
      %v2075 = vpop.f32.mrb[0].mxu0
      %2076 = vmatprep.mubr.f32.mxu0 0.0
      %2077 = vmatmul.mubr.f32.gmra.mrb[0].mxu0 %v739
      %v2078 = vpop.f32.mrb[0].mxu0
      %v2079 = vadd.f32 0.0, %v2078
      %v2080 = vpop.f32.mrb[0].mxu0
      %2081 = vmatprep.mubr.f32.mxu0 0.0
      %2082 = vmatmul.mubr.f32.gmra.mrb[0].mxu0 %v742
      %v2083 = vpop.f32.mrb[0].mxu0
      %v2084 = vadd.f32 0.0, %v2083
      %v2085 = vpop.f32.mrb[0].mxu0
      %2086 = vmatprep.mubr.f32.mxu0 0.0
      %2087 = vmatmul.mubr.f32.gmra.mrb[0].mxu0 %v745
      %v2088 = vpop.f32.mrb[0].mxu0
      %v2089 = vadd.f32 0.0, %v2088
      %v2090 = vpop.f32.mrb[0].mxu0
      %2091 = vmatprep.mubr.f32.mxu0 0.0
      %2092 = vmatmul.mubr.f32.gmra.mrb[0].mxu0 %v748
      %v2093 = vpop.f32.mrb[0].mxu0
      %v2094 = vadd.f32 0.0, %v2093
      %v2095 = vpop.f32.mrb[0].mxu0
      %2096 = vmatprep.mubr.f32.mxu0 0.0
      %2097 = vmatmul.mubr.f32.gmra.mrb[0].mxu0 %v751
      %v2098 = vpop.f32.mrb[0].mxu0
      %v2099 = vadd.f32 0.0, %v2098
      %v2100 = vpop.f32.mrb[0].mxu0
      %2101 = vmatprep.mubr.f32.mxu0 0.0
      %2102 = vmatmul.mubr.f32.gmra.mrb[0].mxu0 %v754
      %v2103 = vpop.f32.mrb[0].mxu0
      %v2104 = vadd.f32 0.0, %v2103
      %v2105 = vpop.f32.mrb[0].mxu0
      %2106 = vmatprep.mubr.f32.mxu0 0.0
      %2107 = vmatmul.mubr.f32.gmra.mrb[0].mxu0 %v757
      %v2108 = vpop.f32.mrb[0].mxu0
      %v2109 = vadd.f32 0.0, %v2108
      %v2110 = vpop.f32.mrb[0].mxu0
      %2111 = vmatprep.mubr.f32.mxu0 0.0
      %2112 = vmatmul.mubr.f32.gmra.mrb[0].mxu0 %v760
      %v2113 = vpop.f32.mrb[0].mxu0
      %v2114 = vadd.f32 0.0, %v2113
      %v2115 = vpop.f32.mrb[0].mxu0
      %2116 = vmatprep.mubr.f32.mxu0 0.0
      %2117 = vmatmul.mubr.f32.gmra.mrb[0].mxu0 %v763
      %v2118 = vpop.f32.mrb[0].mxu0
      %v2119 = vadd.f32 0.0, %v2118
      %v2120 = vpop.f32.mrb[0].mxu0
      %2121 = vmatprep.mubr.f32.mxu0 0.0
      %2122 = vmatmul.mubr.f32.gmra.mrb[0].mxu0 %v766
      %v2123 = vpop.f32.mrb[0].mxu0
      %v2124 = vadd.f32 0.0, %v2123
      %v2125 = vpop.f32.mrb[0].mxu0
      %2126 = vmatprep.mubr.f32.mxu0 0.0
      %2127 = vmatmul.mubr.f32.gmra.mrb[0].mxu0 %v769
      %v2128 = vpop.f32.mrb[0].mxu0
      %v2129 = vadd.f32 0.0, %v2128
      %v2130 = vpop.f32.mrb[0].mxu0
      %2131 = vmatprep.mubr.f32.mxu0 0.0
      %2132 = vmatmul.mubr.f32.gmra.mrb[0].mxu0 %v772
      %v2133 = vpop.f32.mrb[0].mxu0
      %v2134 = vadd.f32 0.0, %v2133
      %v2135 = vpop.f32.mrb[0].mxu0
      %2136 = vmatprep.mubr.f32.mxu0 0.0
      %2137 = vmatmul.mubr.f32.gmra.mrb[0].mxu0 %v775
      %v2138 = vpop.f32.mrb[0].mxu0
      %v2139 = vadd.f32 0.0, %v2138
      %v2140 = vpop.f32.mrb[0].mxu0
      %2141 = vmatprep.mubr.f32.mxu0 0.0
      %2142 = vmatmul.mubr.f32.gmra.mrb[0].mxu0 %v778
      %v2143 = vpop.f32.mrb[0].mxu0
      %v2144 = vadd.f32 0.0, %v2143
      %v2145 = vpop.f32.mrb[0].mxu0
      %2146 = vmatprep.mubr.f32.mxu0 0.0
      %2147 = vmatmul.mubr.f32.gmra.mrb[0].mxu0 %v781
      %v2148 = vpop.f32.mrb[0].mxu0
      %v2149 = vadd.f32 0.0, %v2148
      %v2150 = vpop.f32.mrb[0].mxu0
      %2151 = vmatprep.mubr.f32.mxu0 0.0
      %2152 = vmatmul.mubr.f32.gmra.mrb[0].mxu0 %v784
      %v2153 = vpop.f32.mrb[0].mxu0
      %v2154 = vadd.f32 0.0, %v2153
      %v2155 = vpop.f32.mrb[0].mxu0
      %2156 = vmatprep.mubr.f32.mxu0 0.0
      %2157 = vmatmul.mubr.f32.gmra.mrb[0].mxu0 %v787
      %v2158 = vpop.f32.mrb[0].mxu0
      %v2159 = vadd.f32 0.0, %v2158
      %v2160 = vpop.f32.mrb[0].mxu0
      %2161 = vmatprep.mubr.f32.mxu0 0.0
      %2162 = vmatmul.mubr.f32.gmra.mrb[0].mxu0 %v790
      %v2163 = vpop.f32.mrb[0].mxu0
      %v2164 = vadd.f32 0.0, %v2163
      %v2165 = vpop.f32.mrb[0].mxu0
      %2166 = vmatprep.mubr.f32.mxu0 0.0
      %2167 = vmatmul.mubr.f32.gmra.mrb[0].mxu0 %v793
      %v2168 = vpop.f32.mrb[0].mxu0
      %v2169 = vadd.f32 0.0, %v2168
      %v2170 = vpop.f32.mrb[0].mxu0
      %2171 = vmatprep.mubr.f32.mxu0 0.0
      %2172 = vmatmul.mubr.f32.gmra.mrb[0].mxu0 %v796
      %v2173 = vpop.f32.mrb[0].mxu0
      %v2174 = vadd.f32 0.0, %v2173
      %v2175 = vpop.f32.mrb[0].mxu0
      %2176 = vmatprep.mubr.f32.mxu0 0.0
      %2177 = vmatmul.mubr.f32.gmra.mrb[0].mxu0 %v799
      %v2178 = vpop.f32.mrb[0].mxu0
      %v2179 = vadd.f32 0.0, %v2178
      %v2180 = vpop.f32.mrb[0].mxu0
      %2181 = vmatprep.mubr.f32.mxu0 0.0
      %2182 = vmatmul.mubr.f32.gmra.mrb[0].mxu0 %v802
      %v2183 = vpop.f32.mrb[0].mxu0
      %v2184 = vadd.f32 0.0, %v2183
      %v2185 = vpop.f32.mrb[0].mxu0
      %2186 = vmatprep.mubr.f32.mxu0 0.0
      %2187 = vmatmul.mubr.f32.gmra.mrb[0].mxu0 %v805
      %v2188 = vpop.f32.mrb[0].mxu0
      %v2189 = vadd.f32 0.0, %v2188
      %v2190 = vpop.f32.mrb[0].mxu0
      %2191 = vmatprep.mubr.f32.mxu0 0.0
      %2192 = vmatmul.mubr.f32.gmra.mrb[0].mxu0 %v808
      %v2193 = vpop.f32.mrb[0].mxu0
      %v2194 = vadd.f32 0.0, %v2193
      %v2195 = vpop.f32.mrb[0].mxu0
      %2196 = vmatprep.mubr.f32.mxu0 0.0
      %2197 = vmatmul.mubr.f32.gmra.mrb[0].mxu0 %v811
      %v2198 = vpop.f32.mrb[0].mxu0
      %v2199 = vadd.f32 0.0, %v2198
      %v2200 = vpop.f32.mrb[0].mxu0
      %2201 = vmatprep.mubr.f32.mxu0 0.0
      %2202 = vmatmul.mubr.f32.gmra.mrb[0].mxu0 %v814
      %v2203 = vpop.f32.mrb[0].mxu0
      %v2204 = vadd.f32 0.0, %v2203
      %v2205 = vpop.f32.mrb[0].mxu0
      %2206 = vmatprep.mubr.f32.mxu0 0.0
      %2207 = vmatmul.mubr.f32.gmra.mrb[0].mxu0 %v817
      %v2208 = vpop.f32.mrb[0].mxu0
      %v2209 = vadd.f32 0.0, %v2208
      %v2210 = vpop.f32.mrb[0].mxu0
      %2211 = vmatprep.mubr.f32.mxu0 0.0
      %2212 = vmatmul.mubr.f32.gmra.mrb[0].mxu0 %v820
      %v2213 = vpop.f32.mrb[0].mxu0
      %v2214 = vadd.f32 0.0, %v2213
      %v2215 = vpop.f32.mrb[0].mxu0
      %2216 = vmatprep.mubr.f32.mxu0 0.0
      %2217 = vmatmul.mubr.f32.gmra.mrb[0].mxu0 %v823
      %v2218 = vpop.f32.mrb[0].mxu0
      %v2219 = vadd.f32 0.0, %v2218
      %v2220 = vpop.f32.mrb[0].mxu0
      %2221 = vmatprep.mubr.f32.mxu0 0.0
      %2222 = vmatmul.mubr.f32.gmra.mrb[0].mxu0 %v826
      %v2223 = vpop.f32.mrb[0].mxu0
      %v2224 = vadd.f32 0.0, %v2223
      %v2225 = vpop.f32.mrb[0].mxu0
      %2226 = vmatprep.mubr.f32.mxu0 0.0
      %2227 = vmatmul.mubr.f32.gmra.mrb[0].mxu0 %v829
      %v2228 = vpop.f32.mrb[0].mxu0
      %v2229 = vadd.f32 0.0, %v2228
      %v2230 = vpop.f32.mrb[0].mxu0
      %2231 = vmatprep.mubr.f32.mxu0 0.0
      %2232 = vmatmul.mubr.f32.gmra.mrb[0].mxu0 %v832
      %v2233 = vpop.f32.mrb[0].mxu0
      %v2234 = vadd.f32 0.0, %v2233
      %v2235 = vpop.f32.mrb[0].mxu0
      %2236 = vmatprep.mubr.f32.mxu0 0.0
      %2237 = vmatmul.mubr.f32.gmra.mrb[0].mxu0 %v835
      %v2238 = vpop.f32.mrb[0].mxu0
      %v2239 = vadd.f32 0.0, %v2238
      %v2240 = vpop.f32.mrb[0].mxu0
      %2241 = vmatprep.mubr.f32.mxu0 0.0
      %2242 = vmatmul.mubr.f32.gmra.mrb[0].mxu0 %v838
      %v2243 = vpop.f32.mrb[0].mxu0
      %v2244 = vadd.f32 0.0, %v2243
      %v2245 = vpop.f32.mrb[0].mxu0
      %2246 = vmatprep.mubr.f32.mxu0 0.0
      %2247 = vmatmul.mubr.f32.gmra.mrb[0].mxu0 %v841
      %v2248 = vpop.f32.mrb[0].mxu0
      %v2249 = vadd.f32 0.0, %v2248
      %v2250 = vpop.f32.mrb[0].mxu0
      %2251 = vmatprep.mubr.f32.mxu0 0.0
      %2252 = vmatmul.mubr.f32.gmra.mrb[0].mxu0 %v844
      %v2253 = vpop.f32.mrb[0].mxu0
      %v2254 = vadd.f32 0.0, %v2253
      %v2255 = vpop.f32.mrb[0].mxu0
      %2256 = vmatprep.mubr.f32.mxu0 0.0
      %2257 = vmatmul.mubr.f32.gmra.mrb[0].mxu0 %v847
      %v2258 = vpop.f32.mrb[0].mxu0
      %v2259 = vadd.f32 0.0, %v2258
      %v2260 = vpop.f32.mrb[0].mxu0
      %2261 = vmatprep.mubr.f32.mxu0 0.0
      %2262 = vmatmul.mubr.f32.gmra.mrb[0].mxu0 %v850
      %v2263 = vpop.f32.mrb[0].mxu0
      %v2264 = vadd.f32 0.0, %v2263
      %v2265 = vpop.f32.mrb[0].mxu0
      %2266 = vmatprep.mubr.f32.mxu0 0.0
      %2267 = vmatmul.mubr.f32.gmra.mrb[0].mxu0 %v853
      %v2268 = vpop.f32.mrb[0].mxu0
      %v2269 = vadd.f32 0.0, %v2268
      %v2270 = vpop.f32.mrb[0].mxu0
      %2271 = vmatprep.mubr.f32.mxu0 0.0
      %2272 = vmatmul.mubr.f32.gmra.mrb[0].mxu0 %v856
      %v2273 = vpop.f32.mrb[0].mxu0
      %v2274 = vadd.f32 0.0, %v2273
      %v2275 = vpop.f32.mrb[0].mxu0
      %2276 = vmatprep.mubr.f32.mxu0 0.0
      %2277 = vmatmul.mubr.f32.gmra.mrb[0].mxu0 %v859
      %v2278 = vpop.f32.mrb[0].mxu0
      %v2279 = vadd.f32 0.0, %v2278
      %v2280 = vpop.f32.mrb[0].mxu0
      %2281 = vmatprep.mubr.f32.mxu0 0.0
      %2282 = vmatmul.mubr.f32.gmra.mrb[0].mxu0 %v862
      %v2283 = vpop.f32.mrb[0].mxu0
      %v2284 = vadd.f32 0.0, %v2283
      %v2285 = vpop.f32.mrb[0].mxu0
      %2286 = vmatprep.mubr.f32.mxu0 0.0
      %2287 = vmatmul.mubr.f32.gmra.mrb[0].mxu0 %v865
      %v2288 = vpop.f32.mrb[0].mxu0
      %v2289 = vadd.f32 0.0, %v2288
      %v2290 = vpop.f32.mrb[0].mxu0
      %2291 = vmatprep.mubr.f32.mxu0 0.0
      %2292 = vmatmul.mubr.f32.gmra.mrb[0].mxu0 %v868
      %v2293 = vpop.f32.mrb[0].mxu0
      %v2294 = vadd.f32 0.0, %v2293
      %v2295 = vpop.f32.mrb[0].mxu0
      %2296 = vmatprep.mubr.f32.mxu0 0.0
      %2297 = vmatmul.mubr.f32.gmra.mrb[0].mxu0 %v871
      %v2298 = vpop.f32.mrb[0].mxu0
      %v2299 = vadd.f32 0.0, %v2298
      %v2300 = vpop.f32.mrb[0].mxu0
      %2301 = vmatprep.mubr.f32.mxu0 0.0
      %2302 = vmatmul.mubr.f32.gmra.mrb[0].mxu0 %v874
      %v2303 = vpop.f32.mrb[0].mxu0
      %v2304 = vadd.f32 0.0, %v2303
      %v2305 = vpop.f32.mrb[0].mxu0
      %2306 = vmatprep.mubr.f32.mxu0 0.0
      %2307 = vmatmul.mubr.f32.gmra.mrb[0].mxu0 %v877
      %v2308 = vpop.f32.mrb[0].mxu0
      %v2309 = vadd.f32 0.0, %v2308
      %v2310 = vpop.f32.mrb[0].mxu0
      %2311 = vmatprep.mubr.f32.mxu0 0.0
      %2312 = vmatmul.mubr.f32.gmra.mrb[0].mxu0 %v880
      %v2313 = vpop.f32.mrb[0].mxu0
      %v2314 = vadd.f32 0.0, %v2313
      %v2315 = vpop.f32.mrb[0].mxu0
      %2316 = vmatprep.mubr.f32.mxu0 0.0
      %2317 = vmatmul.mubr.f32.gmra.mrb[0].mxu0 %v883
      %v2318 = vpop.f32.mrb[0].mxu0
      %v2319 = vadd.f32 0.0, %v2318
      %v2320 = vpop.f32.mrb[0].mxu0
      %2321 = vmatprep.mubr.f32.mxu0 0.0
      %2322 = vmatmul.mubr.f32.gmra.mrb[0].mxu0 %v886
      %v2323 = vpop.f32.mrb[0].mxu0
      %v2324 = vadd.f32 0.0, %v2323
      %v2325 = vpop.f32.mrb[0].mxu0
      %2326 = vmatprep.mubr.f32.mxu0 0.0
      %2327 = vmatmul.mubr.f32.gmra.mrb[0].mxu0 %v889
      %v2328 = vpop.f32.mrb[0].mxu0
      %v2329 = vadd.f32 0.0, %v2328
      %v2330 = vpop.f32.mrb[0].mxu0
      %2331 = vmatprep.mubr.f32.mxu0 0.0
      %2332 = vmatmul.mubr.f32.gmra.mrb[0].mxu0 %v892
      %v2333 = vpop.f32.mrb[0].mxu0
      %v2334 = vadd.f32 0.0, %v2333
      %v2335 = vpop.f32.mrb[0].mxu0
      %2336 = vmatprep.mubr.f32.mxu0 0.0
      %2337 = vmatmul.mubr.f32.gmra.mrb[0].mxu0 %v895
      %v2338 = vpop.f32.mrb[0].mxu0
      %v2339 = vadd.f32 0.0, %v2338
      %v2340 = vpop.f32.mrb[0].mxu0
      %2341 = vmatprep.mubr.f32.mxu0 0.0
      %2342 = vmatmul.mubr.f32.gmra.mrb[0].mxu0 %v898
      %v2343 = vpop.f32.mrb[0].mxu0
      %v2344 = vadd.f32 0.0, %v2343
      %v2345 = vpop.f32.mrb[0].mxu0
      %2346 = vmatprep.mubr.f32.mxu0 0.0
      %2347 = vmatmul.mubr.f32.gmra.mrb[0].mxu0 %v901
      %v2348 = vpop.f32.mrb[0].mxu0
      %v2349 = vadd.f32 0.0, %v2348
      %v2350 = vpop.f32.mrb[0].mxu0
      %2351 = vmatprep.mubr.f32.mxu0 0.0
      %2352 = vmatmul.mubr.f32.gmra.mrb[0].mxu0 %v904
      %v2353 = vpop.f32.mrb[0].mxu0
      %v2354 = vadd.f32 0.0, %v2353
      %v2355 = vpop.f32.mrb[0].mxu0
      %2356 = vmatprep.mubr.f32.mxu0 0.0
      %2357 = vmatmul.mubr.f32.gmra.mrb[0].mxu0 %v907
      %v2358 = vpop.f32.mrb[0].mxu0
      %v2359 = vadd.f32 0.0, %v2358
      %v2360 = vpop.f32.mrb[0].mxu0
      %2361 = vmatprep.mubr.f32.mxu0 0.0
      %2362 = vmatmul.mubr.f32.gmra.mrb[0].mxu0 %v910
      %v2363 = vpop.f32.mrb[0].mxu0
      %v2364 = vadd.f32 0.0, %v2363
      %v2365 = vpop.f32.mrb[0].mxu0
      %2366 = vmatprep.mubr.f32.mxu0 0.0
      %2367 = vmatmul.mubr.f32.gmra.mrb[0].mxu0 %v913
      %v2368 = vpop.f32.mrb[0].mxu0
      %v2369 = vadd.f32 0.0, %v2368
      %v2370 = vpop.f32.mrb[0].mxu0
      %2371 = vmatprep.mubr.f32.mxu0 0.0
      %2372 = vmatmul.mubr.f32.gmra.mrb[0].mxu0 %v916
      %v2373 = vpop.f32.mrb[0].mxu0
      %v2374 = vadd.f32 0.0, %v2373
      %v2375 = vpop.f32.mrb[0].mxu0
      %2376 = vmatprep.mubr.f32.mxu0 0.0
      %2377 = vmatmul.mubr.f32.gmra.mrb[0].mxu0 %v919
      %v2378 = vpop.f32.mrb[0].mxu0
      %v2379 = vadd.f32 0.0, %v2378
      %v2380 = vpop.f32.mrb[0].mxu0
      %2381 = vmatprep.mubr.f32.mxu0 0.0
      %2382 = vmatmul.mubr.f32.gmra.mrb[0].mxu0 %v922
      %v2383 = vpop.f32.mrb[0].mxu0
      %v2384 = vadd.f32 0.0, %v2383
      %v2385 = vpop.f32.mrb[0].mxu0
      %2386 = vmatprep.mubr.f32.mxu0 0.0
      %2387 = vmatmul.mubr.f32.gmra.mrb[0].mxu0 %v925
      %v2388 = vpop.f32.mrb[0].mxu0
      %v2389 = vadd.f32 0.0, %v2388
      %v2390 = vpop.f32.mrb[0].mxu0
      %2391 = vmatprep.mubr.f32.mxu0 0.0
      %2392 = vmatmul.mubr.f32.gmra.mrb[0].mxu0 %v928
      %v2393 = vpop.f32.mrb[0].mxu0
      %v2394 = vadd.f32 0.0, %v2393
      %v2395 = vpop.f32.mrb[0].mxu0
      %2396 = vmatprep.mubr.f32.mxu0 0.0
      %2397 = vmatmul.mubr.f32.gmra.mrb[0].mxu0 %v931
      %v2398 = vpop.f32.mrb[0].mxu0
      %v2399 = vadd.f32 0.0, %v2398
      %v2400 = vpop.f32.mrb[0].mxu0
      %2401 = vmatprep.mubr.f32.mxu0 0.0
      %2402 = vmatmul.mubr.f32.gmra.mrb[0].mxu0 %v934
      %v2403 = vpop.f32.mrb[0].mxu0
      %v2404 = vadd.f32 0.0, %v2403
      %v2405 = vpop.f32.mrb[0].mxu0
      %2406 = vmatprep.mubr.f32.mxu0 0.0
      %2407 = vmatmul.mubr.f32.gmra.mrb[0].mxu0 %v937
      %v2408 = vpop.f32.mrb[0].mxu0
      %v2409 = vadd.f32 0.0, %v2408
      %v2410 = vpop.f32.mrb[0].mxu0
      %2411 = vmatprep.mubr.f32.mxu0 0.0
      %2412 = vmatmul.mubr.f32.gmra.mrb[0].mxu0 %v940
      %v2413 = vpop.f32.mrb[0].mxu0
      %v2414 = vadd.f32 0.0, %v2413
      %v2415 = vpop.f32.mrb[0].mxu0
      %2416 = vmatprep.mubr.f32.mxu0 0.0
      %2417 = vmatmul.mubr.f32.gmra.mrb[0].mxu0 %v943
      %v2418 = vpop.f32.mrb[0].mxu0
      %v2419 = vadd.f32 0.0, %v2418
      %v2420 = vpop.f32.mrb[0].mxu0
      %2421 = vmatprep.mubr.f32.mxu0 0.0
      %2422 = vmatmul.mubr.f32.gmra.mrb[0].mxu0 %v946
      %v2423 = vpop.f32.mrb[0].mxu0
      %v2424 = vadd.f32 0.0, %v2423
      %v2425 = vpop.f32.mrb[0].mxu0
      %2426 = vmatprep.mubr.f32.mxu0 0.0
      %2427 = vmatmul.mubr.f32.gmra.mrb[0].mxu0 %v949
      %v2428 = vpop.f32.mrb[0].mxu0
      %v2429 = vadd.f32 0.0, %v2428
      %v2430 = vpop.f32.mrb[0].mxu0
      %2431 = vmatprep.mubr.f32.mxu0 0.0
      %2432 = vmatmul.mubr.f32.gmra.mrb[0].mxu0 %v952
      %v2433 = vpop.f32.mrb[0].mxu0
      %v2434 = vadd.f32 0.0, %v2433
      %v2435 = vpop.f32.mrb[0].mxu0
      %2436 = vmatprep.mubr.f32.mxu0 0.0
      %2437 = vmatmul.mubr.f32.gmra.mrb[0].mxu0 %v955
      %v2438 = vpop.f32.mrb[0].mxu0
      %v2439 = vadd.f32 0.0, %v2438
      %v2440 = vpop.f32.mrb[0].mxu0
      %2441 = vmatprep.mubr.f32.mxu0 0.0
      %2442 = vmatmul.mubr.f32.gmra.mrb[0].mxu0 %v958
      %v2443 = vpop.f32.mrb[0].mxu0
      %v2444 = vadd.f32 0.0, %v2443
      %v2445 = vpop.f32.mrb[0].mxu0
      %2446 = vmatprep.mubr.f32.mxu0 0.0
      %2447 = vmatmul.mubr.f32.gmra.mrb[0].mxu0 %v961
      %v2448 = vpop.f32.mrb[0].mxu0
      %v2449 = vadd.f32 0.0, %v2448
      %v2450 = vpop.f32.mrb[0].mxu0
      %2451 = vmatprep.mubr.f32.mxu0 0.0
      %2452 = vmatmul.mubr.f32.gmra.mrb[0].mxu0 %v964
      %v2453 = vpop.f32.mrb[0].mxu0
      %v2454 = vadd.f32 0.0, %v2453
      %v2455 = vpop.f32.mrb[0].mxu0
      %2456 = vmatprep.mubr.f32.mxu0 0.0
      %2457 = vmatmul.mubr.f32.gmra.mrb[0].mxu0 %v967
      %v2458 = vpop.f32.mrb[0].mxu0
      %v2459 = vadd.f32 0.0, %v2458
      %v2460 = vpop.f32.mrb[0].mxu0
      %2461 = vmatprep.mubr.f32.mxu0 0.0
      %2462 = vmatmul.mubr.f32.gmra.mrb[0].mxu0 %v970
      %v2463 = vpop.f32.mrb[0].mxu0
      %v2464 = vadd.f32 0.0, %v2463
      %v2465 = vpop.f32.mrb[0].mxu0
      %2466 = vmatprep.mubr.f32.mxu0 0.0
      %2467 = vmatmul.mubr.f32.gmra.mrb[0].mxu0 %v973
      %v2468 = vpop.f32.mrb[0].mxu0
      %v2469 = vadd.f32 0.0, %v2468
      %v2470 = vpop.f32.mrb[0].mxu0
      %2471 = vmatprep.mubr.f32.mxu0 0.0
      %2472 = vmatmul.mubr.f32.gmra.mrb[0].mxu0 %v976
      %v2473 = vpop.f32.mrb[0].mxu0
      %v2474 = vadd.f32 0.0, %v2473
      %v2475 = vpop.f32.mrb[0].mxu0
      %2476 = vmatprep.mubr.f32.mxu0 0.0
      %2477 = vmatmul.mubr.f32.gmra.mrb[0].mxu0 %v979
      %v2478 = vpop.f32.mrb[0].mxu0
      %v2479 = vadd.f32 0.0, %v2478
      %v2480 = vpop.f32.mrb[0].mxu0
      %2481 = vmatprep.mubr.f32.mxu0 0.0
      %2482 = vmatmul.mubr.f32.gmra.mrb[0].mxu0 %v982
      %v2483 = vpop.f32.mrb[0].mxu0
      %v2484 = vadd.f32 0.0, %v2483
      %v2485 = vpop.f32.mrb[0].mxu0
      %2486 = vmatprep.mubr.f32.mxu0 0.0
      %2487 = vmatmul.mubr.f32.gmra.mrb[0].mxu0 %v985
      %v2488 = vpop.f32.mrb[0].mxu0
      %v2489 = vadd.f32 0.0, %v2488
      %v2490 = vpop.f32.mrb[0].mxu0
      %2491 = vmatprep.mubr.f32.mxu0 0.0
      %2492 = vmatmul.mubr.f32.gmra.mrb[0].mxu0 %v988
      %v2493 = vpop.f32.mrb[0].mxu0
      %v2494 = vadd.f32 0.0, %v2493
      %v2495 = vpop.f32.mrb[0].mxu0
      %2496 = vmatprep.mubr.f32.mxu0 0.0
      %2497 = vmatmul.mubr.f32.gmra.mrb[0].mxu0 %v991
      %v2498 = vpop.f32.mrb[0].mxu0
      %v2499 = vadd.f32 0.0, %v2498
      %v2500 = vpop.f32.mrb[0].mxu0
      %2501 = vmatprep.mubr.f32.mxu0 0.0
      %2502 = vmatmul.mubr.f32.gmra.mrb[0].mxu0 %v994
      %v2503 = vpop.f32.mrb[0].mxu0
      %v2504 = vadd.f32 0.0, %v2503
      %v2505 = vpop.f32.mrb[0].mxu0
      %2506 = vmatprep.mubr.f32.mxu0 0.0
      %2507 = vmatmul.mubr.f32.gmra.mrb[0].mxu0 %v997
      %v2508 = vpop.f32.mrb[0].mxu0
      %v2509 = vadd.f32 0.0, %v2508
      %v2510 = vpop.f32.mrb[0].mxu0
      %2511 = vmatprep.mubr.f32.mxu0 0.0
      %2512 = vmatmul.mubr.f32.gmra.mrb[0].mxu0 %v1000
      %v2513 = vpop.f32.mrb[0].mxu0
      %v2514 = vadd.f32 0.0, %v2513
      %v2515 = vpop.f32.mrb[0].mxu0
      %2516 = vmatprep.mubr.f32.mxu0 0.0
      %2517 = vmatmul.mubr.f32.gmra.mrb[0].mxu0 %v1003
      %v2518 = vpop.f32.mrb[0].mxu0
      %v2519 = vadd.f32 0.0, %v2518
      %v2520 = vpop.f32.mrb[0].mxu0
      %2521 = vmatprep.mubr.f32.mxu0 0.0
      %2522 = vmatmul.mubr.f32.gmra.mrb[0].mxu0 %v1006
      %v2523 = vpop.f32.mrb[0].mxu0
      %v2524 = vadd.f32 0.0, %v2523
      %v2525 = vpop.f32.mrb[0].mxu0
      %2526 = vmatprep.mubr.f32.mxu0 0.0
      %2527 = vmatmul.mubr.f32.gmra.mrb[0].mxu0 %v1009
      %v2528 = vpop.f32.mrb[0].mxu0
      %v2529 = vadd.f32 0.0, %v2528
      %v2530 = vpop.f32.mrb[0].mxu0
      %2531 = vmatprep.mubr.f32.mxu0 0.0
      %2532 = vmatmul.mubr.f32.gmra.mrb[0].mxu0 %v1012
      %v2533 = vpop.f32.mrb[0].mxu0
      %v2534 = vadd.f32 0.0, %v2533
      %v2535 = vpop.f32.mrb[0].mxu0
      %2536 = vmatprep.mubr.f32.mxu0 0.0
      %2537 = vmatmul.mubr.f32.gmra.mrb[0].mxu0 %v1015
      %v2538 = vpop.f32.mrb[0].mxu0
      %v2539 = vadd.f32 0.0, %v2538
      %v2540 = vpop.f32.mrb[0].mxu0
      %2541 = vmatprep.mubr.f32.mxu0 0.0
      %2542 = vmatmul.mubr.f32.gmra.mrb[0].mxu0 %v1018
      %v2543 = vpop.f32.mrb[0].mxu0
      %v2544 = vadd.f32 0.0, %v2543
      %v2545 = vpop.f32.mrb[0].mxu0
      %2546 = vmatprep.mubr.f32.mxu0 0.0
      %2547 = vmatmul.mubr.f32.gmra.mrb[0].mxu0 %v1021
      %v2548 = vpop.f32.mrb[0].mxu0
      %v2549 = vadd.f32 0.0, %v2548
      %v2550 = vpop.f32.mrb[0].mxu0
      %2551 = vmatprep.mubr.f32.mxu0 0.0
      %2552 = vmatmul.mubr.f32.gmra.mrb[0].mxu0 %v1024
      %v2553 = vpop.f32.mrb[0].mxu0
      %v2554 = vadd.f32 0.0, %v2553
      %v2555 = vpop.f32.mrb[0].mxu0
      %2556 = vmatprep.mubr.f32.mxu0 0.0
      %2557 = vmatmul.mubr.f32.gmra.mrb[0].mxu0 %v1027
      %v2558 = vpop.f32.mrb[0].mxu0
      %v2559 = vadd.f32 0.0, %v2558
      %v2560 = vpop.f32.mrb[0].mxu0
      %2561 = vmatprep.mubr.f32.mxu0 0.0
      %2562 = vmatmul.mubr.f32.gmra.mrb[0].mxu0 %v1030
      %v2563 = vpop.f32.mrb[0].mxu0
      %v2564 = vadd.f32 0.0, %v2563
      %v2565 = vpop.f32.mrb[0].mxu0
      %2566 = vmatprep.mubr.f32.mxu0 0.0
      %2567 = vmatmul.mubr.f32.gmra.mrb[0].mxu0 %v1033
      %v2568 = vpop.f32.mrb[0].mxu0
      %v2569 = vadd.f32 0.0, %v2568
      %v2570 = vpop.f32.mrb[0].mxu0
      %2571 = vmatprep.mubr.f32.mxu0 0.0
      %2572 = vmatmul.mubr.f32.gmra.mrb[0].mxu0 %v1036
      %v2573 = vpop.f32.mrb[0].mxu0
      %v2574 = vadd.f32 0.0, %v2573
      %v2575 = vpop.f32.mrb[0].mxu0
      %2576 = vmatprep.mubr.f32.mxu0 0.0
      %2577 = vmatmul.mubr.f32.gmra.mrb[0].mxu0 %v1039
      %v2578 = vpop.f32.mrb[0].mxu0
      %v2579 = vadd.f32 0.0, %v2578
      %v2580 = vpop.f32.mrb[0].mxu0
      %2581 = vmatprep.mubr.f32.mxu0 0.0
      %2582 = vmatmul.mubr.f32.gmra.mrb[0].mxu0 %v1042
      %v2583 = vpop.f32.mrb[0].mxu0
      %v2584 = vadd.f32 0.0, %v2583
      %v2585 = vpop.f32.mrb[0].mxu0
      %2586 = vmatprep.mubr.f32.mxu0 0.0
      %2587 = vmatmul.mubr.f32.gmra.mrb[0].mxu0 %v1045
      %v2588 = vpop.f32.mrb[0].mxu0
      %v2589 = vadd.f32 0.0, %v2588
      %v2590 = vpop.f32.mrb[0].mxu0
      %2591 = vmatprep.mubr.f32.mxu0 0.0
      %2592 = vmatmul.mubr.f32.gmra.mrb[0].mxu0 %v1048
      %v2593 = vpop.f32.mrb[0].mxu0
      %v2594 = vadd.f32 0.0, %v2593
      %v2595 = vpop.f32.mrb[0].mxu0
      %2596 = vmatprep.mubr.f32.mxu0 0.0
      %2597 = vmatmul.mubr.f32.gmra.mrb[0].mxu0 %v1051
      %v2598 = vpop.f32.mrb[0].mxu0
      %v2599 = vadd.f32 0.0, %v2598
      %v2600 = vpop.f32.mrb[0].mxu0
      %2601 = vmatprep.mubr.f32.mxu0 0.0
      %2602 = vmatmul.mubr.f32.gmra.mrb[0].mxu0 %v1054
      %v2603 = vpop.f32.mrb[0].mxu0
      %v2604 = vadd.f32 0.0, %v2603
      %v2605 = vpop.f32.mrb[0].mxu0
      %2606 = vmatprep.mubr.f32.mxu0 0.0
      %2607 = vmatmul.mubr.f32.gmra.mrb[0].mxu0 %v1057
      %v2608 = vpop.f32.mrb[0].mxu0
      %v2609 = vadd.f32 0.0, %v2608
      %v2610 = vpop.f32.mrb[0].mxu0
      %2611 = vmatprep.mubr.f32.mxu0 0.0
      %2612 = vmatmul.mubr.f32.gmra.mrb[0].mxu0 %v1060
      %v2613 = vpop.f32.mrb[0].mxu0
      %v2614 = vadd.f32 0.0, %v2613
      %v2615 = vpop.f32.mrb[0].mxu0
      %2616 = vmatprep.mubr.f32.mxu0 0.0
      %2617 = vmatmul.mubr.f32.gmra.mrb[0].mxu0 %v1063
      %v2618 = vpop.f32.mrb[0].mxu0
      %v2619 = vadd.f32 0.0, %v2618
      %v2620 = vpop.f32.mrb[0].mxu0
      %2621 = vmatprep.mubr.f32.mxu0 0.0
      %2622 = vmatmul.mubr.f32.gmra.mrb[0].mxu0 %v1066
      %v2623 = vpop.f32.mrb[0].mxu0
      %v2624 = vadd.f32 0.0, %v2623
      %v2625 = vpop.f32.mrb[0].mxu0
      %2626 = vmatprep.mubr.f32.mxu0 0.0
      %2627 = vmatmul.mubr.f32.gmra.mrb[0].mxu0 %v1069
      %v2628 = vpop.f32.mrb[0].mxu0
      %v2629 = vadd.f32 0.0, %v2628
      %v2630 = vpop.f32.mrb[0].mxu0
      %2631 = vmatprep.mubr.f32.mxu0 0.0
      %2632 = vmatmul.mubr.f32.gmra.mrb[0].mxu0 %v1072
      %v2633 = vpop.f32.mrb[0].mxu0
      %v2634 = vadd.f32 0.0, %v2633
      %v2635 = vpop.f32.mrb[0].mxu0
      %2636 = vmatprep.mubr.f32.mxu0 0.0
      %2637 = vmatmul.mubr.f32.gmra.mrb[0].mxu0 %v1075
      %v2638 = vpop.f32.mrb[0].mxu0
      %v2639 = vadd.f32 0.0, %v2638
      %v2640 = vpop.f32.mrb[0].mxu0
      %2641 = vmatprep.mubr.f32.mxu0 0.0
      %2642 = vmatmul.mubr.f32.gmra.mrb[0].mxu0 %v1078
      %v2643 = vpop.f32.mrb[0].mxu0
      %v2644 = vadd.f32 0.0, %v2643
      %v2645 = vpop.f32.mrb[0].mxu0
      %2646 = vmatprep.mubr.f32.mxu0 0.0
      %2647 = vmatmul.mubr.f32.gmra.mrb[0].mxu0 %v1081
      %v2648 = vpop.f32.mrb[0].mxu0
      %v2649 = vadd.f32 0.0, %v2648
      %v2650 = vpop.f32.mrb[0].mxu0
      %2651 = vmatprep.mubr.f32.mxu0 0.0
      %2652 = vmatmul.mubr.f32.gmra.mrb[0].mxu0 %v1084
      %v2653 = vpop.f32.mrb[0].mxu0
      %v2654 = vadd.f32 0.0, %v2653
      %v2655 = vpop.f32.mrb[0].mxu0
      %2656 = vmatprep.mubr.f32.mxu0 0.0
      %2657 = vmatmul.mubr.f32.gmra.mrb[0].mxu0 %v1087
      %v2658 = vpop.f32.mrb[0].mxu0
      %v2659 = vadd.f32 0.0, %v2658
      %v2660 = vpop.f32.mrb[0].mxu0
      %2661 = vmatprep.mubr.f32.mxu0 0.0
      %2662 = vmatmul.mubr.f32.gmra.mrb[0].mxu0 %v1090
      %v2663 = vpop.f32.mrb[0].mxu0
      %v2664 = vadd.f32 0.0, %v2663
      %v2665 = vpop.f32.mrb[0].mxu0
      %2666 = vmatprep.mubr.f32.mxu0 0.0
      %2667 = vmatmul.mubr.f32.gmra.mrb[0].mxu0 %v1093
      %v2668 = vpop.f32.mrb[0].mxu0
      %v2669 = vadd.f32 0.0, %v2668
      %v2670 = vpop.f32.mrb[0].mxu0
      %2671 = vmatprep.mubr.f32.mxu0 0.0
      %2672 = vmatmul.mubr.f32.gmra.mrb[0].mxu0 %v1096
      %v2673 = vpop.f32.mrb[0].mxu0
      %v2674 = vadd.f32 0.0, %v2673
      %v2675 = vpop.f32.mrb[0].mxu0
      %2676 = vmatprep.mubr.f32.mxu0 0.0
      %2677 = vmatmul.mubr.f32.gmra.mrb[0].mxu0 %v1099
      %v2678 = vpop.f32.mrb[0].mxu0
      %v2679 = vadd.f32 0.0, %v2678
      %v2680 = vpop.f32.mrb[0].mxu0
      %2681 = vmatprep.mubr.f32.mxu0 0.0
      %2682 = vmatmul.mubr.f32.gmra.mrb[0].mxu0 %v1102
      %v2683 = vpop.f32.mrb[0].mxu0
      %v2684 = vadd.f32 0.0, %v2683
      %v2685 = vpop.f32.mrb[0].mxu0
      %2686 = vmatprep.mubr.f32.mxu0 0.0
      %2687 = vmatmul.mubr.f32.gmra.mrb[0].mxu0 %v1105
      %v2688 = vpop.f32.mrb[0].mxu0
      %v2689 = vadd.f32 0.0, %v2688
      %v2690 = vpop.f32.mrb[0].mxu0
      %2691 = vmatprep.mubr.f32.mxu0 0.0
      %2692 = vmatmul.mubr.f32.gmra.mrb[0].mxu0 %v1108
      %v2693 = vpop.f32.mrb[0].mxu0
      %v2694 = vadd.f32 0.0, %v2693
      %v2695 = vpop.f32.mrb[0].mxu0
      %2696 = vmatprep.mubr.f32.mxu0 0.0
      %2697 = vmatmul.mubr.f32.gmra.mrb[0].mxu0 %v1111
      %v2698 = vpop.f32.mrb[0].mxu0
      %v2699 = vadd.f32 0.0, %v2698
      %v2700 = vpop.f32.mrb[0].mxu0
      %2701 = vmatprep.mubr.f32.mxu0 0.0
      %2702 = vmatmul.mubr.f32.gmra.mrb[0].mxu0 %v1114
      %v2703 = vpop.f32.mrb[0].mxu0
      %v2704 = vadd.f32 0.0, %v2703
      %v2705 = vpop.f32.mrb[0].mxu0
      %2706 = vmatprep.mubr.f32.mxu0 0.0
      %2707 = vmatmul.mubr.f32.gmra.mrb[0].mxu0 %v1117
      %v2708 = vpop.f32.mrb[0].mxu0
      %v2709 = vadd.f32 0.0, %v2708
      %v2710 = vpop.f32.mrb[0].mxu0
      %2711 = vmatprep.mubr.f32.mxu0 0.0
      %2712 = vmatmul.mubr.f32.gmra.mrb[0].mxu0 %v1120
      %v2713 = vpop.f32.mrb[0].mxu0
      %v2714 = vadd.f32 0.0, %v2713
      %v2715 = vpop.f32.mrb[0].mxu0
      %2716 = vmatprep.mubr.f32.mxu0 0.0
      %2717 = vmatmul.mubr.f32.gmra.mrb[0].mxu0 %v1123
      %v2718 = vpop.f32.mrb[0].mxu0
      %v2719 = vadd.f32 0.0, %v2718
      %v2720 = vpop.f32.mrb[0].mxu0
      %2721 = vmatprep.mubr.f32.mxu0 0.0
      %2722 = vmatmul.mubr.f32.gmra.mrb[0].mxu0 %v1126
      %v2723 = vpop.f32.mrb[0].mxu0
      %v2724 = vadd.f32 0.0, %v2723
      %v2725 = vpop.f32.mrb[0].mxu0
      %2726 = vmatprep.mubr.f32.mxu0 0.0
      %2727 = vmatmul.mubr.f32.gmra.mrb[0].mxu0 %v1129
      %v2728 = vpop.f32.mrb[0].mxu0
      %v2729 = vadd.f32 0.0, %v2728
      %v2730 = vpop.f32.mrb[0].mxu0
      %2731 = vmatprep.mubr.f32.mxu0 0.0
      %2732 = vmatmul.mubr.f32.gmra.mrb[0].mxu0 %v1132
      %v2733 = vpop.f32.mrb[0].mxu0
      %v2734 = vadd.f32 0.0, %v2733
      %v2735 = vpop.f32.mrb[0].mxu0
      %2736 = vmatprep.mubr.f32.mxu0 0.0
      %2737 = vmatmul.mubr.f32.gmra.mrb[0].mxu0 %v1135
      %v2738 = vpop.f32.mrb[0].mxu0
      %v2739 = vadd.f32 0.0, %v2738
      %v2740 = vpop.f32.mrb[0].mxu0
      %2741 = vmatprep.mubr.f32.mxu0 0.0
      %2742 = vmatmul.mubr.f32.gmra.mrb[0].mxu0 %v1138
      %v2743 = vpop.f32.mrb[0].mxu0
      %v2744 = vadd.f32 0.0, %v2743
      %v2745 = vpop.f32.mrb[0].mxu0
      %2746 = vmatprep.mubr.f32.mxu0 0.0
      %2747 = vmatmul.mubr.f32.gmra.mrb[0].mxu0 %v1141
      %v2748 = vpop.f32.mrb[0].mxu0
      %v2749 = vadd.f32 0.0, %v2748
      %v2750 = vpop.f32.mrb[0].mxu0
      %2751 = vmatprep.mubr.f32.mxu0 0.0
      %2752 = vmatmul.mubr.f32.gmra.mrb[0].mxu0 %v1144
      %v2753 = vpop.f32.mrb[0].mxu0
      %v2754 = vadd.f32 0.0, %v2753
      %v2755 = vpop.f32.mrb[0].mxu0
      %2756 = vmatprep.mubr.f32.mxu0 0.0
      %2757 = vmatmul.mubr.f32.gmra.mrb[0].mxu0 %v1147
      %v2758 = vpop.f32.mrb[0].mxu0
      %v2759 = vadd.f32 0.0, %v2758
      %v2760 = vpop.f32.mrb[0].mxu0
      %2761 = vmatprep.mubr.f32.mxu0 0.0
      %2762 = vmatmul.mubr.f32.gmra.mrb[0].mxu0 %v1150
      %v2763 = vpop.f32.mrb[0].mxu0
      %v2764 = vadd.f32 0.0, %v2763
      %v2765 = vpop.f32.mrb[0].mxu0
      %2766 = vmatprep.mubr.f32.mxu0 0.0
      %2767 = vmatmul.mubr.f32.gmra.mrb[0].mxu0 %v1153
      %v2768 = vpop.f32.mrb[0].mxu0
      %v2769 = vadd.f32 0.0, %v2768
      %v2770 = vpop.f32.mrb[0].mxu0
      %2771 = vmatprep.mubr.f32.mxu0 0.0
      %2772 = vmatmul.mubr.f32.gmra.mrb[0].mxu0 %v1156
      %v2773 = vpop.f32.mrb[0].mxu0
      %v2774 = vadd.f32 0.0, %v2773
      %v2775 = vpop.f32.mrb[0].mxu0
      %2776 = vmatprep.mubr.f32.mxu0 0.0
      %2777 = vmatmul.mubr.f32.gmra.mrb[0].mxu0 %v1159
      %v2778 = vpop.f32.mrb[0].mxu0
      %v2779 = vadd.f32 0.0, %v2778
      %v2780 = vpop.f32.mrb[0].mxu0
      %2781 = vmatprep.mubr.f32.mxu0 0.0
      %2782 = vmatmul.mubr.f32.gmra.mrb[0].mxu0 %v1162
      %v2783 = vpop.f32.mrb[0].mxu0
      %v2784 = vadd.f32 0.0, %v2783
      %v2785 = vpop.f32.mrb[0].mxu0
      %2786 = vmatprep.mubr.f32.mxu0 0.0
      %2787 = vmatmul.mubr.f32.gmra.mrb[0].mxu0 %v1165
      %v2788 = vpop.f32.mrb[0].mxu0
      %v2789 = vadd.f32 0.0, %v2788
      %v2790 = vpop.f32.mrb[0].mxu0
      %2791 = vmatprep.mubr.f32.mxu0 0.0
      %2792 = vmatmul.mubr.f32.gmra.mrb[0].mxu0 %v1168
      %v2793 = vpop.f32.mrb[0].mxu0
      %v2794 = vadd.f32 0.0, %v2793
      %v2795 = vpop.f32.mrb[0].mxu0
      %2796 = vmatprep.mubr.f32.mxu0 0.0
      %2797 = vmatmul.mubr.f32.gmra.mrb[0].mxu0 %v1171
      %v2798 = vpop.f32.mrb[0].mxu0
      %v2799 = vadd.f32 0.0, %v2798
      %v2800 = vpop.f32.mrb[0].mxu0
      %2801 = vmatprep.mubr.f32.mxu0 0.0
      %2802 = vmatmul.mubr.f32.gmra.mrb[0].mxu0 %v1174
      %v2803 = vpop.f32.mrb[0].mxu0
      %v2804 = vadd.f32 0.0, %v2803
      %v2805 = vpop.f32.mrb[0].mxu0
      %2806 = vmatprep.mubr.f32.mxu0 0.0
      %2807 = vmatmul.mubr.f32.gmra.mrb[0].mxu0 %v1177
      %v2808 = vpop.f32.mrb[0].mxu0
      %v2809 = vadd.f32 0.0, %v2808
      %v2810 = vpop.f32.mrb[0].mxu0
      %2811 = vmatprep.mubr.f32.mxu0 0.0
      %2812 = vmatmul.mubr.f32.gmra.mrb[0].mxu0 %v1180
      %v2813 = vpop.f32.mrb[0].mxu0
      %v2814 = vadd.f32 0.0, %v2813
      %v2815 = vpop.f32.mrb[0].mxu0
      %2816 = vmatprep.mubr.f32.mxu0 0.0
      %2817 = vmatmul.mubr.f32.gmra.mrb[0].mxu0 %v1183
      %v2818 = vpop.f32.mrb[0].mxu0
      %v2819 = vadd.f32 0.0, %v2818
      %v2820 = vpop.f32.mrb[0].mxu0
      %2821 = vmatprep.mubr.f32.mxu0 0.0
      %2822 = vmatmul.mubr.f32.gmra.mrb[0].mxu0 %v1186
      %v2823 = vpop.f32.mrb[0].mxu0
      %v2824 = vadd.f32 0.0, %v2823
      %v2825 = vpop.f32.mrb[0].mxu0
      %2826 = vmatprep.mubr.f32.mxu0 0.0
      %2827 = vmatmul.mubr.f32.gmra.mrb[0].mxu0 %v1189
      %v2828 = vpop.f32.mrb[0].mxu0
      %v2829 = vadd.f32 0.0, %v2828
      %v2830 = vpop.f32.mrb[0].mxu0
      %2831 = vmatprep.mubr.f32.mxu0 0.0
      %2832 = vmatmul.mubr.f32.gmra.mrb[0].mxu0 %v1192
      %v2833 = vpop.f32.mrb[0].mxu0
      %v2834 = vadd.f32 0.0, %v2833
      %v2835 = vpop.f32.mrb[0].mxu0
      %2836 = vmatprep.mubr.f32.mxu0 0.0
      %2837 = vmatmul.mubr.f32.gmra.mrb[0].mxu0 %v1195
      %v2838 = vpop.f32.mrb[0].mxu0
      %v2839 = vadd.f32 0.0, %v2838
      %v2840 = vpop.f32.mrb[0].mxu0
      %2841 = vmatprep.mubr.f32.mxu0 0.0
      %2842 = vmatmul.mubr.f32.gmra.mrb[0].mxu0 %v1198
      %v2843 = vpop.f32.mrb[0].mxu0
      %v2844 = vadd.f32 0.0, %v2843
      %v2845 = vpop.f32.mrb[0].mxu0
      %2846 = vmatprep.mubr.f32.mxu0 0.0
      %2847 = vmatmul.mubr.f32.gmra.mrb[0].mxu0 %v1201
      %v2848 = vpop.f32.mrb[0].mxu0
      %v2849 = vadd.f32 0.0, %v2848
      %v2850 = vpop.f32.mrb[0].mxu0
      %2851 = vmatprep.mubr.f32.mxu0 0.0
      %2852 = vmatmul.mubr.f32.gmra.mrb[0].mxu0 %v1204
      %v2853 = vpop.f32.mrb[0].mxu0
      %v2854 = vadd.f32 0.0, %v2853
      %v2855 = vpop.f32.mrb[0].mxu0
      %2856 = vmatprep.mubr.f32.mxu0 0.0
      %2857 = vmatmul.mubr.f32.gmra.mrb[0].mxu0 %v1207
      %v2858 = vpop.f32.mrb[0].mxu0
      %v2859 = vadd.f32 0.0, %v2858
      %v2860 = vpop.f32.mrb[0].mxu0
      %2861 = vmatprep.mubr.f32.mxu0 0.0
      %2862 = vmatmul.mubr.f32.gmra.mrb[0].mxu0 %v1210
      %v2863 = vpop.f32.mrb[0].mxu0
      %v2864 = vadd.f32 0.0, %v2863
      %v2865 = vpop.f32.mrb[0].mxu0
      %2866 = vmatprep.mubr.f32.mxu0 0.0
      %2867 = vmatmul.mubr.f32.gmra.mrb[0].mxu0 %v1213
      %v2868 = vpop.f32.mrb[0].mxu0
      %v2869 = vadd.f32 0.0, %v2868
      %v2870 = vpop.f32.mrb[0].mxu0
      %2871 = vmatprep.mubr.f32.mxu0 0.0
      %2872 = vmatmul.mubr.f32.gmra.mrb[0].mxu0 %v1216
      %v2873 = vpop.f32.mrb[0].mxu0
      %v2874 = vadd.f32 0.0, %v2873
      %v2875 = vpop.f32.mrb[0].mxu0
      %2876 = vmatprep.mubr.f32.mxu0 0.0
      %2877 = vmatmul.mubr.f32.gmra.mrb[0].mxu0 %v1219
      %v2878 = vpop.f32.mrb[0].mxu0
      %v2879 = vadd.f32 0.0, %v2878
      %v2880 = vpop.f32.mrb[0].mxu0
      %2881 = vmatprep.mubr.f32.mxu0 0.0
      %2882 = vmatmul.mubr.f32.gmra.mrb[0].mxu0 %v1222
      %v2883 = vpop.f32.mrb[0].mxu0
      %v2884 = vadd.f32 0.0, %v2883
      %v2885 = vpop.f32.mrb[0].mxu0
      %2886 = vmatprep.mubr.f32.mxu0 0.0
      %2887 = vmatmul.mubr.f32.gmra.mrb[0].mxu0 %v1225
      %v2888 = vpop.f32.mrb[0].mxu0
      %v2889 = vadd.f32 0.0, %v2888
      %v2890 = vpop.f32.mrb[0].mxu0
      %2891 = vmatprep.mubr.f32.mxu0 0.0
      %2892 = vmatmul.mubr.f32.gmra.mrb[0].mxu0 %v1228
      %v2893 = vpop.f32.mrb[0].mxu0
      %v2894 = vadd.f32 0.0, %v2893
      %v2895 = vpop.f32.mrb[0].mxu0
      %2896 = vmatprep.mubr.f32.mxu0 0.0
      %2897 = vmatmul.mubr.f32.gmra.mrb[0].mxu0 %v1231
      %v2898 = vpop.f32.mrb[0].mxu0
      %v2899 = vadd.f32 0.0, %v2898
      %v2900 = vpop.f32.mrb[0].mxu0
      %2901 = vmatprep.mubr.f32.mxu0 0.0
      %2902 = vmatmul.mubr.f32.gmra.mrb[0].mxu0 %v1234
      %v2903 = vpop.f32.mrb[0].mxu0
      %v2904 = vadd.f32 0.0, %v2903
      %v2905 = vpop.f32.mrb[0].mxu0
      %2906 = vmatprep.mubr.f32.mxu0 0.0
      %2907 = vmatmul.mubr.f32.gmra.mrb[0].mxu0 %v1237
      %v2908 = vpop.f32.mrb[0].mxu0
      %v2909 = vadd.f32 0.0, %v2908
      %v2910 = vpop.f32.mrb[0].mxu0
      %2911 = vmatprep.mubr.f32.mxu0 0.0
      %2912 = vmatmul.mubr.f32.gmra.mrb[0].mxu0 %v1240
      %v2913 = vpop.f32.mrb[0].mxu0
      %v2914 = vadd.f32 0.0, %v2913
      %v2915 = vpop.f32.mrb[0].mxu0
      %2916 = vmatprep.mubr.f32.mxu0 0.0
      %2917 = vmatmul.mubr.f32.gmra.mrb[0].mxu0 %v1243
      %v2918 = vpop.f32.mrb[0].mxu0
      %v2919 = vadd.f32 0.0, %v2918
      %v2920 = vpop.f32.mrb[0].mxu0
      %2921 = vmatprep.mubr.f32.mxu0 0.0
      %2922 = vmatmul.mubr.f32.gmra.mrb[0].mxu0 %v1246
      %v2923 = vpop.f32.mrb[0].mxu0
      %v2924 = vadd.f32 0.0, %v2923
      %v2925 = vpop.f32.mrb[0].mxu0
      %2926 = vmatprep.mubr.f32.mxu0 0.0
      %2927 = vmatmul.mubr.f32.gmra.mrb[0].mxu0 %v1249
      %v2928 = vpop.f32.mrb[0].mxu0
      %v2929 = vadd.f32 0.0, %v2928
      %v2930 = vpop.f32.mrb[0].mxu0
      %2931 = vmatprep.mubr.f32.mxu0 0.0
      %2932 = vmatmul.mubr.f32.gmra.mrb[0].mxu0 %v1252
      %v2933 = vpop.f32.mrb[0].mxu0
      %v2934 = vadd.f32 0.0, %v2933
      %v2935 = vpop.f32.mrb[0].mxu0
      %2936 = vmatprep.mubr.f32.mxu0 0.0
      %2937 = vmatmul.mubr.f32.gmra.mrb[0].mxu0 %v1255
      %v2938 = vpop.f32.mrb[0].mxu0
      %v2939 = vadd.f32 0.0, %v2938
      %v2940 = vpop.f32.mrb[0].mxu0
      %2941 = vmatprep.mubr.f32.mxu0 0.0
      %2942 = vmatmul.mubr.f32.gmra.mrb[0].mxu0 %v1258
      %v2943 = vpop.f32.mrb[0].mxu0
      %v2944 = vadd.f32 0.0, %v2943
      %v2945 = vpop.f32.mrb[0].mxu0
      %2946 = vmatprep.mubr.f32.mxu0 0.0
      %2947 = vmatmul.mubr.f32.gmra.mrb[0].mxu0 %v1261
      %v2948 = vpop.f32.mrb[0].mxu0
      %v2949 = vadd.f32 0.0, %v2948
      %v2950 = vpop.f32.mrb[0].mxu0
      %2951 = vmatprep.mubr.f32.mxu0 0.0
      %2952 = vmatmul.mubr.f32.gmra.mrb[0].mxu0 %v1264
      %v2953 = vpop.f32.mrb[0].mxu0
      %v2954 = vadd.f32 0.0, %v2953
      %v2955 = vpop.f32.mrb[0].mxu0
      %2956 = vmatprep.mubr.f32.mxu0 0.0
      %2957 = vmatmul.mubr.f32.gmra.mrb[0].mxu0 %v1267
      %v2958 = vpop.f32.mrb[0].mxu0
      %v2959 = vadd.f32 0.0, %v2958
      %v2960 = vpop.f32.mrb[0].mxu0
      %2961 = vmatprep.mubr.f32.mxu0 0.0
      %2962 = vmatmul.mubr.f32.gmra.mrb[0].mxu0 %v1270
      %v2963 = vpop.f32.mrb[0].mxu0
      %v2964 = vadd.f32 0.0, %v2963
      %v2965 = vpop.f32.mrb[0].mxu0
      %2966 = vmatprep.mubr.f32.mxu0 0.0
      %2967 = vmatmul.mubr.f32.gmra.mrb[0].mxu0 %v1273
      %v2968 = vpop.f32.mrb[0].mxu0
      %v2969 = vadd.f32 0.0, %v2968
      %v2970 = vpop.f32.mrb[0].mxu0
      %2971 = vmatprep.mubr.f32.mxu0 0.0
      %2972 = vmatmul.mubr.f32.gmra.mrb[0].mxu0 %v1276
      %v2973 = vpop.f32.mrb[0].mxu0
      %v2974 = vadd.f32 0.0, %v2973
      %v2975 = vpop.f32.mrb[0].mxu0
      %2976 = vmatprep.mubr.f32.mxu0 0.0
      %2977 = vmatmul.mubr.f32.gmra.mrb[0].mxu0 %v1279
      %v2978 = vpop.f32.mrb[0].mxu0
      %v2979 = vadd.f32 0.0, %v2978
      %v2980 = vpop.f32.mrb[0].mxu0
      %2981 = vmatprep.mubr.f32.mxu0 0.0
      %2982 = vmatmul.mubr.f32.gmra.mrb[0].mxu0 %v1282
      %v2983 = vpop.f32.mrb[0].mxu0
      %v2984 = vadd.f32 0.0, %v2983
      %v2985 = vpop.f32.mrb[0].mxu0
      %2986 = vmatprep.mubr.f32.mxu0 0.0
      %2987 = vmatmul.mubr.f32.gmra.mrb[0].mxu0 %v1285
      %v2988 = vpop.f32.mrb[0].mxu0
      %v2989 = vadd.f32 0.0, %v2988
      %v2990 = vpop.f32.mrb[0].mxu0
      %2991 = vmatprep.mubr.f32.mxu0 0.0
      %2992 = vmatmul.mubr.f32.gmra.mrb[0].mxu0 %v1288
      %v2993 = vpop.f32.mrb[0].mxu0
      %v2994 = vadd.f32 0.0, %v2993
      %v2995 = vpop.f32.mrb[0].mxu0
      %2996 = vmatprep.mubr.f32.mxu0 0.0
      %2997 = vmatmul.mubr.f32.gmra.mrb[0].mxu0 %v1291
      %v2998 = vpop.f32.mrb[0].mxu0
      %v2999 = vadd.f32 0.0, %v2998
      %v3000 = vpop.f32.mrb[0].mxu0
      %3001 = vmatprep.mubr.f32.mxu0 0.0
      %3002 = vmatmul.mubr.f32.gmra.mrb[0].mxu0 %v1294
      %v3003 = vpop.f32.mrb[0].mxu0
      %v3004 = vadd.f32 0.0, %v3003
      %v3005 = vpop.f32.mrb[0].mxu0
      %3006 = vmatprep.mubr.f32.mxu0 0.0
      %3007 = vmatmul.mubr.f32.gmra.mrb[0].mxu0 %v1297
      %v3008 = vpop.f32.mrb[0].mxu0
      %v3009 = vadd.f32 0.0, %v3008
      %v3010 = vpop.f32.mrb[0].mxu0
      %3011 = vmatprep.mubr.f32.mxu0 0.0
      %3012 = vmatmul.mubr.f32.gmra.mrb[0].mxu0 %v1300
      %v3013 = vpop.f32.mrb[0].mxu0
      %v3014 = vadd.f32 0.0, %v3013
      %v3015 = vpop.f32.mrb[0].mxu0
      %3016 = vmatprep.mubr.f32.mxu0 0.0
      %3017 = vmatmul.mubr.f32.gmra.mrb[0].mxu0 %v1303
      %v3018 = vpop.f32.mrb[0].mxu0
      %v3019 = vadd.f32 0.0, %v3018
      %v3020 = vpop.f32.mrb[0].mxu0
      %3021 = vmatprep.mubr.f32.mxu0 0.0
      %3022 = vmatmul.mubr.f32.gmra.mrb[0].mxu0 %v1306
      %v3023 = vpop.f32.mrb[0].mxu0
      %v3024 = vadd.f32 0.0, %v3023
      %v3025 = vpop.f32.mrb[0].mxu0
      %3026 = vmatprep.mubr.f32.mxu0 0.0
      %3027 = vmatmul.mubr.f32.gmra.mrb[0].mxu0 %v1309
      %v3028 = vpop.f32.mrb[0].mxu0
      %v3029 = vadd.f32 0.0, %v3028
      %v3030 = vpop.f32.mrb[0].mxu0
      %3031 = vmatprep.mubr.f32.mxu0 0.0
      %3032 = vmatmul.mubr.f32.gmra.mrb[0].mxu0 %v1312
      %v3033 = vpop.f32.mrb[0].mxu0
      %v3034 = vadd.f32 0.0, %v3033
      %v3035 = vpop.f32.mrb[0].mxu0
      %3036 = vmatprep.mubr.f32.mxu0 0.0
      %3037 = vmatmul.mubr.f32.gmra.mrb[0].mxu0 %v1315
      %v3038 = vpop.f32.mrb[0].mxu0
      %v3039 = vadd.f32 0.0, %v3038
      %v3040 = vpop.f32.mrb[0].mxu0
      %3041 = vmatprep.mubr.f32.mxu0 0.0
      %3042 = vmatmul.mubr.f32.gmra.mrb[0].mxu0 %v1318
      %v3043 = vpop.f32.mrb[0].mxu0
      %v3044 = vadd.f32 0.0, %v3043
      %v3045 = vpop.f32.mrb[0].mxu0
      %3046 = vmatprep.mubr.f32.mxu0 0.0
      %3047 = vmatmul.mubr.f32.gmra.mrb[0].mxu0 %v1321
      %v3048 = vpop.f32.mrb[0].mxu0
      %v3049 = vadd.f32 0.0, %v3048
      %v3050 = vpop.f32.mrb[0].mxu0
      %3051 = vmatprep.mubr.f32.mxu0 0.0
      %3052 = vmatmul.mubr.f32.gmra.mrb[0].mxu0 %v1324
      %v3053 = vpop.f32.mrb[0].mxu0
      %v3054 = vadd.f32 0.0, %v3053
      %v3055 = vpop.f32.mrb[0].mxu0
      %3056 = vmatprep.mubr.f32.mxu0 0.0
      %3057 = vmatmul.mubr.f32.gmra.mrb[0].mxu0 %v1327
      %v3058 = vpop.f32.mrb[0].mxu0
      %v3059 = vadd.f32 0.0, %v3058
      %v3060 = vpop.f32.mrb[0].mxu0
      %3061 = vmatprep.mubr.f32.mxu0 0.0
      %3062 = vmatmul.mubr.f32.gmra.mrb[0].mxu0 %v1330
      %v3063 = vpop.f32.mrb[0].mxu0
      %v3064 = vadd.f32 0.0, %v3063
      %v3065 = vpop.f32.mrb[0].mxu0
      %3066 = vmatprep.mubr.f32.mxu0 0.0
      %3067 = vmatmul.mubr.f32.gmra.mrb[0].mxu0 %v1333
      %v3068 = vpop.f32.mrb[0].mxu0
      %v3069 = vadd.f32 0.0, %v3068
      %v3070 = vpop.f32.mrb[0].mxu0
      %3071 = vmatprep.mubr.f32.mxu0 0.0
      %3072 = vmatmul.mubr.f32.gmra.mrb[0].mxu0 %v1336
      %v3073 = vpop.f32.mrb[0].mxu0
      %v3074 = vadd.f32 0.0, %v3073
      %v3075 = vpop.f32.mrb[0].mxu0
      %3076 = vmatprep.mubr.f32.mxu0 0.0
      %3077 = vmatmul.mubr.f32.gmra.mrb[0].mxu0 %v1339
      %v3078 = vpop.f32.mrb[0].mxu0
      %v3079 = vadd.f32 0.0, %v3078
      %v3080 = vpop.f32.mrb[0].mxu0
      %3081 = vmatprep.mubr.f32.mxu0 0.0
      %3082 = vmatmul.mubr.f32.gmra.mrb[0].mxu0 %v1342
      %v3083 = vpop.f32.mrb[0].mxu0
      %v3084 = vadd.f32 0.0, %v3083
      %v3085 = vpop.f32.mrb[0].mxu0
      %3086 = vmatprep.mubr.f32.mxu0 0.0
      %3087 = vmatmul.mubr.f32.gmra.mrb[0].mxu0 %v1345
      %v3088 = vpop.f32.mrb[0].mxu0
      %v3089 = vadd.f32 0.0, %v3088
      %v3090 = vpop.f32.mrb[0].mxu0
      %3091 = vmatprep.mubr.f32.mxu0 0.0
      %3092 = vmatmul.mubr.f32.gmra.mrb[0].mxu0 %v1348
      %v3093 = vpop.f32.mrb[0].mxu0
      %v3094 = vadd.f32 0.0, %v3093
      %v3095 = vpop.f32.mrb[0].mxu0
      %3096 = vmatprep.mubr.f32.mxu0 0.0
      %3097 = vmatmul.mubr.f32.gmra.mrb[0].mxu0 %v1351
      %v3098 = vpop.f32.mrb[0].mxu0
      %v3099 = vadd.f32 0.0, %v3098
      %v3100 = vpop.f32.mrb[0].mxu0
      %3101 = vmatprep.mubr.f32.mxu0 0.0
      %3102 = vmatmul.mubr.f32.gmra.mrb[0].mxu0 %v1354
      %v3103 = vpop.f32.mrb[0].mxu0
      %v3104 = vadd.f32 0.0, %v3103
      %v3105 = vpop.f32.mrb[0].mxu0
      %3106 = vmatprep.mubr.f32.mxu0 0.0
      %3107 = vmatmul.mubr.f32.gmra.mrb[0].mxu0 %v1357
      %v3108 = vpop.f32.mrb[0].mxu0
      %v3109 = vadd.f32 0.0, %v3108
      %v3110 = vpop.f32.mrb[0].mxu0
      %3111 = vmatprep.mubr.f32.mxu0 0.0
      %3112 = vmatmul.mubr.f32.gmra.mrb[0].mxu0 %v1360
      %v3113 = vpop.f32.mrb[0].mxu0
      %v3114 = vadd.f32 0.0, %v3113
      %v3115 = vpop.f32.mrb[0].mxu0
      %3116 = vmatprep.mubr.f32.mxu0 0.0
      %3117 = vmatmul.mubr.f32.gmra.mrb[0].mxu0 %v1363
      %v3118 = vpop.f32.mrb[0].mxu0
      %v3119 = vadd.f32 0.0, %v3118
      %v3120 = vpop.f32.mrb[0].mxu0
      %3121 = vmatprep.mubr.f32.mxu0 0.0
      %3122 = vmatmul.mubr.f32.gmra.mrb[0].mxu0 %v1366
      %v3123 = vpop.f32.mrb[0].mxu0
      %v3124 = vadd.f32 0.0, %v3123
      %v3125 = vpop.f32.mrb[0].mxu0
      %3126 = vmatprep.mubr.f32.mxu0 0.0
      %3127 = vmatmul.mubr.f32.gmra.mrb[0].mxu0 %v1369
      %v3128 = vpop.f32.mrb[0].mxu0
      %v3129 = vadd.f32 0.0, %v3128
      %v3130 = vpop.f32.mrb[0].mxu0
      %3131 = vmatprep.mubr.f32.mxu0 0.0
      %3132 = vmatmul.mubr.f32.gmra.mrb[0].mxu0 %v1372
      %v3133 = vpop.f32.mrb[0].mxu0
      %v3134 = vadd.f32 0.0, %v3133
      %v3135 = vpop.f32.mrb[0].mxu0
      %3136 = vmatprep.mubr.f32.mxu0 0.0
      %3137 = vmatmul.mubr.f32.gmra.mrb[0].mxu0 %v1375
      %v3138 = vpop.f32.mrb[0].mxu0
      %v3139 = vadd.f32 0.0, %v3138
      %v3140 = vpop.f32.mrb[0].mxu0
      %3141 = vmatprep.mubr.f32.mxu0 0.0
      %3142 = vmatmul.mubr.f32.gmra.mrb[0].mxu0 %v1378
      %v3143 = vpop.f32.mrb[0].mxu0
      %v3144 = vadd.f32 0.0, %v3143
      %v3145 = vpop.f32.mrb[0].mxu0
      %3146 = vmatprep.mubr.f32.mxu0 0.0
      %3147 = vmatmul.mubr.f32.gmra.mrb[0].mxu0 %v1381
      %v3148 = vpop.f32.mrb[0].mxu0
      %v3149 = vadd.f32 0.0, %v3148
      %v3150 = vpop.f32.mrb[0].mxu0
      %3151 = vmatprep.mubr.f32.mxu0 0.0
      %3152 = vmatmul.mubr.f32.gmra.mrb[0].mxu0 %v1384
      %v3153 = vpop.f32.mrb[0].mxu0
      %v3154 = vadd.f32 0.0, %v3153
      %v3155 = vpop.f32.mrb[0].mxu0
      %3156 = vmatprep.mubr.f32.mxu0 0.0
      %3157 = vmatmul.mubr.f32.gmra.mrb[0].mxu0 %v1387
      %v3158 = vpop.f32.mrb[0].mxu0
      %v3159 = vadd.f32 0.0, %v3158
      %v3160 = vpop.f32.mrb[0].mxu0
      %3161 = vmatprep.mubr.f32.mxu0 0.0
      %3162 = vmatmul.mubr.f32.gmra.mrb[0].mxu0 %v1390
      %v3163 = vpop.f32.mrb[0].mxu0
      %v3164 = vadd.f32 0.0, %v3163
      %v3165 = vpop.f32.mrb[0].mxu0
      %3166 = vmatprep.mubr.f32.mxu0 0.0
      %3167 = vmatmul.mubr.f32.gmra.mrb[0].mxu0 %v1393
      %v3168 = vpop.f32.mrb[0].mxu0
      %v3169 = vadd.f32 0.0, %v3168
      %v3170 = vpop.f32.mrb[0].mxu0
      %3171 = vmatprep.mubr.f32.mxu0 0.0
      %3172 = vmatmul.mubr.f32.gmra.mrb[0].mxu0 %v1396
      %v3173 = vpop.f32.mrb[0].mxu0
      %v3174 = vadd.f32 0.0, %v3173
      %v3175 = vpop.f32.mrb[0].mxu0
      %3176 = vmatprep.mubr.f32.mxu0 0.0
      %3177 = vmatmul.mubr.f32.gmra.mrb[0].mxu0 %v1399
      %v3178 = vpop.f32.mrb[0].mxu0
      %v3179 = vadd.f32 0.0, %v3178
      %v3180 = vpop.f32.mrb[0].mxu0
      %3181 = vmatprep.mubr.f32.mxu0 0.0
      %3182 = vmatmul.mubr.f32.gmra.mrb[0].mxu0 %v1402
      %v3183 = vpop.f32.mrb[0].mxu0
      %v3184 = vadd.f32 0.0, %v3183
      %v3185 = vpop.f32.mrb[0].mxu0
      %3186 = vmatprep.mubr.f32.mxu0 0.0
      %3187 = vmatmul.mubr.f32.gmra.mrb[0].mxu0 %v1405
      %v3188 = vpop.f32.mrb[0].mxu0
      %v3189 = vadd.f32 0.0, %v3188
      %v3190 = vpop.f32.mrb[0].mxu0
      %3191 = vmatprep.mubr.f32.mxu0 0.0
      %3192 = vmatmul.mubr.f32.gmra.mrb[0].mxu0 %v1408
      %v3193 = vpop.f32.mrb[0].mxu0
      %v3194 = vadd.f32 0.0, %v3193
      %v3195 = vpop.f32.mrb[0].mxu0
      %3196 = vmatprep.mubr.f32.mxu0 0.0
      %3197 = vmatmul.mubr.f32.gmra.mrb[0].mxu0 %v1411
      %v3198 = vpop.f32.mrb[0].mxu0
      %v3199 = vadd.f32 0.0, %v3198
      %v3200 = vpop.f32.mrb[0].mxu0
      %3201 = vmatprep.mubr.f32.mxu0 0.0
      %3202 = vmatmul.mubr.f32.gmra.mrb[0].mxu0 %v1414
      %v3203 = vpop.f32.mrb[0].mxu0
      %v3204 = vadd.f32 0.0, %v3203
      %v3205 = vpop.f32.mrb[0].mxu0
      %3206 = vmatprep.mubr.f32.mxu0 0.0
      %3207 = vmatmul.mubr.f32.gmra.mrb[0].mxu0 %v1417
      %v3208 = vpop.f32.mrb[0].mxu0
      %v3209 = vadd.f32 0.0, %v3208
      %v3210 = vpop.f32.mrb[0].mxu0
      %3211 = vmatprep.mubr.f32.mxu0 0.0
      %3212 = vmatmul.mubr.f32.gmra.mrb[0].mxu0 %v1420
      %v3213 = vpop.f32.mrb[0].mxu0
      %v3214 = vadd.f32 0.0, %v3213
      %v3215 = vpop.f32.mrb[0].mxu0
      %3216 = vmatprep.mubr.f32.mxu0 0.0
      %3217 = vmatmul.mubr.f32.gmra.mrb[0].mxu0 %v1423
      %v3218 = vpop.f32.mrb[0].mxu0
      %v3219 = vadd.f32 0.0, %v3218
      %v3220 = vpop.f32.mrb[0].mxu0
      %3221 = vmatprep.mubr.f32.mxu0 0.0
      %3222 = vmatmul.mubr.f32.gmra.mrb[0].mxu0 %v1426
      %v3223 = vpop.f32.mrb[0].mxu0
      %v3224 = vadd.f32 0.0, %v3223
      %v3225 = vpop.f32.mrb[0].mxu0
      %3226 = vmatprep.mubr.f32.mxu0 0.0
      %3227 = vmatmul.mubr.f32.gmra.mrb[0].mxu0 %v1429
      %v3228 = vpop.f32.mrb[0].mxu0
      %v3229 = vadd.f32 0.0, %v3228
      %v3230 = vpop.f32.mrb[0].mxu0
      %3231 = vmatprep.mubr.f32.mxu0 0.0
      %3232 = vmatmul.mubr.f32.gmra.mrb[0].mxu0 %v1432
      %v3233 = vpop.f32.mrb[0].mxu0
      %v3234 = vadd.f32 0.0, %v3233
      %v3235 = vpop.f32.mrb[0].mxu0
      %3236 = vmatprep.mubr.f32.mxu0 0.0
      %3237 = vmatmul.mubr.f32.gmra.mrb[0].mxu0 %v1435
      %v3238 = vpop.f32.mrb[0].mxu0
      %v3239 = vadd.f32 0.0, %v3238
      %v3240 = vpop.f32.mrb[0].mxu0
      %3241 = vmatprep.mubr.f32.mxu0 0.0
      %3242 = vmatmul.mubr.f32.gmra.mrb[0].mxu0 %v1438
      %v3243 = vpop.f32.mrb[0].mxu0
      %v3244 = vadd.f32 0.0, %v3243
      %v3245 = vpop.f32.mrb[0].mxu0
      %3246 = vmatprep.mubr.f32.mxu0 0.0
      %3247 = vmatmul.mubr.f32.gmra.mrb[0].mxu0 %v1441
      %v3248 = vpop.f32.mrb[0].mxu0
      %v3249 = vadd.f32 0.0, %v3248
      %v3250 = vpop.f32.mrb[0].mxu0
      %3251 = vmatprep.mubr.f32.mxu0 0.0
      %3252 = vmatmul.mubr.f32.gmra.mrb[0].mxu0 %v1444
      %v3253 = vpop.f32.mrb[0].mxu0
      %v3254 = vadd.f32 0.0, %v3253
      %v3255 = vpop.f32.mrb[0].mxu0
      %3256 = vmatprep.mubr.f32.mxu0 0.0
      %3257 = vmatmul.mubr.f32.gmra.mrb[0].mxu0 %v1447
      %v3258 = vpop.f32.mrb[0].mxu0
      %v3259 = vadd.f32 0.0, %v3258
      %v3260 = vpop.f32.mrb[0].mxu0
      %3261 = vmatprep.mubr.f32.mxu0 0.0
      %3262 = vmatmul.mubr.f32.gmra.mrb[0].mxu0 %v1450
      %v3263 = vpop.f32.mrb[0].mxu0
      %v3264 = vadd.f32 0.0, %v3263
      %v3265 = vpop.f32.mrb[0].mxu0
      %3266 = vmatprep.mubr.f32.mxu0 0.0
      %3267 = vmatmul.mubr.f32.gmra.mrb[0].mxu0 %v1453
      %v3268 = vpop.f32.mrb[0].mxu0
      %v3269 = vadd.f32 0.0, %v3268
      %v3270 = vpop.f32.mrb[0].mxu0
      %3271 = vmatprep.mubr.f32.mxu0 0.0
      %3272 = vmatmul.mubr.f32.gmra.mrb[0].mxu0 %v1456
      %v3273 = vpop.f32.mrb[0].mxu0
      %v3274 = vadd.f32 0.0, %v3273
      %v3275 = vpop.f32.mrb[0].mxu0
      %3276 = vmatprep.mubr.f32.mxu0 0.0
      %3277 = vmatmul.mubr.f32.gmra.mrb[0].mxu0 %v1459
      %v3278 = vpop.f32.mrb[0].mxu0
      %v3279 = vadd.f32 0.0, %v3278
      %v3280 = vpop.f32.mrb[0].mxu0
      %3281 = vmatprep.mubr.f32.mxu0 0.0
      %3282 = vmatmul.mubr.f32.gmra.mrb[0].mxu0 %v1462
      %v3283 = vpop.f32.mrb[0].mxu0
      %v3284 = vadd.f32 0.0, %v3283
      %v3285 = vpop.f32.mrb[0].mxu0
      %3286 = vmatprep.mubr.f32.mxu0 0.0
      %3287 = vmatmul.mubr.f32.gmra.mrb[0].mxu0 %v1465
      %v3288 = vpop.f32.mrb[0].mxu0
      %v3289 = vadd.f32 0.0, %v3288
      %v3290 = vpop.f32.mrb[0].mxu0
      %3291 = vmatprep.mubr.f32.mxu0 0.0
      %3292 = vmatmul.mubr.f32.gmra.mrb[0].mxu0 %v1468
      %v3293 = vpop.f32.mrb[0].mxu0
      %v3294 = vadd.f32 0.0, %v3293
      %v3295 = vpop.f32.mrb[0].mxu0
      %3296 = vmatprep.mubr.f32.mxu0 0.0
      %3297 = vmatmul.mubr.f32.gmra.mrb[0].mxu0 %v1471
      %v3298 = vpop.f32.mrb[0].mxu0
      %v3299 = vadd.f32 0.0, %v3298
      %v3300 = vpop.f32.mrb[0].mxu0
      %3301 = vmatprep.mubr.f32.mxu0 0.0
      %3302 = vmatmul.mubr.f32.gmra.mrb[0].mxu0 %v1474
      %v3303 = vpop.f32.mrb[0].mxu0
      %v3304 = vadd.f32 0.0, %v3303
      %v3305 = vpop.f32.mrb[0].mxu0
      %3306 = vmatprep.mubr.f32.mxu0 0.0
      %3307 = vmatmul.mubr.f32.gmra.mrb[0].mxu0 %v1477
      %v3308 = vpop.f32.mrb[0].mxu0
      %v3309 = vadd.f32 0.0, %v3308
      %v3310 = vpop.f32.mrb[0].mxu0
      %3311 = vmatprep.mubr.f32.mxu0 0.0
      %3312 = vmatmul.mubr.f32.gmra.mrb[0].mxu0 %v1480
      %v3313 = vpop.f32.mrb[0].mxu0
      %v3314 = vadd.f32 0.0, %v3313
      %v3315 = vpop.f32.mrb[0].mxu0
      %3316 = vmatprep.mubr.f32.mxu0 0.0
      %3317 = vmatmul.mubr.f32.gmra.mrb[0].mxu0 %v1483
      %v3318 = vpop.f32.mrb[0].mxu0
      %v3319 = vadd.f32 0.0, %v3318
      %v3320 = vpop.f32.mrb[0].mxu0
      %3321 = vmatprep.mubr.f32.mxu0 0.0
      %3322 = vmatmul.mubr.f32.gmra.mrb[0].mxu0 %v1486
      %v3323 = vpop.f32.mrb[0].mxu0
      %v3324 = vadd.f32 0.0, %v3323
      %v3325 = vpop.f32.mrb[0].mxu0
      %3326 = vmatprep.mubr.f32.mxu0 0.0
      %3327 = vmatmul.mubr.f32.gmra.mrb[0].mxu0 %v1489
      %v3328 = vpop.f32.mrb[0].mxu0
      %v3329 = vadd.f32 0.0, %v3328
      %v3330 = vpop.f32.mrb[0].mxu0
      %3331 = vmatprep.mubr.f32.mxu0 0.0
      %3332 = vmatmul.mubr.f32.gmra.mrb[0].mxu0 %v1492
      %v3333 = vpop.f32.mrb[0].mxu0
      %v3334 = vadd.f32 0.0, %v3333
      %v3335 = vpop.f32.mrb[0].mxu0
      %3336 = vmatprep.mubr.f32.mxu0 0.0
      %3337 = vmatmul.mubr.f32.gmra.mrb[0].mxu0 %v1495
      %v3338 = vpop.f32.mrb[0].mxu0
      %v3339 = vadd.f32 0.0, %v3338
      %v3340 = vpop.f32.mrb[0].mxu0
      %3341 = vmatprep.mubr.f32.mxu0 0.0
      %3342 = vmatmul.mubr.f32.gmra.mrb[0].mxu0 %v1498
      %v3343 = vpop.f32.mrb[0].mxu0
      %v3344 = vadd.f32 0.0, %v3343
      %v3345 = vpop.f32.mrb[0].mxu0
      %3346 = vmatprep.mubr.f32.mxu0 0.0
      %3347 = vmatmul.mubr.f32.gmra.mrb[0].mxu0 %v1501
      %v3348 = vpop.f32.mrb[0].mxu0
      %v3349 = vadd.f32 0.0, %v3348
      %v3350 = vpop.f32.mrb[0].mxu0
      %3351 = vmatprep.mubr.f32.mxu0 0.0
      %3352 = vmatmul.mubr.f32.gmra.mrb[0].mxu0 %v1504
      %v3353 = vpop.f32.mrb[0].mxu0
      %v3354 = vadd.f32 0.0, %v3353
      %v3355 = vpop.f32.mrb[0].mxu0
      %3356 = vmatprep.mubr.f32.mxu0 0.0
      %3357 = vmatmul.mubr.f32.gmra.mrb[0].mxu0 %v1507
      %v3358 = vpop.f32.mrb[0].mxu0
      %v3359 = vadd.f32 0.0, %v3358
      %v3360 = vpop.f32.mrb[0].mxu0
      %3361 = vmatprep.mubr.f32.mxu0 0.0
      %3362 = vmatmul.mubr.f32.gmra.mrb[0].mxu0 %v1510
      %v3363 = vpop.f32.mrb[0].mxu0
      %v3364 = vadd.f32 0.0, %v3363
      %v3365 = vpop.f32.mrb[0].mxu0
      %3366 = vmatprep.mubr.f32.mxu0 0.0
      %3367 = vmatmul.mubr.f32.gmra.mrb[0].mxu0 %v1513
      %v3368 = vpop.f32.mrb[0].mxu0
      %v3369 = vadd.f32 0.0, %v3368
      %v3370 = vpop.f32.mrb[0].mxu0
      %3371 = vmatprep.mubr.f32.mxu0 0.0
      %3372 = vmatmul.mubr.f32.gmra.mrb[0].mxu0 %v1516
      %v3373 = vpop.f32.mrb[0].mxu0
      %v3374 = vadd.f32 0.0, %v3373
      %v3375 = vpop.f32.mrb[0].mxu0
      %3376 = vmatprep.mubr.f32.mxu0 0.0
      %3377 = vmatmul.mubr.f32.gmra.mrb[0].mxu0 %v1519
      %v3378 = vpop.f32.mrb[0].mxu0
      %v3379 = vadd.f32 0.0, %v3378
      %v3380 = vpop.f32.mrb[0].mxu0
      %3381 = vmatprep.mubr.f32.mxu0 0.0
      %3382 = vmatmul.mubr.f32.gmra.mrb[0].mxu0 %v1522
      %v3383 = vpop.f32.mrb[0].mxu0
      %v3384 = vadd.f32 0.0, %v3383
      %v3385 = vpop.f32.mrb[0].mxu0
      %3386 = vmatprep.mubr.f32.mxu0 0.0
      %3387 = vmatmul.mubr.f32.gmra.mrb[0].mxu0 %v1525
      %v3388 = vpop.f32.mrb[0].mxu0
      %v3389 = vadd.f32 0.0, %v3388
      %v3390 = vpop.f32.mrb[0].mxu0
      %3391 = vmatprep.mubr.f32.mxu0 0.0
      %3392 = vmatmul.mubr.f32.gmra.mrb[0].mxu0 %v1528
      %v3393 = vpop.f32.mrb[0].mxu0
      %v3394 = vadd.f32 0.0, %v3393
      %v3395 = vpop.f32.mrb[0].mxu0
      %3396 = vmatprep.mubr.f32.mxu0 0.0
      %3397 = vmatmul.mubr.f32.gmra.mrb[0].mxu0 %v1531
      %v3398 = vpop.f32.mrb[0].mxu0
      %v3399 = vadd.f32 0.0, %v3398
      %v3400 = vpop.f32.mrb[0].mxu0
      %3401 = vmatprep.mubr.f32.mxu0 0.0
      %3402 = vmatmul.mubr.f32.gmra.mrb[0].mxu0 %v1534
      %v3403 = vpop.f32.mrb[0].mxu0
      %v3404 = vadd.f32 0.0, %v3403
      %v3405 = vpop.f32.mrb[0].mxu0
      %3406 = vmatprep.mubr.f32.mxu0 0.0
      %3407 = vmatmul.mubr.f32.gmra.mrb[0].mxu0 %v1537
      %v3408 = vpop.f32.mrb[0].mxu0
      %v3409 = vadd.f32 0.0, %v3408
      %v3410 = vpop.f32.mrb[0].mxu0
      %3411 = vmatprep.mubr.f32.mxu0 0.0
      %3412 = vmatmul.mubr.f32.gmra.mrb[0].mxu0 %v1540
      %v3413 = vpop.f32.mrb[0].mxu0
      %v3414 = vadd.f32 0.0, %v3413
      %v3415 = vpop.f32.mrb[0].mxu0
      %3416 = vmatprep.mubr.f32.mxu0 0.0
      %3417 = vmatmul.mubr.f32.gmra.mrb[0].mxu0 %v1543
      %v3418 = vpop.f32.mrb[0].mxu0
      %v3419 = vadd.f32 0.0, %v3418
      %v3420 = vpop.f32.mrb[0].mxu0
      %3421 = vmatprep.mubr.f32.mxu0 0.0
      %3422 = vmatmul.mubr.f32.gmra.mrb[0].mxu0 %v1546
      %v3423 = vpop.f32.mrb[0].mxu0
      %v3424 = vadd.f32 0.0, %v3423
      %v3425 = vpop.f32.mrb[0].mxu0
      %3426 = vmatprep.mubr.f32.mxu0 0.0
      %3427 = vmatmul.mubr.f32.gmra.mrb[0].mxu0 %v1549
      %v3428 = vpop.f32.mrb[0].mxu0
      %v3429 = vadd.f32 0.0, %v3428
      %v3430 = vpop.f32.mrb[0].mxu0
      %3431 = vmatprep.mubr.f32.mxu0 0.0
      %3432 = vmatmul.mubr.f32.gmra.mrb[0].mxu0 %v1552
      %v3433 = vpop.f32.mrb[0].mxu0
      %v3434 = vadd.f32 0.0, %v3433
      %v3435 = vpop.f32.mrb[0].mxu0
      %3436 = vmatprep.mubr.f32.mxu0 0.0
      %3437 = vmatmul.mubr.f32.gmra.mrb[0].mxu0 %v1555
      %v3438 = vpop.f32.mrb[0].mxu0
      %v3439 = vadd.f32 0.0, %v3438
      %v3440 = vpop.f32.mrb[0].mxu0
      %3441 = vmatprep.mubr.f32.mxu0 0.0
      %3442 = vmatmul.mubr.f32.gmra.mrb[0].mxu0 %v1558
      %v3443 = vpop.f32.mrb[0].mxu0
      %v3444 = vadd.f32 0.0, %v3443
      %v3445 = vpop.f32.mrb[0].mxu0
      %3446 = vmatprep.mubr.f32.mxu0 0.0
      %3447 = vmatmul.mubr.f32.gmra.mrb[0].mxu0 %v1561
      %v3448 = vpop.f32.mrb[0].mxu0
      %v3449 = vadd.f32 0.0, %v3448
      %v3450 = vpop.f32.mrb[0].mxu0
      %3451 = vmatprep.mubr.f32.mxu0 0.0
      %3452 = vmatmul.mubr.f32.gmra.mrb[0].mxu0 %v1564
      %v3453 = vpop.f32.mrb[0].mxu0
      %v3454 = vadd.f32 0.0, %v3453
      %v3455 = vpop.f32.mrb[0].mxu0
      %3456 = vmatprep.mubr.f32.mxu0 0.0
      %3457 = vmatmul.mubr.f32.gmra.mrb[0].mxu0 %v1567
      %v3458 = vpop.f32.mrb[0].mxu0
      %v3459 = vadd.f32 0.0, %v3458
      %v3460 = vpop.f32.mrb[0].mxu0
      %3461 = vmatprep.mubr.f32.mxu0 0.0
      %3462 = vmatmul.mubr.f32.gmra.mrb[0].mxu0 %v1570
      %v3463 = vpop.f32.mrb[0].mxu0
      %v3464 = vadd.f32 0.0, %v3463
      %v3465 = vpop.f32.mrb[0].mxu0
      %3466 = vmatprep.mubr.f32.mxu0 0.0
      %3467 = vmatmul.mubr.f32.gmra.mrb[0].mxu0 %v1573
      %v3468 = vpop.f32.mrb[0].mxu0
      %v3469 = vadd.f32 0.0, %v3468
      %v3470 = vpop.f32.mrb[0].mxu0
      %3471 = vmatprep.mubr.f32.mxu0 0.0
      %3472 = vmatmul.mubr.f32.gmra.mrb[0].mxu0 %v1576
      %v3473 = vpop.f32.mrb[0].mxu0
      %v3474 = vadd.f32 0.0, %v3473
      %v3475 = vpop.f32.mrb[0].mxu0
      %3476 = vmatprep.mubr.f32.mxu0 0.0
      %3477 = vmatmul.mubr.f32.gmra.mrb[0].mxu0 %v1579
      %v3478 = vpop.f32.mrb[0].mxu0
      %v3479 = vadd.f32 0.0, %v3478
      %v3480 = vpop.f32.mrb[0].mxu0
      %3481 = vmatprep.mubr.f32.mxu0 0.0
      %3482 = vmatmul.mubr.f32.gmra.mrb[0].mxu0 %v1582
      %v3483 = vpop.f32.mrb[0].mxu0
      %v3484 = vadd.f32 0.0, %v3483
      %v3485 = vpop.f32.mrb[0].mxu0
      %3486 = vmatprep.mubr.f32.mxu0 0.0
      %3487 = vmatmul.mubr.f32.gmra.mrb[0].mxu0 %v1585
      %v3488 = vpop.f32.mrb[0].mxu0
      %v3489 = vadd.f32 0.0, %v3488
      %v3490 = vpop.f32.mrb[0].mxu0
      %3491 = vmatprep.mubr.f32.mxu0 0.0
      %3492 = vmatmul.mubr.f32.gmra.mrb[0].mxu0 %v1588
      %v3493 = vpop.f32.mrb[0].mxu0
      %v3494 = vadd.f32 0.0, %v3493
      %v3495 = vpop.f32.mrb[0].mxu0
      %3496 = vmatprep.mubr.f32.mxu0 0.0
      %3497 = vmatmul.mubr.f32.gmra.mrb[0].mxu0 %v1591
      %v3498 = vpop.f32.mrb[0].mxu0
      %v3499 = vadd.f32 0.0, %v3498
      %v3500 = vpop.f32.mrb[0].mxu0
      %3501 = vmatprep.mubr.f32.mxu0 0.0
      %3502 = vmatmul.mubr.f32.gmra.mrb[0].mxu0 %v1594
      %v3503 = vpop.f32.mrb[0].mxu0
      %v3504 = vadd.f32 0.0, %v3503
      %v3505 = vpop.f32.mrb[0].mxu0
      %3506 = vmatprep.mubr.f32.mxu0 0.0
      %3507 = vmatmul.mubr.f32.gmra.mrb[0].mxu0 %v1597
      %v3508 = vpop.f32.mrb[0].mxu0
      %v3509 = vadd.f32 0.0, %v3508
      %v3510 = vpop.f32.mrb[0].mxu0
      %3511 = vmatprep.mubr.f32.mxu0 0.0
      %3512 = vmatmul.mubr.f32.gmra.mrb[0].mxu0 %v1600
      %v3513 = vpop.f32.mrb[0].mxu0
      %v3514 = vadd.f32 0.0, %v3513
      %v3515 = vpop.f32.mrb[0].mxu0
      %3516 = vmatprep.mubr.f32.mxu0 0.0
      %3517 = vmatmul.mubr.f32.gmra.mrb[0].mxu0 %v1603
      %v3518 = vpop.f32.mrb[0].mxu0
      %v3519 = vadd.f32 0.0, %v3518
      %v3520 = vpop.f32.mrb[0].mxu0
      %3521 = vmatprep.mubr.f32.mxu0 0.0
      %3522 = vmatmul.mubr.f32.gmra.mrb[0].mxu0 %v1606
      %v3523 = vpop.f32.mrb[0].mxu0
      %v3524 = vadd.f32 0.0, %v3523
      %v3525 = vpop.f32.mrb[0].mxu0
      %3526 = vmatprep.mubr.f32.mxu0 0.0
      %3527 = vmatmul.mubr.f32.gmra.mrb[0].mxu0 %v1609
      %v3528 = vpop.f32.mrb[0].mxu0
      %v3529 = vadd.f32 0.0, %v3528
      %v3530 = vpop.f32.mrb[0].mxu0
      %3531 = vmatprep.mubr.f32.mxu0 0.0
      %3532 = vmatmul.mubr.f32.gmra.mrb[0].mxu0 %v1612
      %v3533 = vpop.f32.mrb[0].mxu0
      %v3534 = vadd.f32 0.0, %v3533
      %v3535 = vpop.f32.mrb[0].mxu0
      %3536 = vmatprep.mubr.f32.mxu0 0.0
      %3537 = vmatmul.mubr.f32.gmra.mrb[0].mxu0 %v1615
      %v3538 = vpop.f32.mrb[0].mxu0
      %v3539 = vadd.f32 0.0, %v3538
      %v3540 = vpop.f32.mrb[0].mxu0
      %3541 = vmatprep.mubr.f32.mxu0 0.0
      %3542 = vmatmul.mubr.f32.gmra.mrb[0].mxu0 %v1618
      %v3543 = vpop.f32.mrb[0].mxu0
      %v3544 = vadd.f32 0.0, %v3543
      %v3545 = vpop.f32.mrb[0].mxu0
      %3546 = vmatprep.mubr.f32.mxu0 0.0
      %3547 = vmatmul.mubr.f32.gmra.mrb[0].mxu0 %v1621
      %v3548 = vpop.f32.mrb[0].mxu0
      %v3549 = vadd.f32 0.0, %v3548
      %v3550 = vpop.f32.mrb[0].mxu0
      %3551 = vmatprep.mubr.f32.mxu0 0.0
      %3552 = vmatmul.mubr.f32.gmra.mrb[0].mxu0 %v1624
      %v3553 = vpop.f32.mrb[0].mxu0
      %v3554 = vadd.f32 0.0, %v3553
      %v3555 = vpop.f32.mrb[0].mxu0
      %3556 = vmatprep.mubr.f32.mxu0 0.0
      %3557 = vmatmul.mubr.f32.gmra.mrb[0].mxu0 %v1627
      %v3558 = vpop.f32.mrb[0].mxu0
      %v3559 = vadd.f32 0.0, %v3558
      %v3560 = vpop.f32.mrb[0].mxu0
      %3561 = vmatprep.mubr.f32.mxu0 0.0
      %3562 = vmatmul.mubr.f32.gmra.mrb[0].mxu0 %v1630
      %v3563 = vpop.f32.mrb[0].mxu0
      %v3564 = vadd.f32 0.0, %v3563
      %v3565 = vpop.f32.mrb[0].mxu0
      %3566 = vmatprep.mubr.f32.mxu0 0.0
      %3567 = vmatmul.mubr.f32.gmra.mrb[0].mxu0 %v1633
      %v3568 = vpop.f32.mrb[0].mxu0
      %v3569 = vadd.f32 0.0, %v3568
      %v3570 = vpop.f32.mrb[0].mxu0
      %3571 = vmatprep.mubr.f32.mxu0 0.0
      %3572 = vmatmul.mubr.f32.gmra.mrb[0].mxu0 %v1636
      %v3573 = vpop.f32.mrb[0].mxu0
      %v3574 = vadd.f32 0.0, %v3573
      %v3575 = vpop.f32.mrb[0].mxu0
      %3576 = vmatprep.mubr.f32.mxu0 0.0
      %3577 = vmatmul.mubr.f32.gmra.mrb[0].mxu0 %v1639
      %v3578 = vpop.f32.mrb[0].mxu0
      %v3579 = vadd.f32 0.0, %v3578
      %v3580 = vpop.f32.mrb[0].mxu0
      %3581 = vmatprep.mubr.f32.mxu0 0.0
      %3582 = vmatmul.mubr.f32.gmra.mrb[0].mxu0 %v1642
      %v3583 = vpop.f32.mrb[0].mxu0
      %v3584 = vadd.f32 0.0, %v3583
      %v3585 = vpop.f32.mrb[0].mxu0
      %3586 = vmatprep.mubr.f32.mxu0 0.0
      %3587 = vmatmul.mubr.f32.gmra.mrb[0].mxu0 %v1645
      %v3588 = vpop.f32.mrb[0].mxu0
      %v3589 = vadd.f32 0.0, %v3588
      %v3590 = vpop.f32.mrb[0].mxu0
      %3591 = vmatprep.mubr.f32.mxu0 0.0
      %3592 = vmatmul.mubr.f32.gmra.mrb[0].mxu0 %v1648
      %v3593 = vpop.f32.mrb[0].mxu0
      %v3594 = vadd.f32 0.0, %v3593
      %v3595 = vpop.f32.mrb[0].mxu0
      %3596 = vmatprep.mubr.f32.mxu0 0.0
      %3597 = vmatmul.mubr.f32.gmra.mrb[0].mxu0 %v1651
      %v3598 = vpop.f32.mrb[0].mxu0
      %v3599 = vadd.f32 0.0, %v3598
      %v3600 = vpop.f32.mrb[0].mxu0
      %3601 = vmatprep.mubr.f32.mxu0 0.0
      %3602 = vmatmul.mubr.f32.gmra.mrb[0].mxu0 %v1654
      %v3603 = vpop.f32.mrb[0].mxu0
      %v3604 = vadd.f32 0.0, %v3603
      %v3605 = vpop.f32.mrb[0].mxu0
      %3606 = vmatprep.mubr.f32.mxu0 0.0
      %3607 = vmatmul.mubr.f32.gmra.mrb[0].mxu0 %v1657
      %v3608 = vpop.f32.mrb[0].mxu0
      %v3609 = vadd.f32 0.0, %v3608
      %v3610 = vpop.f32.mrb[0].mxu0
      %3611 = vmatprep.mubr.f32.mxu0 0.0
      %3612 = vmatmul.mubr.f32.gmra.mrb[0].mxu0 %v1660
      %v3613 = vpop.f32.mrb[0].mxu0
      %v3614 = vadd.f32 0.0, %v3613
      %v3615 = vpop.f32.mrb[0].mxu0
      %3616 = vmatprep.mubr.f32.mxu0 0.0
      %3617 = vmatmul.mubr.f32.gmra.mrb[0].mxu0 %v1663
      %v3618 = vpop.f32.mrb[0].mxu0
      %v3619 = vadd.f32 0.0, %v3618
      %v3620 = vpop.f32.mrb[0].mxu0
      %3621 = vmatprep.mubr.f32.mxu0 0.0
      %3622 = vmatmul.mubr.f32.gmra.mrb[0].mxu0 %v1666
      %v3623 = vpop.f32.mrb[0].mxu0
      %v3624 = vadd.f32 0.0, %v3623
      %v3625 = vpop.f32.mrb[0].mxu0
      %3626 = vmatprep.mubr.f32.mxu0 0.0
      %3627 = vmatmul.mubr.f32.gmra.mrb[0].mxu0 %v1669
      %v3628 = vpop.f32.mrb[0].mxu0
      %v3629 = vadd.f32 0.0, %v3628
      %v3630 = vpop.f32.mrb[0].mxu0
      %3631 = vmatprep.mubr.f32.mxu0 0.0
      %3632 = vmatmul.mubr.f32.gmra.mrb[0].mxu0 %v1672
      %v3633 = vpop.f32.mrb[0].mxu0
      %v3634 = vadd.f32 0.0, %v3633
      %v3635 = vpop.f32.mrb[0].mxu0
      %3636 = vmatprep.mubr.f32.mxu0 0.0
      %3637 = vmatmul.mubr.f32.gmra.mrb[0].mxu0 %v1675
      %v3638 = vpop.f32.mrb[0].mxu0
      %v3639 = vadd.f32 0.0, %v3638
      %v3640 = vpop.f32.mrb[0].mxu0
      %3641 = vmatprep.mubr.f32.mxu0 0.0
      %3642 = vmatmul.mubr.f32.gmra.mrb[0].mxu0 %v1678
      %v3643 = vpop.f32.mrb[0].mxu0
      %v3644 = vadd.f32 0.0, %v3643
      %v3645 = vpop.f32.mrb[0].mxu0
      %3646 = vmatprep.mubr.f32.mxu0 0.0
      %3647 = vmatmul.mubr.f32.gmra.mrb[0].mxu0 %v1681
      %v3648 = vpop.f32.mrb[0].mxu0
      %v3649 = vadd.f32 0.0, %v3648
      %v3650 = vpop.f32.mrb[0].mxu0
      %3651 = vmatprep.mubr.f32.mxu0 0.0
      %3652 = vmatmul.mubr.f32.gmra.mrb[0].mxu0 %v1684
      %v3653 = vpop.f32.mrb[0].mxu0
      %v3654 = vadd.f32 0.0, %v3653
      %v3655 = vpop.f32.mrb[0].mxu0
      %3656 = vmatprep.mubr.f32.mxu0 0.0
      %3657 = vmatmul.mubr.f32.gmra.mrb[0].mxu0 %v1687
      %v3658 = vpop.f32.mrb[0].mxu0
      %v3659 = vadd.f32 0.0, %v3658
      %v3660 = vpop.f32.mrb[0].mxu0
      %3661 = vmatprep.mubr.f32.mxu0 0.0
      %3662 = vmatmul.mubr.f32.gmra.mrb[0].mxu0 %v1690
      %v3663 = vpop.f32.mrb[0].mxu0
      %v3664 = vadd.f32 0.0, %v3663
      %v3665 = vpop.f32.mrb[0].mxu0
      %3666 = vmatprep.mubr.f32.mxu0 0.0
      %3667 = vmatmul.mubr.f32.gmra.mrb[0].mxu0 %v1693
      %v3668 = vpop.f32.mrb[0].mxu0
      %v3669 = vadd.f32 0.0, %v3668
      %v3670 = vpop.f32.mrb[0].mxu0
      %3671 = vmatprep.mubr.f32.mxu0 0.0
      %3672 = vmatmul.mubr.f32.gmra.mrb[0].mxu0 %v1696
      %v3673 = vpop.f32.mrb[0].mxu0
      %v3674 = vadd.f32 0.0, %v3673
      %v3675 = vpop.f32.mrb[0].mxu0
      %3676 = vmatprep.mubr.f32.mxu0 0.0
      %3677 = vmatmul.mubr.f32.gmra.mrb[0].mxu0 %v1699
      %v3678 = vpop.f32.mrb[0].mxu0
      %v3679 = vadd.f32 0.0, %v3678
      %v3680 = vpop.f32.mrb[0].mxu0
      %3681 = vmatprep.mubr.f32.mxu0 0.0
      %3682 = vmatmul.mubr.f32.gmra.mrb[0].mxu0 %v1702
      %v3683 = vpop.f32.mrb[0].mxu0
      %v3684 = vadd.f32 0.0, %v3683
      %v3685 = vpop.f32.mrb[0].mxu0
      %3686 = vmatprep.mubr.f32.mxu0 0.0
      %3687 = vmatmul.mubr.f32.gmra.mrb[0].mxu0 %v1705
      %v3688 = vpop.f32.mrb[0].mxu0
      %v3689 = vadd.f32 0.0, %v3688
      %v3690 = vpop.f32.mrb[0].mxu0
      %3691 = vmatprep.mubr.f32.mxu0 0.0
      %3692 = vmatmul.mubr.f32.gmra.mrb[0].mxu0 %v1708
      %v3693 = vpop.f32.mrb[0].mxu0
      %v3694 = vadd.f32 0.0, %v3693
      %v3695 = vpop.f32.mrb[0].mxu0
      %3696 = vmatprep.mubr.f32.mxu0 0.0
      %3697 = vmatmul.mubr.f32.gmra.mrb[0].mxu0 %v1711
      %v3698 = vpop.f32.mrb[0].mxu0
      %v3699 = vadd.f32 0.0, %v3698
      %v3700 = vpop.f32.mrb[0].mxu0
      %3701 = vmatprep.mubr.f32.mxu0 0.0
      %3702 = vmatmul.mubr.f32.gmra.mrb[0].mxu0 %v1714
      %v3703 = vpop.f32.mrb[0].mxu0
      %v3704 = vadd.f32 0.0, %v3703
      %v3705 = vpop.f32.mrb[0].mxu0
      %3706 = vmatprep.mubr.f32.mxu0 0.0
      %3707 = vmatmul.mubr.f32.gmra.mrb[0].mxu0 %v1717
      %v3708 = vpop.f32.mrb[0].mxu0
      %v3709 = vadd.f32 0.0, %v3708
      %v3710 = vpop.f32.mrb[0].mxu0
      %3711 = vmatprep.mubr.f32.mxu0 0.0
      %3712 = vmatmul.mubr.f32.gmra.mrb[0].mxu0 %v1720
      %v3713 = vpop.f32.mrb[0].mxu0
      %v3714 = vadd.f32 0.0, %v3713
      %v3715 = vpop.f32.mrb[0].mxu0
      %3716 = vmatprep.mubr.f32.mxu0 0.0
      %3717 = vmatmul.mubr.f32.gmra.mrb[0].mxu0 %v1723
      %v3718 = vpop.f32.mrb[0].mxu0
      %v3719 = vadd.f32 0.0, %v3718
      %v3720 = vpop.f32.mrb[0].mxu0
      %3721 = vmatprep.mubr.f32.mxu0 0.0
      %3722 = vmatmul.mubr.f32.gmra.mrb[0].mxu0 %v1726
      %v3723 = vpop.f32.mrb[0].mxu0
      %v3724 = vadd.f32 0.0, %v3723
      %v3725 = vpop.f32.mrb[0].mxu0
      %3726 = vmatprep.mubr.f32.mxu0 0.0
      %3727 = vmatmul.mubr.f32.gmra.mrb[0].mxu0 %v1729
      %v3728 = vpop.f32.mrb[0].mxu0
      %v3729 = vadd.f32 0.0, %v3728
      %v3730 = vpop.f32.mrb[0].mxu0
      %3731 = vmatprep.mubr.f32.mxu0 0.0
      %3732 = vmatmul.mubr.f32.gmra.mrb[0].mxu0 %v1732
      %v3733 = vpop.f32.mrb[0].mxu0
      %v3734 = vadd.f32 0.0, %v3733
      %v3735 = vpop.f32.mrb[0].mxu0
      %3736 = vmatprep.mubr.f32.mxu0 0.0
      %3737 = vmatmul.mubr.f32.gmra.mrb[0].mxu0 %v1735
      %v3738 = vpop.f32.mrb[0].mxu0
      %v3739 = vadd.f32 0.0, %v3738
      %v3740 = vpop.f32.mrb[0].mxu0
      %3741 = vmatprep.mubr.f32.mxu0 0.0
      %3742 = vmatmul.mubr.f32.gmra.mrb[0].mxu0 %v1738
      %v3743 = vpop.f32.mrb[0].mxu0
      %v3744 = vadd.f32 0.0, %v3743
      %v3745 = vpop.f32.mrb[0].mxu0
      %3746 = vmatprep.mubr.f32.mxu0 0.0
      %3747 = vmatmul.mubr.f32.gmra.mrb[0].mxu0 %v1741
      %v3748 = vpop.f32.mrb[0].mxu0
      %v3749 = vadd.f32 0.0, %v3748
      %v3750 = vpop.f32.mrb[0].mxu0
      %3751 = vmatprep.mubr.f32.mxu0 0.0
      %3752 = vmatmul.mubr.f32.gmra.mrb[0].mxu0 %v1744
      %v3753 = vpop.f32.mrb[0].mxu0
      %v3754 = vadd.f32 0.0, %v3753
      %v3755 = vpop.f32.mrb[0].mxu0
      %3756 = vmatprep.mubr.f32.mxu0 0.0
      %3757 = vmatmul.mubr.f32.gmra.mrb[0].mxu0 %v1747
      %v3758 = vpop.f32.mrb[0].mxu0
      %v3759 = vadd.f32 0.0, %v3758
      %v3760 = vpop.f32.mrb[0].mxu0
      %3761 = vmatprep.mubr.f32.mxu0 0.0
      %3762 = vmatmul.mubr.f32.gmra.mrb[0].mxu0 %v1750
      %v3763 = vpop.f32.mrb[0].mxu0
      %v3764 = vadd.f32 0.0, %v3763
      %v3765 = vpop.f32.mrb[0].mxu0
      %3766 = vmatprep.mubr.f32.mxu0 0.0
      %3767 = vmatmul.mubr.f32.gmra.mrb[0].mxu0 %v1753
      %v3768 = vpop.f32.mrb[0].mxu0
      %v3769 = vadd.f32 0.0, %v3768
      %v3770 = vpop.f32.mrb[0].mxu0
      %3771 = vmatprep.mubr.f32.mxu0 0.0
      %3772 = vmatmul.mubr.f32.gmra.mrb[0].mxu0 %v1756
      %v3773 = vpop.f32.mrb[0].mxu0
      %v3774 = vadd.f32 0.0, %v3773
      %v3775 = vpop.f32.mrb[0].mxu0
      %3776 = vmatprep.mubr.f32.mxu0 0.0
      %3777 = vmatmul.mubr.f32.gmra.mrb[0].mxu0 %v1759
      %v3778 = vpop.f32.mrb[0].mxu0
      %v3779 = vadd.f32 0.0, %v3778
      %v3780 = vpop.f32.mrb[0].mxu0
      %3781 = vmatprep.mubr.f32.mxu0 0.0
      %3782 = vmatmul.mubr.f32.gmra.mrb[0].mxu0 %v1762
      %v3783 = vpop.f32.mrb[0].mxu0
      %v3784 = vadd.f32 0.0, %v3783
      %v3785 = vpop.f32.mrb[0].mxu0
      %3786 = vmatprep.mubr.f32.mxu0 0.0
      %3787 = vmatmul.mubr.f32.gmra.mrb[0].mxu0 %v1765
      %v3788 = vpop.f32.mrb[0].mxu0
      %v3789 = vadd.f32 0.0, %v3788
      %v3790 = vpop.f32.mrb[0].mxu0
      %3791 = vmatprep.mubr.f32.mxu0 0.0
      %3792 = vmatmul.mubr.f32.gmra.mrb[0].mxu0 %v1768
      %v3793 = vpop.f32.mrb[0].mxu0
      %v3794 = vadd.f32 0.0, %v3793
      %v3795 = vpop.f32.mrb[0].mxu0
      %3796 = vmatprep.mubr.f32.mxu0 0.0
      %3797 = vmatmul.mubr.f32.gmra.mrb[0].mxu0 %v1771
      %v3798 = vpop.f32.mrb[0].mxu0
      %v3799 = vadd.f32 0.0, %v3798
      %v3800 = vpop.f32.mrb[0].mxu0
      %3801 = vdwg.mxu0
      %v3802 = vld [vmem:[%s2] sm:$0x1]
      %v3804 = vlaneseq
      %v3805 = vshrl.u32 %v3804, 7
      %v3806 = vsub.s32 0, %v3805
      %v3807 = vrot.slane %v3802, %v3806
      %v3809 = vmul.f32 %v1844, %v3807
      %v3810 = vmul.f32 %v1849, %v3807
      %v3811 = vmul.f32 %v1854, %v3807
      %v3812 = vmul.f32 %v1859, %v3807
      %v3813 = vmul.f32 %v1864, %v3807
      %v3814 = vmul.f32 %v1869, %v3807
      %v3815 = vmul.f32 %v1874, %v3807
      %v3816 = vmul.f32 %v1879, %v3807
      %v3817 = vmul.f32 %v1884, %v3807
      %v3818 = vmul.f32 %v1889, %v3807
      %v3819 = vmul.f32 %v1894, %v3807
      %v3820 = vmul.f32 %v1899, %v3807
      %v3821 = vmul.f32 %v1904, %v3807
      %v3822 = vmul.f32 %v1909, %v3807
      %v3823 = vmul.f32 %v1914, %v3807
      %v3824 = vmul.f32 %v1919, %v3807
      %v3825 = vmul.f32 %v1924, %v3807
      %v3826 = vmul.f32 %v1929, %v3807
      %v3827 = vmul.f32 %v1934, %v3807
      %v3828 = vmul.f32 %v1939, %v3807
      %v3829 = vmul.f32 %v1944, %v3807
      %v3830 = vmul.f32 %v1949, %v3807
      %v3831 = vmul.f32 %v1954, %v3807
      %v3832 = vmul.f32 %v1959, %v3807
      %v3833 = vmul.f32 %v1964, %v3807
      %v3834 = vmul.f32 %v1969, %v3807
      %v3835 = vmul.f32 %v1974, %v3807
      %v3836 = vmul.f32 %v1979, %v3807
      %v3837 = vmul.f32 %v1984, %v3807
      %v3838 = vmul.f32 %v1989, %v3807
      %v3839 = vmul.f32 %v1994, %v3807
      %v3840 = vmul.f32 %v1999, %v3807
      %v3841 = vmul.f32 %v2004, %v3807
      %v3842 = vmul.f32 %v2009, %v3807
      %v3843 = vmul.f32 %v2014, %v3807
      %v3844 = vmul.f32 %v2019, %v3807
      %v3845 = vmul.f32 %v2024, %v3807
      %v3846 = vmul.f32 %v2029, %v3807
      %v3847 = vmul.f32 %v2034, %v3807
      %v3848 = vmul.f32 %v2039, %v3807
      %v3849 = vmul.f32 %v2044, %v3807
      %v3850 = vmul.f32 %v2049, %v3807
      %v3851 = vmul.f32 %v2054, %v3807
      %v3852 = vmul.f32 %v2059, %v3807
      %v3853 = vmul.f32 %v2064, %v3807
      %v3854 = vmul.f32 %v2069, %v3807
      %v3855 = vmul.f32 %v2074, %v3807
      %v3856 = vmul.f32 %v2079, %v3807
      %v3857 = vmul.f32 %v2084, %v3807
      %v3858 = vmul.f32 %v2089, %v3807
      %v3859 = vmul.f32 %v2094, %v3807
      %v3860 = vmul.f32 %v2099, %v3807
      %v3861 = vmul.f32 %v2104, %v3807
      %v3862 = vmul.f32 %v2109, %v3807
      %v3863 = vmul.f32 %v2114, %v3807
      %v3864 = vmul.f32 %v2119, %v3807
      %v3865 = vmul.f32 %v2124, %v3807
      %v3866 = vmul.f32 %v2129, %v3807
      %v3867 = vmul.f32 %v2134, %v3807
      %v3868 = vmul.f32 %v2139, %v3807
      %v3869 = vmul.f32 %v2144, %v3807
      %v3870 = vmul.f32 %v2149, %v3807
      %v3871 = vmul.f32 %v2154, %v3807
      %v3872 = vmul.f32 %v2159, %v3807
      %v3873 = vmul.f32 %v2164, %v3807
      %v3874 = vmul.f32 %v2169, %v3807
      %v3875 = vmul.f32 %v2174, %v3807
      %v3876 = vmul.f32 %v2179, %v3807
      %v3877 = vmul.f32 %v2184, %v3807
      %v3878 = vmul.f32 %v2189, %v3807
      %v3879 = vmul.f32 %v2194, %v3807
      %v3880 = vmul.f32 %v2199, %v3807
      %v3881 = vmul.f32 %v2204, %v3807
      %v3882 = vmul.f32 %v2209, %v3807
      %v3883 = vmul.f32 %v2214, %v3807
      %v3884 = vmul.f32 %v2219, %v3807
      %v3885 = vmul.f32 %v2224, %v3807
      %v3886 = vmul.f32 %v2229, %v3807
      %v3887 = vmul.f32 %v2234, %v3807
      %v3888 = vmul.f32 %v2239, %v3807
      %v3889 = vmul.f32 %v2244, %v3807
      %v3890 = vmul.f32 %v2249, %v3807
      %v3891 = vmul.f32 %v2254, %v3807
      %v3892 = vmul.f32 %v2259, %v3807
      %v3893 = vmul.f32 %v2264, %v3807
      %v3894 = vmul.f32 %v2269, %v3807
      %v3895 = vmul.f32 %v2274, %v3807
      %v3896 = vmul.f32 %v2279, %v3807
      %v3897 = vmul.f32 %v2284, %v3807
      %v3898 = vmul.f32 %v2289, %v3807
      %v3899 = vmul.f32 %v2294, %v3807
      %v3900 = vmul.f32 %v2299, %v3807
      %v3901 = vmul.f32 %v2304, %v3807
      %v3902 = vmul.f32 %v2309, %v3807
      %v3903 = vmul.f32 %v2314, %v3807
      %v3904 = vmul.f32 %v2319, %v3807
      %v3905 = vmul.f32 %v2324, %v3807
      %v3906 = vmul.f32 %v2329, %v3807
      %v3907 = vmul.f32 %v2334, %v3807
      %v3908 = vmul.f32 %v2339, %v3807
      %v3909 = vmul.f32 %v2344, %v3807
      %v3910 = vmul.f32 %v2349, %v3807
      %v3911 = vmul.f32 %v2354, %v3807
      %v3912 = vmul.f32 %v2359, %v3807
      %v3913 = vmul.f32 %v2364, %v3807
      %v3914 = vmul.f32 %v2369, %v3807
      %v3915 = vmul.f32 %v2374, %v3807
      %v3916 = vmul.f32 %v2379, %v3807
      %v3917 = vmul.f32 %v2384, %v3807
      %v3918 = vmul.f32 %v2389, %v3807
      %v3919 = vmul.f32 %v2394, %v3807
      %v3920 = vmul.f32 %v2399, %v3807
      %v3921 = vmul.f32 %v2404, %v3807
      %v3922 = vmul.f32 %v2409, %v3807
      %v3923 = vmul.f32 %v2414, %v3807
      %v3924 = vmul.f32 %v2419, %v3807
      %v3925 = vmul.f32 %v2424, %v3807
      %v3926 = vmul.f32 %v2429, %v3807
      %v3927 = vmul.f32 %v2434, %v3807
      %v3928 = vmul.f32 %v2439, %v3807
      %v3929 = vmul.f32 %v2444, %v3807
      %v3930 = vmul.f32 %v2449, %v3807
      %v3931 = vmul.f32 %v2454, %v3807
      %v3932 = vmul.f32 %v2459, %v3807
      %v3933 = vmul.f32 %v2464, %v3807
      %v3934 = vmul.f32 %v2469, %v3807
      %v3935 = vmul.f32 %v2474, %v3807
      %v3936 = vmul.f32 %v2479, %v3807
      %v3937 = vmul.f32 %v2484, %v3807
      %v3938 = vmul.f32 %v2489, %v3807
      %v3939 = vmul.f32 %v2494, %v3807
      %v3940 = vmul.f32 %v2499, %v3807
      %v3941 = vmul.f32 %v2504, %v3807
      %v3942 = vmul.f32 %v2509, %v3807
      %v3943 = vmul.f32 %v2514, %v3807
      %v3944 = vmul.f32 %v2519, %v3807
      %v3945 = vmul.f32 %v2524, %v3807
      %v3946 = vmul.f32 %v2529, %v3807
      %v3947 = vmul.f32 %v2534, %v3807
      %v3948 = vmul.f32 %v2539, %v3807
      %v3949 = vmul.f32 %v2544, %v3807
      %v3950 = vmul.f32 %v2549, %v3807
      %v3951 = vmul.f32 %v2554, %v3807
      %v3952 = vmul.f32 %v2559, %v3807
      %v3953 = vmul.f32 %v2564, %v3807
      %v3954 = vmul.f32 %v2569, %v3807
      %v3955 = vmul.f32 %v2574, %v3807
      %v3956 = vmul.f32 %v2579, %v3807
      %v3957 = vmul.f32 %v2584, %v3807
      %v3958 = vmul.f32 %v2589, %v3807
      %v3959 = vmul.f32 %v2594, %v3807
      %v3960 = vmul.f32 %v2599, %v3807
      %v3961 = vmul.f32 %v2604, %v3807
      %v3962 = vmul.f32 %v2609, %v3807
      %v3963 = vmul.f32 %v2614, %v3807
      %v3964 = vmul.f32 %v2619, %v3807
      %v3965 = vmul.f32 %v2624, %v3807
      %v3966 = vmul.f32 %v2629, %v3807
      %v3967 = vmul.f32 %v2634, %v3807
      %v3968 = vmul.f32 %v2639, %v3807
      %v3969 = vmul.f32 %v2644, %v3807
      %v3970 = vmul.f32 %v2649, %v3807
      %v3971 = vmul.f32 %v2654, %v3807
      %v3972 = vmul.f32 %v2659, %v3807
      %v3973 = vmul.f32 %v2664, %v3807
      %v3974 = vmul.f32 %v2669, %v3807
      %v3975 = vmul.f32 %v2674, %v3807
      %v3976 = vmul.f32 %v2679, %v3807
      %v3977 = vmul.f32 %v2684, %v3807
      %v3978 = vmul.f32 %v2689, %v3807
      %v3979 = vmul.f32 %v2694, %v3807
      %v3980 = vmul.f32 %v2699, %v3807
      %v3981 = vmul.f32 %v2704, %v3807
      %v3982 = vmul.f32 %v2709, %v3807
      %v3983 = vmul.f32 %v2714, %v3807
      %v3984 = vmul.f32 %v2719, %v3807
      %v3985 = vmul.f32 %v2724, %v3807
      %v3986 = vmul.f32 %v2729, %v3807
      %v3987 = vmul.f32 %v2734, %v3807
      %v3988 = vmul.f32 %v2739, %v3807
      %v3989 = vmul.f32 %v2744, %v3807
      %v3990 = vmul.f32 %v2749, %v3807
      %v3991 = vmul.f32 %v2754, %v3807
      %v3992 = vmul.f32 %v2759, %v3807
      %v3993 = vmul.f32 %v2764, %v3807
      %v3994 = vmul.f32 %v2769, %v3807
      %v3995 = vmul.f32 %v2774, %v3807
      %v3996 = vmul.f32 %v2779, %v3807
      %v3997 = vmul.f32 %v2784, %v3807
      %v3998 = vmul.f32 %v2789, %v3807
      %v3999 = vmul.f32 %v2794, %v3807
      %v4000 = vmul.f32 %v2799, %v3807
      %v4001 = vmul.f32 %v2804, %v3807
      %v4002 = vmul.f32 %v2809, %v3807
      %v4003 = vmul.f32 %v2814, %v3807
      %v4004 = vmul.f32 %v2819, %v3807
      %v4005 = vmul.f32 %v2824, %v3807
      %v4006 = vmul.f32 %v2829, %v3807
      %v4007 = vmul.f32 %v2834, %v3807
      %v4008 = vmul.f32 %v2839, %v3807
      %v4009 = vmul.f32 %v2844, %v3807
      %v4010 = vmul.f32 %v2849, %v3807
      %v4011 = vmul.f32 %v2854, %v3807
      %v4012 = vmul.f32 %v2859, %v3807
      %v4013 = vmul.f32 %v2864, %v3807
      %v4014 = vmul.f32 %v2869, %v3807
      %v4015 = vmul.f32 %v2874, %v3807
      %v4016 = vmul.f32 %v2879, %v3807
      %v4017 = vmul.f32 %v2884, %v3807
      %v4018 = vmul.f32 %v2889, %v3807
      %v4019 = vmul.f32 %v2894, %v3807
      %v4020 = vmul.f32 %v2899, %v3807
      %v4021 = vmul.f32 %v2904, %v3807
      %v4022 = vmul.f32 %v2909, %v3807
      %v4023 = vmul.f32 %v2914, %v3807
      %v4024 = vmul.f32 %v2919, %v3807
      %v4025 = vmul.f32 %v2924, %v3807
      %v4026 = vmul.f32 %v2929, %v3807
      %v4027 = vmul.f32 %v2934, %v3807
      %v4028 = vmul.f32 %v2939, %v3807
      %v4029 = vmul.f32 %v2944, %v3807
      %v4030 = vmul.f32 %v2949, %v3807
      %v4031 = vmul.f32 %v2954, %v3807
      %v4032 = vmul.f32 %v2959, %v3807
      %v4033 = vmul.f32 %v2964, %v3807
      %v4034 = vmul.f32 %v2969, %v3807
      %v4035 = vmul.f32 %v2974, %v3807
      %v4036 = vmul.f32 %v2979, %v3807
      %v4037 = vmul.f32 %v2984, %v3807
      %v4038 = vmul.f32 %v2989, %v3807
      %v4039 = vmul.f32 %v2994, %v3807
      %v4040 = vmul.f32 %v2999, %v3807
      %v4041 = vmul.f32 %v3004, %v3807
      %v4042 = vmul.f32 %v3009, %v3807
      %v4043 = vmul.f32 %v3014, %v3807
      %v4044 = vmul.f32 %v3019, %v3807
      %v4045 = vmul.f32 %v3024, %v3807
      %v4046 = vmul.f32 %v3029, %v3807
      %v4047 = vmul.f32 %v3034, %v3807
      %v4048 = vmul.f32 %v3039, %v3807
      %v4049 = vmul.f32 %v3044, %v3807
      %v4050 = vmul.f32 %v3049, %v3807
      %v4051 = vmul.f32 %v3054, %v3807
      %v4052 = vmul.f32 %v3059, %v3807
      %v4053 = vmul.f32 %v3064, %v3807
      %v4054 = vmul.f32 %v3069, %v3807
      %v4055 = vmul.f32 %v3074, %v3807
      %v4056 = vmul.f32 %v3079, %v3807
      %v4057 = vmul.f32 %v3084, %v3807
      %v4058 = vmul.f32 %v3089, %v3807
      %v4059 = vmul.f32 %v3094, %v3807
      %v4060 = vmul.f32 %v3099, %v3807
      %v4061 = vmul.f32 %v3104, %v3807
      %v4062 = vmul.f32 %v3109, %v3807
      %v4063 = vmul.f32 %v3114, %v3807
      %v4064 = vmul.f32 %v3119, %v3807
      %v4065 = vmul.f32 %v3124, %v3807
      %v4066 = vmul.f32 %v3129, %v3807
      %v4067 = vmul.f32 %v3134, %v3807
      %v4068 = vmul.f32 %v3139, %v3807
      %v4069 = vmul.f32 %v3144, %v3807
      %v4070 = vmul.f32 %v3149, %v3807
      %v4071 = vmul.f32 %v3154, %v3807
      %v4072 = vmul.f32 %v3159, %v3807
      %v4073 = vmul.f32 %v3164, %v3807
      %v4074 = vmul.f32 %v3169, %v3807
      %v4075 = vmul.f32 %v3174, %v3807
      %v4076 = vmul.f32 %v3179, %v3807
      %v4077 = vmul.f32 %v3184, %v3807
      %v4078 = vmul.f32 %v3189, %v3807
      %v4079 = vmul.f32 %v3194, %v3807
      %v4080 = vmul.f32 %v3199, %v3807
      %v4081 = vmul.f32 %v3204, %v3807
      %v4082 = vmul.f32 %v3209, %v3807
      %v4083 = vmul.f32 %v3214, %v3807
      %v4084 = vmul.f32 %v3219, %v3807
      %v4085 = vmul.f32 %v3224, %v3807
      %v4086 = vmul.f32 %v3229, %v3807
      %v4087 = vmul.f32 %v3234, %v3807
      %v4088 = vmul.f32 %v3239, %v3807
      %v4089 = vmul.f32 %v3244, %v3807
      %v4090 = vmul.f32 %v3249, %v3807
      %v4091 = vmul.f32 %v3254, %v3807
      %v4092 = vmul.f32 %v3259, %v3807
      %v4093 = vmul.f32 %v3264, %v3807
      %v4094 = vmul.f32 %v3269, %v3807
      %v4095 = vmul.f32 %v3274, %v3807
      %v4096 = vmul.f32 %v3279, %v3807
      %v4097 = vmul.f32 %v3284, %v3807
      %v4098 = vmul.f32 %v3289, %v3807
      %v4099 = vmul.f32 %v3294, %v3807
      %v4100 = vmul.f32 %v3299, %v3807
      %v4101 = vmul.f32 %v3304, %v3807
      %v4102 = vmul.f32 %v3309, %v3807
      %v4103 = vmul.f32 %v3314, %v3807
      %v4104 = vmul.f32 %v3319, %v3807
      %v4105 = vmul.f32 %v3324, %v3807
      %v4106 = vmul.f32 %v3329, %v3807
      %v4107 = vmul.f32 %v3334, %v3807
      %v4108 = vmul.f32 %v3339, %v3807
      %v4109 = vmul.f32 %v3344, %v3807
      %v4110 = vmul.f32 %v3349, %v3807
      %v4111 = vmul.f32 %v3354, %v3807
      %v4112 = vmul.f32 %v3359, %v3807
      %v4113 = vmul.f32 %v3364, %v3807
      %v4114 = vmul.f32 %v3369, %v3807
      %v4115 = vmul.f32 %v3374, %v3807
      %v4116 = vmul.f32 %v3379, %v3807
      %v4117 = vmul.f32 %v3384, %v3807
      %v4118 = vmul.f32 %v3389, %v3807
      %v4119 = vmul.f32 %v3394, %v3807
      %v4120 = vmul.f32 %v3399, %v3807
      %v4121 = vmul.f32 %v3404, %v3807
      %v4122 = vmul.f32 %v3409, %v3807
      %v4123 = vmul.f32 %v3414, %v3807
      %v4124 = vmul.f32 %v3419, %v3807
      %v4125 = vmul.f32 %v3424, %v3807
      %v4126 = vmul.f32 %v3429, %v3807
      %v4127 = vmul.f32 %v3434, %v3807
      %v4128 = vmul.f32 %v3439, %v3807
      %v4129 = vmul.f32 %v3444, %v3807
      %v4130 = vmul.f32 %v3449, %v3807
      %v4131 = vmul.f32 %v3454, %v3807
      %v4132 = vmul.f32 %v3459, %v3807
      %v4133 = vmul.f32 %v3464, %v3807
      %v4134 = vmul.f32 %v3469, %v3807
      %v4135 = vmul.f32 %v3474, %v3807
      %v4136 = vmul.f32 %v3479, %v3807
      %v4137 = vmul.f32 %v3484, %v3807
      %v4138 = vmul.f32 %v3489, %v3807
      %v4139 = vmul.f32 %v3494, %v3807
      %v4140 = vmul.f32 %v3499, %v3807
      %v4141 = vmul.f32 %v3504, %v3807
      %v4142 = vmul.f32 %v3509, %v3807
      %v4143 = vmul.f32 %v3514, %v3807
      %v4144 = vmul.f32 %v3519, %v3807
      %v4145 = vmul.f32 %v3524, %v3807
      %v4146 = vmul.f32 %v3529, %v3807
      %v4147 = vmul.f32 %v3534, %v3807
      %v4148 = vmul.f32 %v3539, %v3807
      %v4149 = vmul.f32 %v3544, %v3807
      %v4150 = vmul.f32 %v3549, %v3807
      %v4151 = vmul.f32 %v3554, %v3807
      %v4152 = vmul.f32 %v3559, %v3807
      %v4153 = vmul.f32 %v3564, %v3807
      %v4154 = vmul.f32 %v3569, %v3807
      %v4155 = vmul.f32 %v3574, %v3807
      %v4156 = vmul.f32 %v3579, %v3807
      %v4157 = vmul.f32 %v3584, %v3807
      %v4158 = vmul.f32 %v3589, %v3807
      %v4159 = vmul.f32 %v3594, %v3807
      %v4160 = vmul.f32 %v3599, %v3807
      %v4161 = vmul.f32 %v3604, %v3807
      %v4162 = vmul.f32 %v3609, %v3807
      %v4163 = vmul.f32 %v3614, %v3807
      %v4164 = vmul.f32 %v3619, %v3807
      %v4165 = vmul.f32 %v3624, %v3807
      %v4166 = vmul.f32 %v3629, %v3807
      %v4167 = vmul.f32 %v3634, %v3807
      %v4168 = vmul.f32 %v3639, %v3807
      %v4169 = vmul.f32 %v3644, %v3807
      %v4170 = vmul.f32 %v3649, %v3807
      %v4171 = vmul.f32 %v3654, %v3807
      %v4172 = vmul.f32 %v3659, %v3807
      %v4173 = vmul.f32 %v3664, %v3807
      %v4174 = vmul.f32 %v3669, %v3807
      %v4175 = vmul.f32 %v3674, %v3807
      %v4176 = vmul.f32 %v3679, %v3807
      %v4177 = vmul.f32 %v3684, %v3807
      %v4178 = vmul.f32 %v3689, %v3807
      %v4179 = vmul.f32 %v3694, %v3807
      %v4180 = vmul.f32 %v3699, %v3807
      %v4181 = vmul.f32 %v3704, %v3807
      %v4182 = vmul.f32 %v3709, %v3807
      %v4183 = vmul.f32 %v3714, %v3807
      %v4184 = vmul.f32 %v3719, %v3807
      %v4185 = vmul.f32 %v3724, %v3807
      %v4186 = vmul.f32 %v3729, %v3807
      %v4187 = vmul.f32 %v3734, %v3807
      %v4188 = vmul.f32 %v3739, %v3807
      %v4189 = vmul.f32 %v3744, %v3807
      %v4190 = vmul.f32 %v3749, %v3807
      %v4191 = vmul.f32 %v3754, %v3807
      %v4192 = vmul.f32 %v3759, %v3807
      %v4193 = vmul.f32 %v3764, %v3807
      %v4194 = vmul.f32 %v3769, %v3807
      %v4195 = vmul.f32 %v3774, %v3807
      %v4196 = vmul.f32 %v3779, %v3807
      %v4197 = vmul.f32 %v3784, %v3807
      %v4198 = vmul.f32 %v3789, %v3807
      %v4199 = vmul.f32 %v3794, %v3807
      %v4200 = vmul.f32 %v3799, %v3807
      %v4201 = vld [vmem:[%s3] sm:$0x1]
      %v4203 = vlaneseq
      %v4204 = vshrl.u32 %v4203, 7
      %v4205 = vsub.s32 0, %v4204
      %v4206 = vrot.slane %v4201, %v4205
      %v4208 = vadd.f32 %v3809, %v4206
      %v4209 = vadd.f32 %v3810, %v4206
      %v4210 = vadd.f32 %v3811, %v4206
      %v4211 = vadd.f32 %v3812, %v4206
      %v4212 = vadd.f32 %v3813, %v4206
      %v4213 = vadd.f32 %v3814, %v4206
      %v4214 = vadd.f32 %v3815, %v4206
      %v4215 = vadd.f32 %v3816, %v4206
      %v4216 = vadd.f32 %v3817, %v4206
      %v4217 = vadd.f32 %v3818, %v4206
      %v4218 = vadd.f32 %v3819, %v4206
      %v4219 = vadd.f32 %v3820, %v4206
      %v4220 = vadd.f32 %v3821, %v4206
      %v4221 = vadd.f32 %v3822, %v4206
      %v4222 = vadd.f32 %v3823, %v4206
      %v4223 = vadd.f32 %v3824, %v4206
      %v4224 = vadd.f32 %v3825, %v4206
      %v4225 = vadd.f32 %v3826, %v4206
      %v4226 = vadd.f32 %v3827, %v4206
      %v4227 = vadd.f32 %v3828, %v4206
      %v4228 = vadd.f32 %v3829, %v4206
      %v4229 = vadd.f32 %v3830, %v4206
      %v4230 = vadd.f32 %v3831, %v4206
      %v4231 = vadd.f32 %v3832, %v4206
      %v4232 = vadd.f32 %v3833, %v4206
      %v4233 = vadd.f32 %v3834, %v4206
      %v4234 = vadd.f32 %v3835, %v4206
      %v4235 = vadd.f32 %v3836, %v4206
      %v4236 = vadd.f32 %v3837, %v4206
      %v4237 = vadd.f32 %v3838, %v4206
      %v4238 = vadd.f32 %v3839, %v4206
      %v4239 = vadd.f32 %v3840, %v4206
      %v4240 = vadd.f32 %v3841, %v4206
      %v4241 = vadd.f32 %v3842, %v4206
      %v4242 = vadd.f32 %v3843, %v4206
      %v4243 = vadd.f32 %v3844, %v4206
      %v4244 = vadd.f32 %v3845, %v4206
      %v4245 = vadd.f32 %v3846, %v4206
      %v4246 = vadd.f32 %v3847, %v4206
      %v4247 = vadd.f32 %v3848, %v4206
      %v4248 = vadd.f32 %v3849, %v4206
      %v4249 = vadd.f32 %v3850, %v4206
      %v4250 = vadd.f32 %v3851, %v4206
      %v4251 = vadd.f32 %v3852, %v4206
      %v4252 = vadd.f32 %v3853, %v4206
      %v4253 = vadd.f32 %v3854, %v4206
      %v4254 = vadd.f32 %v3855, %v4206
      %v4255 = vadd.f32 %v3856, %v4206
      %v4256 = vadd.f32 %v3857, %v4206
      %v4257 = vadd.f32 %v3858, %v4206
      %v4258 = vadd.f32 %v3859, %v4206
      %v4259 = vadd.f32 %v3860, %v4206
      %v4260 = vadd.f32 %v3861, %v4206
      %v4261 = vadd.f32 %v3862, %v4206
      %v4262 = vadd.f32 %v3863, %v4206
      %v4263 = vadd.f32 %v3864, %v4206
      %v4264 = vadd.f32 %v3865, %v4206
      %v4265 = vadd.f32 %v3866, %v4206
      %v4266 = vadd.f32 %v3867, %v4206
      %v4267 = vadd.f32 %v3868, %v4206
      %v4268 = vadd.f32 %v3869, %v4206
      %v4269 = vadd.f32 %v3870, %v4206
      %v4270 = vadd.f32 %v3871, %v4206
      %v4271 = vadd.f32 %v3872, %v4206
      %v4272 = vadd.f32 %v3873, %v4206
      %v4273 = vadd.f32 %v3874, %v4206
      %v4274 = vadd.f32 %v3875, %v4206
      %v4275 = vadd.f32 %v3876, %v4206
      %v4276 = vadd.f32 %v3877, %v4206
      %v4277 = vadd.f32 %v3878, %v4206
      %v4278 = vadd.f32 %v3879, %v4206
      %v4279 = vadd.f32 %v3880, %v4206
      %v4280 = vadd.f32 %v3881, %v4206
      %v4281 = vadd.f32 %v3882, %v4206
      %v4282 = vadd.f32 %v3883, %v4206
      %v4283 = vadd.f32 %v3884, %v4206
      %v4284 = vadd.f32 %v3885, %v4206
      %v4285 = vadd.f32 %v3886, %v4206
      %v4286 = vadd.f32 %v3887, %v4206
      %v4287 = vadd.f32 %v3888, %v4206
      %v4288 = vadd.f32 %v3889, %v4206
      %v4289 = vadd.f32 %v3890, %v4206
      %v4290 = vadd.f32 %v3891, %v4206
      %v4291 = vadd.f32 %v3892, %v4206
      %v4292 = vadd.f32 %v3893, %v4206
      %v4293 = vadd.f32 %v3894, %v4206
      %v4294 = vadd.f32 %v3895, %v4206
      %v4295 = vadd.f32 %v3896, %v4206
      %v4296 = vadd.f32 %v3897, %v4206
      %v4297 = vadd.f32 %v3898, %v4206
      %v4298 = vadd.f32 %v3899, %v4206
      %v4299 = vadd.f32 %v3900, %v4206
      %v4300 = vadd.f32 %v3901, %v4206
      %v4301 = vadd.f32 %v3902, %v4206
      %v4302 = vadd.f32 %v3903, %v4206
      %v4303 = vadd.f32 %v3904, %v4206
      %v4304 = vadd.f32 %v3905, %v4206
      %v4305 = vadd.f32 %v3906, %v4206
      %v4306 = vadd.f32 %v3907, %v4206
      %v4307 = vadd.f32 %v3908, %v4206
      %v4308 = vadd.f32 %v3909, %v4206
      %v4309 = vadd.f32 %v3910, %v4206
      %v4310 = vadd.f32 %v3911, %v4206
      %v4311 = vadd.f32 %v3912, %v4206
      %v4312 = vadd.f32 %v3913, %v4206
      %v4313 = vadd.f32 %v3914, %v4206
      %v4314 = vadd.f32 %v3915, %v4206
      %v4315 = vadd.f32 %v3916, %v4206
      %v4316 = vadd.f32 %v3917, %v4206
      %v4317 = vadd.f32 %v3918, %v4206
      %v4318 = vadd.f32 %v3919, %v4206
      %v4319 = vadd.f32 %v3920, %v4206
      %v4320 = vadd.f32 %v3921, %v4206
      %v4321 = vadd.f32 %v3922, %v4206
      %v4322 = vadd.f32 %v3923, %v4206
      %v4323 = vadd.f32 %v3924, %v4206
      %v4324 = vadd.f32 %v3925, %v4206
      %v4325 = vadd.f32 %v3926, %v4206
      %v4326 = vadd.f32 %v3927, %v4206
      %v4327 = vadd.f32 %v3928, %v4206
      %v4328 = vadd.f32 %v3929, %v4206
      %v4329 = vadd.f32 %v3930, %v4206
      %v4330 = vadd.f32 %v3931, %v4206
      %v4331 = vadd.f32 %v3932, %v4206
      %v4332 = vadd.f32 %v3933, %v4206
      %v4333 = vadd.f32 %v3934, %v4206
      %v4334 = vadd.f32 %v3935, %v4206
      %v4335 = vadd.f32 %v3936, %v4206
      %v4336 = vadd.f32 %v3937, %v4206
      %v4337 = vadd.f32 %v3938, %v4206
      %v4338 = vadd.f32 %v3939, %v4206
      %v4339 = vadd.f32 %v3940, %v4206
      %v4340 = vadd.f32 %v3941, %v4206
      %v4341 = vadd.f32 %v3942, %v4206
      %v4342 = vadd.f32 %v3943, %v4206
      %v4343 = vadd.f32 %v3944, %v4206
      %v4344 = vadd.f32 %v3945, %v4206
      %v4345 = vadd.f32 %v3946, %v4206
      %v4346 = vadd.f32 %v3947, %v4206
      %v4347 = vadd.f32 %v3948, %v4206
      %v4348 = vadd.f32 %v3949, %v4206
      %v4349 = vadd.f32 %v3950, %v4206
      %v4350 = vadd.f32 %v3951, %v4206
      %v4351 = vadd.f32 %v3952, %v4206
      %v4352 = vadd.f32 %v3953, %v4206
      %v4353 = vadd.f32 %v3954, %v4206
      %v4354 = vadd.f32 %v3955, %v4206
      %v4355 = vadd.f32 %v3956, %v4206
      %v4356 = vadd.f32 %v3957, %v4206
      %v4357 = vadd.f32 %v3958, %v4206
      %v4358 = vadd.f32 %v3959, %v4206
      %v4359 = vadd.f32 %v3960, %v4206
      %v4360 = vadd.f32 %v3961, %v4206
      %v4361 = vadd.f32 %v3962, %v4206
      %v4362 = vadd.f32 %v3963, %v4206
      %v4363 = vadd.f32 %v3964, %v4206
      %v4364 = vadd.f32 %v3965, %v4206
      %v4365 = vadd.f32 %v3966, %v4206
      %v4366 = vadd.f32 %v3967, %v4206
      %v4367 = vadd.f32 %v3968, %v4206
      %v4368 = vadd.f32 %v3969, %v4206
      %v4369 = vadd.f32 %v3970, %v4206
      %v4370 = vadd.f32 %v3971, %v4206
      %v4371 = vadd.f32 %v3972, %v4206
      %v4372 = vadd.f32 %v3973, %v4206
      %v4373 = vadd.f32 %v3974, %v4206
      %v4374 = vadd.f32 %v3975, %v4206
      %v4375 = vadd.f32 %v3976, %v4206
      %v4376 = vadd.f32 %v3977, %v4206
      %v4377 = vadd.f32 %v3978, %v4206
      %v4378 = vadd.f32 %v3979, %v4206
      %v4379 = vadd.f32 %v3980, %v4206
      %v4380 = vadd.f32 %v3981, %v4206
      %v4381 = vadd.f32 %v3982, %v4206
      %v4382 = vadd.f32 %v3983, %v4206
      %v4383 = vadd.f32 %v3984, %v4206
      %v4384 = vadd.f32 %v3985, %v4206
      %v4385 = vadd.f32 %v3986, %v4206
      %v4386 = vadd.f32 %v3987, %v4206
      %v4387 = vadd.f32 %v3988, %v4206
      %v4388 = vadd.f32 %v3989, %v4206
      %v4389 = vadd.f32 %v3990, %v4206
      %v4390 = vadd.f32 %v3991, %v4206
      %v4391 = vadd.f32 %v3992, %v4206
      %v4392 = vadd.f32 %v3993, %v4206
      %v4393 = vadd.f32 %v3994, %v4206
      %v4394 = vadd.f32 %v3995, %v4206
      %v4395 = vadd.f32 %v3996, %v4206
      %v4396 = vadd.f32 %v3997, %v4206
      %v4397 = vadd.f32 %v3998, %v4206
      %v4398 = vadd.f32 %v3999, %v4206
      %v4399 = vadd.f32 %v4000, %v4206
      %v4400 = vadd.f32 %v4001, %v4206
      %v4401 = vadd.f32 %v4002, %v4206
      %v4402 = vadd.f32 %v4003, %v4206
      %v4403 = vadd.f32 %v4004, %v4206
      %v4404 = vadd.f32 %v4005, %v4206
      %v4405 = vadd.f32 %v4006, %v4206
      %v4406 = vadd.f32 %v4007, %v4206
      %v4407 = vadd.f32 %v4008, %v4206
      %v4408 = vadd.f32 %v4009, %v4206
      %v4409 = vadd.f32 %v4010, %v4206
      %v4410 = vadd.f32 %v4011, %v4206
      %v4411 = vadd.f32 %v4012, %v4206
      %v4412 = vadd.f32 %v4013, %v4206
      %v4413 = vadd.f32 %v4014, %v4206
      %v4414 = vadd.f32 %v4015, %v4206
      %v4415 = vadd.f32 %v4016, %v4206
      %v4416 = vadd.f32 %v4017, %v4206
      %v4417 = vadd.f32 %v4018, %v4206
      %v4418 = vadd.f32 %v4019, %v4206
      %v4419 = vadd.f32 %v4020, %v4206
      %v4420 = vadd.f32 %v4021, %v4206
      %v4421 = vadd.f32 %v4022, %v4206
      %v4422 = vadd.f32 %v4023, %v4206
      %v4423 = vadd.f32 %v4024, %v4206
      %v4424 = vadd.f32 %v4025, %v4206
      %v4425 = vadd.f32 %v4026, %v4206
      %v4426 = vadd.f32 %v4027, %v4206
      %v4427 = vadd.f32 %v4028, %v4206
      %v4428 = vadd.f32 %v4029, %v4206
      %v4429 = vadd.f32 %v4030, %v4206
      %v4430 = vadd.f32 %v4031, %v4206
      %v4431 = vadd.f32 %v4032, %v4206
      %v4432 = vadd.f32 %v4033, %v4206
      %v4433 = vadd.f32 %v4034, %v4206
      %v4434 = vadd.f32 %v4035, %v4206
      %v4435 = vadd.f32 %v4036, %v4206
      %v4436 = vadd.f32 %v4037, %v4206
      %v4437 = vadd.f32 %v4038, %v4206
      %v4438 = vadd.f32 %v4039, %v4206
      %v4439 = vadd.f32 %v4040, %v4206
      %v4440 = vadd.f32 %v4041, %v4206
      %v4441 = vadd.f32 %v4042, %v4206
      %v4442 = vadd.f32 %v4043, %v4206
      %v4443 = vadd.f32 %v4044, %v4206
      %v4444 = vadd.f32 %v4045, %v4206
      %v4445 = vadd.f32 %v4046, %v4206
      %v4446 = vadd.f32 %v4047, %v4206
      %v4447 = vadd.f32 %v4048, %v4206
      %v4448 = vadd.f32 %v4049, %v4206
      %v4449 = vadd.f32 %v4050, %v4206
      %v4450 = vadd.f32 %v4051, %v4206
      %v4451 = vadd.f32 %v4052, %v4206
      %v4452 = vadd.f32 %v4053, %v4206
      %v4453 = vadd.f32 %v4054, %v4206
      %v4454 = vadd.f32 %v4055, %v4206
      %v4455 = vadd.f32 %v4056, %v4206
      %v4456 = vadd.f32 %v4057, %v4206
      %v4457 = vadd.f32 %v4058, %v4206
      %v4458 = vadd.f32 %v4059, %v4206
      %v4459 = vadd.f32 %v4060, %v4206
      %v4460 = vadd.f32 %v4061, %v4206
      %v4461 = vadd.f32 %v4062, %v4206
      %v4462 = vadd.f32 %v4063, %v4206
      %v4463 = vadd.f32 %v4064, %v4206
      %v4464 = vadd.f32 %v4065, %v4206
      %v4465 = vadd.f32 %v4066, %v4206
      %v4466 = vadd.f32 %v4067, %v4206
      %v4467 = vadd.f32 %v4068, %v4206
      %v4468 = vadd.f32 %v4069, %v4206
      %v4469 = vadd.f32 %v4070, %v4206
      %v4470 = vadd.f32 %v4071, %v4206
      %v4471 = vadd.f32 %v4072, %v4206
      %v4472 = vadd.f32 %v4073, %v4206
      %v4473 = vadd.f32 %v4074, %v4206
      %v4474 = vadd.f32 %v4075, %v4206
      %v4475 = vadd.f32 %v4076, %v4206
      %v4476 = vadd.f32 %v4077, %v4206
      %v4477 = vadd.f32 %v4078, %v4206
      %v4478 = vadd.f32 %v4079, %v4206
      %v4479 = vadd.f32 %v4080, %v4206
      %v4480 = vadd.f32 %v4081, %v4206
      %v4481 = vadd.f32 %v4082, %v4206
      %v4482 = vadd.f32 %v4083, %v4206
      %v4483 = vadd.f32 %v4084, %v4206
      %v4484 = vadd.f32 %v4085, %v4206
      %v4485 = vadd.f32 %v4086, %v4206
      %v4486 = vadd.f32 %v4087, %v4206
      %v4487 = vadd.f32 %v4088, %v4206
      %v4488 = vadd.f32 %v4089, %v4206
      %v4489 = vadd.f32 %v4090, %v4206
      %v4490 = vadd.f32 %v4091, %v4206
      %v4491 = vadd.f32 %v4092, %v4206
      %v4492 = vadd.f32 %v4093, %v4206
      %v4493 = vadd.f32 %v4094, %v4206
      %v4494 = vadd.f32 %v4095, %v4206
      %v4495 = vadd.f32 %v4096, %v4206
      %v4496 = vadd.f32 %v4097, %v4206
      %v4497 = vadd.f32 %v4098, %v4206
      %v4498 = vadd.f32 %v4099, %v4206
      %v4499 = vadd.f32 %v4100, %v4206
      %v4500 = vadd.f32 %v4101, %v4206
      %v4501 = vadd.f32 %v4102, %v4206
      %v4502 = vadd.f32 %v4103, %v4206
      %v4503 = vadd.f32 %v4104, %v4206
      %v4504 = vadd.f32 %v4105, %v4206
      %v4505 = vadd.f32 %v4106, %v4206
      %v4506 = vadd.f32 %v4107, %v4206
      %v4507 = vadd.f32 %v4108, %v4206
      %v4508 = vadd.f32 %v4109, %v4206
      %v4509 = vadd.f32 %v4110, %v4206
      %v4510 = vadd.f32 %v4111, %v4206
      %v4511 = vadd.f32 %v4112, %v4206
      %v4512 = vadd.f32 %v4113, %v4206
      %v4513 = vadd.f32 %v4114, %v4206
      %v4514 = vadd.f32 %v4115, %v4206
      %v4515 = vadd.f32 %v4116, %v4206
      %v4516 = vadd.f32 %v4117, %v4206
      %v4517 = vadd.f32 %v4118, %v4206
      %v4518 = vadd.f32 %v4119, %v4206
      %v4519 = vadd.f32 %v4120, %v4206
      %v4520 = vadd.f32 %v4121, %v4206
      %v4521 = vadd.f32 %v4122, %v4206
      %v4522 = vadd.f32 %v4123, %v4206
      %v4523 = vadd.f32 %v4124, %v4206
      %v4524 = vadd.f32 %v4125, %v4206
      %v4525 = vadd.f32 %v4126, %v4206
      %v4526 = vadd.f32 %v4127, %v4206
      %v4527 = vadd.f32 %v4128, %v4206
      %v4528 = vadd.f32 %v4129, %v4206
      %v4529 = vadd.f32 %v4130, %v4206
      %v4530 = vadd.f32 %v4131, %v4206
      %v4531 = vadd.f32 %v4132, %v4206
      %v4532 = vadd.f32 %v4133, %v4206
      %v4533 = vadd.f32 %v4134, %v4206
      %v4534 = vadd.f32 %v4135, %v4206
      %v4535 = vadd.f32 %v4136, %v4206
      %v4536 = vadd.f32 %v4137, %v4206
      %v4537 = vadd.f32 %v4138, %v4206
      %v4538 = vadd.f32 %v4139, %v4206
      %v4539 = vadd.f32 %v4140, %v4206
      %v4540 = vadd.f32 %v4141, %v4206
      %v4541 = vadd.f32 %v4142, %v4206
      %v4542 = vadd.f32 %v4143, %v4206
      %v4543 = vadd.f32 %v4144, %v4206
      %v4544 = vadd.f32 %v4145, %v4206
      %v4545 = vadd.f32 %v4146, %v4206
      %v4546 = vadd.f32 %v4147, %v4206
      %v4547 = vadd.f32 %v4148, %v4206
      %v4548 = vadd.f32 %v4149, %v4206
      %v4549 = vadd.f32 %v4150, %v4206
      %v4550 = vadd.f32 %v4151, %v4206
      %v4551 = vadd.f32 %v4152, %v4206
      %v4552 = vadd.f32 %v4153, %v4206
      %v4553 = vadd.f32 %v4154, %v4206
      %v4554 = vadd.f32 %v4155, %v4206
      %v4555 = vadd.f32 %v4156, %v4206
      %v4556 = vadd.f32 %v4157, %v4206
      %v4557 = vadd.f32 %v4158, %v4206
      %v4558 = vadd.f32 %v4159, %v4206
      %v4559 = vadd.f32 %v4160, %v4206
      %v4560 = vadd.f32 %v4161, %v4206
      %v4561 = vadd.f32 %v4162, %v4206
      %v4562 = vadd.f32 %v4163, %v4206
      %v4563 = vadd.f32 %v4164, %v4206
      %v4564 = vadd.f32 %v4165, %v4206
      %v4565 = vadd.f32 %v4166, %v4206
      %v4566 = vadd.f32 %v4167, %v4206
      %v4567 = vadd.f32 %v4168, %v4206
      %v4568 = vadd.f32 %v4169, %v4206
      %v4569 = vadd.f32 %v4170, %v4206
      %v4570 = vadd.f32 %v4171, %v4206
      %v4571 = vadd.f32 %v4172, %v4206
      %v4572 = vadd.f32 %v4173, %v4206
      %v4573 = vadd.f32 %v4174, %v4206
      %v4574 = vadd.f32 %v4175, %v4206
      %v4575 = vadd.f32 %v4176, %v4206
      %v4576 = vadd.f32 %v4177, %v4206
      %v4577 = vadd.f32 %v4178, %v4206
      %v4578 = vadd.f32 %v4179, %v4206
      %v4579 = vadd.f32 %v4180, %v4206
      %v4580 = vadd.f32 %v4181, %v4206
      %v4581 = vadd.f32 %v4182, %v4206
      %v4582 = vadd.f32 %v4183, %v4206
      %v4583 = vadd.f32 %v4184, %v4206
      %v4584 = vadd.f32 %v4185, %v4206
      %v4585 = vadd.f32 %v4186, %v4206
      %v4586 = vadd.f32 %v4187, %v4206
      %v4587 = vadd.f32 %v4188, %v4206
      %v4588 = vadd.f32 %v4189, %v4206
      %v4589 = vadd.f32 %v4190, %v4206
      %v4590 = vadd.f32 %v4191, %v4206
      %v4591 = vadd.f32 %v4192, %v4206
      %v4592 = vadd.f32 %v4193, %v4206
      %v4593 = vadd.f32 %v4194, %v4206
      %v4594 = vadd.f32 %v4195, %v4206
      %v4595 = vadd.f32 %v4196, %v4206
      %v4596 = vadd.f32 %v4197, %v4206
      %v4597 = vadd.f32 %v4198, %v4206
      %v4598 = vadd.f32 %v4199, %v4206
      %v4599 = vadd.f32 %v4200, %v4206
      %v4600 = vmul.f32 %v4208, 0.1
      %v4601 = vmul.f32 %v4209, 0.1
      %v4602 = vmul.f32 %v4210, 0.1
      %v4603 = vmul.f32 %v4211, 0.1
      %v4604 = vmul.f32 %v4212, 0.1
      %v4605 = vmul.f32 %v4213, 0.1
      %v4606 = vmul.f32 %v4214, 0.1
      %v4607 = vmul.f32 %v4215, 0.1
      %v4608 = vmul.f32 %v4216, 0.1
      %v4609 = vmul.f32 %v4217, 0.1
      %v4610 = vmul.f32 %v4218, 0.1
      %v4611 = vmul.f32 %v4219, 0.1
      %v4612 = vmul.f32 %v4220, 0.1
      %v4613 = vmul.f32 %v4221, 0.1
      %v4614 = vmul.f32 %v4222, 0.1
      %v4615 = vmul.f32 %v4223, 0.1
      %v4616 = vmul.f32 %v4224, 0.1
      %v4617 = vmul.f32 %v4225, 0.1
      %v4618 = vmul.f32 %v4226, 0.1
      %v4619 = vmul.f32 %v4227, 0.1
      %v4620 = vmul.f32 %v4228, 0.1
      %v4621 = vmul.f32 %v4229, 0.1
      %v4622 = vmul.f32 %v4230, 0.1
      %v4623 = vmul.f32 %v4231, 0.1
      %v4624 = vmul.f32 %v4232, 0.1
      %v4625 = vmul.f32 %v4233, 0.1
      %v4626 = vmul.f32 %v4234, 0.1
      %v4627 = vmul.f32 %v4235, 0.1
      %v4628 = vmul.f32 %v4236, 0.1
      %v4629 = vmul.f32 %v4237, 0.1
      %v4630 = vmul.f32 %v4238, 0.1
      %v4631 = vmul.f32 %v4239, 0.1
      %v4632 = vmul.f32 %v4240, 0.1
      %v4633 = vmul.f32 %v4241, 0.1
      %v4634 = vmul.f32 %v4242, 0.1
      %v4635 = vmul.f32 %v4243, 0.1
      %v4636 = vmul.f32 %v4244, 0.1
      %v4637 = vmul.f32 %v4245, 0.1
      %v4638 = vmul.f32 %v4246, 0.1
      %v4639 = vmul.f32 %v4247, 0.1
      %v4640 = vmul.f32 %v4248, 0.1
      %v4641 = vmul.f32 %v4249, 0.1
      %v4642 = vmul.f32 %v4250, 0.1
      %v4643 = vmul.f32 %v4251, 0.1
      %v4644 = vmul.f32 %v4252, 0.1
      %v4645 = vmul.f32 %v4253, 0.1
      %v4646 = vmul.f32 %v4254, 0.1
      %v4647 = vmul.f32 %v4255, 0.1
      %v4648 = vmul.f32 %v4256, 0.1
      %v4649 = vmul.f32 %v4257, 0.1
      %v4650 = vmul.f32 %v4258, 0.1
      %v4651 = vmul.f32 %v4259, 0.1
      %v4652 = vmul.f32 %v4260, 0.1
      %v4653 = vmul.f32 %v4261, 0.1
      %v4654 = vmul.f32 %v4262, 0.1
      %v4655 = vmul.f32 %v4263, 0.1
      %v4656 = vmul.f32 %v4264, 0.1
      %v4657 = vmul.f32 %v4265, 0.1
      %v4658 = vmul.f32 %v4266, 0.1
      %v4659 = vmul.f32 %v4267, 0.1
      %v4660 = vmul.f32 %v4268, 0.1
      %v4661 = vmul.f32 %v4269, 0.1
      %v4662 = vmul.f32 %v4270, 0.1
      %v4663 = vmul.f32 %v4271, 0.1
      %v4664 = vmul.f32 %v4272, 0.1
      %v4665 = vmul.f32 %v4273, 0.1
      %v4666 = vmul.f32 %v4274, 0.1
      %v4667 = vmul.f32 %v4275, 0.1
      %v4668 = vmul.f32 %v4276, 0.1
      %v4669 = vmul.f32 %v4277, 0.1
      %v4670 = vmul.f32 %v4278, 0.1
      %v4671 = vmul.f32 %v4279, 0.1
      %v4672 = vmul.f32 %v4280, 0.1
      %v4673 = vmul.f32 %v4281, 0.1
      %v4674 = vmul.f32 %v4282, 0.1
      %v4675 = vmul.f32 %v4283, 0.1
      %v4676 = vmul.f32 %v4284, 0.1
      %v4677 = vmul.f32 %v4285, 0.1
      %v4678 = vmul.f32 %v4286, 0.1
      %v4679 = vmul.f32 %v4287, 0.1
      %v4680 = vmul.f32 %v4288, 0.1
      %v4681 = vmul.f32 %v4289, 0.1
      %v4682 = vmul.f32 %v4290, 0.1
      %v4683 = vmul.f32 %v4291, 0.1
      %v4684 = vmul.f32 %v4292, 0.1
      %v4685 = vmul.f32 %v4293, 0.1
      %v4686 = vmul.f32 %v4294, 0.1
      %v4687 = vmul.f32 %v4295, 0.1
      %v4688 = vmul.f32 %v4296, 0.1
      %v4689 = vmul.f32 %v4297, 0.1
      %v4690 = vmul.f32 %v4298, 0.1
      %v4691 = vmul.f32 %v4299, 0.1
      %v4692 = vmul.f32 %v4300, 0.1
      %v4693 = vmul.f32 %v4301, 0.1
      %v4694 = vmul.f32 %v4302, 0.1
      %v4695 = vmul.f32 %v4303, 0.1
      %v4696 = vmul.f32 %v4304, 0.1
      %v4697 = vmul.f32 %v4305, 0.1
      %v4698 = vmul.f32 %v4306, 0.1
      %v4699 = vmul.f32 %v4307, 0.1
      %v4700 = vmul.f32 %v4308, 0.1
      %v4701 = vmul.f32 %v4309, 0.1
      %v4702 = vmul.f32 %v4310, 0.1
      %v4703 = vmul.f32 %v4311, 0.1
      %v4704 = vmul.f32 %v4312, 0.1
      %v4705 = vmul.f32 %v4313, 0.1
      %v4706 = vmul.f32 %v4314, 0.1
      %v4707 = vmul.f32 %v4315, 0.1
      %v4708 = vmul.f32 %v4316, 0.1
      %v4709 = vmul.f32 %v4317, 0.1
      %v4710 = vmul.f32 %v4318, 0.1
      %v4711 = vmul.f32 %v4319, 0.1
      %v4712 = vmul.f32 %v4320, 0.1
      %v4713 = vmul.f32 %v4321, 0.1
      %v4714 = vmul.f32 %v4322, 0.1
      %v4715 = vmul.f32 %v4323, 0.1
      %v4716 = vmul.f32 %v4324, 0.1
      %v4717 = vmul.f32 %v4325, 0.1
      %v4718 = vmul.f32 %v4326, 0.1
      %v4719 = vmul.f32 %v4327, 0.1
      %v4720 = vmul.f32 %v4328, 0.1
      %v4721 = vmul.f32 %v4329, 0.1
      %v4722 = vmul.f32 %v4330, 0.1
      %v4723 = vmul.f32 %v4331, 0.1
      %v4724 = vmul.f32 %v4332, 0.1
      %v4725 = vmul.f32 %v4333, 0.1
      %v4726 = vmul.f32 %v4334, 0.1
      %v4727 = vmul.f32 %v4335, 0.1
      %v4728 = vmul.f32 %v4336, 0.1
      %v4729 = vmul.f32 %v4337, 0.1
      %v4730 = vmul.f32 %v4338, 0.1
      %v4731 = vmul.f32 %v4339, 0.1
      %v4732 = vmul.f32 %v4340, 0.1
      %v4733 = vmul.f32 %v4341, 0.1
      %v4734 = vmul.f32 %v4342, 0.1
      %v4735 = vmul.f32 %v4343, 0.1
      %v4736 = vmul.f32 %v4344, 0.1
      %v4737 = vmul.f32 %v4345, 0.1
      %v4738 = vmul.f32 %v4346, 0.1
      %v4739 = vmul.f32 %v4347, 0.1
      %v4740 = vmul.f32 %v4348, 0.1
      %v4741 = vmul.f32 %v4349, 0.1
      %v4742 = vmul.f32 %v4350, 0.1
      %v4743 = vmul.f32 %v4351, 0.1
      %v4744 = vmul.f32 %v4352, 0.1
      %v4745 = vmul.f32 %v4353, 0.1
      %v4746 = vmul.f32 %v4354, 0.1
      %v4747 = vmul.f32 %v4355, 0.1
      %v4748 = vmul.f32 %v4356, 0.1
      %v4749 = vmul.f32 %v4357, 0.1
      %v4750 = vmul.f32 %v4358, 0.1
      %v4751 = vmul.f32 %v4359, 0.1
      %v4752 = vmul.f32 %v4360, 0.1
      %v4753 = vmul.f32 %v4361, 0.1
      %v4754 = vmul.f32 %v4362, 0.1
      %v4755 = vmul.f32 %v4363, 0.1
      %v4756 = vmul.f32 %v4364, 0.1
      %v4757 = vmul.f32 %v4365, 0.1
      %v4758 = vmul.f32 %v4366, 0.1
      %v4759 = vmul.f32 %v4367, 0.1
      %v4760 = vmul.f32 %v4368, 0.1
      %v4761 = vmul.f32 %v4369, 0.1
      %v4762 = vmul.f32 %v4370, 0.1
      %v4763 = vmul.f32 %v4371, 0.1
      %v4764 = vmul.f32 %v4372, 0.1
      %v4765 = vmul.f32 %v4373, 0.1
      %v4766 = vmul.f32 %v4374, 0.1
      %v4767 = vmul.f32 %v4375, 0.1
      %v4768 = vmul.f32 %v4376, 0.1
      %v4769 = vmul.f32 %v4377, 0.1
      %v4770 = vmul.f32 %v4378, 0.1
      %v4771 = vmul.f32 %v4379, 0.1
      %v4772 = vmul.f32 %v4380, 0.1
      %v4773 = vmul.f32 %v4381, 0.1
      %v4774 = vmul.f32 %v4382, 0.1
      %v4775 = vmul.f32 %v4383, 0.1
      %v4776 = vmul.f32 %v4384, 0.1
      %v4777 = vmul.f32 %v4385, 0.1
      %v4778 = vmul.f32 %v4386, 0.1
      %v4779 = vmul.f32 %v4387, 0.1
      %v4780 = vmul.f32 %v4388, 0.1
      %v4781 = vmul.f32 %v4389, 0.1
      %v4782 = vmul.f32 %v4390, 0.1
      %v4783 = vmul.f32 %v4391, 0.1
      %v4784 = vmul.f32 %v4392, 0.1
      %v4785 = vmul.f32 %v4393, 0.1
      %v4786 = vmul.f32 %v4394, 0.1
      %v4787 = vmul.f32 %v4395, 0.1
      %v4788 = vmul.f32 %v4396, 0.1
      %v4789 = vmul.f32 %v4397, 0.1
      %v4790 = vmul.f32 %v4398, 0.1
      %v4791 = vmul.f32 %v4399, 0.1
      %v4792 = vmul.f32 %v4400, 0.1
      %v4793 = vmul.f32 %v4401, 0.1
      %v4794 = vmul.f32 %v4402, 0.1
      %v4795 = vmul.f32 %v4403, 0.1
      %v4796 = vmul.f32 %v4404, 0.1
      %v4797 = vmul.f32 %v4405, 0.1
      %v4798 = vmul.f32 %v4406, 0.1
      %v4799 = vmul.f32 %v4407, 0.1
      %v4800 = vmul.f32 %v4408, 0.1
      %v4801 = vmul.f32 %v4409, 0.1
      %v4802 = vmul.f32 %v4410, 0.1
      %v4803 = vmul.f32 %v4411, 0.1
      %v4804 = vmul.f32 %v4412, 0.1
      %v4805 = vmul.f32 %v4413, 0.1
      %v4806 = vmul.f32 %v4414, 0.1
      %v4807 = vmul.f32 %v4415, 0.1
      %v4808 = vmul.f32 %v4416, 0.1
      %v4809 = vmul.f32 %v4417, 0.1
      %v4810 = vmul.f32 %v4418, 0.1
      %v4811 = vmul.f32 %v4419, 0.1
      %v4812 = vmul.f32 %v4420, 0.1
      %v4813 = vmul.f32 %v4421, 0.1
      %v4814 = vmul.f32 %v4422, 0.1
      %v4815 = vmul.f32 %v4423, 0.1
      %v4816 = vmul.f32 %v4424, 0.1
      %v4817 = vmul.f32 %v4425, 0.1
      %v4818 = vmul.f32 %v4426, 0.1
      %v4819 = vmul.f32 %v4427, 0.1
      %v4820 = vmul.f32 %v4428, 0.1
      %v4821 = vmul.f32 %v4429, 0.1
      %v4822 = vmul.f32 %v4430, 0.1
      %v4823 = vmul.f32 %v4431, 0.1
      %v4824 = vmul.f32 %v4432, 0.1
      %v4825 = vmul.f32 %v4433, 0.1
      %v4826 = vmul.f32 %v4434, 0.1
      %v4827 = vmul.f32 %v4435, 0.1
      %v4828 = vmul.f32 %v4436, 0.1
      %v4829 = vmul.f32 %v4437, 0.1
      %v4830 = vmul.f32 %v4438, 0.1
      %v4831 = vmul.f32 %v4439, 0.1
      %v4832 = vmul.f32 %v4440, 0.1
      %v4833 = vmul.f32 %v4441, 0.1
      %v4834 = vmul.f32 %v4442, 0.1
      %v4835 = vmul.f32 %v4443, 0.1
      %v4836 = vmul.f32 %v4444, 0.1
      %v4837 = vmul.f32 %v4445, 0.1
      %v4838 = vmul.f32 %v4446, 0.1
      %v4839 = vmul.f32 %v4447, 0.1
      %v4840 = vmul.f32 %v4448, 0.1
      %v4841 = vmul.f32 %v4449, 0.1
      %v4842 = vmul.f32 %v4450, 0.1
      %v4843 = vmul.f32 %v4451, 0.1
      %v4844 = vmul.f32 %v4452, 0.1
      %v4845 = vmul.f32 %v4453, 0.1
      %v4846 = vmul.f32 %v4454, 0.1
      %v4847 = vmul.f32 %v4455, 0.1
      %v4848 = vmul.f32 %v4456, 0.1
      %v4849 = vmul.f32 %v4457, 0.1
      %v4850 = vmul.f32 %v4458, 0.1
      %v4851 = vmul.f32 %v4459, 0.1
      %v4852 = vmul.f32 %v4460, 0.1
      %v4853 = vmul.f32 %v4461, 0.1
      %v4854 = vmul.f32 %v4462, 0.1
      %v4855 = vmul.f32 %v4463, 0.1
      %v4856 = vmul.f32 %v4464, 0.1
      %v4857 = vmul.f32 %v4465, 0.1
      %v4858 = vmul.f32 %v4466, 0.1
      %v4859 = vmul.f32 %v4467, 0.1
      %v4860 = vmul.f32 %v4468, 0.1
      %v4861 = vmul.f32 %v4469, 0.1
      %v4862 = vmul.f32 %v4470, 0.1
      %v4863 = vmul.f32 %v4471, 0.1
      %v4864 = vmul.f32 %v4472, 0.1
      %v4865 = vmul.f32 %v4473, 0.1
      %v4866 = vmul.f32 %v4474, 0.1
      %v4867 = vmul.f32 %v4475, 0.1
      %v4868 = vmul.f32 %v4476, 0.1
      %v4869 = vmul.f32 %v4477, 0.1
      %v4870 = vmul.f32 %v4478, 0.1
      %v4871 = vmul.f32 %v4479, 0.1
      %v4872 = vmul.f32 %v4480, 0.1
      %v4873 = vmul.f32 %v4481, 0.1
      %v4874 = vmul.f32 %v4482, 0.1
      %v4875 = vmul.f32 %v4483, 0.1
      %v4876 = vmul.f32 %v4484, 0.1
      %v4877 = vmul.f32 %v4485, 0.1
      %v4878 = vmul.f32 %v4486, 0.1
      %v4879 = vmul.f32 %v4487, 0.1
      %v4880 = vmul.f32 %v4488, 0.1
      %v4881 = vmul.f32 %v4489, 0.1
      %v4882 = vmul.f32 %v4490, 0.1
      %v4883 = vmul.f32 %v4491, 0.1
      %v4884 = vmul.f32 %v4492, 0.1
      %v4885 = vmul.f32 %v4493, 0.1
      %v4886 = vmul.f32 %v4494, 0.1
      %v4887 = vmul.f32 %v4495, 0.1
      %v4888 = vmul.f32 %v4496, 0.1
      %v4889 = vmul.f32 %v4497, 0.1
      %v4890 = vmul.f32 %v4498, 0.1
      %v4891 = vmul.f32 %v4499, 0.1
      %v4892 = vmul.f32 %v4500, 0.1
      %v4893 = vmul.f32 %v4501, 0.1
      %v4894 = vmul.f32 %v4502, 0.1
      %v4895 = vmul.f32 %v4503, 0.1
      %v4896 = vmul.f32 %v4504, 0.1
      %v4897 = vmul.f32 %v4505, 0.1
      %v4898 = vmul.f32 %v4506, 0.1
      %v4899 = vmul.f32 %v4507, 0.1
      %v4900 = vmul.f32 %v4508, 0.1
      %v4901 = vmul.f32 %v4509, 0.1
      %v4902 = vmul.f32 %v4510, 0.1
      %v4903 = vmul.f32 %v4511, 0.1
      %v4904 = vmul.f32 %v4512, 0.1
      %v4905 = vmul.f32 %v4513, 0.1
      %v4906 = vmul.f32 %v4514, 0.1
      %v4907 = vmul.f32 %v4515, 0.1
      %v4908 = vmul.f32 %v4516, 0.1
      %v4909 = vmul.f32 %v4517, 0.1
      %v4910 = vmul.f32 %v4518, 0.1
      %v4911 = vmul.f32 %v4519, 0.1
      %v4912 = vmul.f32 %v4520, 0.1
      %v4913 = vmul.f32 %v4521, 0.1
      %v4914 = vmul.f32 %v4522, 0.1
      %v4915 = vmul.f32 %v4523, 0.1
      %v4916 = vmul.f32 %v4524, 0.1
      %v4917 = vmul.f32 %v4525, 0.1
      %v4918 = vmul.f32 %v4526, 0.1
      %v4919 = vmul.f32 %v4527, 0.1
      %v4920 = vmul.f32 %v4528, 0.1
      %v4921 = vmul.f32 %v4529, 0.1
      %v4922 = vmul.f32 %v4530, 0.1
      %v4923 = vmul.f32 %v4531, 0.1
      %v4924 = vmul.f32 %v4532, 0.1
      %v4925 = vmul.f32 %v4533, 0.1
      %v4926 = vmul.f32 %v4534, 0.1
      %v4927 = vmul.f32 %v4535, 0.1
      %v4928 = vmul.f32 %v4536, 0.1
      %v4929 = vmul.f32 %v4537, 0.1
      %v4930 = vmul.f32 %v4538, 0.1
      %v4931 = vmul.f32 %v4539, 0.1
      %v4932 = vmul.f32 %v4540, 0.1
      %v4933 = vmul.f32 %v4541, 0.1
      %v4934 = vmul.f32 %v4542, 0.1
      %v4935 = vmul.f32 %v4543, 0.1
      %v4936 = vmul.f32 %v4544, 0.1
      %v4937 = vmul.f32 %v4545, 0.1
      %v4938 = vmul.f32 %v4546, 0.1
      %v4939 = vmul.f32 %v4547, 0.1
      %v4940 = vmul.f32 %v4548, 0.1
      %v4941 = vmul.f32 %v4549, 0.1
      %v4942 = vmul.f32 %v4550, 0.1
      %v4943 = vmul.f32 %v4551, 0.1
      %v4944 = vmul.f32 %v4552, 0.1
      %v4945 = vmul.f32 %v4553, 0.1
      %v4946 = vmul.f32 %v4554, 0.1
      %v4947 = vmul.f32 %v4555, 0.1
      %v4948 = vmul.f32 %v4556, 0.1
      %v4949 = vmul.f32 %v4557, 0.1
      %v4950 = vmul.f32 %v4558, 0.1
      %v4951 = vmul.f32 %v4559, 0.1
      %v4952 = vmul.f32 %v4560, 0.1
      %v4953 = vmul.f32 %v4561, 0.1
      %v4954 = vmul.f32 %v4562, 0.1
      %v4955 = vmul.f32 %v4563, 0.1
      %v4956 = vmul.f32 %v4564, 0.1
      %v4957 = vmul.f32 %v4565, 0.1
      %v4958 = vmul.f32 %v4566, 0.1
      %v4959 = vmul.f32 %v4567, 0.1
      %v4960 = vmul.f32 %v4568, 0.1
      %v4961 = vmul.f32 %v4569, 0.1
      %v4962 = vmul.f32 %v4570, 0.1
      %v4963 = vmul.f32 %v4571, 0.1
      %v4964 = vmul.f32 %v4572, 0.1
      %v4965 = vmul.f32 %v4573, 0.1
      %v4966 = vmul.f32 %v4574, 0.1
      %v4967 = vmul.f32 %v4575, 0.1
      %v4968 = vmul.f32 %v4576, 0.1
      %v4969 = vmul.f32 %v4577, 0.1
      %v4970 = vmul.f32 %v4578, 0.1
      %v4971 = vmul.f32 %v4579, 0.1
      %v4972 = vmul.f32 %v4580, 0.1
      %v4973 = vmul.f32 %v4581, 0.1
      %v4974 = vmul.f32 %v4582, 0.1
      %v4975 = vmul.f32 %v4583, 0.1
      %v4976 = vmul.f32 %v4584, 0.1
      %v4977 = vmul.f32 %v4585, 0.1
      %v4978 = vmul.f32 %v4586, 0.1
      %v4979 = vmul.f32 %v4587, 0.1
      %v4980 = vmul.f32 %v4588, 0.1
      %v4981 = vmul.f32 %v4589, 0.1
      %v4982 = vmul.f32 %v4590, 0.1
      %v4983 = vmul.f32 %v4591, 0.1
      %v4984 = vmul.f32 %v4592, 0.1
      %v4985 = vmul.f32 %v4593, 0.1
      %v4986 = vmul.f32 %v4594, 0.1
      %v4987 = vmul.f32 %v4595, 0.1
      %v4988 = vmul.f32 %v4596, 0.1
      %v4989 = vmul.f32 %v4597, 0.1
      %v4990 = vmul.f32 %v4598, 0.1
      %v4991 = vmul.f32 %v4599, 0.1
      %v4992 = vmax.f32 %v4208, %v4600
      %v4993 = vmax.f32 %v4209, %v4601
      %v4994 = vmax.f32 %v4210, %v4602
      %v4995 = vmax.f32 %v4211, %v4603
      %v4996 = vmax.f32 %v4212, %v4604
      %v4997 = vmax.f32 %v4213, %v4605
      %v4998 = vmax.f32 %v4214, %v4606
      %v4999 = vmax.f32 %v4215, %v4607
      %v5000 = vmax.f32 %v4216, %v4608
      %v5001 = vmax.f32 %v4217, %v4609
      %v5002 = vmax.f32 %v4218, %v4610
      %v5003 = vmax.f32 %v4219, %v4611
      %v5004 = vmax.f32 %v4220, %v4612
      %v5005 = vmax.f32 %v4221, %v4613
      %v5006 = vmax.f32 %v4222, %v4614
      %v5007 = vmax.f32 %v4223, %v4615
      %v5008 = vmax.f32 %v4224, %v4616
      %v5009 = vmax.f32 %v4225, %v4617
      %v5010 = vmax.f32 %v4226, %v4618
      %v5011 = vmax.f32 %v4227, %v4619
      %v5012 = vmax.f32 %v4228, %v4620
      %v5013 = vmax.f32 %v4229, %v4621
      %v5014 = vmax.f32 %v4230, %v4622
      %v5015 = vmax.f32 %v4231, %v4623
      %v5016 = vmax.f32 %v4232, %v4624
      %v5017 = vmax.f32 %v4233, %v4625
      %v5018 = vmax.f32 %v4234, %v4626
      %v5019 = vmax.f32 %v4235, %v4627
      %v5020 = vmax.f32 %v4236, %v4628
      %v5021 = vmax.f32 %v4237, %v4629
      %v5022 = vmax.f32 %v4238, %v4630
      %v5023 = vmax.f32 %v4239, %v4631
      %v5024 = vmax.f32 %v4240, %v4632
      %v5025 = vmax.f32 %v4241, %v4633
      %v5026 = vmax.f32 %v4242, %v4634
      %v5027 = vmax.f32 %v4243, %v4635
      %v5028 = vmax.f32 %v4244, %v4636
      %v5029 = vmax.f32 %v4245, %v4637
      %v5030 = vmax.f32 %v4246, %v4638
      %v5031 = vmax.f32 %v4247, %v4639
      %v5032 = vmax.f32 %v4248, %v4640
      %v5033 = vmax.f32 %v4249, %v4641
      %v5034 = vmax.f32 %v4250, %v4642
      %v5035 = vmax.f32 %v4251, %v4643
      %v5036 = vmax.f32 %v4252, %v4644
      %v5037 = vmax.f32 %v4253, %v4645
      %v5038 = vmax.f32 %v4254, %v4646
      %v5039 = vmax.f32 %v4255, %v4647
      %v5040 = vmax.f32 %v4256, %v4648
      %v5041 = vmax.f32 %v4257, %v4649
      %v5042 = vmax.f32 %v4258, %v4650
      %v5043 = vmax.f32 %v4259, %v4651
      %v5044 = vmax.f32 %v4260, %v4652
      %v5045 = vmax.f32 %v4261, %v4653
      %v5046 = vmax.f32 %v4262, %v4654
      %v5047 = vmax.f32 %v4263, %v4655
      %v5048 = vmax.f32 %v4264, %v4656
      %v5049 = vmax.f32 %v4265, %v4657
      %v5050 = vmax.f32 %v4266, %v4658
      %v5051 = vmax.f32 %v4267, %v4659
      %v5052 = vmax.f32 %v4268, %v4660
      %v5053 = vmax.f32 %v4269, %v4661
      %v5054 = vmax.f32 %v4270, %v4662
      %v5055 = vmax.f32 %v4271, %v4663
      %v5056 = vmax.f32 %v4272, %v4664
      %v5057 = vmax.f32 %v4273, %v4665
      %v5058 = vmax.f32 %v4274, %v4666
      %v5059 = vmax.f32 %v4275, %v4667
      %v5060 = vmax.f32 %v4276, %v4668
      %v5061 = vmax.f32 %v4277, %v4669
      %v5062 = vmax.f32 %v4278, %v4670
      %v5063 = vmax.f32 %v4279, %v4671
      %v5064 = vmax.f32 %v4280, %v4672
      %v5065 = vmax.f32 %v4281, %v4673
      %v5066 = vmax.f32 %v4282, %v4674
      %v5067 = vmax.f32 %v4283, %v4675
      %v5068 = vmax.f32 %v4284, %v4676
      %v5069 = vmax.f32 %v4285, %v4677
      %v5070 = vmax.f32 %v4286, %v4678
      %v5071 = vmax.f32 %v4287, %v4679
      %v5072 = vmax.f32 %v4288, %v4680
      %v5073 = vmax.f32 %v4289, %v4681
      %v5074 = vmax.f32 %v4290, %v4682
      %v5075 = vmax.f32 %v4291, %v4683
      %v5076 = vmax.f32 %v4292, %v4684
      %v5077 = vmax.f32 %v4293, %v4685
      %v5078 = vmax.f32 %v4294, %v4686
      %v5079 = vmax.f32 %v4295, %v4687
      %v5080 = vmax.f32 %v4296, %v4688
      %v5081 = vmax.f32 %v4297, %v4689
      %v5082 = vmax.f32 %v4298, %v4690
      %v5083 = vmax.f32 %v4299, %v4691
      %v5084 = vmax.f32 %v4300, %v4692
      %v5085 = vmax.f32 %v4301, %v4693
      %v5086 = vmax.f32 %v4302, %v4694
      %v5087 = vmax.f32 %v4303, %v4695
      %v5088 = vmax.f32 %v4304, %v4696
      %v5089 = vmax.f32 %v4305, %v4697
      %v5090 = vmax.f32 %v4306, %v4698
      %v5091 = vmax.f32 %v4307, %v4699
      %v5092 = vmax.f32 %v4308, %v4700
      %v5093 = vmax.f32 %v4309, %v4701
      %v5094 = vmax.f32 %v4310, %v4702
      %v5095 = vmax.f32 %v4311, %v4703
      %v5096 = vmax.f32 %v4312, %v4704
      %v5097 = vmax.f32 %v4313, %v4705
      %v5098 = vmax.f32 %v4314, %v4706
      %v5099 = vmax.f32 %v4315, %v4707
      %v5100 = vmax.f32 %v4316, %v4708
      %v5101 = vmax.f32 %v4317, %v4709
      %v5102 = vmax.f32 %v4318, %v4710
      %v5103 = vmax.f32 %v4319, %v4711
      %v5104 = vmax.f32 %v4320, %v4712
      %v5105 = vmax.f32 %v4321, %v4713
      %v5106 = vmax.f32 %v4322, %v4714
      %v5107 = vmax.f32 %v4323, %v4715
      %v5108 = vmax.f32 %v4324, %v4716
      %v5109 = vmax.f32 %v4325, %v4717
      %v5110 = vmax.f32 %v4326, %v4718
      %v5111 = vmax.f32 %v4327, %v4719
      %v5112 = vmax.f32 %v4328, %v4720
      %v5113 = vmax.f32 %v4329, %v4721
      %v5114 = vmax.f32 %v4330, %v4722
      %v5115 = vmax.f32 %v4331, %v4723
      %v5116 = vmax.f32 %v4332, %v4724
      %v5117 = vmax.f32 %v4333, %v4725
      %v5118 = vmax.f32 %v4334, %v4726
      %v5119 = vmax.f32 %v4335, %v4727
      %v5120 = vmax.f32 %v4336, %v4728
      %v5121 = vmax.f32 %v4337, %v4729
      %v5122 = vmax.f32 %v4338, %v4730
      %v5123 = vmax.f32 %v4339, %v4731
      %v5124 = vmax.f32 %v4340, %v4732
      %v5125 = vmax.f32 %v4341, %v4733
      %v5126 = vmax.f32 %v4342, %v4734
      %v5127 = vmax.f32 %v4343, %v4735
      %v5128 = vmax.f32 %v4344, %v4736
      %v5129 = vmax.f32 %v4345, %v4737
      %v5130 = vmax.f32 %v4346, %v4738
      %v5131 = vmax.f32 %v4347, %v4739
      %v5132 = vmax.f32 %v4348, %v4740
      %v5133 = vmax.f32 %v4349, %v4741
      %v5134 = vmax.f32 %v4350, %v4742
      %v5135 = vmax.f32 %v4351, %v4743
      %v5136 = vmax.f32 %v4352, %v4744
      %v5137 = vmax.f32 %v4353, %v4745
      %v5138 = vmax.f32 %v4354, %v4746
      %v5139 = vmax.f32 %v4355, %v4747
      %v5140 = vmax.f32 %v4356, %v4748
      %v5141 = vmax.f32 %v4357, %v4749
      %v5142 = vmax.f32 %v4358, %v4750
      %v5143 = vmax.f32 %v4359, %v4751
      %v5144 = vmax.f32 %v4360, %v4752
      %v5145 = vmax.f32 %v4361, %v4753
      %v5146 = vmax.f32 %v4362, %v4754
      %v5147 = vmax.f32 %v4363, %v4755
      %v5148 = vmax.f32 %v4364, %v4756
      %v5149 = vmax.f32 %v4365, %v4757
      %v5150 = vmax.f32 %v4366, %v4758
      %v5151 = vmax.f32 %v4367, %v4759
      %v5152 = vmax.f32 %v4368, %v4760
      %v5153 = vmax.f32 %v4369, %v4761
      %v5154 = vmax.f32 %v4370, %v4762
      %v5155 = vmax.f32 %v4371, %v4763
      %v5156 = vmax.f32 %v4372, %v4764
      %v5157 = vmax.f32 %v4373, %v4765
      %v5158 = vmax.f32 %v4374, %v4766
      %v5159 = vmax.f32 %v4375, %v4767
      %v5160 = vmax.f32 %v4376, %v4768
      %v5161 = vmax.f32 %v4377, %v4769
      %v5162 = vmax.f32 %v4378, %v4770
      %v5163 = vmax.f32 %v4379, %v4771
      %v5164 = vmax.f32 %v4380, %v4772
      %v5165 = vmax.f32 %v4381, %v4773
      %v5166 = vmax.f32 %v4382, %v4774
      %v5167 = vmax.f32 %v4383, %v4775
      %v5168 = vmax.f32 %v4384, %v4776
      %v5169 = vmax.f32 %v4385, %v4777
      %v5170 = vmax.f32 %v4386, %v4778
      %v5171 = vmax.f32 %v4387, %v4779
      %v5172 = vmax.f32 %v4388, %v4780
      %v5173 = vmax.f32 %v4389, %v4781
      %v5174 = vmax.f32 %v4390, %v4782
      %v5175 = vmax.f32 %v4391, %v4783
      %v5176 = vmax.f32 %v4392, %v4784
      %v5177 = vmax.f32 %v4393, %v4785
      %v5178 = vmax.f32 %v4394, %v4786
      %v5179 = vmax.f32 %v4395, %v4787
      %v5180 = vmax.f32 %v4396, %v4788
      %v5181 = vmax.f32 %v4397, %v4789
      %v5182 = vmax.f32 %v4398, %v4790
      %v5183 = vmax.f32 %v4399, %v4791
      %v5184 = vmax.f32 %v4400, %v4792
      %v5185 = vmax.f32 %v4401, %v4793
      %v5186 = vmax.f32 %v4402, %v4794
      %v5187 = vmax.f32 %v4403, %v4795
      %v5188 = vmax.f32 %v4404, %v4796
      %v5189 = vmax.f32 %v4405, %v4797
      %v5190 = vmax.f32 %v4406, %v4798
      %v5191 = vmax.f32 %v4407, %v4799
      %v5192 = vmax.f32 %v4408, %v4800
      %v5193 = vmax.f32 %v4409, %v4801
      %v5194 = vmax.f32 %v4410, %v4802
      %v5195 = vmax.f32 %v4411, %v4803
      %v5196 = vmax.f32 %v4412, %v4804
      %v5197 = vmax.f32 %v4413, %v4805
      %v5198 = vmax.f32 %v4414, %v4806
      %v5199 = vmax.f32 %v4415, %v4807
      %v5200 = vmax.f32 %v4416, %v4808
      %v5201 = vmax.f32 %v4417, %v4809
      %v5202 = vmax.f32 %v4418, %v4810
      %v5203 = vmax.f32 %v4419, %v4811
      %v5204 = vmax.f32 %v4420, %v4812
      %v5205 = vmax.f32 %v4421, %v4813
      %v5206 = vmax.f32 %v4422, %v4814
      %v5207 = vmax.f32 %v4423, %v4815
      %v5208 = vmax.f32 %v4424, %v4816
      %v5209 = vmax.f32 %v4425, %v4817
      %v5210 = vmax.f32 %v4426, %v4818
      %v5211 = vmax.f32 %v4427, %v4819
      %v5212 = vmax.f32 %v4428, %v4820
      %v5213 = vmax.f32 %v4429, %v4821
      %v5214 = vmax.f32 %v4430, %v4822
      %v5215 = vmax.f32 %v4431, %v4823
      %v5216 = vmax.f32 %v4432, %v4824
      %v5217 = vmax.f32 %v4433, %v4825
      %v5218 = vmax.f32 %v4434, %v4826
      %v5219 = vmax.f32 %v4435, %v4827
      %v5220 = vmax.f32 %v4436, %v4828
      %v5221 = vmax.f32 %v4437, %v4829
      %v5222 = vmax.f32 %v4438, %v4830
      %v5223 = vmax.f32 %v4439, %v4831
      %v5224 = vmax.f32 %v4440, %v4832
      %v5225 = vmax.f32 %v4441, %v4833
      %v5226 = vmax.f32 %v4442, %v4834
      %v5227 = vmax.f32 %v4443, %v4835
      %v5228 = vmax.f32 %v4444, %v4836
      %v5229 = vmax.f32 %v4445, %v4837
      %v5230 = vmax.f32 %v4446, %v4838
      %v5231 = vmax.f32 %v4447, %v4839
      %v5232 = vmax.f32 %v4448, %v4840
      %v5233 = vmax.f32 %v4449, %v4841
      %v5234 = vmax.f32 %v4450, %v4842
      %v5235 = vmax.f32 %v4451, %v4843
      %v5236 = vmax.f32 %v4452, %v4844
      %v5237 = vmax.f32 %v4453, %v4845
      %v5238 = vmax.f32 %v4454, %v4846
      %v5239 = vmax.f32 %v4455, %v4847
      %v5240 = vmax.f32 %v4456, %v4848
      %v5241 = vmax.f32 %v4457, %v4849
      %v5242 = vmax.f32 %v4458, %v4850
      %v5243 = vmax.f32 %v4459, %v4851
      %v5244 = vmax.f32 %v4460, %v4852
      %v5245 = vmax.f32 %v4461, %v4853
      %v5246 = vmax.f32 %v4462, %v4854
      %v5247 = vmax.f32 %v4463, %v4855
      %v5248 = vmax.f32 %v4464, %v4856
      %v5249 = vmax.f32 %v4465, %v4857
      %v5250 = vmax.f32 %v4466, %v4858
      %v5251 = vmax.f32 %v4467, %v4859
      %v5252 = vmax.f32 %v4468, %v4860
      %v5253 = vmax.f32 %v4469, %v4861
      %v5254 = vmax.f32 %v4470, %v4862
      %v5255 = vmax.f32 %v4471, %v4863
      %v5256 = vmax.f32 %v4472, %v4864
      %v5257 = vmax.f32 %v4473, %v4865
      %v5258 = vmax.f32 %v4474, %v4866
      %v5259 = vmax.f32 %v4475, %v4867
      %v5260 = vmax.f32 %v4476, %v4868
      %v5261 = vmax.f32 %v4477, %v4869
      %v5262 = vmax.f32 %v4478, %v4870
      %v5263 = vmax.f32 %v4479, %v4871
      %v5264 = vmax.f32 %v4480, %v4872
      %v5265 = vmax.f32 %v4481, %v4873
      %v5266 = vmax.f32 %v4482, %v4874
      %v5267 = vmax.f32 %v4483, %v4875
      %v5268 = vmax.f32 %v4484, %v4876
      %v5269 = vmax.f32 %v4485, %v4877
      %v5270 = vmax.f32 %v4486, %v4878
      %v5271 = vmax.f32 %v4487, %v4879
      %v5272 = vmax.f32 %v4488, %v4880
      %v5273 = vmax.f32 %v4489, %v4881
      %v5274 = vmax.f32 %v4490, %v4882
      %v5275 = vmax.f32 %v4491, %v4883
      %v5276 = vmax.f32 %v4492, %v4884
      %v5277 = vmax.f32 %v4493, %v4885
      %v5278 = vmax.f32 %v4494, %v4886
      %v5279 = vmax.f32 %v4495, %v4887
      %v5280 = vmax.f32 %v4496, %v4888
      %v5281 = vmax.f32 %v4497, %v4889
      %v5282 = vmax.f32 %v4498, %v4890
      %v5283 = vmax.f32 %v4499, %v4891
      %v5284 = vmax.f32 %v4500, %v4892
      %v5285 = vmax.f32 %v4501, %v4893
      %v5286 = vmax.f32 %v4502, %v4894
      %v5287 = vmax.f32 %v4503, %v4895
      %v5288 = vmax.f32 %v4504, %v4896
      %v5289 = vmax.f32 %v4505, %v4897
      %v5290 = vmax.f32 %v4506, %v4898
      %v5291 = vmax.f32 %v4507, %v4899
      %v5292 = vmax.f32 %v4508, %v4900
      %v5293 = vmax.f32 %v4509, %v4901
      %v5294 = vmax.f32 %v4510, %v4902
      %v5295 = vmax.f32 %v4511, %v4903
      %v5296 = vmax.f32 %v4512, %v4904
      %v5297 = vmax.f32 %v4513, %v4905
      %v5298 = vmax.f32 %v4514, %v4906
      %v5299 = vmax.f32 %v4515, %v4907
      %v5300 = vmax.f32 %v4516, %v4908
      %v5301 = vmax.f32 %v4517, %v4909
      %v5302 = vmax.f32 %v4518, %v4910
      %v5303 = vmax.f32 %v4519, %v4911
      %v5304 = vmax.f32 %v4520, %v4912
      %v5305 = vmax.f32 %v4521, %v4913
      %v5306 = vmax.f32 %v4522, %v4914
      %v5307 = vmax.f32 %v4523, %v4915
      %v5308 = vmax.f32 %v4524, %v4916
      %v5309 = vmax.f32 %v4525, %v4917
      %v5310 = vmax.f32 %v4526, %v4918
      %v5311 = vmax.f32 %v4527, %v4919
      %v5312 = vmax.f32 %v4528, %v4920
      %v5313 = vmax.f32 %v4529, %v4921
      %v5314 = vmax.f32 %v4530, %v4922
      %v5315 = vmax.f32 %v4531, %v4923
      %v5316 = vmax.f32 %v4532, %v4924
      %v5317 = vmax.f32 %v4533, %v4925
      %v5318 = vmax.f32 %v4534, %v4926
      %v5319 = vmax.f32 %v4535, %v4927
      %v5320 = vmax.f32 %v4536, %v4928
      %v5321 = vmax.f32 %v4537, %v4929
      %v5322 = vmax.f32 %v4538, %v4930
      %v5323 = vmax.f32 %v4539, %v4931
      %v5324 = vmax.f32 %v4540, %v4932
      %v5325 = vmax.f32 %v4541, %v4933
      %v5326 = vmax.f32 %v4542, %v4934
      %v5327 = vmax.f32 %v4543, %v4935
      %v5328 = vmax.f32 %v4544, %v4936
      %v5329 = vmax.f32 %v4545, %v4937
      %v5330 = vmax.f32 %v4546, %v4938
      %v5331 = vmax.f32 %v4547, %v4939
      %v5332 = vmax.f32 %v4548, %v4940
      %v5333 = vmax.f32 %v4549, %v4941
      %v5334 = vmax.f32 %v4550, %v4942
      %v5335 = vmax.f32 %v4551, %v4943
      %v5336 = vmax.f32 %v4552, %v4944
      %v5337 = vmax.f32 %v4553, %v4945
      %v5338 = vmax.f32 %v4554, %v4946
      %v5339 = vmax.f32 %v4555, %v4947
      %v5340 = vmax.f32 %v4556, %v4948
      %v5341 = vmax.f32 %v4557, %v4949
      %v5342 = vmax.f32 %v4558, %v4950
      %v5343 = vmax.f32 %v4559, %v4951
      %v5344 = vmax.f32 %v4560, %v4952
      %v5345 = vmax.f32 %v4561, %v4953
      %v5346 = vmax.f32 %v4562, %v4954
      %v5347 = vmax.f32 %v4563, %v4955
      %v5348 = vmax.f32 %v4564, %v4956
      %v5349 = vmax.f32 %v4565, %v4957
      %v5350 = vmax.f32 %v4566, %v4958
      %v5351 = vmax.f32 %v4567, %v4959
      %v5352 = vmax.f32 %v4568, %v4960
      %v5353 = vmax.f32 %v4569, %v4961
      %v5354 = vmax.f32 %v4570, %v4962
      %v5355 = vmax.f32 %v4571, %v4963
      %v5356 = vmax.f32 %v4572, %v4964
      %v5357 = vmax.f32 %v4573, %v4965
      %v5358 = vmax.f32 %v4574, %v4966
      %v5359 = vmax.f32 %v4575, %v4967
      %v5360 = vmax.f32 %v4576, %v4968
      %v5361 = vmax.f32 %v4577, %v4969
      %v5362 = vmax.f32 %v4578, %v4970
      %v5363 = vmax.f32 %v4579, %v4971
      %v5364 = vmax.f32 %v4580, %v4972
      %v5365 = vmax.f32 %v4581, %v4973
      %v5366 = vmax.f32 %v4582, %v4974
      %v5367 = vmax.f32 %v4583, %v4975
      %v5368 = vmax.f32 %v4584, %v4976
      %v5369 = vmax.f32 %v4585, %v4977
      %v5370 = vmax.f32 %v4586, %v4978
      %v5371 = vmax.f32 %v4587, %v4979
      %v5372 = vmax.f32 %v4588, %v4980
      %v5373 = vmax.f32 %v4589, %v4981
      %v5374 = vmax.f32 %v4590, %v4982
      %v5375 = vmax.f32 %v4591, %v4983
      %v5376 = vmax.f32 %v4592, %v4984
      %v5377 = vmax.f32 %v4593, %v4985
      %v5378 = vmax.f32 %v4594, %v4986
      %v5379 = vmax.f32 %v4595, %v4987
      %v5380 = vmax.f32 %v4596, %v4988
      %v5381 = vmax.f32 %v4597, %v4989
      %v5382 = vmax.f32 %v4598, %v4990
      %v5383 = vmax.f32 %v4599, %v4991
      %vm5384 = vcmask 261120
      %5385 = vst.msk [vmem:[%s199] sm:$0xff] %vm5384, %v4992
      %5386 = vst.msk [vmem:[%s199 + $0x8] sm:$0xff] %vm5384, %v4993
      %5387 = vst.msk [vmem:[%s199 + $0x10] sm:$0xff] %vm5384, %v4994
      %5388 = vst.msk [vmem:[%s199 + $0x18] sm:$0xff] %vm5384, %v4995
      %5389 = vst.msk [vmem:[%s199 + $0x20] sm:$0xff] %vm5384, %v4996
      %5390 = vst.msk [vmem:[%s199 + $0x28] sm:$0xff] %vm5384, %v4997
      %5391 = vst.msk [vmem:[%s199 + $0x30] sm:$0xff] %vm5384, %v4998
      %5392 = vst.msk [vmem:[%s199 + $0x38] sm:$0xff] %vm5384, %v4999
      %5393 = vst.msk [vmem:[%s199 + $0x40] sm:$0xff] %vm5384, %v5000
      %5394 = vst.msk [vmem:[%s199 + $0x48] sm:$0xff] %vm5384, %v5001
      %5395 = vst.msk [vmem:[%s199 + $0x50] sm:$0xff] %vm5384, %v5002
      %5396 = vst.msk [vmem:[%s199 + $0x58] sm:$0xff] %vm5384, %v5003
      %5397 = vst.msk [vmem:[%s199 + $0x60] sm:$0xff] %vm5384, %v5004
      %5398 = vst.msk [vmem:[%s199 + $0x68] sm:$0xff] %vm5384, %v5005
      %5399 = vst.msk [vmem:[%s199 + $0x70] sm:$0xff] %vm5384, %v5006
      %5400 = vst.msk [vmem:[%s199 + $0x78] sm:$0xff] %vm5384, %v5007
      %5401 = vst.msk [vmem:[%s199 + $0x80] sm:$0xff] %vm5384, %v5008
      %5402 = vst.msk [vmem:[%s199 + $0x88] sm:$0xff] %vm5384, %v5009
      %5403 = vst.msk [vmem:[%s199 + $0x90] sm:$0xff] %vm5384, %v5010
      %5404 = vst.msk [vmem:[%s199 + $0x98] sm:$0xff] %vm5384, %v5011
      %5405 = vst.msk [vmem:[%s199 + $0xa0] sm:$0xff] %vm5384, %v5012
      %5406 = vst.msk [vmem:[%s199 + $0xa8] sm:$0xff] %vm5384, %v5013
      %5407 = vst.msk [vmem:[%s199 + $0xb0] sm:$0xff] %vm5384, %v5014
      %5408 = vst.msk [vmem:[%s199 + $0xb8] sm:$0xff] %vm5384, %v5015
      %5409 = vst.msk [vmem:[%s199 + $0xc0] sm:$0xff] %vm5384, %v5016
      %5410 = vst.msk [vmem:[%s199 + $0xc8] sm:$0xff] %vm5384, %v5017
      %5411 = vst.msk [vmem:[%s199 + $0xd0] sm:$0xff] %vm5384, %v5018
      %5412 = vst.msk [vmem:[%s199 + $0xd8] sm:$0xff] %vm5384, %v5019
      %5413 = vst.msk [vmem:[%s199 + $0xe0] sm:$0xff] %vm5384, %v5020
      %5414 = vst.msk [vmem:[%s199 + $0xe8] sm:$0xff] %vm5384, %v5021
      %5415 = vst.msk [vmem:[%s199 + $0xf0] sm:$0xff] %vm5384, %v5022
      %5416 = vst.msk [vmem:[%s199 + $0xf8] sm:$0xff] %vm5384, %v5023
      %5417 = vst.msk [vmem:[%s199 + $0x100] sm:$0xff] %vm5384, %v5024
      %5418 = vst.msk [vmem:[%s199 + $0x108] sm:$0xff] %vm5384, %v5025
      %5419 = vst.msk [vmem:[%s199 + $0x110] sm:$0xff] %vm5384, %v5026
      %5420 = vst.msk [vmem:[%s199 + $0x118] sm:$0xff] %vm5384, %v5027
      %5421 = vst.msk [vmem:[%s199 + $0x120] sm:$0xff] %vm5384, %v5028
      %5422 = vst.msk [vmem:[%s199 + $0x128] sm:$0xff] %vm5384, %v5029
      %5423 = vst.msk [vmem:[%s199 + $0x130] sm:$0xff] %vm5384, %v5030
      %5424 = vst.msk [vmem:[%s199 + $0x138] sm:$0xff] %vm5384, %v5031
      %5425 = vst.msk [vmem:[%s199 + $0x140] sm:$0xff] %vm5384, %v5032
      %5426 = vst.msk [vmem:[%s199 + $0x148] sm:$0xff] %vm5384, %v5033
      %5427 = vst.msk [vmem:[%s199 + $0x150] sm:$0xff] %vm5384, %v5034
      %5428 = vst.msk [vmem:[%s199 + $0x158] sm:$0xff] %vm5384, %v5035
      %5429 = vst.msk [vmem:[%s199 + $0x160] sm:$0xff] %vm5384, %v5036
      %5430 = vst.msk [vmem:[%s199 + $0x168] sm:$0xff] %vm5384, %v5037
      %5431 = vst.msk [vmem:[%s199 + $0x170] sm:$0xff] %vm5384, %v5038
      %5432 = vst.msk [vmem:[%s199 + $0x178] sm:$0xff] %vm5384, %v5039
      %5433 = vst.msk [vmem:[%s199 + $0x180] sm:$0xff] %vm5384, %v5040
      %5434 = vst.msk [vmem:[%s199 + $0x188] sm:$0xff] %vm5384, %v5041
      %5435 = vst.msk [vmem:[%s199 + $0x190] sm:$0xff] %vm5384, %v5042
      %5436 = vst.msk [vmem:[%s199 + $0x198] sm:$0xff] %vm5384, %v5043
      %5437 = vst.msk [vmem:[%s199 + $0x1a0] sm:$0xff] %vm5384, %v5044
      %5438 = vst.msk [vmem:[%s199 + $0x1a8] sm:$0xff] %vm5384, %v5045
      %5439 = vst.msk [vmem:[%s199 + $0x1b0] sm:$0xff] %vm5384, %v5046
      %5440 = vst.msk [vmem:[%s199 + $0x1b8] sm:$0xff] %vm5384, %v5047
      %5441 = vst.msk [vmem:[%s199 + $0x1c0] sm:$0xff] %vm5384, %v5048
      %5442 = vst.msk [vmem:[%s199 + $0x1c8] sm:$0xff] %vm5384, %v5049
      %5443 = vst.msk [vmem:[%s199 + $0x1d0] sm:$0xff] %vm5384, %v5050
      %5444 = vst.msk [vmem:[%s199 + $0x1d8] sm:$0xff] %vm5384, %v5051
      %5445 = vst.msk [vmem:[%s199 + $0x1e0] sm:$0xff] %vm5384, %v5052
      %5446 = vst.msk [vmem:[%s199 + $0x1e8] sm:$0xff] %vm5384, %v5053
      %5447 = vst.msk [vmem:[%s199 + $0x1f0] sm:$0xff] %vm5384, %v5054
      %5448 = vst.msk [vmem:[%s199 + $0x1f8] sm:$0xff] %vm5384, %v5055
      %5449 = vst.msk [vmem:[%s199 + $0x200] sm:$0xff] %vm5384, %v5056
      %5450 = vst.msk [vmem:[%s199 + $0x208] sm:$0xff] %vm5384, %v5057
      %5451 = vst.msk [vmem:[%s199 + $0x210] sm:$0xff] %vm5384, %v5058
      %5452 = vst.msk [vmem:[%s199 + $0x218] sm:$0xff] %vm5384, %v5059
      %5453 = vst.msk [vmem:[%s199 + $0x220] sm:$0xff] %vm5384, %v5060
      %5454 = vst.msk [vmem:[%s199 + $0x228] sm:$0xff] %vm5384, %v5061
      %5455 = vst.msk [vmem:[%s199 + $0x230] sm:$0xff] %vm5384, %v5062
      %5456 = vst.msk [vmem:[%s199 + $0x238] sm:$0xff] %vm5384, %v5063
      %5457 = vst.msk [vmem:[%s199 + $0x240] sm:$0xff] %vm5384, %v5064
      %5458 = vst.msk [vmem:[%s199 + $0x248] sm:$0xff] %vm5384, %v5065
      %5459 = vst.msk [vmem:[%s199 + $0x250] sm:$0xff] %vm5384, %v5066
      %5460 = vst.msk [vmem:[%s199 + $0x258] sm:$0xff] %vm5384, %v5067
      %5461 = vst.msk [vmem:[%s199 + $0x260] sm:$0xff] %vm5384, %v5068
      %5462 = vst.msk [vmem:[%s199 + $0x268] sm:$0xff] %vm5384, %v5069
      %5463 = vst.msk [vmem:[%s199 + $0x270] sm:$0xff] %vm5384, %v5070
      %5464 = vst.msk [vmem:[%s199 + $0x278] sm:$0xff] %vm5384, %v5071
      %5465 = vst.msk [vmem:[%s199 + $0x280] sm:$0xff] %vm5384, %v5072
      %5466 = vst.msk [vmem:[%s199 + $0x288] sm:$0xff] %vm5384, %v5073
      %5467 = vst.msk [vmem:[%s199 + $0x290] sm:$0xff] %vm5384, %v5074
      %5468 = vst.msk [vmem:[%s199 + $0x298] sm:$0xff] %vm5384, %v5075
      %5469 = vst.msk [vmem:[%s199 + $0x2a0] sm:$0xff] %vm5384, %v5076
      %5470 = vst.msk [vmem:[%s199 + $0x2a8] sm:$0xff] %vm5384, %v5077
      %5471 = vst.msk [vmem:[%s199 + $0x2b0] sm:$0xff] %vm5384, %v5078
      %5472 = vst.msk [vmem:[%s199 + $0x2b8] sm:$0xff] %vm5384, %v5079
      %5473 = vst.msk [vmem:[%s199 + $0x2c0] sm:$0xff] %vm5384, %v5080
      %5474 = vst.msk [vmem:[%s199 + $0x2c8] sm:$0xff] %vm5384, %v5081
      %5475 = vst.msk [vmem:[%s199 + $0x2d0] sm:$0xff] %vm5384, %v5082
      %5476 = vst.msk [vmem:[%s199 + $0x2d8] sm:$0xff] %vm5384, %v5083
      %5477 = vst.msk [vmem:[%s199 + $0x2e0] sm:$0xff] %vm5384, %v5084
      %5478 = vst.msk [vmem:[%s199 + $0x2e8] sm:$0xff] %vm5384, %v5085
      %5479 = vst.msk [vmem:[%s199 + $0x2f0] sm:$0xff] %vm5384, %v5086
      %5480 = vst.msk [vmem:[%s199 + $0x2f8] sm:$0xff] %vm5384, %v5087
      %5481 = vst.msk [vmem:[%s199 + $0x300] sm:$0xff] %vm5384, %v5088
      %5482 = vst.msk [vmem:[%s199 + $0x308] sm:$0xff] %vm5384, %v5089
      %5483 = vst.msk [vmem:[%s199 + $0x310] sm:$0xff] %vm5384, %v5090
      %5484 = vst.msk [vmem:[%s199 + $0x318] sm:$0xff] %vm5384, %v5091
      %5485 = vst.msk [vmem:[%s199 + $0x320] sm:$0xff] %vm5384, %v5092
      %5486 = vst.msk [vmem:[%s199 + $0x328] sm:$0xff] %vm5384, %v5093
      %5487 = vst.msk [vmem:[%s199 + $0x330] sm:$0xff] %vm5384, %v5094
      %5488 = vst.msk [vmem:[%s199 + $0x338] sm:$0xff] %vm5384, %v5095
      %5489 = vst.msk [vmem:[%s199 + $0x340] sm:$0xff] %vm5384, %v5096
      %5490 = vst.msk [vmem:[%s199 + $0x348] sm:$0xff] %vm5384, %v5097
      %5491 = vst.msk [vmem:[%s199 + $0x350] sm:$0xff] %vm5384, %v5098
      %5492 = vst.msk [vmem:[%s199 + $0x358] sm:$0xff] %vm5384, %v5099
      %5493 = vst.msk [vmem:[%s199 + $0x360] sm:$0xff] %vm5384, %v5100
      %5494 = vst.msk [vmem:[%s199 + $0x368] sm:$0xff] %vm5384, %v5101
      %5495 = vst.msk [vmem:[%s199 + $0x370] sm:$0xff] %vm5384, %v5102
      %5496 = vst.msk [vmem:[%s199 + $0x378] sm:$0xff] %vm5384, %v5103
      %5497 = vst.msk [vmem:[%s199 + $0x380] sm:$0xff] %vm5384, %v5104
      %5498 = vst.msk [vmem:[%s199 + $0x388] sm:$0xff] %vm5384, %v5105
      %5499 = vst.msk [vmem:[%s199 + $0x390] sm:$0xff] %vm5384, %v5106
      %5500 = vst.msk [vmem:[%s199 + $0x398] sm:$0xff] %vm5384, %v5107
      %5501 = vst.msk [vmem:[%s199 + $0x3a0] sm:$0xff] %vm5384, %v5108
      %5502 = vst.msk [vmem:[%s199 + $0x3a8] sm:$0xff] %vm5384, %v5109
      %5503 = vst.msk [vmem:[%s199 + $0x3b0] sm:$0xff] %vm5384, %v5110
      %5504 = vst.msk [vmem:[%s199 + $0x3b8] sm:$0xff] %vm5384, %v5111
      %5505 = vst.msk [vmem:[%s199 + $0x3c0] sm:$0xff] %vm5384, %v5112
      %5506 = vst.msk [vmem:[%s199 + $0x3c8] sm:$0xff] %vm5384, %v5113
      %5507 = vst.msk [vmem:[%s199 + $0x3d0] sm:$0xff] %vm5384, %v5114
      %5508 = vst.msk [vmem:[%s199 + $0x3d8] sm:$0xff] %vm5384, %v5115
      %5509 = vst.msk [vmem:[%s199 + $0x3e0] sm:$0xff] %vm5384, %v5116
      %5510 = vst.msk [vmem:[%s199 + $0x3e8] sm:$0xff] %vm5384, %v5117
      %5511 = vst.msk [vmem:[%s199 + $0x3f0] sm:$0xff] %vm5384, %v5118
      %5512 = vst.msk [vmem:[%s199 + $0x3f8] sm:$0xff] %vm5384, %v5119
      %5513 = vst.msk [vmem:[%s199 + $0x400] sm:$0xff] %vm5384, %v5120
      %5514 = vst.msk [vmem:[%s199 + $0x408] sm:$0xff] %vm5384, %v5121
      %5515 = vst.msk [vmem:[%s199 + $0x410] sm:$0xff] %vm5384, %v5122
      %5516 = vst.msk [vmem:[%s199 + $0x418] sm:$0xff] %vm5384, %v5123
      %5517 = vst.msk [vmem:[%s199 + $0x420] sm:$0xff] %vm5384, %v5124
      %5518 = vst.msk [vmem:[%s199 + $0x428] sm:$0xff] %vm5384, %v5125
      %5519 = vst.msk [vmem:[%s199 + $0x430] sm:$0xff] %vm5384, %v5126
      %5520 = vst.msk [vmem:[%s199 + $0x438] sm:$0xff] %vm5384, %v5127
      %5521 = vst.msk [vmem:[%s199 + $0x440] sm:$0xff] %vm5384, %v5128
      %5522 = vst.msk [vmem:[%s199 + $0x448] sm:$0xff] %vm5384, %v5129
      %5523 = vst.msk [vmem:[%s199 + $0x450] sm:$0xff] %vm5384, %v5130
      %5524 = vst.msk [vmem:[%s199 + $0x458] sm:$0xff] %vm5384, %v5131
      %5525 = vst.msk [vmem:[%s199 + $0x460] sm:$0xff] %vm5384, %v5132
      %5526 = vst.msk [vmem:[%s199 + $0x468] sm:$0xff] %vm5384, %v5133
      %5527 = vst.msk [vmem:[%s199 + $0x470] sm:$0xff] %vm5384, %v5134
      %5528 = vst.msk [vmem:[%s199 + $0x478] sm:$0xff] %vm5384, %v5135
      %5529 = vst.msk [vmem:[%s199 + $0x480] sm:$0xff] %vm5384, %v5136
      %5530 = vst.msk [vmem:[%s199 + $0x488] sm:$0xff] %vm5384, %v5137
      %5531 = vst.msk [vmem:[%s199 + $0x490] sm:$0xff] %vm5384, %v5138
      %5532 = vst.msk [vmem:[%s199 + $0x498] sm:$0xff] %vm5384, %v5139
      %5533 = vst.msk [vmem:[%s199 + $0x4a0] sm:$0xff] %vm5384, %v5140
      %5534 = vst.msk [vmem:[%s199 + $0x4a8] sm:$0xff] %vm5384, %v5141
      %5535 = vst.msk [vmem:[%s199 + $0x4b0] sm:$0xff] %vm5384, %v5142
      %5536 = vst.msk [vmem:[%s199 + $0x4b8] sm:$0xff] %vm5384, %v5143
      %5537 = vst.msk [vmem:[%s199 + $0x4c0] sm:$0xff] %vm5384, %v5144
      %5538 = vst.msk [vmem:[%s199 + $0x4c8] sm:$0xff] %vm5384, %v5145
      %5539 = vst.msk [vmem:[%s199 + $0x4d0] sm:$0xff] %vm5384, %v5146
      %5540 = vst.msk [vmem:[%s199 + $0x4d8] sm:$0xff] %vm5384, %v5147
      %5541 = vst.msk [vmem:[%s199 + $0x4e0] sm:$0xff] %vm5384, %v5148
      %5542 = vst.msk [vmem:[%s199 + $0x4e8] sm:$0xff] %vm5384, %v5149
      %5543 = vst.msk [vmem:[%s199 + $0x4f0] sm:$0xff] %vm5384, %v5150
      %5544 = vst.msk [vmem:[%s199 + $0x4f8] sm:$0xff] %vm5384, %v5151
      %5545 = vst.msk [vmem:[%s199 + $0x500] sm:$0xff] %vm5384, %v5152
      %5546 = vst.msk [vmem:[%s199 + $0x508] sm:$0xff] %vm5384, %v5153
      %5547 = vst.msk [vmem:[%s199 + $0x510] sm:$0xff] %vm5384, %v5154
      %5548 = vst.msk [vmem:[%s199 + $0x518] sm:$0xff] %vm5384, %v5155
      %5549 = vst.msk [vmem:[%s199 + $0x520] sm:$0xff] %vm5384, %v5156
      %5550 = vst.msk [vmem:[%s199 + $0x528] sm:$0xff] %vm5384, %v5157
      %5551 = vst.msk [vmem:[%s199 + $0x530] sm:$0xff] %vm5384, %v5158
      %5552 = vst.msk [vmem:[%s199 + $0x538] sm:$0xff] %vm5384, %v5159
      %5553 = vst.msk [vmem:[%s199 + $0x540] sm:$0xff] %vm5384, %v5160
      %5554 = vst.msk [vmem:[%s199 + $0x548] sm:$0xff] %vm5384, %v5161
      %5555 = vst.msk [vmem:[%s199 + $0x550] sm:$0xff] %vm5384, %v5162
      %5556 = vst.msk [vmem:[%s199 + $0x558] sm:$0xff] %vm5384, %v5163
      %5557 = vst.msk [vmem:[%s199 + $0x560] sm:$0xff] %vm5384, %v5164
      %5558 = vst.msk [vmem:[%s199 + $0x568] sm:$0xff] %vm5384, %v5165
      %5559 = vst.msk [vmem:[%s199 + $0x570] sm:$0xff] %vm5384, %v5166
      %5560 = vst.msk [vmem:[%s199 + $0x578] sm:$0xff] %vm5384, %v5167
      %5561 = vst.msk [vmem:[%s199 + $0x580] sm:$0xff] %vm5384, %v5168
      %5562 = vst.msk [vmem:[%s199 + $0x588] sm:$0xff] %vm5384, %v5169
      %5563 = vst.msk [vmem:[%s199 + $0x590] sm:$0xff] %vm5384, %v5170
      %5564 = vst.msk [vmem:[%s199 + $0x598] sm:$0xff] %vm5384, %v5171
      %5565 = vst.msk [vmem:[%s199 + $0x5a0] sm:$0xff] %vm5384, %v5172
      %5566 = vst.msk [vmem:[%s199 + $0x5a8] sm:$0xff] %vm5384, %v5173
      %5567 = vst.msk [vmem:[%s199 + $0x5b0] sm:$0xff] %vm5384, %v5174
      %5568 = vst.msk [vmem:[%s199 + $0x5b8] sm:$0xff] %vm5384, %v5175
      %5569 = vst.msk [vmem:[%s199 + $0x5c0] sm:$0xff] %vm5384, %v5176
      %5570 = vst.msk [vmem:[%s199 + $0x5c8] sm:$0xff] %vm5384, %v5177
      %5571 = vst.msk [vmem:[%s199 + $0x5d0] sm:$0xff] %vm5384, %v5178
      %5572 = vst.msk [vmem:[%s199 + $0x5d8] sm:$0xff] %vm5384, %v5179
      %5573 = vst.msk [vmem:[%s199 + $0x5e0] sm:$0xff] %vm5384, %v5180
      %5574 = vst.msk [vmem:[%s199 + $0x5e8] sm:$0xff] %vm5384, %v5181
      %5575 = vst.msk [vmem:[%s199 + $0x5f0] sm:$0xff] %vm5384, %v5182
      %5576 = vst.msk [vmem:[%s199 + $0x5f8] sm:$0xff] %vm5384, %v5183
      %5577 = vst.msk [vmem:[%s199 + $0x600] sm:$0xff] %vm5384, %v5184
      %5578 = vst.msk [vmem:[%s199 + $0x608] sm:$0xff] %vm5384, %v5185
      %5579 = vst.msk [vmem:[%s199 + $0x610] sm:$0xff] %vm5384, %v5186
      %5580 = vst.msk [vmem:[%s199 + $0x618] sm:$0xff] %vm5384, %v5187
      %5581 = vst.msk [vmem:[%s199 + $0x620] sm:$0xff] %vm5384, %v5188
      %5582 = vst.msk [vmem:[%s199 + $0x628] sm:$0xff] %vm5384, %v5189
      %5583 = vst.msk [vmem:[%s199 + $0x630] sm:$0xff] %vm5384, %v5190
      %5584 = vst.msk [vmem:[%s199 + $0x638] sm:$0xff] %vm5384, %v5191
      %5585 = vst.msk [vmem:[%s199 + $0x640] sm:$0xff] %vm5384, %v5192
      %5586 = vst.msk [vmem:[%s199 + $0x648] sm:$0xff] %vm5384, %v5193
      %5587 = vst.msk [vmem:[%s199 + $0x650] sm:$0xff] %vm5384, %v5194
      %5588 = vst.msk [vmem:[%s199 + $0x658] sm:$0xff] %vm5384, %v5195
      %5589 = vst.msk [vmem:[%s199 + $0x660] sm:$0xff] %vm5384, %v5196
      %5590 = vst.msk [vmem:[%s199 + $0x668] sm:$0xff] %vm5384, %v5197
      %5591 = vst.msk [vmem:[%s199 + $0x670] sm:$0xff] %vm5384, %v5198
      %5592 = vst.msk [vmem:[%s199 + $0x678] sm:$0xff] %vm5384, %v5199
      %5593 = vst.msk [vmem:[%s199 + $0x680] sm:$0xff] %vm5384, %v5200
      %5594 = vst.msk [vmem:[%s199 + $0x688] sm:$0xff] %vm5384, %v5201
      %5595 = vst.msk [vmem:[%s199 + $0x690] sm:$0xff] %vm5384, %v5202
      %5596 = vst.msk [vmem:[%s199 + $0x698] sm:$0xff] %vm5384, %v5203
      %5597 = vst.msk [vmem:[%s199 + $0x6a0] sm:$0xff] %vm5384, %v5204
      %5598 = vst.msk [vmem:[%s199 + $0x6a8] sm:$0xff] %vm5384, %v5205
      %5599 = vst.msk [vmem:[%s199 + $0x6b0] sm:$0xff] %vm5384, %v5206
      %5600 = vst.msk [vmem:[%s199 + $0x6b8] sm:$0xff] %vm5384, %v5207
      %5601 = vst.msk [vmem:[%s199 + $0x6c0] sm:$0xff] %vm5384, %v5208
      %5602 = vst.msk [vmem:[%s199 + $0x6c8] sm:$0xff] %vm5384, %v5209
      %5603 = vst.msk [vmem:[%s199 + $0x6d0] sm:$0xff] %vm5384, %v5210
      %5604 = vst.msk [vmem:[%s199 + $0x6d8] sm:$0xff] %vm5384, %v5211
      %5605 = vst.msk [vmem:[%s199 + $0x6e0] sm:$0xff] %vm5384, %v5212
      %5606 = vst.msk [vmem:[%s199 + $0x6e8] sm:$0xff] %vm5384, %v5213
      %5607 = vst.msk [vmem:[%s199 + $0x6f0] sm:$0xff] %vm5384, %v5214
      %5608 = vst.msk [vmem:[%s199 + $0x6f8] sm:$0xff] %vm5384, %v5215
      %5609 = vst.msk [vmem:[%s199 + $0x700] sm:$0xff] %vm5384, %v5216
      %5610 = vst.msk [vmem:[%s199 + $0x708] sm:$0xff] %vm5384, %v5217
      %5611 = vst.msk [vmem:[%s199 + $0x710] sm:$0xff] %vm5384, %v5218
      %5612 = vst.msk [vmem:[%s199 + $0x718] sm:$0xff] %vm5384, %v5219
      %5613 = vst.msk [vmem:[%s199 + $0x720] sm:$0xff] %vm5384, %v5220
      %5614 = vst.msk [vmem:[%s199 + $0x728] sm:$0xff] %vm5384, %v5221
      %5615 = vst.msk [vmem:[%s199 + $0x730] sm:$0xff] %vm5384, %v5222
      %5616 = vst.msk [vmem:[%s199 + $0x738] sm:$0xff] %vm5384, %v5223
      %5617 = vst.msk [vmem:[%s199 + $0x740] sm:$0xff] %vm5384, %v5224
      %5618 = vst.msk [vmem:[%s199 + $0x748] sm:$0xff] %vm5384, %v5225
      %5619 = vst.msk [vmem:[%s199 + $0x750] sm:$0xff] %vm5384, %v5226
      %5620 = vst.msk [vmem:[%s199 + $0x758] sm:$0xff] %vm5384, %v5227
      %5621 = vst.msk [vmem:[%s199 + $0x760] sm:$0xff] %vm5384, %v5228
      %5622 = vst.msk [vmem:[%s199 + $0x768] sm:$0xff] %vm5384, %v5229
      %5623 = vst.msk [vmem:[%s199 + $0x770] sm:$0xff] %vm5384, %v5230
      %5624 = vst.msk [vmem:[%s199 + $0x778] sm:$0xff] %vm5384, %v5231
      %5625 = vst.msk [vmem:[%s199 + $0x780] sm:$0xff] %vm5384, %v5232
      %5626 = vst.msk [vmem:[%s199 + $0x788] sm:$0xff] %vm5384, %v5233
      %5627 = vst.msk [vmem:[%s199 + $0x790] sm:$0xff] %vm5384, %v5234
      %5628 = vst.msk [vmem:[%s199 + $0x798] sm:$0xff] %vm5384, %v5235
      %5629 = vst.msk [vmem:[%s199 + $0x7a0] sm:$0xff] %vm5384, %v5236
      %5630 = vst.msk [vmem:[%s199 + $0x7a8] sm:$0xff] %vm5384, %v5237
      %5631 = vst.msk [vmem:[%s199 + $0x7b0] sm:$0xff] %vm5384, %v5238
      %5632 = vst.msk [vmem:[%s199 + $0x7b8] sm:$0xff] %vm5384, %v5239
      %5633 = vst.msk [vmem:[%s199 + $0x7c0] sm:$0xff] %vm5384, %v5240
      %5634 = vst.msk [vmem:[%s199 + $0x7c8] sm:$0xff] %vm5384, %v5241
      %5635 = vst.msk [vmem:[%s199 + $0x7d0] sm:$0xff] %vm5384, %v5242
      %5636 = vst.msk [vmem:[%s199 + $0x7d8] sm:$0xff] %vm5384, %v5243
      %5637 = vst.msk [vmem:[%s199 + $0x7e0] sm:$0xff] %vm5384, %v5244
      %5638 = vst.msk [vmem:[%s199 + $0x7e8] sm:$0xff] %vm5384, %v5245
      %5639 = vst.msk [vmem:[%s199 + $0x7f0] sm:$0xff] %vm5384, %v5246
      %5640 = vst.msk [vmem:[%s199 + $0x7f8] sm:$0xff] %vm5384, %v5247
      %5641 = vst.msk [vmem:[%s199 + $0x800] sm:$0xff] %vm5384, %v5248
      %5642 = vst.msk [vmem:[%s199 + $0x808] sm:$0xff] %vm5384, %v5249
      %5643 = vst.msk [vmem:[%s199 + $0x810] sm:$0xff] %vm5384, %v5250
      %5644 = vst.msk [vmem:[%s199 + $0x818] sm:$0xff] %vm5384, %v5251
      %5645 = vst.msk [vmem:[%s199 + $0x820] sm:$0xff] %vm5384, %v5252
      %5646 = vst.msk [vmem:[%s199 + $0x828] sm:$0xff] %vm5384, %v5253
      %5647 = vst.msk [vmem:[%s199 + $0x830] sm:$0xff] %vm5384, %v5254
      %5648 = vst.msk [vmem:[%s199 + $0x838] sm:$0xff] %vm5384, %v5255
      %5649 = vst.msk [vmem:[%s199 + $0x840] sm:$0xff] %vm5384, %v5256
      %5650 = vst.msk [vmem:[%s199 + $0x848] sm:$0xff] %vm5384, %v5257
      %5651 = vst.msk [vmem:[%s199 + $0x850] sm:$0xff] %vm5384, %v5258
      %5652 = vst.msk [vmem:[%s199 + $0x858] sm:$0xff] %vm5384, %v5259
      %5653 = vst.msk [vmem:[%s199 + $0x860] sm:$0xff] %vm5384, %v5260
      %5654 = vst.msk [vmem:[%s199 + $0x868] sm:$0xff] %vm5384, %v5261
      %5655 = vst.msk [vmem:[%s199 + $0x870] sm:$0xff] %vm5384, %v5262
      %5656 = vst.msk [vmem:[%s199 + $0x878] sm:$0xff] %vm5384, %v5263
      %5657 = vst.msk [vmem:[%s199 + $0x880] sm:$0xff] %vm5384, %v5264
      %5658 = vst.msk [vmem:[%s199 + $0x888] sm:$0xff] %vm5384, %v5265
      %5659 = vst.msk [vmem:[%s199 + $0x890] sm:$0xff] %vm5384, %v5266
      %5660 = vst.msk [vmem:[%s199 + $0x898] sm:$0xff] %vm5384, %v5267
      %5661 = vst.msk [vmem:[%s199 + $0x8a0] sm:$0xff] %vm5384, %v5268
      %5662 = vst.msk [vmem:[%s199 + $0x8a8] sm:$0xff] %vm5384, %v5269
      %5663 = vst.msk [vmem:[%s199 + $0x8b0] sm:$0xff] %vm5384, %v5270
      %5664 = vst.msk [vmem:[%s199 + $0x8b8] sm:$0xff] %vm5384, %v5271
      %5665 = vst.msk [vmem:[%s199 + $0x8c0] sm:$0xff] %vm5384, %v5272
      %5666 = vst.msk [vmem:[%s199 + $0x8c8] sm:$0xff] %vm5384, %v5273
      %5667 = vst.msk [vmem:[%s199 + $0x8d0] sm:$0xff] %vm5384, %v5274
      %5668 = vst.msk [vmem:[%s199 + $0x8d8] sm:$0xff] %vm5384, %v5275
      %5669 = vst.msk [vmem:[%s199 + $0x8e0] sm:$0xff] %vm5384, %v5276
      %5670 = vst.msk [vmem:[%s199 + $0x8e8] sm:$0xff] %vm5384, %v5277
      %5671 = vst.msk [vmem:[%s199 + $0x8f0] sm:$0xff] %vm5384, %v5278
      %5672 = vst.msk [vmem:[%s199 + $0x8f8] sm:$0xff] %vm5384, %v5279
      %5673 = vst.msk [vmem:[%s199 + $0x900] sm:$0xff] %vm5384, %v5280
      %5674 = vst.msk [vmem:[%s199 + $0x908] sm:$0xff] %vm5384, %v5281
      %5675 = vst.msk [vmem:[%s199 + $0x910] sm:$0xff] %vm5384, %v5282
      %5676 = vst.msk [vmem:[%s199 + $0x918] sm:$0xff] %vm5384, %v5283
      %5677 = vst.msk [vmem:[%s199 + $0x920] sm:$0xff] %vm5384, %v5284
      %5678 = vst.msk [vmem:[%s199 + $0x928] sm:$0xff] %vm5384, %v5285
      %5679 = vst.msk [vmem:[%s199 + $0x930] sm:$0xff] %vm5384, %v5286
      %5680 = vst.msk [vmem:[%s199 + $0x938] sm:$0xff] %vm5384, %v5287
      %5681 = vst.msk [vmem:[%s199 + $0x940] sm:$0xff] %vm5384, %v5288
      %5682 = vst.msk [vmem:[%s199 + $0x948] sm:$0xff] %vm5384, %v5289
      %5683 = vst.msk [vmem:[%s199 + $0x950] sm:$0xff] %vm5384, %v5290
      %5684 = vst.msk [vmem:[%s199 + $0x958] sm:$0xff] %vm5384, %v5291
      %5685 = vst.msk [vmem:[%s199 + $0x960] sm:$0xff] %vm5384, %v5292
      %5686 = vst.msk [vmem:[%s199 + $0x968] sm:$0xff] %vm5384, %v5293
      %5687 = vst.msk [vmem:[%s199 + $0x970] sm:$0xff] %vm5384, %v5294
      %5688 = vst.msk [vmem:[%s199 + $0x978] sm:$0xff] %vm5384, %v5295
      %5689 = vst.msk [vmem:[%s199 + $0x980] sm:$0xff] %vm5384, %v5296
      %5690 = vst.msk [vmem:[%s199 + $0x988] sm:$0xff] %vm5384, %v5297
      %5691 = vst.msk [vmem:[%s199 + $0x990] sm:$0xff] %vm5384, %v5298
      %5692 = vst.msk [vmem:[%s199 + $0x998] sm:$0xff] %vm5384, %v5299
      %5693 = vst.msk [vmem:[%s199 + $0x9a0] sm:$0xff] %vm5384, %v5300
      %5694 = vst.msk [vmem:[%s199 + $0x9a8] sm:$0xff] %vm5384, %v5301
      %5695 = vst.msk [vmem:[%s199 + $0x9b0] sm:$0xff] %vm5384, %v5302
      %5696 = vst.msk [vmem:[%s199 + $0x9b8] sm:$0xff] %vm5384, %v5303
      %5697 = vst.msk [vmem:[%s199 + $0x9c0] sm:$0xff] %vm5384, %v5304
      %5698 = vst.msk [vmem:[%s199 + $0x9c8] sm:$0xff] %vm5384, %v5305
      %5699 = vst.msk [vmem:[%s199 + $0x9d0] sm:$0xff] %vm5384, %v5306
      %5700 = vst.msk [vmem:[%s199 + $0x9d8] sm:$0xff] %vm5384, %v5307
      %5701 = vst.msk [vmem:[%s199 + $0x9e0] sm:$0xff] %vm5384, %v5308
      %5702 = vst.msk [vmem:[%s199 + $0x9e8] sm:$0xff] %vm5384, %v5309
      %5703 = vst.msk [vmem:[%s199 + $0x9f0] sm:$0xff] %vm5384, %v5310
      %5704 = vst.msk [vmem:[%s199 + $0x9f8] sm:$0xff] %vm5384, %v5311
      %5705 = vst.msk [vmem:[%s199 + $0xa00] sm:$0xff] %vm5384, %v5312
      %5706 = vst.msk [vmem:[%s199 + $0xa08] sm:$0xff] %vm5384, %v5313
      %5707 = vst.msk [vmem:[%s199 + $0xa10] sm:$0xff] %vm5384, %v5314
      %5708 = vst.msk [vmem:[%s199 + $0xa18] sm:$0xff] %vm5384, %v5315
      %5709 = vst.msk [vmem:[%s199 + $0xa20] sm:$0xff] %vm5384, %v5316
      %5710 = vst.msk [vmem:[%s199 + $0xa28] sm:$0xff] %vm5384, %v5317
      %5711 = vst.msk [vmem:[%s199 + $0xa30] sm:$0xff] %vm5384, %v5318
      %5712 = vst.msk [vmem:[%s199 + $0xa38] sm:$0xff] %vm5384, %v5319
      %5713 = vst.msk [vmem:[%s199 + $0xa40] sm:$0xff] %vm5384, %v5320
      %5714 = vst.msk [vmem:[%s199 + $0xa48] sm:$0xff] %vm5384, %v5321
      %5715 = vst.msk [vmem:[%s199 + $0xa50] sm:$0xff] %vm5384, %v5322
      %5716 = vst.msk [vmem:[%s199 + $0xa58] sm:$0xff] %vm5384, %v5323
      %5717 = vst.msk [vmem:[%s199 + $0xa60] sm:$0xff] %vm5384, %v5324
      %5718 = vst.msk [vmem:[%s199 + $0xa68] sm:$0xff] %vm5384, %v5325
      %5719 = vst.msk [vmem:[%s199 + $0xa70] sm:$0xff] %vm5384, %v5326
      %5720 = vst.msk [vmem:[%s199 + $0xa78] sm:$0xff] %vm5384, %v5327
      %5721 = vst.msk [vmem:[%s199 + $0xa80] sm:$0xff] %vm5384, %v5328
      %5722 = vst.msk [vmem:[%s199 + $0xa88] sm:$0xff] %vm5384, %v5329
      %5723 = vst.msk [vmem:[%s199 + $0xa90] sm:$0xff] %vm5384, %v5330
      %5724 = vst.msk [vmem:[%s199 + $0xa98] sm:$0xff] %vm5384, %v5331
      %5725 = vst.msk [vmem:[%s199 + $0xaa0] sm:$0xff] %vm5384, %v5332
      %5726 = vst.msk [vmem:[%s199 + $0xaa8] sm:$0xff] %vm5384, %v5333
      %5727 = vst.msk [vmem:[%s199 + $0xab0] sm:$0xff] %vm5384, %v5334
      %5728 = vst.msk [vmem:[%s199 + $0xab8] sm:$0xff] %vm5384, %v5335
      %5729 = vst.msk [vmem:[%s199 + $0xac0] sm:$0xff] %vm5384, %v5336
      %5730 = vst.msk [vmem:[%s199 + $0xac8] sm:$0xff] %vm5384, %v5337
      %5731 = vst.msk [vmem:[%s199 + $0xad0] sm:$0xff] %vm5384, %v5338
      %5732 = vst.msk [vmem:[%s199 + $0xad8] sm:$0xff] %vm5384, %v5339
      %5733 = vst.msk [vmem:[%s199 + $0xae0] sm:$0xff] %vm5384, %v5340
      %5734 = vst.msk [vmem:[%s199 + $0xae8] sm:$0xff] %vm5384, %v5341
      %5735 = vst.msk [vmem:[%s199 + $0xaf0] sm:$0xff] %vm5384, %v5342
      %5736 = vst.msk [vmem:[%s199 + $0xaf8] sm:$0xff] %vm5384, %v5343
      %5737 = vst.msk [vmem:[%s199 + $0xb00] sm:$0xff] %vm5384, %v5344
      %5738 = vst.msk [vmem:[%s199 + $0xb08] sm:$0xff] %vm5384, %v5345
      %5739 = vst.msk [vmem:[%s199 + $0xb10] sm:$0xff] %vm5384, %v5346
      %5740 = vst.msk [vmem:[%s199 + $0xb18] sm:$0xff] %vm5384, %v5347
      %5741 = vst.msk [vmem:[%s199 + $0xb20] sm:$0xff] %vm5384, %v5348
      %5742 = vst.msk [vmem:[%s199 + $0xb28] sm:$0xff] %vm5384, %v5349
      %5743 = vst.msk [vmem:[%s199 + $0xb30] sm:$0xff] %vm5384, %v5350
      %5744 = vst.msk [vmem:[%s199 + $0xb38] sm:$0xff] %vm5384, %v5351
      %5745 = vst.msk [vmem:[%s199 + $0xb40] sm:$0xff] %vm5384, %v5352
      %5746 = vst.msk [vmem:[%s199 + $0xb48] sm:$0xff] %vm5384, %v5353
      %5747 = vst.msk [vmem:[%s199 + $0xb50] sm:$0xff] %vm5384, %v5354
      %5748 = vst.msk [vmem:[%s199 + $0xb58] sm:$0xff] %vm5384, %v5355
      %5749 = vst.msk [vmem:[%s199 + $0xb60] sm:$0xff] %vm5384, %v5356
      %5750 = vst.msk [vmem:[%s199 + $0xb68] sm:$0xff] %vm5384, %v5357
      %5751 = vst.msk [vmem:[%s199 + $0xb70] sm:$0xff] %vm5384, %v5358
      %5752 = vst.msk [vmem:[%s199 + $0xb78] sm:$0xff] %vm5384, %v5359
      %5753 = vst.msk [vmem:[%s199 + $0xb80] sm:$0xff] %vm5384, %v5360
      %5754 = vst.msk [vmem:[%s199 + $0xb88] sm:$0xff] %vm5384, %v5361
      %5755 = vst.msk [vmem:[%s199 + $0xb90] sm:$0xff] %vm5384, %v5362
      %5756 = vst.msk [vmem:[%s199 + $0xb98] sm:$0xff] %vm5384, %v5363
      %5757 = vst.msk [vmem:[%s199 + $0xba0] sm:$0xff] %vm5384, %v5364
      %5758 = vst.msk [vmem:[%s199 + $0xba8] sm:$0xff] %vm5384, %v5365
      %5759 = vst.msk [vmem:[%s199 + $0xbb0] sm:$0xff] %vm5384, %v5366
      %5760 = vst.msk [vmem:[%s199 + $0xbb8] sm:$0xff] %vm5384, %v5367
      %5761 = vst.msk [vmem:[%s199 + $0xbc0] sm:$0xff] %vm5384, %v5368
      %5762 = vst.msk [vmem:[%s199 + $0xbc8] sm:$0xff] %vm5384, %v5369
      %5763 = vst.msk [vmem:[%s199 + $0xbd0] sm:$0xff] %vm5384, %v5370
      %5764 = vst.msk [vmem:[%s199 + $0xbd8] sm:$0xff] %vm5384, %v5371
      %5765 = vst.msk [vmem:[%s199 + $0xbe0] sm:$0xff] %vm5384, %v5372
      %5766 = vst.msk [vmem:[%s199 + $0xbe8] sm:$0xff] %vm5384, %v5373
      %5767 = vst.msk [vmem:[%s199 + $0xbf0] sm:$0xff] %vm5384, %v5374
      %5768 = vst.msk [vmem:[%s199 + $0xbf8] sm:$0xff] %vm5384, %v5375
      %5769 = vst.msk [vmem:[%s199 + $0xc00] sm:$0xff] %vm5384, %v5376
      %5770 = vst.msk [vmem:[%s199 + $0xc08] sm:$0xff] %vm5384, %v5377
      %5771 = vst.msk [vmem:[%s199 + $0xc10] sm:$0xff] %vm5384, %v5378
      %5772 = vst.msk [vmem:[%s199 + $0xc18] sm:$0xff] %vm5384, %v5379
      %5773 = vst.msk [vmem:[%s199 + $0xc20] sm:$0xff] %vm5384, %v5380
      %5774 = vst.msk [vmem:[%s199 + $0xc28] sm:$0xff] %vm5384, %v5381
      %5775 = vst.msk [vmem:[%s199 + $0xc30] sm:$0xff] %vm5384, %v5382
      %5776 = vst.msk [vmem:[%s199 + $0xc38] sm:$0xff] %vm5384, %v5383
      %s5777 = smul.u32 392, %s15
      %p5778 = scmp.lt.s32.totalorder %s5777, 3135
      %s5779 = scalar_select %p5778, %s5777, 3135
      %s5780 = smul.addr %s5779, 8
      %s5781 = scalar_lea.vmem %s4, %s5780
      // Predicated region
      $region37: #{discriminator_forward.4} parent=35 // pred_check
        %p5782 = pneg %p122
      $region38: #{discriminator_forward.4} parent=35 // pred_check_branch
        %5784 = sbr.rel (%p5782) target = $region40
      $region39: #{discriminator_forward.4} parent=35 // pred_region
        %s5785 = smul.u32 392, %s15
      $region40: #{discriminator_forward.4} parent=35 // pred_fallthru
        _
    $region36: #{discriminator_forward.4} parent=5 // pred_fallthru
      _
    %p5786 = scmp.le.s32.totalorder 2, %s10
    // Predicated region
    $region41: #{discriminator_forward.4} parent=5 // pred_check
      %p5787 = pneg %p5786
    $region42: #{discriminator_forward.4} parent=5 // pred_check_branch
      %5789 = sbr.rel (%p5787) target = $region44
    $region43: #{discriminator_forward.4} parent=5 // pred_region
      %s5790 = ssub.s32 %s10, 2
      // Predicated region
      $region45: #{discriminator_forward.4} parent=43 // pred_check
        %p5791 = pneg %p128
      $region46: #{discriminator_forward.4} parent=43 // pred_check_branch
        %5793 = sbr.rel (%p5791) target = $region48
      $region47: #{discriminator_forward.4} parent=43 // pred_region
        %s5794 = smul.u32 392, %s16
        %p5795 = scmp.lt.s32.totalorder %s5794, 3135
        %s5796 = scalar_select %p5795, %s5794, 3135
        %s5797 = smul.addr %s5796, 8
        %s5798 = scalar_lea.vmem %s4, %s5797
      $region48: #{discriminator_forward.4} parent=43 // pred_fallthru
        _
    $region44: #{discriminator_forward.4} parent=5 // pred_fallthru
      _
  $region6: #{discriminator_forward.4} parent=0 // loop_footer
    %s14 = sadd.s32 1, %s10
  $region7: #{discriminator_forward.4} parent=0 // loop_footer_branch
    %9 = sbr.rel target = $region3
  $region8: #{discriminator_forward.4} parent=0 // loop_exit
    _

// kernel: tile.7
$region0: #{tile.7}
  %s0 = inlined_call_operand.vmem [shape: f32[16,49,128], index: 0, kind: input, shape index: {}]
  %s1 = inlined_call_operand.vmem [shape: f32[784,128], index: 1, kind: output, shape index: {}]
  %v2 = vld [vmem:[%s0] sm:$0xff]
  %3 = vst [vmem:[%s1] sm:$0xff] %v2
  %s4 = scalar_lea.vmem %s0, 8
  %v5 = vld [vmem:[%s4] sm:$0xff]
  %s6 = scalar_lea.vmem %s1, 8
  %7 = vst [vmem:[%s6] sm:$0xff] %v5
  %s8 = scalar_lea.vmem %s0, 16
  %v9 = vld [vmem:[%s8] sm:$0xff]
  %s10 = scalar_lea.vmem %s1, 16
  %11 = vst [vmem:[%s10] sm:$0xff] %v9
  %s12 = scalar_lea.vmem %s0, 24
  %v13 = vld [vmem:[%s12] sm:$0xff]
  %s14 = scalar_lea.vmem %s1, 24
  %15 = vst [vmem:[%s14] sm:$0xff] %v13
  %s16 = scalar_lea.vmem %s0, 32
  %v17 = vld [vmem:[%s16] sm:$0xff]
  %s18 = scalar_lea.vmem %s1, 32
  %19 = vst [vmem:[%s18] sm:$0xff] %v17
  %s20 = scalar_lea.vmem %s0, 40
  %v21 = vld [vmem:[%s20] sm:$0xff]
  %s22 = scalar_lea.vmem %s1, 40
  %23 = vst [vmem:[%s22] sm:$0xff] %v21
  %s24 = scalar_lea.vmem %s0, 48
  %s25 = smov 3
  %v26 = vld [vmem:[%s24] ss:$8 sm:%s25]
  %s27 = scalar_lea.vmem %s1, 48
  %28 = vst [vmem:[%s27] sm:$0x3] %v26
  %s29 = scalar_lea.vmem %s0, 57
  %v30 = vld [vmem:[%s29] sm:$0xff]
  %s31 = scalar_lea.vmem %s1, 50
  %32 = vst [vmem:[%s31] sm:$0xff] %v30
  %s33 = scalar_lea.vmem %s0, 65
  %v34 = vld [vmem:[%s33] sm:$0xff]
  %s35 = scalar_lea.vmem %s1, 58
  %36 = vst [vmem:[%s35] sm:$0xff] %v34
  %s37 = scalar_lea.vmem %s0, 73
  %v38 = vld [vmem:[%s37] sm:$0xff]
  %s39 = scalar_lea.vmem %s1, 66
  %40 = vst [vmem:[%s39] sm:$0xff] %v38
  %s41 = scalar_lea.vmem %s0, 81
  %v42 = vld [vmem:[%s41] sm:$0xff]
  %s43 = scalar_lea.vmem %s1, 74
  %44 = vst [vmem:[%s43] sm:$0xff] %v42
  %s45 = scalar_lea.vmem %s0, 89
  %v46 = vld [vmem:[%s45] sm:$0xff]
  %s47 = scalar_lea.vmem %s1, 82
  %48 = vst [vmem:[%s47] sm:$0xff] %v46
  %s49 = scalar_lea.vmem %s0, 97
  %v50 = vld [vmem:[%s49] sm:$0xff]
  %s51 = scalar_lea.vmem %s1, 90
  %52 = vst [vmem:[%s51] sm:$0xff] %v50
  %s53 = scalar_lea.vmem %s0, 112
  %v54 = vld [vmem:[%s53] sm:$0xff]
  %s55 = scalar_lea.vmem %s1, 98
  %56 = vst [vmem:[%s55] sm:$0xff] %v54
  %s57 = scalar_lea.vmem %s0, 120
  %v58 = vld [vmem:[%s57] sm:$0xff]
  %s59 = scalar_lea.vmem %s1, 106
  %60 = vst [vmem:[%s59] sm:$0xff] %v58
  %s61 = scalar_lea.vmem %s0, 128
  %v62 = vld [vmem:[%s61] sm:$0xff]
  %s63 = scalar_lea.vmem %s1, 114
  %64 = vst [vmem:[%s63] sm:$0xff] %v62
  %s65 = scalar_lea.vmem %s0, 136
  %v66 = vld [vmem:[%s65] sm:$0xff]
  %s67 = scalar_lea.vmem %s1, 122
  %68 = vst [vmem:[%s67] sm:$0xff] %v66
  %s69 = scalar_lea.vmem %s0, 144
  %v70 = vld [vmem:[%s69] sm:$0xff]
  %s71 = scalar_lea.vmem %s1, 130
  %72 = vst [vmem:[%s71] sm:$0xff] %v70
  %s73 = scalar_lea.vmem %s0, 152
  %v74 = vld [vmem:[%s73] sm:$0xff]
  %s75 = scalar_lea.vmem %s1, 138
  %76 = vst [vmem:[%s75] sm:$0xff] %v74
  %s77 = scalar_lea.vmem %s0, 160
  %s78 = smov 3
  %v79 = vld [vmem:[%s77] ss:$8 sm:%s78]
  %s80 = scalar_lea.vmem %s1, 146
  %81 = vst [vmem:[%s80] sm:$0x3] %v79
  %s82 = scalar_lea.vmem %s0, 169
  %v83 = vld [vmem:[%s82] sm:$0xff]
  %s84 = scalar_lea.vmem %s1, 148
  %85 = vst [vmem:[%s84] sm:$0xff] %v83
  %s86 = scalar_lea.vmem %s0, 177
  %v87 = vld [vmem:[%s86] sm:$0xff]
  %s88 = scalar_lea.vmem %s1, 156
  %89 = vst [vmem:[%s88] sm:$0xff] %v87
  %s90 = scalar_lea.vmem %s0, 185
  %v91 = vld [vmem:[%s90] sm:$0xff]
  %s92 = scalar_lea.vmem %s1, 164
  %93 = vst [vmem:[%s92] sm:$0xff] %v91
  %s94 = scalar_lea.vmem %s0, 193
  %v95 = vld [vmem:[%s94] sm:$0xff]
  %s96 = scalar_lea.vmem %s1, 172
  %97 = vst [vmem:[%s96] sm:$0xff] %v95
  %s98 = scalar_lea.vmem %s0, 201
  %v99 = vld [vmem:[%s98] sm:$0xff]
  %s100 = scalar_lea.vmem %s1, 180
  %101 = vst [vmem:[%s100] sm:$0xff] %v99
  %s102 = scalar_lea.vmem %s0, 209
  %v103 = vld [vmem:[%s102] sm:$0xff]
  %s104 = scalar_lea.vmem %s1, 188
  %105 = vst [vmem:[%s104] sm:$0xff] %v103
  %s106 = scalar_lea.vmem %s0, 224
  %v107 = vld [vmem:[%s106] sm:$0xff]
  %s108 = scalar_lea.vmem %s1, 196
  %109 = vst [vmem:[%s108] sm:$0xff] %v107
  %s110 = scalar_lea.vmem %s0, 232
  %v111 = vld [vmem:[%s110] sm:$0xff]
  %s112 = scalar_lea.vmem %s1, 204
  %113 = vst [vmem:[%s112] sm:$0xff] %v111
  %s114 = scalar_lea.vmem %s0, 240
  %v115 = vld [vmem:[%s114] sm:$0xff]
  %s116 = scalar_lea.vmem %s1, 212
  %117 = vst [vmem:[%s116] sm:$0xff] %v115
  %s118 = scalar_lea.vmem %s0, 248
  %v119 = vld [vmem:[%s118] sm:$0xff]
  %s120 = scalar_lea.vmem %s1, 220
  %121 = vst [vmem:[%s120] sm:$0xff] %v119
  %s122 = scalar_lea.vmem %s0, 256
  %v123 = vld [vmem:[%s122] sm:$0xff]
  %s124 = scalar_lea.vmem %s1, 228
  %125 = vst [vmem:[%s124] sm:$0xff] %v123
  %s126 = scalar_lea.vmem %s0, 264
  %v127 = vld [vmem:[%s126] sm:$0xff]
  %s128 = scalar_lea.vmem %s1, 236
  %129 = vst [vmem:[%s128] sm:$0xff] %v127
  %s130 = scalar_lea.vmem %s0, 272
  %s131 = smov 3
  %v132 = vld [vmem:[%s130] ss:$8 sm:%s131]
  %s133 = scalar_lea.vmem %s1, 244
  %134 = vst [vmem:[%s133] sm:$0x3] %v132
  %s135 = scalar_lea.vmem %s0, 281
  %v136 = vld [vmem:[%s135] sm:$0xff]
  %s137 = scalar_lea.vmem %s1, 246
  %138 = vst [vmem:[%s137] sm:$0xff] %v136
  %s139 = scalar_lea.vmem %s0, 289
  %v140 = vld [vmem:[%s139] sm:$0xff]
  %s141 = scalar_lea.vmem %s1, 254
  %142 = vst [vmem:[%s141] sm:$0xff] %v140
  %s143 = scalar_lea.vmem %s0, 297
  %v144 = vld [vmem:[%s143] sm:$0xff]
  %s145 = scalar_lea.vmem %s1, 262
  %146 = vst [vmem:[%s145] sm:$0xff] %v144
  %s147 = scalar_lea.vmem %s0, 305
  %v148 = vld [vmem:[%s147] sm:$0xff]
  %s149 = scalar_lea.vmem %s1, 270
  %150 = vst [vmem:[%s149] sm:$0xff] %v148
  %s151 = scalar_lea.vmem %s0, 313
  %v152 = vld [vmem:[%s151] sm:$0xff]
  %s153 = scalar_lea.vmem %s1, 278
  %154 = vst [vmem:[%s153] sm:$0xff] %v152
  %s155 = scalar_lea.vmem %s0, 321
  %v156 = vld [vmem:[%s155] sm:$0xff]
  %s157 = scalar_lea.vmem %s1, 286
  %158 = vst [vmem:[%s157] sm:$0xff] %v156
  %s159 = scalar_lea.vmem %s0, 336
  %v160 = vld [vmem:[%s159] sm:$0xff]
  %s161 = scalar_lea.vmem %s1, 294
  %162 = vst [vmem:[%s161] sm:$0xff] %v160
  %s163 = scalar_lea.vmem %s0, 344
  %v164 = vld [vmem:[%s163] sm:$0xff]
  %s165 = scalar_lea.vmem %s1, 302
  %166 = vst [vmem:[%s165] sm:$0xff] %v164
  %s167 = scalar_lea.vmem %s0, 352
  %v168 = vld [vmem:[%s167] sm:$0xff]
  %s169 = scalar_lea.vmem %s1, 310
  %170 = vst [vmem:[%s169] sm:$0xff] %v168
  %s171 = scalar_lea.vmem %s0, 360
  %v172 = vld [vmem:[%s171] sm:$0xff]
  %s173 = scalar_lea.vmem %s1, 318
  %174 = vst [vmem:[%s173] sm:$0xff] %v172
  %s175 = scalar_lea.vmem %s0, 368
  %v176 = vld [vmem:[%s175] sm:$0xff]
  %s177 = scalar_lea.vmem %s1, 326
  %178 = vst [vmem:[%s177] sm:$0xff] %v176
  %s179 = scalar_lea.vmem %s0, 376
  %v180 = vld [vmem:[%s179] sm:$0xff]
  %s181 = scalar_lea.vmem %s1, 334
  %182 = vst [vmem:[%s181] sm:$0xff] %v180
  %s183 = scalar_lea.vmem %s0, 384
  %s184 = smov 3
  %v185 = vld [vmem:[%s183] ss:$8 sm:%s184]
  %s186 = scalar_lea.vmem %s1, 342
  %187 = vst [vmem:[%s186] sm:$0x3] %v185
  %s188 = scalar_lea.vmem %s0, 393
  %v189 = vld [vmem:[%s188] sm:$0xff]
  %s190 = scalar_lea.vmem %s1, 344
  %191 = vst [vmem:[%s190] sm:$0xff] %v189
  %s192 = scalar_lea.vmem %s0, 401
  %v193 = vld [vmem:[%s192] sm:$0xff]
  %s194 = scalar_lea.vmem %s1, 352
  %195 = vst [vmem:[%s194] sm:$0xff] %v193
  %s196 = scalar_lea.vmem %s0, 409
  %v197 = vld [vmem:[%s196] sm:$0xff]
  %s198 = scalar_lea.vmem %s1, 360
  %199 = vst [vmem:[%s198] sm:$0xff] %v197
  %s200 = scalar_lea.vmem %s0, 417
  %v201 = vld [vmem:[%s200] sm:$0xff]
  %s202 = scalar_lea.vmem %s1, 368
  %203 = vst [vmem:[%s202] sm:$0xff] %v201
  %s204 = scalar_lea.vmem %s0, 425
  %v205 = vld [vmem:[%s204] sm:$0xff]
  %s206 = scalar_lea.vmem %s1, 376
  %207 = vst [vmem:[%s206] sm:$0xff] %v205
  %s208 = scalar_lea.vmem %s0, 433
  %v209 = vld [vmem:[%s208] sm:$0xff]
  %s210 = scalar_lea.vmem %s1, 384
  %211 = vst [vmem:[%s210] sm:$0xff] %v209
  %s212 = scalar_lea.vmem %s0, 448
  %v213 = vld [vmem:[%s212] sm:$0xff]
  %s214 = scalar_lea.vmem %s1, 392
  %215 = vst [vmem:[%s214] sm:$0xff] %v213
  %s216 = scalar_lea.vmem %s0, 456
  %v217 = vld [vmem:[%s216] sm:$0xff]
  %s218 = scalar_lea.vmem %s1, 400
  %219 = vst [vmem:[%s218] sm:$0xff] %v217
  %s220 = scalar_lea.vmem %s0, 464
  %v221 = vld [vmem:[%s220] sm:$0xff]
  %s222 = scalar_lea.vmem %s1, 408
  %223 = vst [vmem:[%s222] sm:$0xff] %v221
  %s224 = scalar_lea.vmem %s0, 472
  %v225 = vld [vmem:[%s224] sm:$0xff]
  %s226 = scalar_lea.vmem %s1, 416
  %227 = vst [vmem:[%s226] sm:$0xff] %v225
  %s228 = scalar_lea.vmem %s0, 480
  %v229 = vld [vmem:[%s228] sm:$0xff]
  %s230 = scalar_lea.vmem %s1, 424
  %231 = vst [vmem:[%s230] sm:$0xff] %v229
  %s232 = scalar_lea.vmem %s0, 488
  %v233 = vld [vmem:[%s232] sm:$0xff]
  %s234 = scalar_lea.vmem %s1, 432
  %235 = vst [vmem:[%s234] sm:$0xff] %v233
  %s236 = scalar_lea.vmem %s0, 496
  %s237 = smov 3
  %v238 = vld [vmem:[%s236] ss:$8 sm:%s237]
  %s239 = scalar_lea.vmem %s1, 440
  %240 = vst [vmem:[%s239] sm:$0x3] %v238
  %s241 = scalar_lea.vmem %s0, 505
  %v242 = vld [vmem:[%s241] sm:$0xff]
  %s243 = scalar_lea.vmem %s1, 442
  %244 = vst [vmem:[%s243] sm:$0xff] %v242
  %s245 = scalar_lea.vmem %s0, 513
  %v246 = vld [vmem:[%s245] sm:$0xff]
  %s247 = scalar_lea.vmem %s1, 450
  %248 = vst [vmem:[%s247] sm:$0xff] %v246
  %s249 = scalar_lea.vmem %s0, 521
  %v250 = vld [vmem:[%s249] sm:$0xff]
  %s251 = scalar_lea.vmem %s1, 458
  %252 = vst [vmem:[%s251] sm:$0xff] %v250
  %s253 = scalar_lea.vmem %s0, 529
  %v254 = vld [vmem:[%s253] sm:$0xff]
  %s255 = scalar_lea.vmem %s1, 466
  %256 = vst [vmem:[%s255] sm:$0xff] %v254
  %s257 = scalar_lea.vmem %s0, 537
  %v258 = vld [vmem:[%s257] sm:$0xff]
  %s259 = scalar_lea.vmem %s1, 474
  %260 = vst [vmem:[%s259] sm:$0xff] %v258
  %s261 = scalar_lea.vmem %s0, 545
  %v262 = vld [vmem:[%s261] sm:$0xff]
  %s263 = scalar_lea.vmem %s1, 482
  %264 = vst [vmem:[%s263] sm:$0xff] %v262
  %s265 = scalar_lea.vmem %s0, 560
  %v266 = vld [vmem:[%s265] sm:$0xff]
  %s267 = scalar_lea.vmem %s1, 490
  %268 = vst [vmem:[%s267] sm:$0xff] %v266
  %s269 = scalar_lea.vmem %s0, 568
  %v270 = vld [vmem:[%s269] sm:$0xff]
  %s271 = scalar_lea.vmem %s1, 498
  %272 = vst [vmem:[%s271] sm:$0xff] %v270
  %s273 = scalar_lea.vmem %s0, 576
  %v274 = vld [vmem:[%s273] sm:$0xff]
  %s275 = scalar_lea.vmem %s1, 506
  %276 = vst [vmem:[%s275] sm:$0xff] %v274
  %s277 = scalar_lea.vmem %s0, 584
  %v278 = vld [vmem:[%s277] sm:$0xff]
  %s279 = scalar_lea.vmem %s1, 514
  %280 = vst [vmem:[%s279] sm:$0xff] %v278
  %s281 = scalar_lea.vmem %s0, 592
  %v282 = vld [vmem:[%s281] sm:$0xff]
  %s283 = scalar_lea.vmem %s1, 522
  %284 = vst [vmem:[%s283] sm:$0xff] %v282
  %s285 = scalar_lea.vmem %s0, 600
  %v286 = vld [vmem:[%s285] sm:$0xff]
  %s287 = scalar_lea.vmem %s1, 530
  %288 = vst [vmem:[%s287] sm:$0xff] %v286
  %s289 = scalar_lea.vmem %s0, 608
  %s290 = smov 3
  %v291 = vld [vmem:[%s289] ss:$8 sm:%s290]
  %s292 = scalar_lea.vmem %s1, 538
  %293 = vst [vmem:[%s292] sm:$0x3] %v291
  %s294 = scalar_lea.vmem %s0, 617
  %v295 = vld [vmem:[%s294] sm:$0xff]
  %s296 = scalar_lea.vmem %s1, 540
  %297 = vst [vmem:[%s296] sm:$0xff] %v295
  %s298 = scalar_lea.vmem %s0, 625
  %v299 = vld [vmem:[%s298] sm:$0xff]
  %s300 = scalar_lea.vmem %s1, 548
  %301 = vst [vmem:[%s300] sm:$0xff] %v299
  %s302 = scalar_lea.vmem %s0, 633
  %v303 = vld [vmem:[%s302] sm:$0xff]
  %s304 = scalar_lea.vmem %s1, 556
  %305 = vst [vmem:[%s304] sm:$0xff] %v303
  %s306 = scalar_lea.vmem %s0, 641
  %v307 = vld [vmem:[%s306] sm:$0xff]
  %s308 = scalar_lea.vmem %s1, 564
  %309 = vst [vmem:[%s308] sm:$0xff] %v307
  %s310 = scalar_lea.vmem %s0, 649
  %v311 = vld [vmem:[%s310] sm:$0xff]
  %s312 = scalar_lea.vmem %s1, 572
  %313 = vst [vmem:[%s312] sm:$0xff] %v311
  %s314 = scalar_lea.vmem %s0, 657
  %v315 = vld [vmem:[%s314] sm:$0xff]
  %s316 = scalar_lea.vmem %s1, 580
  %317 = vst [vmem:[%s316] sm:$0xff] %v315
  %s318 = scalar_lea.vmem %s0, 672
  %v319 = vld [vmem:[%s318] sm:$0xff]
  %s320 = scalar_lea.vmem %s1, 588
  %321 = vst [vmem:[%s320] sm:$0xff] %v319
  %s322 = scalar_lea.vmem %s0, 680
  %v323 = vld [vmem:[%s322] sm:$0xff]
  %s324 = scalar_lea.vmem %s1, 596
  %325 = vst [vmem:[%s324] sm:$0xff] %v323
  %s326 = scalar_lea.vmem %s0, 688
  %v327 = vld [vmem:[%s326] sm:$0xff]
  %s328 = scalar_lea.vmem %s1, 604
  %329 = vst [vmem:[%s328] sm:$0xff] %v327
  %s330 = scalar_lea.vmem %s0, 696
  %v331 = vld [vmem:[%s330] sm:$0xff]
  %s332 = scalar_lea.vmem %s1, 612
  %333 = vst [vmem:[%s332] sm:$0xff] %v331
  %s334 = scalar_lea.vmem %s0, 704
  %v335 = vld [vmem:[%s334] sm:$0xff]
  %s336 = scalar_lea.vmem %s1, 620
  %337 = vst [vmem:[%s336] sm:$0xff] %v335
  %s338 = scalar_lea.vmem %s0, 712
  %v339 = vld [vmem:[%s338] sm:$0xff]
  %s340 = scalar_lea.vmem %s1, 628
  %341 = vst [vmem:[%s340] sm:$0xff] %v339
  %s342 = scalar_lea.vmem %s0, 720
  %s343 = smov 3
  %v344 = vld [vmem:[%s342] ss:$8 sm:%s343]
  %s345 = scalar_lea.vmem %s1, 636
  %346 = vst [vmem:[%s345] sm:$0x3] %v344
  %s347 = scalar_lea.vmem %s0, 729
  %v348 = vld [vmem:[%s347] sm:$0xff]
  %s349 = scalar_lea.vmem %s1, 638
  %350 = vst [vmem:[%s349] sm:$0xff] %v348
  %s351 = scalar_lea.vmem %s0, 737
  %v352 = vld [vmem:[%s351] sm:$0xff]
  %s353 = scalar_lea.vmem %s1, 646
  %354 = vst [vmem:[%s353] sm:$0xff] %v352
  %s355 = scalar_lea.vmem %s0, 745
  %v356 = vld [vmem:[%s355] sm:$0xff]
  %s357 = scalar_lea.vmem %s1, 654
  %358 = vst [vmem:[%s357] sm:$0xff] %v356
  %s359 = scalar_lea.vmem %s0, 753
  %v360 = vld [vmem:[%s359] sm:$0xff]
  %s361 = scalar_lea.vmem %s1, 662
  %362 = vst [vmem:[%s361] sm:$0xff] %v360
  %s363 = scalar_lea.vmem %s0, 761
  %v364 = vld [vmem:[%s363] sm:$0xff]
  %s365 = scalar_lea.vmem %s1, 670
  %366 = vst [vmem:[%s365] sm:$0xff] %v364
  %s367 = scalar_lea.vmem %s0, 769
  %v368 = vld [vmem:[%s367] sm:$0xff]
  %s369 = scalar_lea.vmem %s1, 678
  %370 = vst [vmem:[%s369] sm:$0xff] %v368
  %s371 = scalar_lea.vmem %s0, 784
  %v372 = vld [vmem:[%s371] sm:$0xff]
  %s373 = scalar_lea.vmem %s1, 686
  %374 = vst [vmem:[%s373] sm:$0xff] %v372
  %s375 = scalar_lea.vmem %s0, 792
  %v376 = vld [vmem:[%s375] sm:$0xff]
  %s377 = scalar_lea.vmem %s1, 694
  %378 = vst [vmem:[%s377] sm:$0xff] %v376
  %s379 = scalar_lea.vmem %s0, 800
  %v380 = vld [vmem:[%s379] sm:$0xff]
  %s381 = scalar_lea.vmem %s1, 702
  %382 = vst [vmem:[%s381] sm:$0xff] %v380
  %s383 = scalar_lea.vmem %s0, 808
  %v384 = vld [vmem:[%s383] sm:$0xff]
  %s385 = scalar_lea.vmem %s1, 710
  %386 = vst [vmem:[%s385] sm:$0xff] %v384
  %s387 = scalar_lea.vmem %s0, 816
  %v388 = vld [vmem:[%s387] sm:$0xff]
  %s389 = scalar_lea.vmem %s1, 718
  %390 = vst [vmem:[%s389] sm:$0xff] %v388
  %s391 = scalar_lea.vmem %s0, 824
  %v392 = vld [vmem:[%s391] sm:$0xff]
  %s393 = scalar_lea.vmem %s1, 726
  %394 = vst [vmem:[%s393] sm:$0xff] %v392
  %s395 = scalar_lea.vmem %s0, 832
  %s396 = smov 3
  %v397 = vld [vmem:[%s395] ss:$8 sm:%s396]
  %s398 = scalar_lea.vmem %s1, 734
  %399 = vst [vmem:[%s398] sm:$0x3] %v397
  %s400 = scalar_lea.vmem %s0, 841
  %v401 = vld [vmem:[%s400] sm:$0xff]
  %s402 = scalar_lea.vmem %s1, 736
  %403 = vst [vmem:[%s402] sm:$0xff] %v401
  %s404 = scalar_lea.vmem %s0, 849
  %v405 = vld [vmem:[%s404] sm:$0xff]
  %s406 = scalar_lea.vmem %s1, 744
  %407 = vst [vmem:[%s406] sm:$0xff] %v405
  %s408 = scalar_lea.vmem %s0, 857
  %v409 = vld [vmem:[%s408] sm:$0xff]
  %s410 = scalar_lea.vmem %s1, 752
  %411 = vst [vmem:[%s410] sm:$0xff] %v409
  %s412 = scalar_lea.vmem %s0, 865
  %v413 = vld [vmem:[%s412] sm:$0xff]
  %s414 = scalar_lea.vmem %s1, 760
  %415 = vst [vmem:[%s414] sm:$0xff] %v413
  %s416 = scalar_lea.vmem %s0, 873
  %v417 = vld [vmem:[%s416] sm:$0xff]
  %s418 = scalar_lea.vmem %s1, 768
  %419 = vst [vmem:[%s418] sm:$0xff] %v417
  %s420 = scalar_lea.vmem %s0, 881
  %v421 = vld [vmem:[%s420] sm:$0xff]
  %s422 = scalar_lea.vmem %s1, 776
  %423 = vst [vmem:[%s422] sm:$0xff] %v421

// kernel: discriminator_forward.5
$region0: #{discriminator_forward.5}
  #allocation0 [shape = 'u32[]', space=smem, size = 0x4, offset = 0x4, fixed_abs, tag = 'smem constant byte address 0x4 - core index']
  #allocation1 [shape = 'u32[144,128]{1,0:T(1,128)}', space=vmem, size = 0x12000, scoped, tag = 'internal scratch']
  #allocation2 [shape = 'f32[1,1]{1,0:T(1,128)S(1)}', space=vmem, size = 0x200, scoped, tag = 'scoped memory for discriminator_forward.5']
  %s0 = inlined_call_operand.vmem [shape: f32[6272,288], index: 0, kind: input, shape index: {}]
  %s1 = inlined_call_operand.vmem [shape: f32[288,128], index: 1, kind: input, shape index: {}]
  %s2 = inlined_call_operand.vmem [shape: f32[1,128], index: 2, kind: input, shape index: {}]
  %s3 = inlined_call_operand.vmem [shape: f32[1,128], index: 3, kind: input, shape index: {}]
  %s4 = inlined_call_operand.vmem [shape: f32[784,128], index: 4, kind: input, shape index: {}]
  %s5 = inlined_call_operand.vmem [shape: f32[16,784], index: 5, kind: input, shape index: {}]
  %s6 = inlined_call_operand.<no memory space> [shape: f32[1,1], index: 6, kind: input, shape index: {}]
  %s7 = inlined_call_operand.vmem [shape: f32[128,1], index: 7, kind: output, shape index: {}]
  %s8 = sld [smem:[#allocation0]]
  $region61: #{discriminator_forward.5} parent=0
    _
  %s10 = ssub.s32 1, %s8
  %s11 = scalar_select 0, %s10, %s8
  %v12 = vstv %s6
  %13 = vst [vmem:[#allocation2] sm:$0x1] %v12
  loop: start=0, step=1, limit=10
  $region2: #{discriminator_forward.5} parent=0 // loop_pre_header
    _
  $region3: #{discriminator_forward.5} parent=0 // loop_header
    %s15 = sphi 0, %s19
    %p16 = scmp.ge.s32.totalorder %s15, 10
    %s25 = sphi 0, %s27
    %s28 = sphi 0, %s25
    %s29 = sphi 0, %s28
    %s45 = sphi 0, %s29
    %s49 = sphi 0, %s49
    %s51 = sphi 0, %s49
    %s52 = sphi 0, %s51
    %s66 = sphi 0, %s52
    %s70 = sphi 0, %s70
    %s72 = sphi 0, %s70
    %s73 = sphi 0, %s72
    %s87 = sphi 0, %s73
    %s91 = sphi 0, %s91
    %s93 = sphi 0, %s91
    %s94 = sphi 0, %s93
    %s108 = sphi 0, %s94
    %s112 = sphi 0, %s112
    %s114 = sphi 0, %s112
    %s115 = sphi 0, %s114
    %s129 = sphi 0, %s115
    %s133 = sphi 0, %s133
    %s135 = sphi 0, %s133
    %s136 = sphi 0, %s135
    %s150 = sphi 0, %s136
    %s154 = sphi 0, %s154
    %s156 = sphi 0, %s154
    %s157 = sphi 0, %s156
    %s171 = sphi 0, %s157
    %s177 = sphi 0, %s179
    %s180 = sphi 0, %s177
    %s181 = sphi 0, %s180
    %s197 = sphi 0, %s181
  $region4: #{discriminator_forward.5} parent=0 // loop_header_branch
    %18 = sbr.rel (%p16) target = $region8
  $region5: #{discriminator_forward.5} parent=0 // loop_body
    %s20 = ssub.s32 %s15, 1
    %s21 = ssub.s32 %s15, 2
    %s22 = sadd.s32 %s15, 1
    %s23 = ssub.s32 %s15, %s22
    %p24 = scmp.eq.s32.totalorder %s23, 0
    %s26 = sadd.s32 %s25, 1
    %s27 = scalar_select %p24, %s25, %s26
    %p30 = pneg %p24
    %p31 = scmp.eq.s32.totalorder %s15, 7
    %p32 = por %p30, %p31
    %p33 = scmp.ne.s32.totalorder %s25, %s28
    %p34 = scmp.eq.s32.totalorder %s15, 0
    %p35 = por %p33, %p34
    %p36 = scmp.ne.s32.totalorder %s25, %s28
    %p37 = scmp.eq.s32.totalorder %s20, 7
    %p38 = por %p36, %p37
    %p39 = scmp.ne.s32.totalorder %s28, %s29
    %p40 = scmp.eq.s32.totalorder %s20, 0
    %p41 = por %p39, %p40
    %p42 = scmp.ne.s32.totalorder %s28, %s29
    %p43 = scmp.eq.s32.totalorder %s21, 7
    %p44 = por %p42, %p43
    %p46 = scmp.ne.s32.totalorder %s29, %s45
    %p47 = scmp.eq.s32.totalorder %s21, 0
    %p48 = por %p46, %p47
    %s50 = sadd.s32 %s49, 1
    %p53 = scmp.eq.s32.totalorder %s15, 7
    %p54 = scmp.ne.s32.totalorder %s49, %s51
    %p55 = scmp.eq.s32.totalorder %s15, 0
    %p56 = por %p54, %p55
    %p57 = scmp.ne.s32.totalorder %s49, %s51
    %p58 = scmp.eq.s32.totalorder %s20, 7
    %p59 = por %p57, %p58
    %p60 = scmp.ne.s32.totalorder %s51, %s52
    %p61 = scmp.eq.s32.totalorder %s20, 0
    %p62 = por %p60, %p61
    %p63 = scmp.ne.s32.totalorder %s51, %s52
    %p64 = scmp.eq.s32.totalorder %s21, 7
    %p65 = por %p63, %p64
    %p67 = scmp.ne.s32.totalorder %s52, %s66
    %p68 = scmp.eq.s32.totalorder %s21, 0
    %p69 = por %p67, %p68
    %s71 = sadd.s32 %s70, 1
    %p74 = scmp.eq.s32.totalorder %s15, 7
    %p75 = scmp.ne.s32.totalorder %s70, %s72
    %p76 = scmp.eq.s32.totalorder %s15, 0
    %p77 = por %p75, %p76
    %p78 = scmp.ne.s32.totalorder %s70, %s72
    %p79 = scmp.eq.s32.totalorder %s20, 7
    %p80 = por %p78, %p79
    %p81 = scmp.ne.s32.totalorder %s72, %s73
    %p82 = scmp.eq.s32.totalorder %s20, 0
    %p83 = por %p81, %p82
    %p84 = scmp.ne.s32.totalorder %s72, %s73
    %p85 = scmp.eq.s32.totalorder %s21, 7
    %p86 = por %p84, %p85
    %p88 = scmp.ne.s32.totalorder %s73, %s87
    %p89 = scmp.eq.s32.totalorder %s21, 0
    %p90 = por %p88, %p89
    %s92 = sadd.s32 %s91, 1
    %p95 = scmp.eq.s32.totalorder %s15, 7
    %p96 = scmp.ne.s32.totalorder %s91, %s93
    %p97 = scmp.eq.s32.totalorder %s15, 0
    %p98 = por %p96, %p97
    %p99 = scmp.ne.s32.totalorder %s91, %s93
    %p100 = scmp.eq.s32.totalorder %s20, 7
    %p101 = por %p99, %p100
    %p102 = scmp.ne.s32.totalorder %s93, %s94
    %p103 = scmp.eq.s32.totalorder %s20, 0
    %p104 = por %p102, %p103
    %p105 = scmp.ne.s32.totalorder %s93, %s94
    %p106 = scmp.eq.s32.totalorder %s21, 7
    %p107 = por %p105, %p106
    %p109 = scmp.ne.s32.totalorder %s94, %s108
    %p110 = scmp.eq.s32.totalorder %s21, 0
    %p111 = por %p109, %p110
    %s113 = sadd.s32 %s112, 1
    %p116 = scmp.eq.s32.totalorder %s15, 7
    %p117 = scmp.ne.s32.totalorder %s112, %s114
    %p118 = scmp.eq.s32.totalorder %s15, 0
    %p119 = por %p117, %p118
    %p120 = scmp.ne.s32.totalorder %s112, %s114
    %p121 = scmp.eq.s32.totalorder %s20, 7
    %p122 = por %p120, %p121
    %p123 = scmp.ne.s32.totalorder %s114, %s115
    %p124 = scmp.eq.s32.totalorder %s20, 0
    %p125 = por %p123, %p124
    %p126 = scmp.ne.s32.totalorder %s114, %s115
    %p127 = scmp.eq.s32.totalorder %s21, 7
    %p128 = por %p126, %p127
    %p130 = scmp.ne.s32.totalorder %s115, %s129
    %p131 = scmp.eq.s32.totalorder %s21, 0
    %p132 = por %p130, %p131
    %s134 = sadd.s32 %s133, 1
    %p137 = scmp.eq.s32.totalorder %s15, 7
    %p138 = scmp.ne.s32.totalorder %s133, %s135
    %p139 = scmp.eq.s32.totalorder %s15, 0
    %p140 = por %p138, %p139
    %p141 = scmp.ne.s32.totalorder %s133, %s135
    %p142 = scmp.eq.s32.totalorder %s20, 7
    %p143 = por %p141, %p142
    %p144 = scmp.ne.s32.totalorder %s135, %s136
    %p145 = scmp.eq.s32.totalorder %s20, 0
    %p146 = por %p144, %p145
    %p147 = scmp.ne.s32.totalorder %s135, %s136
    %p148 = scmp.eq.s32.totalorder %s21, 7
    %p149 = por %p147, %p148
    %p151 = scmp.ne.s32.totalorder %s136, %s150
    %p152 = scmp.eq.s32.totalorder %s21, 0
    %p153 = por %p151, %p152
    %s155 = sadd.s32 %s154, 1
    %p158 = scmp.eq.s32.totalorder %s15, 7
    %p159 = scmp.ne.s32.totalorder %s154, %s156
    %p160 = scmp.eq.s32.totalorder %s15, 0
    %p161 = por %p159, %p160
    %p162 = scmp.ne.s32.totalorder %s154, %s156
    %p163 = scmp.eq.s32.totalorder %s20, 7
    %p164 = por %p162, %p163
    %p165 = scmp.ne.s32.totalorder %s156, %s157
    %p166 = scmp.eq.s32.totalorder %s20, 0
    %p167 = por %p165, %p166
    %p168 = scmp.ne.s32.totalorder %s156, %s157
    %p169 = scmp.eq.s32.totalorder %s21, 7
    %p170 = por %p168, %p169
    %p172 = scmp.ne.s32.totalorder %s157, %s171
    %p173 = scmp.eq.s32.totalorder %s21, 0
    %p174 = por %p172, %p173
    %s175 = ssub.s32 %s15, %s22
    %p176 = scmp.eq.s32.totalorder %s175, 0
    %s178 = sadd.s32 %s177, 1
    %s179 = scalar_select %p176, %s177, %s178
    %p182 = pneg %p176
    %p183 = scmp.eq.s32.totalorder %s15, 7
    %p184 = por %p182, %p183
    %p185 = scmp.ne.s32.totalorder %s177, %s180
    %p186 = scmp.eq.s32.totalorder %s15, 0
    %p187 = por %p185, %p186
    %p188 = scmp.ne.s32.totalorder %s177, %s180
    %p189 = scmp.eq.s32.totalorder %s20, 7
    %p190 = por %p188, %p189
    %p191 = scmp.ne.s32.totalorder %s180, %s181
    %p192 = scmp.eq.s32.totalorder %s20, 0
    %p193 = por %p191, %p192
    %p194 = scmp.ne.s32.totalorder %s180, %s181
    %p195 = scmp.eq.s32.totalorder %s21, 7
    %p196 = por %p194, %p195
    %p198 = scmp.ne.s32.totalorder %s181, %s197
    %p199 = scmp.eq.s32.totalorder %s21, 0
    %p200 = por %p198, %p199
    %p201 = scmp.le.s32.totalorder 1, %s15
    %p202 = scmp.lt.s32.totalorder %s15, 9
    %p203 = pnand %p201, %p202
    %p204 = pneg %p203
    // Predicated region
    $region9: #{discriminator_forward.5} parent=5 // pred_check
      _
    $region10: #{discriminator_forward.5} parent=5 // pred_check_branch
      %206 = sbr.rel (%p203) target = $region12
    $region11: #{discriminator_forward.5} parent=5 // pred_region
      %s207 = ssub.s32 %s15, 1
      // Predicated region
      $region13: #{discriminator_forward.5} parent=11 // pred_check
        %p208 = pneg %p62
      $region14: #{discriminator_forward.5} parent=11 // pred_check_branch
        %210 = sbr.rel (%p208) target = $region16
      $region15: #{discriminator_forward.5} parent=11 // pred_region
        _
      $region16: #{discriminator_forward.5} parent=11 // pred_fallthru
        _
      // Predicated region
      $region17: #{discriminator_forward.5} parent=11 // pred_check
        %p211 = pneg %p83
      $region18: #{discriminator_forward.5} parent=11 // pred_check_branch
        %213 = sbr.rel (%p211) target = $region20
      $region19: #{discriminator_forward.5} parent=11 // pred_region
        _
      $region20: #{discriminator_forward.5} parent=11 // pred_fallthru
        _
      // Predicated region
      $region21: #{discriminator_forward.5} parent=11 // pred_check
        %p214 = pneg %p104
      $region22: #{discriminator_forward.5} parent=11 // pred_check_branch
        %216 = sbr.rel (%p214) target = $region24
      $region23: #{discriminator_forward.5} parent=11 // pred_region
        _
      $region24: #{discriminator_forward.5} parent=11 // pred_fallthru
        _
      // Predicated region
      $region25: #{discriminator_forward.5} parent=11 // pred_check
        %p217 = pneg %p125
      $region26: #{discriminator_forward.5} parent=11 // pred_check_branch
        %219 = sbr.rel (%p217) target = $region28
      $region27: #{discriminator_forward.5} parent=11 // pred_region
        _
      $region28: #{discriminator_forward.5} parent=11 // pred_fallthru
        _
      // Predicated region
      $region29: #{discriminator_forward.5} parent=11 // pred_check
        %p220 = pneg %p146
      $region30: #{discriminator_forward.5} parent=11 // pred_check_branch
        %222 = sbr.rel (%p220) target = $region32
      $region31: #{discriminator_forward.5} parent=11 // pred_region
        _
      $region32: #{discriminator_forward.5} parent=11 // pred_fallthru
        _
      // Predicated region
      $region33: #{discriminator_forward.5} parent=11 // pred_check
        %p223 = pneg %p167
      $region34: #{discriminator_forward.5} parent=11 // pred_check_branch
        %225 = sbr.rel (%p223) target = $region36
      $region35: #{discriminator_forward.5} parent=11 // pred_region
        _
      $region36: #{discriminator_forward.5} parent=11 // pred_fallthru
        _
    $region12: #{discriminator_forward.5} parent=5 // pred_fallthru
      _
    %p226 = scmp.lt.s32.totalorder %s15, 8
    // Predicated region
    $region37: #{discriminator_forward.5} parent=5 // pred_check
      %p227 = pneg %p226
    $region38: #{discriminator_forward.5} parent=5 // pred_check_branch
      %229 = sbr.rel (%p227) target = $region40
    $region39: #{discriminator_forward.5} parent=5 // pred_region
      // Predicated region
      $region41: #{discriminator_forward.5} parent=39 // pred_check
        %p230 = pneg %p35
      $region42: #{discriminator_forward.5} parent=39 // pred_check_branch
        %232 = sbr.rel (%p230) target = $region44
      $region43: #{discriminator_forward.5} parent=39 // pred_region
        %s233 = smul.u32 98, %s15
        %p234 = scmp.lt.s32.totalorder %s233, 783
        %s235 = scalar_select %p234, %s233, 783
        %s236 = smul.addr %s235, 3
        %s237 = smul.addr %s236, 8
        %s238 = scalar_lea.vmem %s0, %s237
        %s239 = smul.u32 98, %s15
      $region44: #{discriminator_forward.5} parent=39 // pred_fallthru
        _
    $region40: #{discriminator_forward.5} parent=5 // pred_fallthru
      _
    %p240 = scmp.le.s32.totalorder 1, %s15
    %p241 = scmp.lt.s32.totalorder %s15, 9
    %p242 = pnand %p240, %p241
    %p243 = pneg %p242
    // Predicated region
    $region45: #{discriminator_forward.5} parent=5 // pred_check
      _
    $region46: #{discriminator_forward.5} parent=5 // pred_check_branch
      %245 = sbr.rel (%p242) target = $region48
    $region47: #{discriminator_forward.5} parent=5 // pred_region
      %s246 = ssub.s32 %s15, 1
      %s247 = smul.u32 98, %s20
      %p248 = scmp.lt.s32.totalorder %s247, 783
      %s249 = scalar_select %p248, %s247, 783
      %s250 = smul.addr %s249, 3
      %s251 = smul.addr %s250, 8
      %s252 = scalar_lea.vmem %s0, %s251
      %p253 = pneg %p41
      %p254 = pneg %p38
      %p255 = pneg %p62
      %p256 = pneg %p59
      %p257 = pneg %p83
      %p258 = pneg %p80
      %p259 = pneg %p104
      %p260 = pneg %p101
      %p261 = pneg %p125
      %p262 = pneg %p122
      %p263 = pneg %p146
      %p264 = pneg %p143
      %p265 = pneg %p167
      %p266 = pneg %p164
      %p267 = pneg %p193
      %p268 = pneg %p190
      %s269 = smul.u32 2, %s20
      %p270 = scmp.lt.s32.totalorder %s269, 15
      %s271 = scalar_select %p270, %s269, 15
      %s272 = smul.addr %s271, 8
      %s273 = scalar_lea.vmem %s7, %s272
      %s274 = smul.u32 98, %s20
      %p275 = scmp.lt.s32.totalorder %s274, 783
      %s276 = scalar_select %p275, %s274, 783
      %s277 = smul.addr %s276, 3
      %s278 = smul.addr %s277, 8
      %s279 = scalar_lea.vmem %s0, %s278
      %s280 = smul.u32 98, %s20
      %s281 = smul.u32 2, %s20
      %p282 = scmp.lt.s32.totalorder %s281, 15
      %s283 = scalar_select %p282, %s281, 15
      %s284 = smul.addr %s283, 8
      %s285 = scalar_lea.vmem %s7, %s284
      %s286 = smul.u32 2, %s20
      %v287 = vld [vmem:[%s279] sm:$0xff]
      %v288 = vld [vmem:[%s279 + $0x8] sm:$0xff]
      %v289 = vld [vmem:[%s279 + $0x10] sm:$0xff]
      %v290 = vld [vmem:[%s279 + $0x18] sm:$0xff]
      %v291 = vld [vmem:[%s279 + $0x20] sm:$0xff]
      %v292 = vld [vmem:[%s279 + $0x28] sm:$0xff]
      %v293 = vld [vmem:[%s279 + $0x30] sm:$0xff]
      %v294 = vld [vmem:[%s279 + $0x38] sm:$0xff]
      %v295 = vld [vmem:[%s279 + $0x40] sm:$0xff]
      %v296 = vld [vmem:[%s279 + $0x48] sm:$0xff]
      %v297 = vld [vmem:[%s279 + $0x50] sm:$0xff]
      %v298 = vld [vmem:[%s279 + $0x58] sm:$0xff]
      %v299 = vld [vmem:[%s279 + $0x60] sm:$0xff]
      %v300 = vld [vmem:[%s279 + $0x68] sm:$0xff]
      %v301 = vld [vmem:[%s279 + $0x70] sm:$0xff]
      %v302 = vld [vmem:[%s279 + $0x78] sm:$0xff]
      %v303 = vld [vmem:[%s279 + $0x80] sm:$0xff]
      %v304 = vld [vmem:[%s279 + $0x88] sm:$0xff]
      %v305 = vld [vmem:[%s279 + $0x90] sm:$0xff]
      %v306 = vld [vmem:[%s279 + $0x98] sm:$0xff]
      %v307 = vld [vmem:[%s279 + $0xa0] sm:$0xff]
      %v308 = vld [vmem:[%s279 + $0xa8] sm:$0xff]
      %v309 = vld [vmem:[%s279 + $0xb0] sm:$0xff]
      %v310 = vld [vmem:[%s279 + $0xb8] sm:$0xff]
      %v311 = vld [vmem:[%s279 + $0xc0] sm:$0xff]
      %v312 = vld [vmem:[%s279 + $0xc8] sm:$0xff]
      %v313 = vld [vmem:[%s279 + $0xd0] sm:$0xff]
      %v314 = vld [vmem:[%s279 + $0xd8] sm:$0xff]
      %v315 = vld [vmem:[%s279 + $0xe0] sm:$0xff]
      %v316 = vld [vmem:[%s279 + $0xe8] sm:$0xff]
      %v317 = vld [vmem:[%s279 + $0xf0] sm:$0xff]
      %v318 = vld [vmem:[%s279 + $0xf8] sm:$0xff]
      %v319 = vld [vmem:[%s279 + $0x100] sm:$0xff]
      %v320 = vld [vmem:[%s279 + $0x108] sm:$0xff]
      %v321 = vld [vmem:[%s279 + $0x110] sm:$0xff]
      %v322 = vld [vmem:[%s279 + $0x118] sm:$0xff]
      %v323 = vld [vmem:[%s279 + $0x120] sm:$0xff]
      %v324 = vld [vmem:[%s279 + $0x128] sm:$0xff]
      %v325 = vld [vmem:[%s279 + $0x130] sm:$0xff]
      %v326 = vld [vmem:[%s279 + $0x138] sm:$0xff]
      %v327 = vld [vmem:[%s279 + $0x140] sm:$0xff]
      %v328 = vld [vmem:[%s279 + $0x148] sm:$0xff]
      %v329 = vld [vmem:[%s279 + $0x150] sm:$0xff]
      %v330 = vld [vmem:[%s279 + $0x158] sm:$0xff]
      %v331 = vld [vmem:[%s279 + $0x160] sm:$0xff]
      %v332 = vld [vmem:[%s279 + $0x168] sm:$0xff]
      %v333 = vld [vmem:[%s279 + $0x170] sm:$0xff]
      %v334 = vld [vmem:[%s279 + $0x178] sm:$0xff]
      %v335 = vld [vmem:[%s279 + $0x180] sm:$0xff]
      %v336 = vld [vmem:[%s279 + $0x188] sm:$0xff]
      %v337 = vld [vmem:[%s279 + $0x190] sm:$0xff]
      %v338 = vld [vmem:[%s279 + $0x198] sm:$0xff]
      %v339 = vld [vmem:[%s279 + $0x1a0] sm:$0xff]
      %v340 = vld [vmem:[%s279 + $0x1a8] sm:$0xff]
      %v341 = vld [vmem:[%s279 + $0x1b0] sm:$0xff]
      %v342 = vld [vmem:[%s279 + $0x1b8] sm:$0xff]
      %v343 = vld [vmem:[%s279 + $0x1c0] sm:$0xff]
      %v344 = vld [vmem:[%s279 + $0x1c8] sm:$0xff]
      %v345 = vld [vmem:[%s279 + $0x1d0] sm:$0xff]
      %v346 = vld [vmem:[%s279 + $0x1d8] sm:$0xff]
      %v347 = vld [vmem:[%s279 + $0x1e0] sm:$0xff]
      %v348 = vld [vmem:[%s279 + $0x1e8] sm:$0xff]
      %v349 = vld [vmem:[%s279 + $0x1f0] sm:$0xff]
      %v350 = vld [vmem:[%s279 + $0x1f8] sm:$0xff]
      %v351 = vld [vmem:[%s279 + $0x200] sm:$0xff]
      %v352 = vld [vmem:[%s279 + $0x208] sm:$0xff]
      %v353 = vld [vmem:[%s279 + $0x210] sm:$0xff]
      %v354 = vld [vmem:[%s279 + $0x218] sm:$0xff]
      %v355 = vld [vmem:[%s279 + $0x220] sm:$0xff]
      %v356 = vld [vmem:[%s279 + $0x228] sm:$0xff]
      %v357 = vld [vmem:[%s279 + $0x230] sm:$0xff]
      %v358 = vld [vmem:[%s279 + $0x238] sm:$0xff]
      %v359 = vld [vmem:[%s279 + $0x240] sm:$0xff]
      %v360 = vld [vmem:[%s279 + $0x248] sm:$0xff]
      %v361 = vld [vmem:[%s279 + $0x250] sm:$0xff]
      %v362 = vld [vmem:[%s279 + $0x258] sm:$0xff]
      %v363 = vld [vmem:[%s279 + $0x260] sm:$0xff]
      %v364 = vld [vmem:[%s279 + $0x268] sm:$0xff]
      %v365 = vld [vmem:[%s279 + $0x270] sm:$0xff]
      %v366 = vld [vmem:[%s279 + $0x278] sm:$0xff]
      %v367 = vld [vmem:[%s279 + $0x280] sm:$0xff]
      %v368 = vld [vmem:[%s279 + $0x288] sm:$0xff]
      %v369 = vld [vmem:[%s279 + $0x290] sm:$0xff]
      %v370 = vld [vmem:[%s279 + $0x298] sm:$0xff]
      %v371 = vld [vmem:[%s279 + $0x2a0] sm:$0xff]
      %v372 = vld [vmem:[%s279 + $0x2a8] sm:$0xff]
      %v373 = vld [vmem:[%s279 + $0x2b0] sm:$0xff]
      %v374 = vld [vmem:[%s279 + $0x2b8] sm:$0xff]
      %v375 = vld [vmem:[%s279 + $0x2c0] sm:$0xff]
      %v376 = vld [vmem:[%s279 + $0x2c8] sm:$0xff]
      %v377 = vld [vmem:[%s279 + $0x2d0] sm:$0xff]
      %v378 = vld [vmem:[%s279 + $0x2d8] sm:$0xff]
      %v379 = vld [vmem:[%s279 + $0x2e0] sm:$0xff]
      %v380 = vld [vmem:[%s279 + $0x2e8] sm:$0xff]
      %v381 = vld [vmem:[%s279 + $0x2f0] sm:$0xff]
      %v382 = vld [vmem:[%s279 + $0x2f8] sm:$0xff]
      %v383 = vld [vmem:[%s279 + $0x300] sm:$0xff]
      %v384 = vld [vmem:[%s279 + $0x308] sm:$0xff]
      %v385 = vld [vmem:[%s279 + $0x310] sm:$0xff]
      %v386 = vld [vmem:[%s279 + $0x318] sm:$0xff]
      %v387 = vld [vmem:[%s279 + $0x320] sm:$0xff]
      %v388 = vld [vmem:[%s279 + $0x328] sm:$0xff]
      %v389 = vld [vmem:[%s279 + $0x330] sm:$0xff]
      %v390 = vld [vmem:[%s279 + $0x338] sm:$0xff]
      %v391 = vld [vmem:[%s279 + $0x340] sm:$0xff]
      %v392 = vld [vmem:[%s279 + $0x348] sm:$0xff]
      %v393 = vld [vmem:[%s279 + $0x350] sm:$0xff]
      %v394 = vld [vmem:[%s279 + $0x358] sm:$0xff]
      %v395 = vld [vmem:[%s279 + $0x360] sm:$0xff]
      %v396 = vld [vmem:[%s279 + $0x368] sm:$0xff]
      %v397 = vld [vmem:[%s279 + $0x370] sm:$0xff]
      %v398 = vld [vmem:[%s279 + $0x378] sm:$0xff]
      %v399 = vld [vmem:[%s279 + $0x380] sm:$0xff]
      %v400 = vld [vmem:[%s279 + $0x388] sm:$0xff]
      %v401 = vld [vmem:[%s279 + $0x390] sm:$0xff]
      %v402 = vld [vmem:[%s279 + $0x398] sm:$0xff]
      %v403 = vld [vmem:[%s279 + $0x3a0] sm:$0xff]
      %v404 = vld [vmem:[%s279 + $0x3a8] sm:$0xff]
      %v405 = vld [vmem:[%s279 + $0x3b0] sm:$0xff]
      %v406 = vld [vmem:[%s279 + $0x3b8] sm:$0xff]
      %v407 = vld [vmem:[%s279 + $0x3c0] sm:$0xff]
      %v408 = vld [vmem:[%s279 + $0x3c8] sm:$0xff]
      %v409 = vld [vmem:[%s279 + $0x3d0] sm:$0xff]
      %v410 = vld [vmem:[%s279 + $0x3d8] sm:$0xff]
      %v411 = vld [vmem:[%s279 + $0x3e0] sm:$0xff]
      %v412 = vld [vmem:[%s279 + $0x3e8] sm:$0xff]
      %v413 = vld [vmem:[%s279 + $0x3f0] sm:$0xff]
      %v414 = vld [vmem:[%s279 + $0x3f8] sm:$0xff]
      %v415 = vld [vmem:[%s279 + $0x400] sm:$0xff]
      %v416 = vld [vmem:[%s279 + $0x408] sm:$0xff]
      %v417 = vld [vmem:[%s279 + $0x410] sm:$0xff]
      %v418 = vld [vmem:[%s279 + $0x418] sm:$0xff]
      %v419 = vld [vmem:[%s279 + $0x420] sm:$0xff]
      %v420 = vld [vmem:[%s279 + $0x428] sm:$0xff]
      %v421 = vld [vmem:[%s279 + $0x430] sm:$0xff]
      %v422 = vld [vmem:[%s279 + $0x438] sm:$0xff]
      %v423 = vld [vmem:[%s279 + $0x440] sm:$0xff]
      %v424 = vld [vmem:[%s279 + $0x448] sm:$0xff]
      %v425 = vld [vmem:[%s279 + $0x450] sm:$0xff]
      %v426 = vld [vmem:[%s279 + $0x458] sm:$0xff]
      %v427 = vld [vmem:[%s279 + $0x460] sm:$0xff]
      %v428 = vld [vmem:[%s279 + $0x468] sm:$0xff]
      %v429 = vld [vmem:[%s279 + $0x470] sm:$0xff]
      %v430 = vld [vmem:[%s279 + $0x478] sm:$0xff]
      %v431 = vld [vmem:[%s279 + $0x480] sm:$0xff]
      %v432 = vld [vmem:[%s279 + $0x488] sm:$0xff]
      %v433 = vld [vmem:[%s279 + $0x490] sm:$0xff]
      %v434 = vld [vmem:[%s279 + $0x498] sm:$0xff]
      %v435 = vld [vmem:[%s279 + $0x4a0] sm:$0xff]
      %v436 = vld [vmem:[%s279 + $0x4a8] sm:$0xff]
      %v437 = vld [vmem:[%s279 + $0x4b0] sm:$0xff]
      %v438 = vld [vmem:[%s279 + $0x4b8] sm:$0xff]
      %v439 = vld [vmem:[%s279 + $0x4c0] sm:$0xff]
      %v440 = vld [vmem:[%s279 + $0x4c8] sm:$0xff]
      %v441 = vld [vmem:[%s279 + $0x4d0] sm:$0xff]
      %v442 = vld [vmem:[%s279 + $0x4d8] sm:$0xff]
      %v443 = vld [vmem:[%s279 + $0x4e0] sm:$0xff]
      %v444 = vld [vmem:[%s279 + $0x4e8] sm:$0xff]
      %v445 = vld [vmem:[%s279 + $0x4f0] sm:$0xff]
      %v446 = vld [vmem:[%s279 + $0x4f8] sm:$0xff]
      %v447 = vld [vmem:[%s279 + $0x500] sm:$0xff]
      %v448 = vld [vmem:[%s279 + $0x508] sm:$0xff]
      %v449 = vld [vmem:[%s279 + $0x510] sm:$0xff]
      %v450 = vld [vmem:[%s279 + $0x518] sm:$0xff]
      %v451 = vld [vmem:[%s279 + $0x520] sm:$0xff]
      %v452 = vld [vmem:[%s279 + $0x528] sm:$0xff]
      %v453 = vld [vmem:[%s279 + $0x530] sm:$0xff]
      %v454 = vld [vmem:[%s279 + $0x538] sm:$0xff]
      %v455 = vld [vmem:[%s279 + $0x540] sm:$0xff]
      %v456 = vld [vmem:[%s279 + $0x548] sm:$0xff]
      %v457 = vld [vmem:[%s279 + $0x550] sm:$0xff]
      %v458 = vld [vmem:[%s279 + $0x558] sm:$0xff]
      %v459 = vld [vmem:[%s279 + $0x560] sm:$0xff]
      %v460 = vld [vmem:[%s279 + $0x568] sm:$0xff]
      %v461 = vld [vmem:[%s279 + $0x570] sm:$0xff]
      %v462 = vld [vmem:[%s279 + $0x578] sm:$0xff]
      %v463 = vld [vmem:[%s279 + $0x580] sm:$0xff]
      %v464 = vld [vmem:[%s279 + $0x588] sm:$0xff]
      %v465 = vld [vmem:[%s279 + $0x590] sm:$0xff]
      %v466 = vld [vmem:[%s279 + $0x598] sm:$0xff]
      %v467 = vld [vmem:[%s279 + $0x5a0] sm:$0xff]
      %v468 = vld [vmem:[%s279 + $0x5a8] sm:$0xff]
      %v469 = vld [vmem:[%s279 + $0x5b0] sm:$0xff]
      %v470 = vld [vmem:[%s279 + $0x5b8] sm:$0xff]
      %v471 = vld [vmem:[%s279 + $0x5c0] sm:$0xff]
      %v472 = vld [vmem:[%s279 + $0x5c8] sm:$0xff]
      %v473 = vld [vmem:[%s279 + $0x5d0] sm:$0xff]
      %v474 = vld [vmem:[%s279 + $0x5d8] sm:$0xff]
      %v475 = vld [vmem:[%s279 + $0x5e0] sm:$0xff]
      %v476 = vld [vmem:[%s279 + $0x5e8] sm:$0xff]
      %v477 = vld [vmem:[%s279 + $0x5f0] sm:$0xff]
      %v478 = vld [vmem:[%s279 + $0x5f8] sm:$0xff]
      %v479 = vld [vmem:[%s279 + $0x600] sm:$0xff]
      %v480 = vld [vmem:[%s279 + $0x608] sm:$0xff]
      %v481 = vld [vmem:[%s279 + $0x610] sm:$0xff]
      %v482 = vld [vmem:[%s279 + $0x618] sm:$0xff]
      %v483 = vld [vmem:[%s279 + $0x620] sm:$0xff]
      %v484 = vld [vmem:[%s279 + $0x628] sm:$0xff]
      %v485 = vld [vmem:[%s279 + $0x630] sm:$0xff]
      %v486 = vld [vmem:[%s279 + $0x638] sm:$0xff]
      %v487 = vld [vmem:[%s279 + $0x640] sm:$0xff]
      %v488 = vld [vmem:[%s279 + $0x648] sm:$0xff]
      %v489 = vld [vmem:[%s279 + $0x650] sm:$0xff]
      %v490 = vld [vmem:[%s279 + $0x658] sm:$0xff]
      %v491 = vld [vmem:[%s279 + $0x660] sm:$0xff]
      %v492 = vld [vmem:[%s279 + $0x668] sm:$0xff]
      %v493 = vld [vmem:[%s279 + $0x670] sm:$0xff]
      %v494 = vld [vmem:[%s279 + $0x678] sm:$0xff]
      %v495 = vld [vmem:[%s279 + $0x680] sm:$0xff]
      %v496 = vld [vmem:[%s279 + $0x688] sm:$0xff]
      %v497 = vld [vmem:[%s279 + $0x690] sm:$0xff]
      %v498 = vld [vmem:[%s279 + $0x698] sm:$0xff]
      %v499 = vld [vmem:[%s279 + $0x6a0] sm:$0xff]
      %v500 = vld [vmem:[%s279 + $0x6a8] sm:$0xff]
      %v501 = vld [vmem:[%s279 + $0x6b0] sm:$0xff]
      %v502 = vld [vmem:[%s279 + $0x6b8] sm:$0xff]
      %v503 = vld [vmem:[%s279 + $0x6c0] sm:$0xff]
      %v504 = vld [vmem:[%s279 + $0x6c8] sm:$0xff]
      %v505 = vld [vmem:[%s279 + $0x6d0] sm:$0xff]
      %v506 = vld [vmem:[%s279 + $0x6d8] sm:$0xff]
      %v507 = vld [vmem:[%s279 + $0x6e0] sm:$0xff]
      %v508 = vld [vmem:[%s279 + $0x6e8] sm:$0xff]
      %v509 = vld [vmem:[%s279 + $0x6f0] sm:$0xff]
      %v510 = vld [vmem:[%s279 + $0x6f8] sm:$0xff]
      %v511 = vld [vmem:[%s279 + $0x700] sm:$0xff]
      %v512 = vld [vmem:[%s279 + $0x708] sm:$0xff]
      %v513 = vld [vmem:[%s279 + $0x710] sm:$0xff]
      %v514 = vld [vmem:[%s279 + $0x718] sm:$0xff]
      %v515 = vld [vmem:[%s279 + $0x720] sm:$0xff]
      %v516 = vld [vmem:[%s279 + $0x728] sm:$0xff]
      %v517 = vld [vmem:[%s279 + $0x730] sm:$0xff]
      %v518 = vld [vmem:[%s279 + $0x738] sm:$0xff]
      %v519 = vld [vmem:[%s279 + $0x740] sm:$0xff]
      %v520 = vld [vmem:[%s279 + $0x748] sm:$0xff]
      %v521 = vld [vmem:[%s279 + $0x750] sm:$0xff]
      %v522 = vld [vmem:[%s279 + $0x758] sm:$0xff]
      %v523 = vld [vmem:[%s279 + $0x760] sm:$0xff]
      %v524 = vld [vmem:[%s279 + $0x768] sm:$0xff]
      %v525 = vld [vmem:[%s279 + $0x770] sm:$0xff]
      %v526 = vld [vmem:[%s279 + $0x778] sm:$0xff]
      %v527 = vld [vmem:[%s279 + $0x780] sm:$0xff]
      %v528 = vld [vmem:[%s279 + $0x788] sm:$0xff]
      %v529 = vld [vmem:[%s279 + $0x790] sm:$0xff]
      %v530 = vld [vmem:[%s279 + $0x798] sm:$0xff]
      %v531 = vld [vmem:[%s279 + $0x7a0] sm:$0xff]
      %v532 = vld [vmem:[%s279 + $0x7a8] sm:$0xff]
      %v533 = vld [vmem:[%s279 + $0x7b0] sm:$0xff]
      %v534 = vld [vmem:[%s279 + $0x7b8] sm:$0xff]
      %v535 = vld [vmem:[%s279 + $0x7c0] sm:$0xff]
      %v536 = vld [vmem:[%s279 + $0x7c8] sm:$0xff]
      %v537 = vld [vmem:[%s279 + $0x7d0] sm:$0xff]
      %v538 = vld [vmem:[%s279 + $0x7d8] sm:$0xff]
      %v539 = vld [vmem:[%s279 + $0x7e0] sm:$0xff]
      %v540 = vld [vmem:[%s279 + $0x7e8] sm:$0xff]
      %v541 = vld [vmem:[%s279 + $0x7f0] sm:$0xff]
      %v542 = vld [vmem:[%s279 + $0x7f8] sm:$0xff]
      %v543 = vld [vmem:[%s279 + $0x800] sm:$0xff]
      %v544 = vld [vmem:[%s279 + $0x808] sm:$0xff]
      %v545 = vld [vmem:[%s279 + $0x810] sm:$0xff]
      %v546 = vld [vmem:[%s279 + $0x818] sm:$0xff]
      %v547 = vld [vmem:[%s279 + $0x820] sm:$0xff]
      %v548 = vld [vmem:[%s279 + $0x828] sm:$0xff]
      %v549 = vld [vmem:[%s279 + $0x830] sm:$0xff]
      %v550 = vld [vmem:[%s279 + $0x838] sm:$0xff]
      %v551 = vld [vmem:[%s279 + $0x840] sm:$0xff]
      %v552 = vld [vmem:[%s279 + $0x848] sm:$0xff]
      %v553 = vld [vmem:[%s279 + $0x850] sm:$0xff]
      %v554 = vld [vmem:[%s279 + $0x858] sm:$0xff]
      %v555 = vld [vmem:[%s279 + $0x860] sm:$0xff]
      %v556 = vld [vmem:[%s279 + $0x868] sm:$0xff]
      %v557 = vld [vmem:[%s279 + $0x870] sm:$0xff]
      %v558 = vld [vmem:[%s279 + $0x878] sm:$0xff]
      %v559 = vld [vmem:[%s279 + $0x880] sm:$0xff]
      %v560 = vld [vmem:[%s279 + $0x888] sm:$0xff]
      %v561 = vld [vmem:[%s279 + $0x890] sm:$0xff]
      %v562 = vld [vmem:[%s279 + $0x898] sm:$0xff]
      %v563 = vld [vmem:[%s279 + $0x8a0] sm:$0xff]
      %v564 = vld [vmem:[%s279 + $0x8a8] sm:$0xff]
      %v565 = vld [vmem:[%s279 + $0x8b0] sm:$0xff]
      %v566 = vld [vmem:[%s279 + $0x8b8] sm:$0xff]
      %v567 = vld [vmem:[%s279 + $0x8c0] sm:$0xff]
      %v568 = vld [vmem:[%s279 + $0x8c8] sm:$0xff]
      %v569 = vld [vmem:[%s279 + $0x8d0] sm:$0xff]
      %v570 = vld [vmem:[%s279 + $0x8d8] sm:$0xff]
      %v571 = vld [vmem:[%s279 + $0x8e0] sm:$0xff]
      %v572 = vld [vmem:[%s279 + $0x8e8] sm:$0xff]
      %v573 = vld [vmem:[%s279 + $0x8f0] sm:$0xff]
      %v574 = vld [vmem:[%s279 + $0x8f8] sm:$0xff]
      %v575 = vld [vmem:[%s279 + $0x900] sm:$0xff]
      %v576 = vld [vmem:[%s279 + $0x908] sm:$0xff]
      %v577 = vld [vmem:[%s279 + $0x910] sm:$0xff]
      %v578 = vld [vmem:[%s279 + $0x918] sm:$0xff]
      %v579 = vld [vmem:[%s279 + $0x920] sm:$0xff]
      %v580 = vld [vmem:[%s279 + $0x928] sm:$0xff]
      %v581 = vld [vmem:[%s1] sm:$0xff]
      %v582 = vld [vmem:[%s1 + $0x8] sm:$0xff]
      %v583 = vld [vmem:[%s1 + $0x10] sm:$0xff]
      %v584 = vld [vmem:[%s1 + $0x18] sm:$0xff]
      %v585 = vld [vmem:[%s1 + $0x20] sm:$0xff]
      %v586 = vld [vmem:[%s1 + $0x28] sm:$0xff]
      %v587 = vld [vmem:[%s1 + $0x30] sm:$0xff]
      %v588 = vld [vmem:[%s1 + $0x38] sm:$0xff]
      %v589 = vld [vmem:[%s1 + $0x40] sm:$0xff]
      %v590 = vld [vmem:[%s1 + $0x48] sm:$0xff]
      %v591 = vld [vmem:[%s1 + $0x50] sm:$0xff]
      %v592 = vld [vmem:[%s1 + $0x58] sm:$0xff]
      %v593 = vld [vmem:[%s1 + $0x60] sm:$0xff]
      %v594 = vld [vmem:[%s1 + $0x68] sm:$0xff]
      %v595 = vld [vmem:[%s1 + $0x70] sm:$0xff]
      %v596 = vld [vmem:[%s1 + $0x78] sm:$0xff]
      %v597 = vld [vmem:[%s1 + $0x80] sm:$0xff]
      %v598 = vld [vmem:[%s1 + $0x88] sm:$0xff]
      %v599 = vld [vmem:[%s1 + $0x90] sm:$0xff]
      %v600 = vld [vmem:[%s1 + $0x98] sm:$0xff]
      %v601 = vld [vmem:[%s1 + $0xa0] sm:$0xff]
      %v602 = vld [vmem:[%s1 + $0xa8] sm:$0xff]
      %v603 = vld [vmem:[%s1 + $0xb0] sm:$0xff]
      %v604 = vld [vmem:[%s1 + $0xb8] sm:$0xff]
      %v605 = vld [vmem:[%s1 + $0xc0] sm:$0xff]
      %v606 = vld [vmem:[%s1 + $0xc8] sm:$0xff]
      %v607 = vld [vmem:[%s1 + $0xd0] sm:$0xff]
      %v608 = vld [vmem:[%s1 + $0xd8] sm:$0xff]
      %v609 = vld [vmem:[%s1 + $0xe0] sm:$0xff]
      %v610 = vld [vmem:[%s1 + $0xe8] sm:$0xff]
      %v611 = vld [vmem:[%s1 + $0xf0] sm:$0xff]
      %v612 = vld [vmem:[%s1 + $0xf8] sm:$0xff]
      %v613 = vld [vmem:[%s1 + $0x100] sm:$0xff]
      %v614 = vld [vmem:[%s1 + $0x108] sm:$0xff]
      %v615 = vld [vmem:[%s1 + $0x110] sm:$0xff]
      %v616 = vld [vmem:[%s1 + $0x118] sm:$0xff]
      %vm617 = vcmask 261120
      %v619 = vsel %vm617, %v289, 0
      %v622 = vsel %vm617, %v292, 0
      %v625 = vsel %vm617, %v295, 0
      %v628 = vsel %vm617, %v298, 0
      %v631 = vsel %vm617, %v301, 0
      %v634 = vsel %vm617, %v304, 0
      %v637 = vsel %vm617, %v307, 0
      %v640 = vsel %vm617, %v310, 0
      %v643 = vsel %vm617, %v313, 0
      %v646 = vsel %vm617, %v316, 0
      %v649 = vsel %vm617, %v319, 0
      %v652 = vsel %vm617, %v322, 0
      %v655 = vsel %vm617, %v325, 0
      %v658 = vsel %vm617, %v328, 0
      %v661 = vsel %vm617, %v331, 0
      %v664 = vsel %vm617, %v334, 0
      %v667 = vsel %vm617, %v337, 0
      %v670 = vsel %vm617, %v340, 0
      %v673 = vsel %vm617, %v343, 0
      %v676 = vsel %vm617, %v346, 0
      %v679 = vsel %vm617, %v349, 0
      %v682 = vsel %vm617, %v352, 0
      %v685 = vsel %vm617, %v355, 0
      %v688 = vsel %vm617, %v358, 0
      %v691 = vsel %vm617, %v361, 0
      %v694 = vsel %vm617, %v364, 0
      %v697 = vsel %vm617, %v367, 0
      %v700 = vsel %vm617, %v370, 0
      %v703 = vsel %vm617, %v373, 0
      %v706 = vsel %vm617, %v376, 0
      %v709 = vsel %vm617, %v379, 0
      %v712 = vsel %vm617, %v382, 0
      %v715 = vsel %vm617, %v385, 0
      %v718 = vsel %vm617, %v388, 0
      %v721 = vsel %vm617, %v391, 0
      %v724 = vsel %vm617, %v394, 0
      %v727 = vsel %vm617, %v397, 0
      %v730 = vsel %vm617, %v400, 0
      %v733 = vsel %vm617, %v403, 0
      %v736 = vsel %vm617, %v406, 0
      %v739 = vsel %vm617, %v409, 0
      %v742 = vsel %vm617, %v412, 0
      %v745 = vsel %vm617, %v415, 0
      %v748 = vsel %vm617, %v418, 0
      %v751 = vsel %vm617, %v421, 0
      %v754 = vsel %vm617, %v424, 0
      %v757 = vsel %vm617, %v427, 0
      %v760 = vsel %vm617, %v430, 0
      %v763 = vsel %vm617, %v433, 0
      %v766 = vsel %vm617, %v436, 0
      %v769 = vsel %vm617, %v439, 0
      %v772 = vsel %vm617, %v442, 0
      %v775 = vsel %vm617, %v445, 0
      %v778 = vsel %vm617, %v448, 0
      %v781 = vsel %vm617, %v451, 0
      %v784 = vsel %vm617, %v454, 0
      %v787 = vsel %vm617, %v457, 0
      %v790 = vsel %vm617, %v460, 0
      %v793 = vsel %vm617, %v463, 0
      %v796 = vsel %vm617, %v466, 0
      %v799 = vsel %vm617, %v469, 0
      %v802 = vsel %vm617, %v472, 0
      %v805 = vsel %vm617, %v475, 0
      %v808 = vsel %vm617, %v478, 0
      %v811 = vsel %vm617, %v481, 0
      %v814 = vsel %vm617, %v484, 0
      %v817 = vsel %vm617, %v487, 0
      %v820 = vsel %vm617, %v490, 0
      %v823 = vsel %vm617, %v493, 0
      %v826 = vsel %vm617, %v496, 0
      %v829 = vsel %vm617, %v499, 0
      %v832 = vsel %vm617, %v502, 0
      %v835 = vsel %vm617, %v505, 0
      %v838 = vsel %vm617, %v508, 0
      %v841 = vsel %vm617, %v511, 0
      %v844 = vsel %vm617, %v514, 0
      %v847 = vsel %vm617, %v517, 0
      %v850 = vsel %vm617, %v520, 0
      %v853 = vsel %vm617, %v523, 0
      %v856 = vsel %vm617, %v526, 0
      %v859 = vsel %vm617, %v529, 0
      %v862 = vsel %vm617, %v532, 0
      %v865 = vsel %vm617, %v535, 0
      %v868 = vsel %vm617, %v538, 0
      %v871 = vsel %vm617, %v541, 0
      %v874 = vsel %vm617, %v544, 0
      %v877 = vsel %vm617, %v547, 0
      %v880 = vsel %vm617, %v550, 0
      %v883 = vsel %vm617, %v553, 0
      %v886 = vsel %vm617, %v556, 0
      %v889 = vsel %vm617, %v559, 0
      %v892 = vsel %vm617, %v562, 0
      %v895 = vsel %vm617, %v565, 0
      %v898 = vsel %vm617, %v568, 0
      %v901 = vsel %vm617, %v571, 0
      %v904 = vsel %vm617, %v574, 0
      %v907 = vsel %vm617, %v577, 0
      %v910 = vsel %vm617, %v580, 0
      %912 = vmatprep.subr.mxu0 0.0
      %913 = vmatpush1.msra.mxu0 %v581
      %914 = vmatprep.subr.mxu0 0.0
      %915 = vmatpush1.msra.mxu0 %v582
      %916 = vmatprep.subr.mxu0 0.0
      %917 = vmatpush1.msra.mxu0 %v583
      %918 = vmatprep.subr.mxu0 0.0
      %919 = vmatpush1.msra.mxu0 %v584
      %920 = vmatprep.subr.mxu0 0.0
      %921 = vmatpush1.msra.mxu0 %v585
      %922 = vmatprep.subr.mxu0 0.0
      %923 = vmatpush1.msra.mxu0 %v586
      %924 = vmatprep.subr.mxu0 0.0
      %925 = vmatpush1.msra.mxu0 %v587
      %926 = vmatprep.subr.mxu0 0.0
      %927 = vmatpush1.msra.mxu0 %v588
      %928 = vmatprep.subr.mxu0 0.0
      %929 = vmatpush1.msra.mxu0 %v589
      %930 = vmatprep.subr.mxu0 0.0
      %931 = vmatpush1.msra.mxu0 %v590
      %932 = vmatprep.subr.mxu0 0.0
      %933 = vmatpush1.msra.mxu0 %v591
      %934 = vmatprep.subr.mxu0 0.0
      %935 = vmatpush1.msra.mxu0 %v592
      %936 = vmatprep.subr.mxu0 0.0
      %937 = vmatpush1.msra.mxu0 %v593
      %938 = vmatprep.subr.mxu0 0.0
      %939 = vmatpush1.msra.mxu0 %v594
      %940 = vmatprep.subr.mxu0 0.0
      %941 = vmatpush1.msra.mxu0 %v595
      %942 = vmatprep.subr.mxu0 0.0
      %943 = vmatpush1.msra.mxu0 %v596
      %944 = vmatprep.subr.mxu0 0.0
      %945 = vmatpush1.msra.mxu0 %v597
      %946 = vmatprep.subr.mxu0 0.0
      %947 = vmatpush1.msra.mxu0 %v598
      %948 = vmatprep.subr.mxu0 0.0
      %949 = vmatpush1.msra.mxu0 %v599
      %950 = vmatprep.subr.mxu0 0.0
      %951 = vmatpush1.msra.mxu0 %v600
      %952 = vmatprep.subr.mxu0 0.0
      %953 = vmatpush1.msra.mxu0 %v601
      %954 = vmatprep.subr.mxu0 0.0
      %955 = vmatpush1.msra.mxu0 %v602
      %956 = vmatprep.subr.mxu0 0.0
      %957 = vmatpush1.msra.mxu0 %v603
      %958 = vmatprep.subr.mxu0 0.0
      %959 = vmatpush1.msra.mxu0 %v604
      %960 = vmatprep.subr.mxu0 0.0
      %961 = vmatpush1.msra.mxu0 %v605
      %962 = vmatprep.subr.mxu0 0.0
      %963 = vmatpush1.msra.mxu0 %v606
      %964 = vmatprep.subr.mxu0 0.0
      %965 = vmatpush1.msra.mxu0 %v607
      %966 = vmatprep.subr.mxu0 0.0
      %967 = vmatpush1.msra.mxu0 %v608
      %968 = vmatprep.subr.mxu0 0.0
      %969 = vmatpush1.msra.mxu0 %v609
      %970 = vmatprep.subr.mxu0 0.0
      %971 = vmatpush1.msra.mxu0 %v610
      %972 = vmatprep.subr.mxu0 0.0
      %973 = vmatpush1.msra.mxu0 %v611
      %974 = vmatprep.subr.mxu0 0.0
      %975 = vmatpush1.msra.mxu0 %v612
      %976 = vmatprep.mubr.f32.mxu0 %v288
      %977 = vmatmul.mubr.f32.gmra.mrb[0].mxu0 %v287
      %v978 = vpop.f32.mrb[0].mxu0
      %v979 = vadd.f32 0.0, %v978
      %v980 = vpop.f32.mrb[0].mxu0
      %981 = vmatprep.mubr.f32.mxu0 %v291
      %982 = vmatmul.mubr.f32.gmra.mrb[0].mxu0 %v290
      %v983 = vpop.f32.mrb[0].mxu0
      %v984 = vadd.f32 0.0, %v983
      %v985 = vpop.f32.mrb[0].mxu0
      %986 = vmatprep.mubr.f32.mxu0 %v294
      %987 = vmatmul.mubr.f32.gmra.mrb[0].mxu0 %v293
      %v988 = vpop.f32.mrb[0].mxu0
      %v989 = vadd.f32 0.0, %v988
      %v990 = vpop.f32.mrb[0].mxu0
      %991 = vmatprep.mubr.f32.mxu0 %v297
      %992 = vmatmul.mubr.f32.gmra.mrb[0].mxu0 %v296
      %v993 = vpop.f32.mrb[0].mxu0
      %v994 = vadd.f32 0.0, %v993
      %v995 = vpop.f32.mrb[0].mxu0
      %996 = vmatprep.mubr.f32.mxu0 %v300
      %997 = vmatmul.mubr.f32.gmra.mrb[0].mxu0 %v299
      %v998 = vpop.f32.mrb[0].mxu0
      %v999 = vadd.f32 0.0, %v998
      %v1000 = vpop.f32.mrb[0].mxu0
      %1001 = vmatprep.mubr.f32.mxu0 %v303
      %1002 = vmatmul.mubr.f32.gmra.mrb[0].mxu0 %v302
      %v1003 = vpop.f32.mrb[0].mxu0
      %v1004 = vadd.f32 0.0, %v1003
      %v1005 = vpop.f32.mrb[0].mxu0
      %1006 = vmatprep.mubr.f32.mxu0 %v306
      %1007 = vmatmul.mubr.f32.gmra.mrb[0].mxu0 %v305
      %v1008 = vpop.f32.mrb[0].mxu0
      %v1009 = vadd.f32 0.0, %v1008
      %v1010 = vpop.f32.mrb[0].mxu0
      %1011 = vmatprep.mubr.f32.mxu0 %v309
      %1012 = vmatmul.mubr.f32.gmra.mrb[0].mxu0 %v308
      %v1013 = vpop.f32.mrb[0].mxu0
      %v1014 = vadd.f32 0.0, %v1013
      %v1015 = vpop.f32.mrb[0].mxu0
      %1016 = vmatprep.mubr.f32.mxu0 %v312
      %1017 = vmatmul.mubr.f32.gmra.mrb[0].mxu0 %v311
      %v1018 = vpop.f32.mrb[0].mxu0
      %v1019 = vadd.f32 0.0, %v1018
      %v1020 = vpop.f32.mrb[0].mxu0
      %1021 = vmatprep.mubr.f32.mxu0 %v315
      %1022 = vmatmul.mubr.f32.gmra.mrb[0].mxu0 %v314
      %v1023 = vpop.f32.mrb[0].mxu0
      %v1024 = vadd.f32 0.0, %v1023
      %v1025 = vpop.f32.mrb[0].mxu0
      %1026 = vmatprep.mubr.f32.mxu0 %v318
      %1027 = vmatmul.mubr.f32.gmra.mrb[0].mxu0 %v317
      %v1028 = vpop.f32.mrb[0].mxu0
      %v1029 = vadd.f32 0.0, %v1028
      %v1030 = vpop.f32.mrb[0].mxu0
      %1031 = vmatprep.mubr.f32.mxu0 %v321
      %1032 = vmatmul.mubr.f32.gmra.mrb[0].mxu0 %v320
      %v1033 = vpop.f32.mrb[0].mxu0
      %v1034 = vadd.f32 0.0, %v1033
      %v1035 = vpop.f32.mrb[0].mxu0
      %1036 = vmatprep.mubr.f32.mxu0 %v324
      %1037 = vmatmul.mubr.f32.gmra.mrb[0].mxu0 %v323
      %v1038 = vpop.f32.mrb[0].mxu0
      %v1039 = vadd.f32 0.0, %v1038
      %v1040 = vpop.f32.mrb[0].mxu0
      %1041 = vmatprep.mubr.f32.mxu0 %v327
      %1042 = vmatmul.mubr.f32.gmra.mrb[0].mxu0 %v326
      %v1043 = vpop.f32.mrb[0].mxu0
      %v1044 = vadd.f32 0.0, %v1043
      %v1045 = vpop.f32.mrb[0].mxu0
      %1046 = vmatprep.mubr.f32.mxu0 %v330
      %1047 = vmatmul.mubr.f32.gmra.mrb[0].mxu0 %v329
      %v1048 = vpop.f32.mrb[0].mxu0
      %v1049 = vadd.f32 0.0, %v1048
      %v1050 = vpop.f32.mrb[0].mxu0
      %1051 = vmatprep.mubr.f32.mxu0 %v333
      %1052 = vmatmul.mubr.f32.gmra.mrb[0].mxu0 %v332
      %v1053 = vpop.f32.mrb[0].mxu0
      %v1054 = vadd.f32 0.0, %v1053
      %v1055 = vpop.f32.mrb[0].mxu0
      %1056 = vmatprep.mubr.f32.mxu0 %v336
      %1057 = vmatmul.mubr.f32.gmra.mrb[0].mxu0 %v335
      %v1058 = vpop.f32.mrb[0].mxu0
      %v1059 = vadd.f32 0.0, %v1058
      %v1060 = vpop.f32.mrb[0].mxu0
      %1061 = vmatprep.mubr.f32.mxu0 %v339
      %1062 = vmatmul.mubr.f32.gmra.mrb[0].mxu0 %v338
      %v1063 = vpop.f32.mrb[0].mxu0
      %v1064 = vadd.f32 0.0, %v1063
      %v1065 = vpop.f32.mrb[0].mxu0
      %1066 = vmatprep.mubr.f32.mxu0 %v342
      %1067 = vmatmul.mubr.f32.gmra.mrb[0].mxu0 %v341
      %v1068 = vpop.f32.mrb[0].mxu0
      %v1069 = vadd.f32 0.0, %v1068
      %v1070 = vpop.f32.mrb[0].mxu0
      %1071 = vmatprep.mubr.f32.mxu0 %v345
      %1072 = vmatmul.mubr.f32.gmra.mrb[0].mxu0 %v344
      %v1073 = vpop.f32.mrb[0].mxu0
      %v1074 = vadd.f32 0.0, %v1073
      %v1075 = vpop.f32.mrb[0].mxu0
      %1076 = vmatprep.mubr.f32.mxu0 %v348
      %1077 = vmatmul.mubr.f32.gmra.mrb[0].mxu0 %v347
      %v1078 = vpop.f32.mrb[0].mxu0
      %v1079 = vadd.f32 0.0, %v1078
      %v1080 = vpop.f32.mrb[0].mxu0
      %1081 = vmatprep.mubr.f32.mxu0 %v351
      %1082 = vmatmul.mubr.f32.gmra.mrb[0].mxu0 %v350
      %v1083 = vpop.f32.mrb[0].mxu0
      %v1084 = vadd.f32 0.0, %v1083
      %v1085 = vpop.f32.mrb[0].mxu0
      %1086 = vmatprep.mubr.f32.mxu0 %v354
      %1087 = vmatmul.mubr.f32.gmra.mrb[0].mxu0 %v353
      %v1088 = vpop.f32.mrb[0].mxu0
      %v1089 = vadd.f32 0.0, %v1088
      %v1090 = vpop.f32.mrb[0].mxu0
      %1091 = vmatprep.mubr.f32.mxu0 %v357
      %1092 = vmatmul.mubr.f32.gmra.mrb[0].mxu0 %v356
      %v1093 = vpop.f32.mrb[0].mxu0
      %v1094 = vadd.f32 0.0, %v1093
      %v1095 = vpop.f32.mrb[0].mxu0
      %1096 = vmatprep.mubr.f32.mxu0 %v360
      %1097 = vmatmul.mubr.f32.gmra.mrb[0].mxu0 %v359
      %v1098 = vpop.f32.mrb[0].mxu0
      %v1099 = vadd.f32 0.0, %v1098
      %v1100 = vpop.f32.mrb[0].mxu0
      %1101 = vmatprep.mubr.f32.mxu0 %v363
      %1102 = vmatmul.mubr.f32.gmra.mrb[0].mxu0 %v362
      %v1103 = vpop.f32.mrb[0].mxu0
      %v1104 = vadd.f32 0.0, %v1103
      %v1105 = vpop.f32.mrb[0].mxu0
      %1106 = vmatprep.mubr.f32.mxu0 %v366
      %1107 = vmatmul.mubr.f32.gmra.mrb[0].mxu0 %v365
      %v1108 = vpop.f32.mrb[0].mxu0
      %v1109 = vadd.f32 0.0, %v1108
      %v1110 = vpop.f32.mrb[0].mxu0
      %1111 = vmatprep.mubr.f32.mxu0 %v369
      %1112 = vmatmul.mubr.f32.gmra.mrb[0].mxu0 %v368
      %v1113 = vpop.f32.mrb[0].mxu0
      %v1114 = vadd.f32 0.0, %v1113
      %v1115 = vpop.f32.mrb[0].mxu0
      %1116 = vmatprep.mubr.f32.mxu0 %v372
      %1117 = vmatmul.mubr.f32.gmra.mrb[0].mxu0 %v371
      %v1118 = vpop.f32.mrb[0].mxu0
      %v1119 = vadd.f32 0.0, %v1118
      %v1120 = vpop.f32.mrb[0].mxu0
      %1121 = vmatprep.mubr.f32.mxu0 %v375
      %1122 = vmatmul.mubr.f32.gmra.mrb[0].mxu0 %v374
      %v1123 = vpop.f32.mrb[0].mxu0
      %v1124 = vadd.f32 0.0, %v1123
      %v1125 = vpop.f32.mrb[0].mxu0
      %1126 = vmatprep.mubr.f32.mxu0 %v378
      %1127 = vmatmul.mubr.f32.gmra.mrb[0].mxu0 %v377
      %v1128 = vpop.f32.mrb[0].mxu0
      %v1129 = vadd.f32 0.0, %v1128
      %v1130 = vpop.f32.mrb[0].mxu0
      %1131 = vmatprep.mubr.f32.mxu0 %v381
      %1132 = vmatmul.mubr.f32.gmra.mrb[0].mxu0 %v380
      %v1133 = vpop.f32.mrb[0].mxu0
      %v1134 = vadd.f32 0.0, %v1133
      %v1135 = vpop.f32.mrb[0].mxu0
      %1136 = vmatprep.mubr.f32.mxu0 %v384
      %1137 = vmatmul.mubr.f32.gmra.mrb[0].mxu0 %v383
      %v1138 = vpop.f32.mrb[0].mxu0
      %v1139 = vadd.f32 0.0, %v1138
      %v1140 = vpop.f32.mrb[0].mxu0
      %1141 = vmatprep.mubr.f32.mxu0 %v387
      %1142 = vmatmul.mubr.f32.gmra.mrb[0].mxu0 %v386
      %v1143 = vpop.f32.mrb[0].mxu0
      %v1144 = vadd.f32 0.0, %v1143
      %v1145 = vpop.f32.mrb[0].mxu0
      %1146 = vmatprep.mubr.f32.mxu0 %v390
      %1147 = vmatmul.mubr.f32.gmra.mrb[0].mxu0 %v389
      %v1148 = vpop.f32.mrb[0].mxu0
      %v1149 = vadd.f32 0.0, %v1148
      %v1150 = vpop.f32.mrb[0].mxu0
      %1151 = vmatprep.mubr.f32.mxu0 %v393
      %1152 = vmatmul.mubr.f32.gmra.mrb[0].mxu0 %v392
      %v1153 = vpop.f32.mrb[0].mxu0
      %v1154 = vadd.f32 0.0, %v1153
      %v1155 = vpop.f32.mrb[0].mxu0
      %1156 = vmatprep.mubr.f32.mxu0 %v396
      %1157 = vmatmul.mubr.f32.gmra.mrb[0].mxu0 %v395
      %v1158 = vpop.f32.mrb[0].mxu0
      %v1159 = vadd.f32 0.0, %v1158
      %v1160 = vpop.f32.mrb[0].mxu0
      %1161 = vmatprep.mubr.f32.mxu0 %v399
      %1162 = vmatmul.mubr.f32.gmra.mrb[0].mxu0 %v398
      %v1163 = vpop.f32.mrb[0].mxu0
      %v1164 = vadd.f32 0.0, %v1163
      %v1165 = vpop.f32.mrb[0].mxu0
      %1166 = vmatprep.mubr.f32.mxu0 %v402
      %1167 = vmatmul.mubr.f32.gmra.mrb[0].mxu0 %v401
      %v1168 = vpop.f32.mrb[0].mxu0
      %v1169 = vadd.f32 0.0, %v1168
      %v1170 = vpop.f32.mrb[0].mxu0
      %1171 = vmatprep.mubr.f32.mxu0 %v405
      %1172 = vmatmul.mubr.f32.gmra.mrb[0].mxu0 %v404
      %v1173 = vpop.f32.mrb[0].mxu0
      %v1174 = vadd.f32 0.0, %v1173
      %v1175 = vpop.f32.mrb[0].mxu0
      %1176 = vmatprep.mubr.f32.mxu0 %v408
      %1177 = vmatmul.mubr.f32.gmra.mrb[0].mxu0 %v407
      %v1178 = vpop.f32.mrb[0].mxu0
      %v1179 = vadd.f32 0.0, %v1178
      %v1180 = vpop.f32.mrb[0].mxu0
      %1181 = vmatprep.mubr.f32.mxu0 %v411
      %1182 = vmatmul.mubr.f32.gmra.mrb[0].mxu0 %v410
      %v1183 = vpop.f32.mrb[0].mxu0
      %v1184 = vadd.f32 0.0, %v1183
      %v1185 = vpop.f32.mrb[0].mxu0
      %1186 = vmatprep.mubr.f32.mxu0 %v414
      %1187 = vmatmul.mubr.f32.gmra.mrb[0].mxu0 %v413
      %v1188 = vpop.f32.mrb[0].mxu0
      %v1189 = vadd.f32 0.0, %v1188
      %v1190 = vpop.f32.mrb[0].mxu0
      %1191 = vmatprep.mubr.f32.mxu0 %v417
      %1192 = vmatmul.mubr.f32.gmra.mrb[0].mxu0 %v416
      %v1193 = vpop.f32.mrb[0].mxu0
      %v1194 = vadd.f32 0.0, %v1193
      %v1195 = vpop.f32.mrb[0].mxu0
      %1196 = vmatprep.mubr.f32.mxu0 %v420
      %1197 = vmatmul.mubr.f32.gmra.mrb[0].mxu0 %v419
      %v1198 = vpop.f32.mrb[0].mxu0
      %v1199 = vadd.f32 0.0, %v1198
      %v1200 = vpop.f32.mrb[0].mxu0
      %1201 = vmatprep.mubr.f32.mxu0 %v423
      %1202 = vmatmul.mubr.f32.gmra.mrb[0].mxu0 %v422
      %v1203 = vpop.f32.mrb[0].mxu0
      %v1204 = vadd.f32 0.0, %v1203
      %v1205 = vpop.f32.mrb[0].mxu0
      %1206 = vmatprep.mubr.f32.mxu0 %v426
      %1207 = vmatmul.mubr.f32.gmra.mrb[0].mxu0 %v425
      %v1208 = vpop.f32.mrb[0].mxu0
      %v1209 = vadd.f32 0.0, %v1208
      %v1210 = vpop.f32.mrb[0].mxu0
      %1211 = vmatprep.mubr.f32.mxu0 %v429
      %1212 = vmatmul.mubr.f32.gmra.mrb[0].mxu0 %v428
      %v1213 = vpop.f32.mrb[0].mxu0
      %v1214 = vadd.f32 0.0, %v1213
      %v1215 = vpop.f32.mrb[0].mxu0
      %1216 = vmatprep.mubr.f32.mxu0 %v432
      %1217 = vmatmul.mubr.f32.gmra.mrb[0].mxu0 %v431
      %v1218 = vpop.f32.mrb[0].mxu0
      %v1219 = vadd.f32 0.0, %v1218
      %v1220 = vpop.f32.mrb[0].mxu0
      %1221 = vmatprep.mubr.f32.mxu0 %v435
      %1222 = vmatmul.mubr.f32.gmra.mrb[0].mxu0 %v434
      %v1223 = vpop.f32.mrb[0].mxu0
      %v1224 = vadd.f32 0.0, %v1223
      %v1225 = vpop.f32.mrb[0].mxu0
      %1226 = vmatprep.mubr.f32.mxu0 %v438
      %1227 = vmatmul.mubr.f32.gmra.mrb[0].mxu0 %v437
      %v1228 = vpop.f32.mrb[0].mxu0
      %v1229 = vadd.f32 0.0, %v1228
      %v1230 = vpop.f32.mrb[0].mxu0
      %1231 = vmatprep.mubr.f32.mxu0 %v441
      %1232 = vmatmul.mubr.f32.gmra.mrb[0].mxu0 %v440
      %v1233 = vpop.f32.mrb[0].mxu0
      %v1234 = vadd.f32 0.0, %v1233
      %v1235 = vpop.f32.mrb[0].mxu0
      %1236 = vmatprep.mubr.f32.mxu0 %v444
      %1237 = vmatmul.mubr.f32.gmra.mrb[0].mxu0 %v443
      %v1238 = vpop.f32.mrb[0].mxu0
      %v1239 = vadd.f32 0.0, %v1238
      %v1240 = vpop.f32.mrb[0].mxu0
      %1241 = vmatprep.mubr.f32.mxu0 %v447
      %1242 = vmatmul.mubr.f32.gmra.mrb[0].mxu0 %v446
      %v1243 = vpop.f32.mrb[0].mxu0
      %v1244 = vadd.f32 0.0, %v1243
      %v1245 = vpop.f32.mrb[0].mxu0
      %1246 = vmatprep.mubr.f32.mxu0 %v450
      %1247 = vmatmul.mubr.f32.gmra.mrb[0].mxu0 %v449
      %v1248 = vpop.f32.mrb[0].mxu0
      %v1249 = vadd.f32 0.0, %v1248
      %v1250 = vpop.f32.mrb[0].mxu0
      %1251 = vmatprep.mubr.f32.mxu0 %v453
      %1252 = vmatmul.mubr.f32.gmra.mrb[0].mxu0 %v452
      %v1253 = vpop.f32.mrb[0].mxu0
      %v1254 = vadd.f32 0.0, %v1253
      %v1255 = vpop.f32.mrb[0].mxu0
      %1256 = vmatprep.mubr.f32.mxu0 %v456
      %1257 = vmatmul.mubr.f32.gmra.mrb[0].mxu0 %v455
      %v1258 = vpop.f32.mrb[0].mxu0
      %v1259 = vadd.f32 0.0, %v1258
      %v1260 = vpop.f32.mrb[0].mxu0
      %1261 = vmatprep.mubr.f32.mxu0 %v459
      %1262 = vmatmul.mubr.f32.gmra.mrb[0].mxu0 %v458
      %v1263 = vpop.f32.mrb[0].mxu0
      %v1264 = vadd.f32 0.0, %v1263
      %v1265 = vpop.f32.mrb[0].mxu0
      %1266 = vmatprep.mubr.f32.mxu0 %v462
      %1267 = vmatmul.mubr.f32.gmra.mrb[0].mxu0 %v461
      %v1268 = vpop.f32.mrb[0].mxu0
      %v1269 = vadd.f32 0.0, %v1268
      %v1270 = vpop.f32.mrb[0].mxu0
      %1271 = vmatprep.mubr.f32.mxu0 %v465
      %1272 = vmatmul.mubr.f32.gmra.mrb[0].mxu0 %v464
      %v1273 = vpop.f32.mrb[0].mxu0
      %v1274 = vadd.f32 0.0, %v1273
      %v1275 = vpop.f32.mrb[0].mxu0
      %1276 = vmatprep.mubr.f32.mxu0 %v468
      %1277 = vmatmul.mubr.f32.gmra.mrb[0].mxu0 %v467
      %v1278 = vpop.f32.mrb[0].mxu0
      %v1279 = vadd.f32 0.0, %v1278
      %v1280 = vpop.f32.mrb[0].mxu0
      %1281 = vmatprep.mubr.f32.mxu0 %v471
      %1282 = vmatmul.mubr.f32.gmra.mrb[0].mxu0 %v470
      %v1283 = vpop.f32.mrb[0].mxu0
      %v1284 = vadd.f32 0.0, %v1283
      %v1285 = vpop.f32.mrb[0].mxu0
      %1286 = vmatprep.mubr.f32.mxu0 %v474
      %1287 = vmatmul.mubr.f32.gmra.mrb[0].mxu0 %v473
      %v1288 = vpop.f32.mrb[0].mxu0
      %v1289 = vadd.f32 0.0, %v1288
      %v1290 = vpop.f32.mrb[0].mxu0
      %1291 = vmatprep.mubr.f32.mxu0 %v477
      %1292 = vmatmul.mubr.f32.gmra.mrb[0].mxu0 %v476
      %v1293 = vpop.f32.mrb[0].mxu0
      %v1294 = vadd.f32 0.0, %v1293
      %v1295 = vpop.f32.mrb[0].mxu0
      %1296 = vmatprep.mubr.f32.mxu0 %v480
      %1297 = vmatmul.mubr.f32.gmra.mrb[0].mxu0 %v479
      %v1298 = vpop.f32.mrb[0].mxu0
      %v1299 = vadd.f32 0.0, %v1298
      %v1300 = vpop.f32.mrb[0].mxu0
      %1301 = vmatprep.mubr.f32.mxu0 %v483
      %1302 = vmatmul.mubr.f32.gmra.mrb[0].mxu0 %v482
      %v1303 = vpop.f32.mrb[0].mxu0
      %v1304 = vadd.f32 0.0, %v1303
      %v1305 = vpop.f32.mrb[0].mxu0
      %1306 = vmatprep.mubr.f32.mxu0 %v486
      %1307 = vmatmul.mubr.f32.gmra.mrb[0].mxu0 %v485
      %v1308 = vpop.f32.mrb[0].mxu0
      %v1309 = vadd.f32 0.0, %v1308
      %v1310 = vpop.f32.mrb[0].mxu0
      %1311 = vmatprep.mubr.f32.mxu0 %v489
      %1312 = vmatmul.mubr.f32.gmra.mrb[0].mxu0 %v488
      %v1313 = vpop.f32.mrb[0].mxu0
      %v1314 = vadd.f32 0.0, %v1313
      %v1315 = vpop.f32.mrb[0].mxu0
      %1316 = vmatprep.mubr.f32.mxu0 %v492
      %1317 = vmatmul.mubr.f32.gmra.mrb[0].mxu0 %v491
      %v1318 = vpop.f32.mrb[0].mxu0
      %v1319 = vadd.f32 0.0, %v1318
      %v1320 = vpop.f32.mrb[0].mxu0
      %1321 = vmatprep.mubr.f32.mxu0 %v495
      %1322 = vmatmul.mubr.f32.gmra.mrb[0].mxu0 %v494
      %v1323 = vpop.f32.mrb[0].mxu0
      %v1324 = vadd.f32 0.0, %v1323
      %v1325 = vpop.f32.mrb[0].mxu0
      %1326 = vmatprep.mubr.f32.mxu0 %v498
      %1327 = vmatmul.mubr.f32.gmra.mrb[0].mxu0 %v497
      %v1328 = vpop.f32.mrb[0].mxu0
      %v1329 = vadd.f32 0.0, %v1328
      %v1330 = vpop.f32.mrb[0].mxu0
      %1331 = vmatprep.mubr.f32.mxu0 %v501
      %1332 = vmatmul.mubr.f32.gmra.mrb[0].mxu0 %v500
      %v1333 = vpop.f32.mrb[0].mxu0
      %v1334 = vadd.f32 0.0, %v1333
      %v1335 = vpop.f32.mrb[0].mxu0
      %1336 = vmatprep.mubr.f32.mxu0 %v504
      %1337 = vmatmul.mubr.f32.gmra.mrb[0].mxu0 %v503
      %v1338 = vpop.f32.mrb[0].mxu0
      %v1339 = vadd.f32 0.0, %v1338
      %v1340 = vpop.f32.mrb[0].mxu0
      %1341 = vmatprep.mubr.f32.mxu0 %v507
      %1342 = vmatmul.mubr.f32.gmra.mrb[0].mxu0 %v506
      %v1343 = vpop.f32.mrb[0].mxu0
      %v1344 = vadd.f32 0.0, %v1343
      %v1345 = vpop.f32.mrb[0].mxu0
      %1346 = vmatprep.mubr.f32.mxu0 %v510
      %1347 = vmatmul.mubr.f32.gmra.mrb[0].mxu0 %v509
      %v1348 = vpop.f32.mrb[0].mxu0
      %v1349 = vadd.f32 0.0, %v1348
      %v1350 = vpop.f32.mrb[0].mxu0
      %1351 = vmatprep.mubr.f32.mxu0 %v513
      %1352 = vmatmul.mubr.f32.gmra.mrb[0].mxu0 %v512
      %v1353 = vpop.f32.mrb[0].mxu0
      %v1354 = vadd.f32 0.0, %v1353
      %v1355 = vpop.f32.mrb[0].mxu0
      %1356 = vmatprep.mubr.f32.mxu0 %v516
      %1357 = vmatmul.mubr.f32.gmra.mrb[0].mxu0 %v515
      %v1358 = vpop.f32.mrb[0].mxu0
      %v1359 = vadd.f32 0.0, %v1358
      %v1360 = vpop.f32.mrb[0].mxu0
      %1361 = vmatprep.mubr.f32.mxu0 %v519
      %1362 = vmatmul.mubr.f32.gmra.mrb[0].mxu0 %v518
      %v1363 = vpop.f32.mrb[0].mxu0
      %v1364 = vadd.f32 0.0, %v1363
      %v1365 = vpop.f32.mrb[0].mxu0
      %1366 = vmatprep.mubr.f32.mxu0 %v522
      %1367 = vmatmul.mubr.f32.gmra.mrb[0].mxu0 %v521
      %v1368 = vpop.f32.mrb[0].mxu0
      %v1369 = vadd.f32 0.0, %v1368
      %v1370 = vpop.f32.mrb[0].mxu0
      %1371 = vmatprep.mubr.f32.mxu0 %v525
      %1372 = vmatmul.mubr.f32.gmra.mrb[0].mxu0 %v524
      %v1373 = vpop.f32.mrb[0].mxu0
      %v1374 = vadd.f32 0.0, %v1373
      %v1375 = vpop.f32.mrb[0].mxu0
      %1376 = vmatprep.mubr.f32.mxu0 %v528
      %1377 = vmatmul.mubr.f32.gmra.mrb[0].mxu0 %v527
      %v1378 = vpop.f32.mrb[0].mxu0
      %v1379 = vadd.f32 0.0, %v1378
      %v1380 = vpop.f32.mrb[0].mxu0
      %1381 = vmatprep.mubr.f32.mxu0 %v531
      %1382 = vmatmul.mubr.f32.gmra.mrb[0].mxu0 %v530
      %v1383 = vpop.f32.mrb[0].mxu0
      %v1384 = vadd.f32 0.0, %v1383
      %v1385 = vpop.f32.mrb[0].mxu0
      %1386 = vmatprep.mubr.f32.mxu0 %v534
      %1387 = vmatmul.mubr.f32.gmra.mrb[0].mxu0 %v533
      %v1388 = vpop.f32.mrb[0].mxu0
      %v1389 = vadd.f32 0.0, %v1388
      %v1390 = vpop.f32.mrb[0].mxu0
      %1391 = vmatprep.mubr.f32.mxu0 %v537
      %1392 = vmatmul.mubr.f32.gmra.mrb[0].mxu0 %v536
      %v1393 = vpop.f32.mrb[0].mxu0
      %v1394 = vadd.f32 0.0, %v1393
      %v1395 = vpop.f32.mrb[0].mxu0
      %1396 = vmatprep.mubr.f32.mxu0 %v540
      %1397 = vmatmul.mubr.f32.gmra.mrb[0].mxu0 %v539
      %v1398 = vpop.f32.mrb[0].mxu0
      %v1399 = vadd.f32 0.0, %v1398
      %v1400 = vpop.f32.mrb[0].mxu0
      %1401 = vmatprep.mubr.f32.mxu0 %v543
      %1402 = vmatmul.mubr.f32.gmra.mrb[0].mxu0 %v542
      %v1403 = vpop.f32.mrb[0].mxu0
      %v1404 = vadd.f32 0.0, %v1403
      %v1405 = vpop.f32.mrb[0].mxu0
      %1406 = vmatprep.mubr.f32.mxu0 %v546
      %1407 = vmatmul.mubr.f32.gmra.mrb[0].mxu0 %v545
      %v1408 = vpop.f32.mrb[0].mxu0
      %v1409 = vadd.f32 0.0, %v1408
      %v1410 = vpop.f32.mrb[0].mxu0
      %1411 = vmatprep.mubr.f32.mxu0 %v549
      %1412 = vmatmul.mubr.f32.gmra.mrb[0].mxu0 %v548
      %v1413 = vpop.f32.mrb[0].mxu0
      %v1414 = vadd.f32 0.0, %v1413
      %v1415 = vpop.f32.mrb[0].mxu0
      %1416 = vmatprep.mubr.f32.mxu0 %v552
      %1417 = vmatmul.mubr.f32.gmra.mrb[0].mxu0 %v551
      %v1418 = vpop.f32.mrb[0].mxu0
      %v1419 = vadd.f32 0.0, %v1418
      %v1420 = vpop.f32.mrb[0].mxu0
      %1421 = vmatprep.mubr.f32.mxu0 %v555
      %1422 = vmatmul.mubr.f32.gmra.mrb[0].mxu0 %v554
      %v1423 = vpop.f32.mrb[0].mxu0
      %v1424 = vadd.f32 0.0, %v1423
      %v1425 = vpop.f32.mrb[0].mxu0
      %1426 = vmatprep.mubr.f32.mxu0 %v558
      %1427 = vmatmul.mubr.f32.gmra.mrb[0].mxu0 %v557
      %v1428 = vpop.f32.mrb[0].mxu0
      %v1429 = vadd.f32 0.0, %v1428
      %v1430 = vpop.f32.mrb[0].mxu0
      %1431 = vmatprep.mubr.f32.mxu0 %v561
      %1432 = vmatmul.mubr.f32.gmra.mrb[0].mxu0 %v560
      %v1433 = vpop.f32.mrb[0].mxu0
      %v1434 = vadd.f32 0.0, %v1433
      %v1435 = vpop.f32.mrb[0].mxu0
      %1436 = vmatprep.mubr.f32.mxu0 %v564
      %1437 = vmatmul.mubr.f32.gmra.mrb[0].mxu0 %v563
      %v1438 = vpop.f32.mrb[0].mxu0
      %v1439 = vadd.f32 0.0, %v1438
      %v1440 = vpop.f32.mrb[0].mxu0
      %1441 = vmatprep.mubr.f32.mxu0 %v567
      %1442 = vmatmul.mubr.f32.gmra.mrb[0].mxu0 %v566
      %v1443 = vpop.f32.mrb[0].mxu0
      %v1444 = vadd.f32 0.0, %v1443
      %v1445 = vpop.f32.mrb[0].mxu0
      %1446 = vmatprep.mubr.f32.mxu0 %v570
      %1447 = vmatmul.mubr.f32.gmra.mrb[0].mxu0 %v569
      %v1448 = vpop.f32.mrb[0].mxu0
      %v1449 = vadd.f32 0.0, %v1448
      %v1450 = vpop.f32.mrb[0].mxu0
      %1451 = vmatprep.mubr.f32.mxu0 %v573
      %1452 = vmatmul.mubr.f32.gmra.mrb[0].mxu0 %v572
      %v1453 = vpop.f32.mrb[0].mxu0
      %v1454 = vadd.f32 0.0, %v1453
      %v1455 = vpop.f32.mrb[0].mxu0
      %1456 = vmatprep.mubr.f32.mxu0 %v576
      %1457 = vmatmul.mubr.f32.gmra.mrb[0].mxu0 %v575
      %v1458 = vpop.f32.mrb[0].mxu0
      %v1459 = vadd.f32 0.0, %v1458
      %v1460 = vpop.f32.mrb[0].mxu0
      %1461 = vmatprep.mubr.f32.mxu0 %v579
      %1462 = vmatmul.mubr.f32.gmra.mrb[0].mxu0 %v578
      %v1463 = vpop.f32.mrb[0].mxu0
      %v1464 = vadd.f32 0.0, %v1463
      %v1465 = vpop.f32.mrb[0].mxu0
      %1466 = vdwg.mxu0
      %1467 = vmatprep.subr.mxu0 0.0
      %1468 = vmatpush1.msra.mxu0 %v613
      %1469 = vmatprep.subr.mxu0 0.0
      %1470 = vmatpush1.msra.mxu0 %v614
      %1471 = vmatprep.subr.mxu0 0.0
      %1472 = vmatpush1.msra.mxu0 %v615
      %1473 = vmatprep.subr.mxu0 0.0
      %1474 = vmatpush1.msra.mxu0 %v616
      %1475 = vmatprep.subr.mxu0 0.0
      %1476 = vmatpush1.msra.mxu0 0.0
      %1477 = vmatprep.subr.mxu0 0.0
      %1478 = vmatpush1.msra.mxu0 0.0
      %1479 = vmatprep.subr.mxu0 0.0
      %1480 = vmatpush1.msra.mxu0 0.0
      %1481 = vmatprep.subr.mxu0 0.0
      %1482 = vmatpush1.msra.mxu0 0.0
      %1483 = vmatprep.subr.mxu0 0.0
      %1484 = vmatpush1.msra.mxu0 0.0
      %1485 = vmatprep.subr.mxu0 0.0
      %1486 = vmatpush1.msra.mxu0 0.0
      %1487 = vmatprep.subr.mxu0 0.0
      %1488 = vmatpush1.msra.mxu0 0.0
      %1489 = vmatprep.subr.mxu0 0.0
      %1490 = vmatpush1.msra.mxu0 0.0
      %1491 = vmatprep.subr.mxu0 0.0
      %1492 = vmatpush1.msra.mxu0 0.0
      %1493 = vmatprep.subr.mxu0 0.0
      %1494 = vmatpush1.msra.mxu0 0.0
      %1495 = vmatprep.subr.mxu0 0.0
      %1496 = vmatpush1.msra.mxu0 0.0
      %1497 = vmatprep.subr.mxu0 0.0
      %1498 = vmatpush1.msra.mxu0 0.0
      %1499 = vmatprep.subr.mxu0 0.0
      %1500 = vmatpush1.msra.mxu0 0.0
      %1501 = vmatprep.subr.mxu0 0.0
      %1502 = vmatpush1.msra.mxu0 0.0
      %1503 = vmatprep.subr.mxu0 0.0
      %1504 = vmatpush1.msra.mxu0 0.0
      %1505 = vmatprep.subr.mxu0 0.0
      %1506 = vmatpush1.msra.mxu0 0.0
      %1507 = vmatprep.subr.mxu0 0.0
      %1508 = vmatpush1.msra.mxu0 0.0
      %1509 = vmatprep.subr.mxu0 0.0
      %1510 = vmatpush1.msra.mxu0 0.0
      %1511 = vmatprep.subr.mxu0 0.0
      %1512 = vmatpush1.msra.mxu0 0.0
      %1513 = vmatprep.subr.mxu0 0.0
      %1514 = vmatpush1.msra.mxu0 0.0
      %1515 = vmatprep.subr.mxu0 0.0
      %1516 = vmatpush1.msra.mxu0 0.0
      %1517 = vmatprep.subr.mxu0 0.0
      %1518 = vmatpush1.msra.mxu0 0.0
      %1519 = vmatprep.subr.mxu0 0.0
      %1520 = vmatpush1.msra.mxu0 0.0
      %1521 = vmatprep.subr.mxu0 0.0
      %1522 = vmatpush1.msra.mxu0 0.0
      %1523 = vmatprep.subr.mxu0 0.0
      %1524 = vmatpush1.msra.mxu0 0.0
      %1525 = vmatprep.subr.mxu0 0.0
      %1526 = vmatpush1.msra.mxu0 0.0
      %1527 = vmatprep.subr.mxu0 0.0
      %1528 = vmatpush1.msra.mxu0 0.0
      %1529 = vmatprep.subr.mxu0 0.0
      %1530 = vmatpush1.msra.mxu0 0.0
      %1531 = vmatprep.mubr.f32.mxu0 0.0
      %1532 = vmatmul.mubr.f32.gmra.mrb[0].mxu0 %v619
      %v1533 = vpop.f32.mrb[0].mxu0
      %v1534 = vadd.f32 %v979, %v1533
      %v1535 = vpop.f32.mrb[0].mxu0
      %1536 = vmatprep.mubr.f32.mxu0 0.0
      %1537 = vmatmul.mubr.f32.gmra.mrb[0].mxu0 %v622
      %v1538 = vpop.f32.mrb[0].mxu0
      %v1539 = vadd.f32 %v984, %v1538
      %v1540 = vpop.f32.mrb[0].mxu0
      %1541 = vmatprep.mubr.f32.mxu0 0.0
      %1542 = vmatmul.mubr.f32.gmra.mrb[0].mxu0 %v625
      %v1543 = vpop.f32.mrb[0].mxu0
      %v1544 = vadd.f32 %v989, %v1543
      %v1545 = vpop.f32.mrb[0].mxu0
      %1546 = vmatprep.mubr.f32.mxu0 0.0
      %1547 = vmatmul.mubr.f32.gmra.mrb[0].mxu0 %v628
      %v1548 = vpop.f32.mrb[0].mxu0
      %v1549 = vadd.f32 %v994, %v1548
      %v1550 = vpop.f32.mrb[0].mxu0
      %1551 = vmatprep.mubr.f32.mxu0 0.0
      %1552 = vmatmul.mubr.f32.gmra.mrb[0].mxu0 %v631
      %v1553 = vpop.f32.mrb[0].mxu0
      %v1554 = vadd.f32 %v999, %v1553
      %v1555 = vpop.f32.mrb[0].mxu0
      %1556 = vmatprep.mubr.f32.mxu0 0.0
      %1557 = vmatmul.mubr.f32.gmra.mrb[0].mxu0 %v634
      %v1558 = vpop.f32.mrb[0].mxu0
      %v1559 = vadd.f32 %v1004, %v1558
      %v1560 = vpop.f32.mrb[0].mxu0
      %1561 = vmatprep.mubr.f32.mxu0 0.0
      %1562 = vmatmul.mubr.f32.gmra.mrb[0].mxu0 %v637
      %v1563 = vpop.f32.mrb[0].mxu0
      %v1564 = vadd.f32 %v1009, %v1563
      %v1565 = vpop.f32.mrb[0].mxu0
      %1566 = vmatprep.mubr.f32.mxu0 0.0
      %1567 = vmatmul.mubr.f32.gmra.mrb[0].mxu0 %v640
      %v1568 = vpop.f32.mrb[0].mxu0
      %v1569 = vadd.f32 %v1014, %v1568
      %v1570 = vpop.f32.mrb[0].mxu0
      %1571 = vmatprep.mubr.f32.mxu0 0.0
      %1572 = vmatmul.mubr.f32.gmra.mrb[0].mxu0 %v643
      %v1573 = vpop.f32.mrb[0].mxu0
      %v1574 = vadd.f32 %v1019, %v1573
      %v1575 = vpop.f32.mrb[0].mxu0
      %1576 = vmatprep.mubr.f32.mxu0 0.0
      %1577 = vmatmul.mubr.f32.gmra.mrb[0].mxu0 %v646
      %v1578 = vpop.f32.mrb[0].mxu0
      %v1579 = vadd.f32 %v1024, %v1578
      %v1580 = vpop.f32.mrb[0].mxu0
      %1581 = vmatprep.mubr.f32.mxu0 0.0
      %1582 = vmatmul.mubr.f32.gmra.mrb[0].mxu0 %v649
      %v1583 = vpop.f32.mrb[0].mxu0
      %v1584 = vadd.f32 %v1029, %v1583
      %v1585 = vpop.f32.mrb[0].mxu0
      %1586 = vmatprep.mubr.f32.mxu0 0.0
      %1587 = vmatmul.mubr.f32.gmra.mrb[0].mxu0 %v652
      %v1588 = vpop.f32.mrb[0].mxu0
      %v1589 = vadd.f32 %v1034, %v1588
      %v1590 = vpop.f32.mrb[0].mxu0
      %1591 = vmatprep.mubr.f32.mxu0 0.0
      %1592 = vmatmul.mubr.f32.gmra.mrb[0].mxu0 %v655
      %v1593 = vpop.f32.mrb[0].mxu0
      %v1594 = vadd.f32 %v1039, %v1593
      %v1595 = vpop.f32.mrb[0].mxu0
      %1596 = vmatprep.mubr.f32.mxu0 0.0
      %1597 = vmatmul.mubr.f32.gmra.mrb[0].mxu0 %v658
      %v1598 = vpop.f32.mrb[0].mxu0
      %v1599 = vadd.f32 %v1044, %v1598
      %v1600 = vpop.f32.mrb[0].mxu0
      %1601 = vmatprep.mubr.f32.mxu0 0.0
      %1602 = vmatmul.mubr.f32.gmra.mrb[0].mxu0 %v661
      %v1603 = vpop.f32.mrb[0].mxu0
      %v1604 = vadd.f32 %v1049, %v1603
      %v1605 = vpop.f32.mrb[0].mxu0
      %1606 = vmatprep.mubr.f32.mxu0 0.0
      %1607 = vmatmul.mubr.f32.gmra.mrb[0].mxu0 %v664
      %v1608 = vpop.f32.mrb[0].mxu0
      %v1609 = vadd.f32 %v1054, %v1608
      %v1610 = vpop.f32.mrb[0].mxu0
      %1611 = vmatprep.mubr.f32.mxu0 0.0
      %1612 = vmatmul.mubr.f32.gmra.mrb[0].mxu0 %v667
      %v1613 = vpop.f32.mrb[0].mxu0
      %v1614 = vadd.f32 %v1059, %v1613
      %v1615 = vpop.f32.mrb[0].mxu0
      %1616 = vmatprep.mubr.f32.mxu0 0.0
      %1617 = vmatmul.mubr.f32.gmra.mrb[0].mxu0 %v670
      %v1618 = vpop.f32.mrb[0].mxu0
      %v1619 = vadd.f32 %v1064, %v1618
      %v1620 = vpop.f32.mrb[0].mxu0
      %1621 = vmatprep.mubr.f32.mxu0 0.0
      %1622 = vmatmul.mubr.f32.gmra.mrb[0].mxu0 %v673
      %v1623 = vpop.f32.mrb[0].mxu0
      %v1624 = vadd.f32 %v1069, %v1623
      %v1625 = vpop.f32.mrb[0].mxu0
      %1626 = vmatprep.mubr.f32.mxu0 0.0
      %1627 = vmatmul.mubr.f32.gmra.mrb[0].mxu0 %v676
      %v1628 = vpop.f32.mrb[0].mxu0
      %v1629 = vadd.f32 %v1074, %v1628
      %v1630 = vpop.f32.mrb[0].mxu0
      %1631 = vmatprep.mubr.f32.mxu0 0.0
      %1632 = vmatmul.mubr.f32.gmra.mrb[0].mxu0 %v679
      %v1633 = vpop.f32.mrb[0].mxu0
      %v1634 = vadd.f32 %v1079, %v1633
      %v1635 = vpop.f32.mrb[0].mxu0
      %1636 = vmatprep.mubr.f32.mxu0 0.0
      %1637 = vmatmul.mubr.f32.gmra.mrb[0].mxu0 %v682
      %v1638 = vpop.f32.mrb[0].mxu0
      %v1639 = vadd.f32 %v1084, %v1638
      %v1640 = vpop.f32.mrb[0].mxu0
      %1641 = vmatprep.mubr.f32.mxu0 0.0
      %1642 = vmatmul.mubr.f32.gmra.mrb[0].mxu0 %v685
      %v1643 = vpop.f32.mrb[0].mxu0
      %v1644 = vadd.f32 %v1089, %v1643
      %v1645 = vpop.f32.mrb[0].mxu0
      %1646 = vmatprep.mubr.f32.mxu0 0.0
      %1647 = vmatmul.mubr.f32.gmra.mrb[0].mxu0 %v688
      %v1648 = vpop.f32.mrb[0].mxu0
      %v1649 = vadd.f32 %v1094, %v1648
      %v1650 = vpop.f32.mrb[0].mxu0
      %1651 = vmatprep.mubr.f32.mxu0 0.0
      %1652 = vmatmul.mubr.f32.gmra.mrb[0].mxu0 %v691
      %v1653 = vpop.f32.mrb[0].mxu0
      %v1654 = vadd.f32 %v1099, %v1653
      %v1655 = vpop.f32.mrb[0].mxu0
      %1656 = vmatprep.mubr.f32.mxu0 0.0
      %1657 = vmatmul.mubr.f32.gmra.mrb[0].mxu0 %v694
      %v1658 = vpop.f32.mrb[0].mxu0
      %v1659 = vadd.f32 %v1104, %v1658
      %v1660 = vpop.f32.mrb[0].mxu0
      %1661 = vmatprep.mubr.f32.mxu0 0.0
      %1662 = vmatmul.mubr.f32.gmra.mrb[0].mxu0 %v697
      %v1663 = vpop.f32.mrb[0].mxu0
      %v1664 = vadd.f32 %v1109, %v1663
      %v1665 = vpop.f32.mrb[0].mxu0
      %1666 = vmatprep.mubr.f32.mxu0 0.0
      %1667 = vmatmul.mubr.f32.gmra.mrb[0].mxu0 %v700
      %v1668 = vpop.f32.mrb[0].mxu0
      %v1669 = vadd.f32 %v1114, %v1668
      %v1670 = vpop.f32.mrb[0].mxu0
      %1671 = vmatprep.mubr.f32.mxu0 0.0
      %1672 = vmatmul.mubr.f32.gmra.mrb[0].mxu0 %v703
      %v1673 = vpop.f32.mrb[0].mxu0
      %v1674 = vadd.f32 %v1119, %v1673
      %v1675 = vpop.f32.mrb[0].mxu0
      %1676 = vmatprep.mubr.f32.mxu0 0.0
      %1677 = vmatmul.mubr.f32.gmra.mrb[0].mxu0 %v706
      %v1678 = vpop.f32.mrb[0].mxu0
      %v1679 = vadd.f32 %v1124, %v1678
      %v1680 = vpop.f32.mrb[0].mxu0
      %1681 = vmatprep.mubr.f32.mxu0 0.0
      %1682 = vmatmul.mubr.f32.gmra.mrb[0].mxu0 %v709
      %v1683 = vpop.f32.mrb[0].mxu0
      %v1684 = vadd.f32 %v1129, %v1683
      %v1685 = vpop.f32.mrb[0].mxu0
      %1686 = vmatprep.mubr.f32.mxu0 0.0
      %1687 = vmatmul.mubr.f32.gmra.mrb[0].mxu0 %v712
      %v1688 = vpop.f32.mrb[0].mxu0
      %v1689 = vadd.f32 %v1134, %v1688
      %v1690 = vpop.f32.mrb[0].mxu0
      %1691 = vmatprep.mubr.f32.mxu0 0.0
      %1692 = vmatmul.mubr.f32.gmra.mrb[0].mxu0 %v715
      %v1693 = vpop.f32.mrb[0].mxu0
      %v1694 = vadd.f32 %v1139, %v1693
      %v1695 = vpop.f32.mrb[0].mxu0
      %1696 = vmatprep.mubr.f32.mxu0 0.0
      %1697 = vmatmul.mubr.f32.gmra.mrb[0].mxu0 %v718
      %v1698 = vpop.f32.mrb[0].mxu0
      %v1699 = vadd.f32 %v1144, %v1698
      %v1700 = vpop.f32.mrb[0].mxu0
      %1701 = vmatprep.mubr.f32.mxu0 0.0
      %1702 = vmatmul.mubr.f32.gmra.mrb[0].mxu0 %v721
      %v1703 = vpop.f32.mrb[0].mxu0
      %v1704 = vadd.f32 %v1149, %v1703
      %v1705 = vpop.f32.mrb[0].mxu0
      %1706 = vmatprep.mubr.f32.mxu0 0.0
      %1707 = vmatmul.mubr.f32.gmra.mrb[0].mxu0 %v724
      %v1708 = vpop.f32.mrb[0].mxu0
      %v1709 = vadd.f32 %v1154, %v1708
      %v1710 = vpop.f32.mrb[0].mxu0
      %1711 = vmatprep.mubr.f32.mxu0 0.0
      %1712 = vmatmul.mubr.f32.gmra.mrb[0].mxu0 %v727
      %v1713 = vpop.f32.mrb[0].mxu0
      %v1714 = vadd.f32 %v1159, %v1713
      %v1715 = vpop.f32.mrb[0].mxu0
      %1716 = vmatprep.mubr.f32.mxu0 0.0
      %1717 = vmatmul.mubr.f32.gmra.mrb[0].mxu0 %v730
      %v1718 = vpop.f32.mrb[0].mxu0
      %v1719 = vadd.f32 %v1164, %v1718
      %v1720 = vpop.f32.mrb[0].mxu0
      %1721 = vmatprep.mubr.f32.mxu0 0.0
      %1722 = vmatmul.mubr.f32.gmra.mrb[0].mxu0 %v733
      %v1723 = vpop.f32.mrb[0].mxu0
      %v1724 = vadd.f32 %v1169, %v1723
      %v1725 = vpop.f32.mrb[0].mxu0
      %1726 = vmatprep.mubr.f32.mxu0 0.0
      %1727 = vmatmul.mubr.f32.gmra.mrb[0].mxu0 %v736
      %v1728 = vpop.f32.mrb[0].mxu0
      %v1729 = vadd.f32 %v1174, %v1728
      %v1730 = vpop.f32.mrb[0].mxu0
      %1731 = vmatprep.mubr.f32.mxu0 0.0
      %1732 = vmatmul.mubr.f32.gmra.mrb[0].mxu0 %v739
      %v1733 = vpop.f32.mrb[0].mxu0
      %v1734 = vadd.f32 %v1179, %v1733
      %v1735 = vpop.f32.mrb[0].mxu0
      %1736 = vmatprep.mubr.f32.mxu0 0.0
      %1737 = vmatmul.mubr.f32.gmra.mrb[0].mxu0 %v742
      %v1738 = vpop.f32.mrb[0].mxu0
      %v1739 = vadd.f32 %v1184, %v1738
      %v1740 = vpop.f32.mrb[0].mxu0
      %1741 = vmatprep.mubr.f32.mxu0 0.0
      %1742 = vmatmul.mubr.f32.gmra.mrb[0].mxu0 %v745
      %v1743 = vpop.f32.mrb[0].mxu0
      %v1744 = vadd.f32 %v1189, %v1743
      %v1745 = vpop.f32.mrb[0].mxu0
      %1746 = vmatprep.mubr.f32.mxu0 0.0
      %1747 = vmatmul.mubr.f32.gmra.mrb[0].mxu0 %v748
      %v1748 = vpop.f32.mrb[0].mxu0
      %v1749 = vadd.f32 %v1194, %v1748
      %v1750 = vpop.f32.mrb[0].mxu0
      %1751 = vmatprep.mubr.f32.mxu0 0.0
      %1752 = vmatmul.mubr.f32.gmra.mrb[0].mxu0 %v751
      %v1753 = vpop.f32.mrb[0].mxu0
      %v1754 = vadd.f32 %v1199, %v1753
      %v1755 = vpop.f32.mrb[0].mxu0
      %1756 = vmatprep.mubr.f32.mxu0 0.0
      %1757 = vmatmul.mubr.f32.gmra.mrb[0].mxu0 %v754
      %v1758 = vpop.f32.mrb[0].mxu0
      %v1759 = vadd.f32 %v1204, %v1758
      %v1760 = vpop.f32.mrb[0].mxu0
      %1761 = vmatprep.mubr.f32.mxu0 0.0
      %1762 = vmatmul.mubr.f32.gmra.mrb[0].mxu0 %v757
      %v1763 = vpop.f32.mrb[0].mxu0
      %v1764 = vadd.f32 %v1209, %v1763
      %v1765 = vpop.f32.mrb[0].mxu0
      %1766 = vmatprep.mubr.f32.mxu0 0.0
      %1767 = vmatmul.mubr.f32.gmra.mrb[0].mxu0 %v760
      %v1768 = vpop.f32.mrb[0].mxu0
      %v1769 = vadd.f32 %v1214, %v1768
      %v1770 = vpop.f32.mrb[0].mxu0
      %1771 = vmatprep.mubr.f32.mxu0 0.0
      %1772 = vmatmul.mubr.f32.gmra.mrb[0].mxu0 %v763
      %v1773 = vpop.f32.mrb[0].mxu0
      %v1774 = vadd.f32 %v1219, %v1773
      %v1775 = vpop.f32.mrb[0].mxu0
      %1776 = vmatprep.mubr.f32.mxu0 0.0
      %1777 = vmatmul.mubr.f32.gmra.mrb[0].mxu0 %v766
      %v1778 = vpop.f32.mrb[0].mxu0
      %v1779 = vadd.f32 %v1224, %v1778
      %v1780 = vpop.f32.mrb[0].mxu0
      %1781 = vmatprep.mubr.f32.mxu0 0.0
      %1782 = vmatmul.mubr.f32.gmra.mrb[0].mxu0 %v769
      %v1783 = vpop.f32.mrb[0].mxu0
      %v1784 = vadd.f32 %v1229, %v1783
      %v1785 = vpop.f32.mrb[0].mxu0
      %1786 = vmatprep.mubr.f32.mxu0 0.0
      %1787 = vmatmul.mubr.f32.gmra.mrb[0].mxu0 %v772
      %v1788 = vpop.f32.mrb[0].mxu0
      %v1789 = vadd.f32 %v1234, %v1788
      %v1790 = vpop.f32.mrb[0].mxu0
      %1791 = vmatprep.mubr.f32.mxu0 0.0
      %1792 = vmatmul.mubr.f32.gmra.mrb[0].mxu0 %v775
      %v1793 = vpop.f32.mrb[0].mxu0
      %v1794 = vadd.f32 %v1239, %v1793
      %v1795 = vpop.f32.mrb[0].mxu0
      %1796 = vmatprep.mubr.f32.mxu0 0.0
      %1797 = vmatmul.mubr.f32.gmra.mrb[0].mxu0 %v778
      %v1798 = vpop.f32.mrb[0].mxu0
      %v1799 = vadd.f32 %v1244, %v1798
      %v1800 = vpop.f32.mrb[0].mxu0
      %1801 = vmatprep.mubr.f32.mxu0 0.0
      %1802 = vmatmul.mubr.f32.gmra.mrb[0].mxu0 %v781
      %v1803 = vpop.f32.mrb[0].mxu0
      %v1804 = vadd.f32 %v1249, %v1803
      %v1805 = vpop.f32.mrb[0].mxu0
      %1806 = vmatprep.mubr.f32.mxu0 0.0
      %1807 = vmatmul.mubr.f32.gmra.mrb[0].mxu0 %v784
      %v1808 = vpop.f32.mrb[0].mxu0
      %v1809 = vadd.f32 %v1254, %v1808
      %v1810 = vpop.f32.mrb[0].mxu0
      %1811 = vmatprep.mubr.f32.mxu0 0.0
      %1812 = vmatmul.mubr.f32.gmra.mrb[0].mxu0 %v787
      %v1813 = vpop.f32.mrb[0].mxu0
      %v1814 = vadd.f32 %v1259, %v1813
      %v1815 = vpop.f32.mrb[0].mxu0
      %1816 = vmatprep.mubr.f32.mxu0 0.0
      %1817 = vmatmul.mubr.f32.gmra.mrb[0].mxu0 %v790
      %v1818 = vpop.f32.mrb[0].mxu0
      %v1819 = vadd.f32 %v1264, %v1818
      %v1820 = vpop.f32.mrb[0].mxu0
      %1821 = vmatprep.mubr.f32.mxu0 0.0
      %1822 = vmatmul.mubr.f32.gmra.mrb[0].mxu0 %v793
      %v1823 = vpop.f32.mrb[0].mxu0
      %v1824 = vadd.f32 %v1269, %v1823
      %v1825 = vpop.f32.mrb[0].mxu0
      %1826 = vmatprep.mubr.f32.mxu0 0.0
      %1827 = vmatmul.mubr.f32.gmra.mrb[0].mxu0 %v796
      %v1828 = vpop.f32.mrb[0].mxu0
      %v1829 = vadd.f32 %v1274, %v1828
      %v1830 = vpop.f32.mrb[0].mxu0
      %1831 = vmatprep.mubr.f32.mxu0 0.0
      %1832 = vmatmul.mubr.f32.gmra.mrb[0].mxu0 %v799
      %v1833 = vpop.f32.mrb[0].mxu0
      %v1834 = vadd.f32 %v1279, %v1833
      %v1835 = vpop.f32.mrb[0].mxu0
      %1836 = vmatprep.mubr.f32.mxu0 0.0
      %1837 = vmatmul.mubr.f32.gmra.mrb[0].mxu0 %v802
      %v1838 = vpop.f32.mrb[0].mxu0
      %v1839 = vadd.f32 %v1284, %v1838
      %v1840 = vpop.f32.mrb[0].mxu0
      %1841 = vmatprep.mubr.f32.mxu0 0.0
      %1842 = vmatmul.mubr.f32.gmra.mrb[0].mxu0 %v805
      %v1843 = vpop.f32.mrb[0].mxu0
      %v1844 = vadd.f32 %v1289, %v1843
      %v1845 = vpop.f32.mrb[0].mxu0
      %1846 = vmatprep.mubr.f32.mxu0 0.0
      %1847 = vmatmul.mubr.f32.gmra.mrb[0].mxu0 %v808
      %v1848 = vpop.f32.mrb[0].mxu0
      %v1849 = vadd.f32 %v1294, %v1848
      %v1850 = vpop.f32.mrb[0].mxu0
      %1851 = vmatprep.mubr.f32.mxu0 0.0
      %1852 = vmatmul.mubr.f32.gmra.mrb[0].mxu0 %v811
      %v1853 = vpop.f32.mrb[0].mxu0
      %v1854 = vadd.f32 %v1299, %v1853
      %v1855 = vpop.f32.mrb[0].mxu0
      %1856 = vmatprep.mubr.f32.mxu0 0.0
      %1857 = vmatmul.mubr.f32.gmra.mrb[0].mxu0 %v814
      %v1858 = vpop.f32.mrb[0].mxu0
      %v1859 = vadd.f32 %v1304, %v1858
      %v1860 = vpop.f32.mrb[0].mxu0
      %1861 = vmatprep.mubr.f32.mxu0 0.0
      %1862 = vmatmul.mubr.f32.gmra.mrb[0].mxu0 %v817
      %v1863 = vpop.f32.mrb[0].mxu0
      %v1864 = vadd.f32 %v1309, %v1863
      %v1865 = vpop.f32.mrb[0].mxu0
      %1866 = vmatprep.mubr.f32.mxu0 0.0
      %1867 = vmatmul.mubr.f32.gmra.mrb[0].mxu0 %v820
      %v1868 = vpop.f32.mrb[0].mxu0
      %v1869 = vadd.f32 %v1314, %v1868
      %v1870 = vpop.f32.mrb[0].mxu0
      %1871 = vmatprep.mubr.f32.mxu0 0.0
      %1872 = vmatmul.mubr.f32.gmra.mrb[0].mxu0 %v823
      %v1873 = vpop.f32.mrb[0].mxu0
      %v1874 = vadd.f32 %v1319, %v1873
      %v1875 = vpop.f32.mrb[0].mxu0
      %1876 = vmatprep.mubr.f32.mxu0 0.0
      %1877 = vmatmul.mubr.f32.gmra.mrb[0].mxu0 %v826
      %v1878 = vpop.f32.mrb[0].mxu0
      %v1879 = vadd.f32 %v1324, %v1878
      %v1880 = vpop.f32.mrb[0].mxu0
      %1881 = vmatprep.mubr.f32.mxu0 0.0
      %1882 = vmatmul.mubr.f32.gmra.mrb[0].mxu0 %v829
      %v1883 = vpop.f32.mrb[0].mxu0
      %v1884 = vadd.f32 %v1329, %v1883
      %v1885 = vpop.f32.mrb[0].mxu0
      %1886 = vmatprep.mubr.f32.mxu0 0.0
      %1887 = vmatmul.mubr.f32.gmra.mrb[0].mxu0 %v832
      %v1888 = vpop.f32.mrb[0].mxu0
      %v1889 = vadd.f32 %v1334, %v1888
      %v1890 = vpop.f32.mrb[0].mxu0
      %1891 = vmatprep.mubr.f32.mxu0 0.0
      %1892 = vmatmul.mubr.f32.gmra.mrb[0].mxu0 %v835
      %v1893 = vpop.f32.mrb[0].mxu0
      %v1894 = vadd.f32 %v1339, %v1893
      %v1895 = vpop.f32.mrb[0].mxu0
      %1896 = vmatprep.mubr.f32.mxu0 0.0
      %1897 = vmatmul.mubr.f32.gmra.mrb[0].mxu0 %v838
      %v1898 = vpop.f32.mrb[0].mxu0
      %v1899 = vadd.f32 %v1344, %v1898
      %v1900 = vpop.f32.mrb[0].mxu0
      %1901 = vmatprep.mubr.f32.mxu0 0.0
      %1902 = vmatmul.mubr.f32.gmra.mrb[0].mxu0 %v841
      %v1903 = vpop.f32.mrb[0].mxu0
      %v1904 = vadd.f32 %v1349, %v1903
      %v1905 = vpop.f32.mrb[0].mxu0
      %1906 = vmatprep.mubr.f32.mxu0 0.0
      %1907 = vmatmul.mubr.f32.gmra.mrb[0].mxu0 %v844
      %v1908 = vpop.f32.mrb[0].mxu0
      %v1909 = vadd.f32 %v1354, %v1908
      %v1910 = vpop.f32.mrb[0].mxu0
      %1911 = vmatprep.mubr.f32.mxu0 0.0
      %1912 = vmatmul.mubr.f32.gmra.mrb[0].mxu0 %v847
      %v1913 = vpop.f32.mrb[0].mxu0
      %v1914 = vadd.f32 %v1359, %v1913
      %v1915 = vpop.f32.mrb[0].mxu0
      %1916 = vmatprep.mubr.f32.mxu0 0.0
      %1917 = vmatmul.mubr.f32.gmra.mrb[0].mxu0 %v850
      %v1918 = vpop.f32.mrb[0].mxu0
      %v1919 = vadd.f32 %v1364, %v1918
      %v1920 = vpop.f32.mrb[0].mxu0
      %1921 = vmatprep.mubr.f32.mxu0 0.0
      %1922 = vmatmul.mubr.f32.gmra.mrb[0].mxu0 %v853
      %v1923 = vpop.f32.mrb[0].mxu0
      %v1924 = vadd.f32 %v1369, %v1923
      %v1925 = vpop.f32.mrb[0].mxu0
      %1926 = vmatprep.mubr.f32.mxu0 0.0
      %1927 = vmatmul.mubr.f32.gmra.mrb[0].mxu0 %v856
      %v1928 = vpop.f32.mrb[0].mxu0
      %v1929 = vadd.f32 %v1374, %v1928
      %v1930 = vpop.f32.mrb[0].mxu0
      %1931 = vmatprep.mubr.f32.mxu0 0.0
      %1932 = vmatmul.mubr.f32.gmra.mrb[0].mxu0 %v859
      %v1933 = vpop.f32.mrb[0].mxu0
      %v1934 = vadd.f32 %v1379, %v1933
      %v1935 = vpop.f32.mrb[0].mxu0
      %1936 = vmatprep.mubr.f32.mxu0 0.0
      %1937 = vmatmul.mubr.f32.gmra.mrb[0].mxu0 %v862
      %v1938 = vpop.f32.mrb[0].mxu0
      %v1939 = vadd.f32 %v1384, %v1938
      %v1940 = vpop.f32.mrb[0].mxu0
      %1941 = vmatprep.mubr.f32.mxu0 0.0
      %1942 = vmatmul.mubr.f32.gmra.mrb[0].mxu0 %v865
      %v1943 = vpop.f32.mrb[0].mxu0
      %v1944 = vadd.f32 %v1389, %v1943
      %v1945 = vpop.f32.mrb[0].mxu0
      %1946 = vmatprep.mubr.f32.mxu0 0.0
      %1947 = vmatmul.mubr.f32.gmra.mrb[0].mxu0 %v868
      %v1948 = vpop.f32.mrb[0].mxu0
      %v1949 = vadd.f32 %v1394, %v1948
      %v1950 = vpop.f32.mrb[0].mxu0
      %1951 = vmatprep.mubr.f32.mxu0 0.0
      %1952 = vmatmul.mubr.f32.gmra.mrb[0].mxu0 %v871
      %v1953 = vpop.f32.mrb[0].mxu0
      %v1954 = vadd.f32 %v1399, %v1953
      %v1955 = vpop.f32.mrb[0].mxu0
      %1956 = vmatprep.mubr.f32.mxu0 0.0
      %1957 = vmatmul.mubr.f32.gmra.mrb[0].mxu0 %v874
      %v1958 = vpop.f32.mrb[0].mxu0
      %v1959 = vadd.f32 %v1404, %v1958
      %v1960 = vpop.f32.mrb[0].mxu0
      %1961 = vmatprep.mubr.f32.mxu0 0.0
      %1962 = vmatmul.mubr.f32.gmra.mrb[0].mxu0 %v877
      %v1963 = vpop.f32.mrb[0].mxu0
      %v1964 = vadd.f32 %v1409, %v1963
      %v1965 = vpop.f32.mrb[0].mxu0
      %1966 = vmatprep.mubr.f32.mxu0 0.0
      %1967 = vmatmul.mubr.f32.gmra.mrb[0].mxu0 %v880
      %v1968 = vpop.f32.mrb[0].mxu0
      %v1969 = vadd.f32 %v1414, %v1968
      %v1970 = vpop.f32.mrb[0].mxu0
      %1971 = vmatprep.mubr.f32.mxu0 0.0
      %1972 = vmatmul.mubr.f32.gmra.mrb[0].mxu0 %v883
      %v1973 = vpop.f32.mrb[0].mxu0
      %v1974 = vadd.f32 %v1419, %v1973
      %v1975 = vpop.f32.mrb[0].mxu0
      %1976 = vmatprep.mubr.f32.mxu0 0.0
      %1977 = vmatmul.mubr.f32.gmra.mrb[0].mxu0 %v886
      %v1978 = vpop.f32.mrb[0].mxu0
      %v1979 = vadd.f32 %v1424, %v1978
      %v1980 = vpop.f32.mrb[0].mxu0
      %1981 = vmatprep.mubr.f32.mxu0 0.0
      %1982 = vmatmul.mubr.f32.gmra.mrb[0].mxu0 %v889
      %v1983 = vpop.f32.mrb[0].mxu0
      %v1984 = vadd.f32 %v1429, %v1983
      %v1985 = vpop.f32.mrb[0].mxu0
      %1986 = vmatprep.mubr.f32.mxu0 0.0
      %1987 = vmatmul.mubr.f32.gmra.mrb[0].mxu0 %v892
      %v1988 = vpop.f32.mrb[0].mxu0
      %v1989 = vadd.f32 %v1434, %v1988
      %v1990 = vpop.f32.mrb[0].mxu0
      %1991 = vmatprep.mubr.f32.mxu0 0.0
      %1992 = vmatmul.mubr.f32.gmra.mrb[0].mxu0 %v895
      %v1993 = vpop.f32.mrb[0].mxu0
      %v1994 = vadd.f32 %v1439, %v1993
      %v1995 = vpop.f32.mrb[0].mxu0
      %1996 = vmatprep.mubr.f32.mxu0 0.0
      %1997 = vmatmul.mubr.f32.gmra.mrb[0].mxu0 %v898
      %v1998 = vpop.f32.mrb[0].mxu0
      %v1999 = vadd.f32 %v1444, %v1998
      %v2000 = vpop.f32.mrb[0].mxu0
      %2001 = vmatprep.mubr.f32.mxu0 0.0
      %2002 = vmatmul.mubr.f32.gmra.mrb[0].mxu0 %v901
      %v2003 = vpop.f32.mrb[0].mxu0
      %v2004 = vadd.f32 %v1449, %v2003
      %v2005 = vpop.f32.mrb[0].mxu0
      %2006 = vmatprep.mubr.f32.mxu0 0.0
      %2007 = vmatmul.mubr.f32.gmra.mrb[0].mxu0 %v904
      %v2008 = vpop.f32.mrb[0].mxu0
      %v2009 = vadd.f32 %v1454, %v2008
      %v2010 = vpop.f32.mrb[0].mxu0
      %2011 = vmatprep.mubr.f32.mxu0 0.0
      %2012 = vmatmul.mubr.f32.gmra.mrb[0].mxu0 %v907
      %v2013 = vpop.f32.mrb[0].mxu0
      %v2014 = vadd.f32 %v1459, %v2013
      %v2015 = vpop.f32.mrb[0].mxu0
      %2016 = vmatprep.mubr.f32.mxu0 0.0
      %2017 = vmatmul.mubr.f32.gmra.mrb[0].mxu0 %v910
      %v2018 = vpop.f32.mrb[0].mxu0
      %v2019 = vadd.f32 %v1464, %v2018
      %v2020 = vpop.f32.mrb[0].mxu0
      %2021 = vdwg.mxu0
      %v2022 = vld [vmem:[%s2] sm:$0x1]
      %v2024 = vlaneseq
      %v2025 = vshrl.u32 %v2024, 7
      %v2026 = vsub.s32 0, %v2025
      %v2027 = vrot.slane %v2022, %v2026
      %v2029 = vmul.f32 %v1534, %v2027
      %v2030 = vmul.f32 %v1539, %v2027
      %v2031 = vmul.f32 %v1544, %v2027
      %v2032 = vmul.f32 %v1549, %v2027
      %v2033 = vmul.f32 %v1554, %v2027
      %v2034 = vmul.f32 %v1559, %v2027
      %v2035 = vmul.f32 %v1564, %v2027
      %v2036 = vmul.f32 %v1569, %v2027
      %v2037 = vmul.f32 %v1574, %v2027
      %v2038 = vmul.f32 %v1579, %v2027
      %v2039 = vmul.f32 %v1584, %v2027
      %v2040 = vmul.f32 %v1589, %v2027
      %v2041 = vmul.f32 %v1594, %v2027
      %v2042 = vmul.f32 %v1599, %v2027
      %v2043 = vmul.f32 %v1604, %v2027
      %v2044 = vmul.f32 %v1609, %v2027
      %v2045 = vmul.f32 %v1614, %v2027
      %v2046 = vmul.f32 %v1619, %v2027
      %v2047 = vmul.f32 %v1624, %v2027
      %v2048 = vmul.f32 %v1629, %v2027
      %v2049 = vmul.f32 %v1634, %v2027
      %v2050 = vmul.f32 %v1639, %v2027
      %v2051 = vmul.f32 %v1644, %v2027
      %v2052 = vmul.f32 %v1649, %v2027
      %v2053 = vmul.f32 %v1654, %v2027
      %v2054 = vmul.f32 %v1659, %v2027
      %v2055 = vmul.f32 %v1664, %v2027
      %v2056 = vmul.f32 %v1669, %v2027
      %v2057 = vmul.f32 %v1674, %v2027
      %v2058 = vmul.f32 %v1679, %v2027
      %v2059 = vmul.f32 %v1684, %v2027
      %v2060 = vmul.f32 %v1689, %v2027
      %v2061 = vmul.f32 %v1694, %v2027
      %v2062 = vmul.f32 %v1699, %v2027
      %v2063 = vmul.f32 %v1704, %v2027
      %v2064 = vmul.f32 %v1709, %v2027
      %v2065 = vmul.f32 %v1714, %v2027
      %v2066 = vmul.f32 %v1719, %v2027
      %v2067 = vmul.f32 %v1724, %v2027
      %v2068 = vmul.f32 %v1729, %v2027
      %v2069 = vmul.f32 %v1734, %v2027
      %v2070 = vmul.f32 %v1739, %v2027
      %v2071 = vmul.f32 %v1744, %v2027
      %v2072 = vmul.f32 %v1749, %v2027
      %v2073 = vmul.f32 %v1754, %v2027
      %v2074 = vmul.f32 %v1759, %v2027
      %v2075 = vmul.f32 %v1764, %v2027
      %v2076 = vmul.f32 %v1769, %v2027
      %v2077 = vmul.f32 %v1774, %v2027
      %v2078 = vmul.f32 %v1779, %v2027
      %v2079 = vmul.f32 %v1784, %v2027
      %v2080 = vmul.f32 %v1789, %v2027
      %v2081 = vmul.f32 %v1794, %v2027
      %v2082 = vmul.f32 %v1799, %v2027
      %v2083 = vmul.f32 %v1804, %v2027
      %v2084 = vmul.f32 %v1809, %v2027
      %v2085 = vmul.f32 %v1814, %v2027
      %v2086 = vmul.f32 %v1819, %v2027
      %v2087 = vmul.f32 %v1824, %v2027
      %v2088 = vmul.f32 %v1829, %v2027
      %v2089 = vmul.f32 %v1834, %v2027
      %v2090 = vmul.f32 %v1839, %v2027
      %v2091 = vmul.f32 %v1844, %v2027
      %v2092 = vmul.f32 %v1849, %v2027
      %v2093 = vmul.f32 %v1854, %v2027
      %v2094 = vmul.f32 %v1859, %v2027
      %v2095 = vmul.f32 %v1864, %v2027
      %v2096 = vmul.f32 %v1869, %v2027
      %v2097 = vmul.f32 %v1874, %v2027
      %v2098 = vmul.f32 %v1879, %v2027
      %v2099 = vmul.f32 %v1884, %v2027
      %v2100 = vmul.f32 %v1889, %v2027
      %v2101 = vmul.f32 %v1894, %v2027
      %v2102 = vmul.f32 %v1899, %v2027
      %v2103 = vmul.f32 %v1904, %v2027
      %v2104 = vmul.f32 %v1909, %v2027
      %v2105 = vmul.f32 %v1914, %v2027
      %v2106 = vmul.f32 %v1919, %v2027
      %v2107 = vmul.f32 %v1924, %v2027
      %v2108 = vmul.f32 %v1929, %v2027
      %v2109 = vmul.f32 %v1934, %v2027
      %v2110 = vmul.f32 %v1939, %v2027
      %v2111 = vmul.f32 %v1944, %v2027
      %v2112 = vmul.f32 %v1949, %v2027
      %v2113 = vmul.f32 %v1954, %v2027
      %v2114 = vmul.f32 %v1959, %v2027
      %v2115 = vmul.f32 %v1964, %v2027
      %v2116 = vmul.f32 %v1969, %v2027
      %v2117 = vmul.f32 %v1974, %v2027
      %v2118 = vmul.f32 %v1979, %v2027
      %v2119 = vmul.f32 %v1984, %v2027
      %v2120 = vmul.f32 %v1989, %v2027
      %v2121 = vmul.f32 %v1994, %v2027
      %v2122 = vmul.f32 %v1999, %v2027
      %v2123 = vmul.f32 %v2004, %v2027
      %v2124 = vmul.f32 %v2009, %v2027
      %v2125 = vmul.f32 %v2014, %v2027
      %v2126 = vmul.f32 %v2019, %v2027
      %v2127 = vld [vmem:[%s3] sm:$0x1]
      %v2129 = vlaneseq
      %v2130 = vshrl.u32 %v2129, 7
      %v2131 = vsub.s32 0, %v2130
      %v2132 = vrot.slane %v2127, %v2131
      %v2134 = vadd.f32 %v2029, %v2132
      %v2135 = vadd.f32 %v2030, %v2132
      %v2136 = vadd.f32 %v2031, %v2132
      %v2137 = vadd.f32 %v2032, %v2132
      %v2138 = vadd.f32 %v2033, %v2132
      %v2139 = vadd.f32 %v2034, %v2132
      %v2140 = vadd.f32 %v2035, %v2132
      %v2141 = vadd.f32 %v2036, %v2132
      %v2142 = vadd.f32 %v2037, %v2132
      %v2143 = vadd.f32 %v2038, %v2132
      %v2144 = vadd.f32 %v2039, %v2132
      %v2145 = vadd.f32 %v2040, %v2132
      %v2146 = vadd.f32 %v2041, %v2132
      %v2147 = vadd.f32 %v2042, %v2132
      %v2148 = vadd.f32 %v2043, %v2132
      %v2149 = vadd.f32 %v2044, %v2132
      %v2150 = vadd.f32 %v2045, %v2132
      %v2151 = vadd.f32 %v2046, %v2132
      %v2152 = vadd.f32 %v2047, %v2132
      %v2153 = vadd.f32 %v2048, %v2132
      %v2154 = vadd.f32 %v2049, %v2132
      %v2155 = vadd.f32 %v2050, %v2132
      %v2156 = vadd.f32 %v2051, %v2132
      %v2157 = vadd.f32 %v2052, %v2132
      %v2158 = vadd.f32 %v2053, %v2132
      %v2159 = vadd.f32 %v2054, %v2132
      %v2160 = vadd.f32 %v2055, %v2132
      %v2161 = vadd.f32 %v2056, %v2132
      %v2162 = vadd.f32 %v2057, %v2132
      %v2163 = vadd.f32 %v2058, %v2132
      %v2164 = vadd.f32 %v2059, %v2132
      %v2165 = vadd.f32 %v2060, %v2132
      %v2166 = vadd.f32 %v2061, %v2132
      %v2167 = vadd.f32 %v2062, %v2132
      %v2168 = vadd.f32 %v2063, %v2132
      %v2169 = vadd.f32 %v2064, %v2132
      %v2170 = vadd.f32 %v2065, %v2132
      %v2171 = vadd.f32 %v2066, %v2132
      %v2172 = vadd.f32 %v2067, %v2132
      %v2173 = vadd.f32 %v2068, %v2132
      %v2174 = vadd.f32 %v2069, %v2132
      %v2175 = vadd.f32 %v2070, %v2132
      %v2176 = vadd.f32 %v2071, %v2132
      %v2177 = vadd.f32 %v2072, %v2132
      %v2178 = vadd.f32 %v2073, %v2132
      %v2179 = vadd.f32 %v2074, %v2132
      %v2180 = vadd.f32 %v2075, %v2132
      %v2181 = vadd.f32 %v2076, %v2132
      %v2182 = vadd.f32 %v2077, %v2132
      %v2183 = vadd.f32 %v2078, %v2132
      %v2184 = vadd.f32 %v2079, %v2132
      %v2185 = vadd.f32 %v2080, %v2132
      %v2186 = vadd.f32 %v2081, %v2132
      %v2187 = vadd.f32 %v2082, %v2132
      %v2188 = vadd.f32 %v2083, %v2132
      %v2189 = vadd.f32 %v2084, %v2132
      %v2190 = vadd.f32 %v2085, %v2132
      %v2191 = vadd.f32 %v2086, %v2132
      %v2192 = vadd.f32 %v2087, %v2132
      %v2193 = vadd.f32 %v2088, %v2132
      %v2194 = vadd.f32 %v2089, %v2132
      %v2195 = vadd.f32 %v2090, %v2132
      %v2196 = vadd.f32 %v2091, %v2132
      %v2197 = vadd.f32 %v2092, %v2132
      %v2198 = vadd.f32 %v2093, %v2132
      %v2199 = vadd.f32 %v2094, %v2132
      %v2200 = vadd.f32 %v2095, %v2132
      %v2201 = vadd.f32 %v2096, %v2132
      %v2202 = vadd.f32 %v2097, %v2132
      %v2203 = vadd.f32 %v2098, %v2132
      %v2204 = vadd.f32 %v2099, %v2132
      %v2205 = vadd.f32 %v2100, %v2132
      %v2206 = vadd.f32 %v2101, %v2132
      %v2207 = vadd.f32 %v2102, %v2132
      %v2208 = vadd.f32 %v2103, %v2132
      %v2209 = vadd.f32 %v2104, %v2132
      %v2210 = vadd.f32 %v2105, %v2132
      %v2211 = vadd.f32 %v2106, %v2132
      %v2212 = vadd.f32 %v2107, %v2132
      %v2213 = vadd.f32 %v2108, %v2132
      %v2214 = vadd.f32 %v2109, %v2132
      %v2215 = vadd.f32 %v2110, %v2132
      %v2216 = vadd.f32 %v2111, %v2132
      %v2217 = vadd.f32 %v2112, %v2132
      %v2218 = vadd.f32 %v2113, %v2132
      %v2219 = vadd.f32 %v2114, %v2132
      %v2220 = vadd.f32 %v2115, %v2132
      %v2221 = vadd.f32 %v2116, %v2132
      %v2222 = vadd.f32 %v2117, %v2132
      %v2223 = vadd.f32 %v2118, %v2132
      %v2224 = vadd.f32 %v2119, %v2132
      %v2225 = vadd.f32 %v2120, %v2132
      %v2226 = vadd.f32 %v2121, %v2132
      %v2227 = vadd.f32 %v2122, %v2132
      %v2228 = vadd.f32 %v2123, %v2132
      %v2229 = vadd.f32 %v2124, %v2132
      %v2230 = vadd.f32 %v2125, %v2132
      %v2231 = vadd.f32 %v2126, %v2132
      %v2232 = vmul.f32 %v2134, 0.1
      %v2233 = vmul.f32 %v2135, 0.1
      %v2234 = vmul.f32 %v2136, 0.1
      %v2235 = vmul.f32 %v2137, 0.1
      %v2236 = vmul.f32 %v2138, 0.1
      %v2237 = vmul.f32 %v2139, 0.1
      %v2238 = vmul.f32 %v2140, 0.1
      %v2239 = vmul.f32 %v2141, 0.1
      %v2240 = vmul.f32 %v2142, 0.1
      %v2241 = vmul.f32 %v2143, 0.1
      %v2242 = vmul.f32 %v2144, 0.1
      %v2243 = vmul.f32 %v2145, 0.1
      %v2244 = vmul.f32 %v2146, 0.1
      %v2245 = vmul.f32 %v2147, 0.1
      %v2246 = vmul.f32 %v2148, 0.1
      %v2247 = vmul.f32 %v2149, 0.1
      %v2248 = vmul.f32 %v2150, 0.1
      %v2249 = vmul.f32 %v2151, 0.1
      %v2250 = vmul.f32 %v2152, 0.1
      %v2251 = vmul.f32 %v2153, 0.1
      %v2252 = vmul.f32 %v2154, 0.1
      %v2253 = vmul.f32 %v2155, 0.1
      %v2254 = vmul.f32 %v2156, 0.1
      %v2255 = vmul.f32 %v2157, 0.1
      %v2256 = vmul.f32 %v2158, 0.1
      %v2257 = vmul.f32 %v2159, 0.1
      %v2258 = vmul.f32 %v2160, 0.1
      %v2259 = vmul.f32 %v2161, 0.1
      %v2260 = vmul.f32 %v2162, 0.1
      %v2261 = vmul.f32 %v2163, 0.1
      %v2262 = vmul.f32 %v2164, 0.1
      %v2263 = vmul.f32 %v2165, 0.1
      %v2264 = vmul.f32 %v2166, 0.1
      %v2265 = vmul.f32 %v2167, 0.1
      %v2266 = vmul.f32 %v2168, 0.1
      %v2267 = vmul.f32 %v2169, 0.1
      %v2268 = vmul.f32 %v2170, 0.1
      %v2269 = vmul.f32 %v2171, 0.1
      %v2270 = vmul.f32 %v2172, 0.1
      %v2271 = vmul.f32 %v2173, 0.1
      %v2272 = vmul.f32 %v2174, 0.1
      %v2273 = vmul.f32 %v2175, 0.1
      %v2274 = vmul.f32 %v2176, 0.1
      %v2275 = vmul.f32 %v2177, 0.1
      %v2276 = vmul.f32 %v2178, 0.1
      %v2277 = vmul.f32 %v2179, 0.1
      %v2278 = vmul.f32 %v2180, 0.1
      %v2279 = vmul.f32 %v2181, 0.1
      %v2280 = vmul.f32 %v2182, 0.1
      %v2281 = vmul.f32 %v2183, 0.1
      %v2282 = vmul.f32 %v2184, 0.1
      %v2283 = vmul.f32 %v2185, 0.1
      %v2284 = vmul.f32 %v2186, 0.1
      %v2285 = vmul.f32 %v2187, 0.1
      %v2286 = vmul.f32 %v2188, 0.1
      %v2287 = vmul.f32 %v2189, 0.1
      %v2288 = vmul.f32 %v2190, 0.1
      %v2289 = vmul.f32 %v2191, 0.1
      %v2290 = vmul.f32 %v2192, 0.1
      %v2291 = vmul.f32 %v2193, 0.1
      %v2292 = vmul.f32 %v2194, 0.1
      %v2293 = vmul.f32 %v2195, 0.1
      %v2294 = vmul.f32 %v2196, 0.1
      %v2295 = vmul.f32 %v2197, 0.1
      %v2296 = vmul.f32 %v2198, 0.1
      %v2297 = vmul.f32 %v2199, 0.1
      %v2298 = vmul.f32 %v2200, 0.1
      %v2299 = vmul.f32 %v2201, 0.1
      %v2300 = vmul.f32 %v2202, 0.1
      %v2301 = vmul.f32 %v2203, 0.1
      %v2302 = vmul.f32 %v2204, 0.1
      %v2303 = vmul.f32 %v2205, 0.1
      %v2304 = vmul.f32 %v2206, 0.1
      %v2305 = vmul.f32 %v2207, 0.1
      %v2306 = vmul.f32 %v2208, 0.1
      %v2307 = vmul.f32 %v2209, 0.1
      %v2308 = vmul.f32 %v2210, 0.1
      %v2309 = vmul.f32 %v2211, 0.1
      %v2310 = vmul.f32 %v2212, 0.1
      %v2311 = vmul.f32 %v2213, 0.1
      %v2312 = vmul.f32 %v2214, 0.1
      %v2313 = vmul.f32 %v2215, 0.1
      %v2314 = vmul.f32 %v2216, 0.1
      %v2315 = vmul.f32 %v2217, 0.1
      %v2316 = vmul.f32 %v2218, 0.1
      %v2317 = vmul.f32 %v2219, 0.1
      %v2318 = vmul.f32 %v2220, 0.1
      %v2319 = vmul.f32 %v2221, 0.1
      %v2320 = vmul.f32 %v2222, 0.1
      %v2321 = vmul.f32 %v2223, 0.1
      %v2322 = vmul.f32 %v2224, 0.1
      %v2323 = vmul.f32 %v2225, 0.1
      %v2324 = vmul.f32 %v2226, 0.1
      %v2325 = vmul.f32 %v2227, 0.1
      %v2326 = vmul.f32 %v2228, 0.1
      %v2327 = vmul.f32 %v2229, 0.1
      %v2328 = vmul.f32 %v2230, 0.1
      %v2329 = vmul.f32 %v2231, 0.1
      %v2330 = vmax.f32 %v2134, %v2232
      %v2331 = vmax.f32 %v2135, %v2233
      %v2332 = vmax.f32 %v2136, %v2234
      %v2333 = vmax.f32 %v2137, %v2235
      %v2334 = vmax.f32 %v2138, %v2236
      %v2335 = vmax.f32 %v2139, %v2237
      %v2336 = vmax.f32 %v2140, %v2238
      %v2337 = vmax.f32 %v2141, %v2239
      %v2338 = vmax.f32 %v2142, %v2240
      %v2339 = vmax.f32 %v2143, %v2241
      %v2340 = vmax.f32 %v2144, %v2242
      %v2341 = vmax.f32 %v2145, %v2243
      %v2342 = vmax.f32 %v2146, %v2244
      %v2343 = vmax.f32 %v2147, %v2245
      %v2344 = vmax.f32 %v2148, %v2246
      %v2345 = vmax.f32 %v2149, %v2247
      %v2346 = vmax.f32 %v2150, %v2248
      %v2347 = vmax.f32 %v2151, %v2249
      %v2348 = vmax.f32 %v2152, %v2250
      %v2349 = vmax.f32 %v2153, %v2251
      %v2350 = vmax.f32 %v2154, %v2252
      %v2351 = vmax.f32 %v2155, %v2253
      %v2352 = vmax.f32 %v2156, %v2254
      %v2353 = vmax.f32 %v2157, %v2255
      %v2354 = vmax.f32 %v2158, %v2256
      %v2355 = vmax.f32 %v2159, %v2257
      %v2356 = vmax.f32 %v2160, %v2258
      %v2357 = vmax.f32 %v2161, %v2259
      %v2358 = vmax.f32 %v2162, %v2260
      %v2359 = vmax.f32 %v2163, %v2261
      %v2360 = vmax.f32 %v2164, %v2262
      %v2361 = vmax.f32 %v2165, %v2263
      %v2362 = vmax.f32 %v2166, %v2264
      %v2363 = vmax.f32 %v2167, %v2265
      %v2364 = vmax.f32 %v2168, %v2266
      %v2365 = vmax.f32 %v2169, %v2267
      %v2366 = vmax.f32 %v2170, %v2268
      %v2367 = vmax.f32 %v2171, %v2269
      %v2368 = vmax.f32 %v2172, %v2270
      %v2369 = vmax.f32 %v2173, %v2271
      %v2370 = vmax.f32 %v2174, %v2272
      %v2371 = vmax.f32 %v2175, %v2273
      %v2372 = vmax.f32 %v2176, %v2274
      %v2373 = vmax.f32 %v2177, %v2275
      %v2374 = vmax.f32 %v2178, %v2276
      %v2375 = vmax.f32 %v2179, %v2277
      %v2376 = vmax.f32 %v2180, %v2278
      %v2377 = vmax.f32 %v2181, %v2279
      %v2378 = vmax.f32 %v2182, %v2280
      %v2379 = vmax.f32 %v2183, %v2281
      %v2380 = vmax.f32 %v2184, %v2282
      %v2381 = vmax.f32 %v2185, %v2283
      %v2382 = vmax.f32 %v2186, %v2284
      %v2383 = vmax.f32 %v2187, %v2285
      %v2384 = vmax.f32 %v2188, %v2286
      %v2385 = vmax.f32 %v2189, %v2287
      %v2386 = vmax.f32 %v2190, %v2288
      %v2387 = vmax.f32 %v2191, %v2289
      %v2388 = vmax.f32 %v2192, %v2290
      %v2389 = vmax.f32 %v2193, %v2291
      %v2390 = vmax.f32 %v2194, %v2292
      %v2391 = vmax.f32 %v2195, %v2293
      %v2392 = vmax.f32 %v2196, %v2294
      %v2393 = vmax.f32 %v2197, %v2295
      %v2394 = vmax.f32 %v2198, %v2296
      %v2395 = vmax.f32 %v2199, %v2297
      %v2396 = vmax.f32 %v2200, %v2298
      %v2397 = vmax.f32 %v2201, %v2299
      %v2398 = vmax.f32 %v2202, %v2300
      %v2399 = vmax.f32 %v2203, %v2301
      %v2400 = vmax.f32 %v2204, %v2302
      %v2401 = vmax.f32 %v2205, %v2303
      %v2402 = vmax.f32 %v2206, %v2304
      %v2403 = vmax.f32 %v2207, %v2305
      %v2404 = vmax.f32 %v2208, %v2306
      %v2405 = vmax.f32 %v2209, %v2307
      %v2406 = vmax.f32 %v2210, %v2308
      %v2407 = vmax.f32 %v2211, %v2309
      %v2408 = vmax.f32 %v2212, %v2310
      %v2409 = vmax.f32 %v2213, %v2311
      %v2410 = vmax.f32 %v2214, %v2312
      %v2411 = vmax.f32 %v2215, %v2313
      %v2412 = vmax.f32 %v2216, %v2314
      %v2413 = vmax.f32 %v2217, %v2315
      %v2414 = vmax.f32 %v2218, %v2316
      %v2415 = vmax.f32 %v2219, %v2317
      %v2416 = vmax.f32 %v2220, %v2318
      %v2417 = vmax.f32 %v2221, %v2319
      %v2418 = vmax.f32 %v2222, %v2320
      %v2419 = vmax.f32 %v2223, %v2321
      %v2420 = vmax.f32 %v2224, %v2322
      %v2421 = vmax.f32 %v2225, %v2323
      %v2422 = vmax.f32 %v2226, %v2324
      %v2423 = vmax.f32 %v2227, %v2325
      %v2424 = vmax.f32 %v2228, %v2326
      %v2425 = vmax.f32 %v2229, %v2327
      %v2426 = vmax.f32 %v2230, %v2328
      %v2427 = vmax.f32 %v2231, %v2329
      %v2428 = vld [vmem:[%s4] sm:$0xff]
      %v2429 = vld [vmem:[%s4 + $0x8] sm:$0xff]
      %v2430 = vld [vmem:[%s4 + $0x10] sm:$0xff]
      %v2431 = vld [vmem:[%s4 + $0x18] sm:$0xff]
      %v2432 = vld [vmem:[%s4 + $0x20] sm:$0xff]
      %v2433 = vld [vmem:[%s4 + $0x28] sm:$0xff]
      %v2434 = vld [vmem:[%s4 + $0x30] sm:$0xff]
      %v2435 = vld [vmem:[%s4 + $0x38] sm:$0xff]
      %v2436 = vld [vmem:[%s4 + $0x40] sm:$0xff]
      %v2437 = vld [vmem:[%s4 + $0x48] sm:$0xff]
      %v2438 = vld [vmem:[%s4 + $0x50] sm:$0xff]
      %v2439 = vld [vmem:[%s4 + $0x58] sm:$0xff]
      %v2440 = vld [vmem:[%s4 + $0x60] sm:$0xff]
      %v2441 = vld [vmem:[%s4 + $0x68] sm:$0xff]
      %v2442 = vld [vmem:[%s4 + $0x70] sm:$0xff]
      %v2443 = vld [vmem:[%s4 + $0x78] sm:$0xff]
      %v2444 = vld [vmem:[%s4 + $0x80] sm:$0xff]
      %v2445 = vld [vmem:[%s4 + $0x88] sm:$0xff]
      %v2446 = vld [vmem:[%s4 + $0x90] sm:$0xff]
      %v2447 = vld [vmem:[%s4 + $0x98] sm:$0xff]
      %v2448 = vld [vmem:[%s4 + $0xa0] sm:$0xff]
      %v2449 = vld [vmem:[%s4 + $0xa8] sm:$0xff]
      %v2450 = vld [vmem:[%s4 + $0xb0] sm:$0xff]
      %v2451 = vld [vmem:[%s4 + $0xb8] sm:$0xff]
      %v2452 = vld [vmem:[%s4 + $0xc0] sm:$0xff]
      %v2453 = vld [vmem:[%s4 + $0xc8] sm:$0xff]
      %v2454 = vld [vmem:[%s4 + $0xd0] sm:$0xff]
      %v2455 = vld [vmem:[%s4 + $0xd8] sm:$0xff]
      %v2456 = vld [vmem:[%s4 + $0xe0] sm:$0xff]
      %v2457 = vld [vmem:[%s4 + $0xe8] sm:$0xff]
      %v2458 = vld [vmem:[%s4 + $0xf0] sm:$0xff]
      %v2459 = vld [vmem:[%s4 + $0xf8] sm:$0xff]
      %v2460 = vld [vmem:[%s4 + $0x100] sm:$0xff]
      %v2461 = vld [vmem:[%s4 + $0x108] sm:$0xff]
      %v2462 = vld [vmem:[%s4 + $0x110] sm:$0xff]
      %v2463 = vld [vmem:[%s4 + $0x118] sm:$0xff]
      %v2464 = vld [vmem:[%s4 + $0x120] sm:$0xff]
      %v2465 = vld [vmem:[%s4 + $0x128] sm:$0xff]
      %v2466 = vld [vmem:[%s4 + $0x130] sm:$0xff]
      %v2467 = vld [vmem:[%s4 + $0x138] sm:$0xff]
      %v2468 = vld [vmem:[%s4 + $0x140] sm:$0xff]
      %v2469 = vld [vmem:[%s4 + $0x148] sm:$0xff]
      %v2470 = vld [vmem:[%s4 + $0x150] sm:$0xff]
      %v2471 = vld [vmem:[%s4 + $0x158] sm:$0xff]
      %v2472 = vld [vmem:[%s4 + $0x160] sm:$0xff]
      %v2473 = vld [vmem:[%s4 + $0x168] sm:$0xff]
      %v2474 = vld [vmem:[%s4 + $0x170] sm:$0xff]
      %v2475 = vld [vmem:[%s4 + $0x178] sm:$0xff]
      %v2476 = vld [vmem:[%s4 + $0x180] sm:$0xff]
      %v2477 = vld [vmem:[%s4 + $0x188] sm:$0xff]
      %v2478 = vld [vmem:[%s4 + $0x190] sm:$0xff]
      %v2479 = vld [vmem:[%s4 + $0x198] sm:$0xff]
      %v2480 = vld [vmem:[%s4 + $0x1a0] sm:$0xff]
      %v2481 = vld [vmem:[%s4 + $0x1a8] sm:$0xff]
      %v2482 = vld [vmem:[%s4 + $0x1b0] sm:$0xff]
      %v2483 = vld [vmem:[%s4 + $0x1b8] sm:$0xff]
      %v2484 = vld [vmem:[%s4 + $0x1c0] sm:$0xff]
      %v2485 = vld [vmem:[%s4 + $0x1c8] sm:$0xff]
      %v2486 = vld [vmem:[%s4 + $0x1d0] sm:$0xff]
      %v2487 = vld [vmem:[%s4 + $0x1d8] sm:$0xff]
      %v2488 = vld [vmem:[%s4 + $0x1e0] sm:$0xff]
      %v2489 = vld [vmem:[%s4 + $0x1e8] sm:$0xff]
      %v2490 = vld [vmem:[%s4 + $0x1f0] sm:$0xff]
      %v2491 = vld [vmem:[%s4 + $0x1f8] sm:$0xff]
      %v2492 = vld [vmem:[%s4 + $0x200] sm:$0xff]
      %v2493 = vld [vmem:[%s4 + $0x208] sm:$0xff]
      %v2494 = vld [vmem:[%s4 + $0x210] sm:$0xff]
      %v2495 = vld [vmem:[%s4 + $0x218] sm:$0xff]
      %v2496 = vld [vmem:[%s4 + $0x220] sm:$0xff]
      %v2497 = vld [vmem:[%s4 + $0x228] sm:$0xff]
      %v2498 = vld [vmem:[%s4 + $0x230] sm:$0xff]
      %v2499 = vld [vmem:[%s4 + $0x238] sm:$0xff]
      %v2500 = vld [vmem:[%s4 + $0x240] sm:$0xff]
      %v2501 = vld [vmem:[%s4 + $0x248] sm:$0xff]
      %v2502 = vld [vmem:[%s4 + $0x250] sm:$0xff]
      %v2503 = vld [vmem:[%s4 + $0x258] sm:$0xff]
      %v2504 = vld [vmem:[%s4 + $0x260] sm:$0xff]
      %v2505 = vld [vmem:[%s4 + $0x268] sm:$0xff]
      %v2506 = vld [vmem:[%s4 + $0x270] sm:$0xff]
      %v2507 = vld [vmem:[%s4 + $0x278] sm:$0xff]
      %v2508 = vld [vmem:[%s4 + $0x280] sm:$0xff]
      %v2509 = vld [vmem:[%s4 + $0x288] sm:$0xff]
      %v2510 = vld [vmem:[%s4 + $0x290] sm:$0xff]
      %v2511 = vld [vmem:[%s4 + $0x298] sm:$0xff]
      %v2512 = vld [vmem:[%s4 + $0x2a0] sm:$0xff]
      %v2513 = vld [vmem:[%s4 + $0x2a8] sm:$0xff]
      %v2514 = vld [vmem:[%s4 + $0x2b0] sm:$0xff]
      %v2515 = vld [vmem:[%s4 + $0x2b8] sm:$0xff]
      %v2516 = vld [vmem:[%s4 + $0x2c0] sm:$0xff]
      %v2517 = vld [vmem:[%s4 + $0x2c8] sm:$0xff]
      %v2518 = vld [vmem:[%s4 + $0x2d0] sm:$0xff]
      %v2519 = vld [vmem:[%s4 + $0x2d8] sm:$0xff]
      %v2520 = vld [vmem:[%s4 + $0x2e0] sm:$0xff]
      %v2521 = vld [vmem:[%s4 + $0x2e8] sm:$0xff]
      %v2522 = vld [vmem:[%s4 + $0x2f0] sm:$0xff]
      %v2523 = vld [vmem:[%s4 + $0x2f8] sm:$0xff]
      %v2524 = vld [vmem:[%s4 + $0x300] sm:$0xff]
      %v2525 = vld [vmem:[%s4 + $0x308] sm:$0xff]
      %v2526 = vmul.f32 %v2330, %v2428
      %v2527 = vmul.f32 %v2331, %v2429
      %v2528 = vmul.f32 %v2332, %v2430
      %v2529 = vmul.f32 %v2333, %v2431
      %v2530 = vmul.f32 %v2334, %v2432
      %v2531 = vmul.f32 %v2335, %v2433
      %v2532 = vmul.f32 %v2336, %v2434
      %v2533 = vmul.f32 %v2337, %v2435
      %v2534 = vmul.f32 %v2338, %v2436
      %v2535 = vmul.f32 %v2339, %v2437
      %v2536 = vmul.f32 %v2340, %v2438
      %v2537 = vmul.f32 %v2341, %v2439
      %v2538 = vmul.f32 %v2342, %v2440
      %v2539 = vmul.f32 %v2343, %v2441
      %v2540 = vmul.f32 %v2344, %v2442
      %v2541 = vmul.f32 %v2345, %v2443
      %v2542 = vmul.f32 %v2346, %v2444
      %v2543 = vmul.f32 %v2347, %v2445
      %v2544 = vmul.f32 %v2348, %v2446
      %v2545 = vmul.f32 %v2349, %v2447
      %v2546 = vmul.f32 %v2350, %v2448
      %v2547 = vmul.f32 %v2351, %v2449
      %v2548 = vmul.f32 %v2352, %v2450
      %v2549 = vmul.f32 %v2353, %v2451
      %v2550 = vmul.f32 %v2354, %v2452
      %v2551 = vmul.f32 %v2355, %v2453
      %v2552 = vmul.f32 %v2356, %v2454
      %v2553 = vmul.f32 %v2357, %v2455
      %v2554 = vmul.f32 %v2358, %v2456
      %v2555 = vmul.f32 %v2359, %v2457
      %v2556 = vmul.f32 %v2360, %v2458
      %v2557 = vmul.f32 %v2361, %v2459
      %v2558 = vmul.f32 %v2362, %v2460
      %v2559 = vmul.f32 %v2363, %v2461
      %v2560 = vmul.f32 %v2364, %v2462
      %v2561 = vmul.f32 %v2365, %v2463
      %v2562 = vmul.f32 %v2366, %v2464
      %v2563 = vmul.f32 %v2367, %v2465
      %v2564 = vmul.f32 %v2368, %v2466
      %v2565 = vmul.f32 %v2369, %v2467
      %v2566 = vmul.f32 %v2370, %v2468
      %v2567 = vmul.f32 %v2371, %v2469
      %v2568 = vmul.f32 %v2372, %v2470
      %v2569 = vmul.f32 %v2373, %v2471
      %v2570 = vmul.f32 %v2374, %v2472
      %v2571 = vmul.f32 %v2375, %v2473
      %v2572 = vmul.f32 %v2376, %v2474
      %v2573 = vmul.f32 %v2377, %v2475
      %v2574 = vmul.f32 %v2378, %v2476
      %v2575 = vmul.f32 %v2379, %v2477
      %v2576 = vmul.f32 %v2380, %v2478
      %v2577 = vmul.f32 %v2381, %v2479
      %v2578 = vmul.f32 %v2382, %v2480
      %v2579 = vmul.f32 %v2383, %v2481
      %v2580 = vmul.f32 %v2384, %v2482
      %v2581 = vmul.f32 %v2385, %v2483
      %v2582 = vmul.f32 %v2386, %v2484
      %v2583 = vmul.f32 %v2387, %v2485
      %v2584 = vmul.f32 %v2388, %v2486
      %v2585 = vmul.f32 %v2389, %v2487
      %v2586 = vmul.f32 %v2390, %v2488
      %v2587 = vmul.f32 %v2391, %v2489
      %v2588 = vmul.f32 %v2392, %v2490
      %v2589 = vmul.f32 %v2393, %v2491
      %v2590 = vmul.f32 %v2394, %v2492
      %v2591 = vmul.f32 %v2395, %v2493
      %v2592 = vmul.f32 %v2396, %v2494
      %v2593 = vmul.f32 %v2397, %v2495
      %v2594 = vmul.f32 %v2398, %v2496
      %v2595 = vmul.f32 %v2399, %v2497
      %v2596 = vmul.f32 %v2400, %v2498
      %v2597 = vmul.f32 %v2401, %v2499
      %v2598 = vmul.f32 %v2402, %v2500
      %v2599 = vmul.f32 %v2403, %v2501
      %v2600 = vmul.f32 %v2404, %v2502
      %v2601 = vmul.f32 %v2405, %v2503
      %v2602 = vmul.f32 %v2406, %v2504
      %v2603 = vmul.f32 %v2407, %v2505
      %v2604 = vmul.f32 %v2408, %v2506
      %v2605 = vmul.f32 %v2409, %v2507
      %v2606 = vmul.f32 %v2410, %v2508
      %v2607 = vmul.f32 %v2411, %v2509
      %v2608 = vmul.f32 %v2412, %v2510
      %v2609 = vmul.f32 %v2413, %v2511
      %v2610 = vmul.f32 %v2414, %v2512
      %v2611 = vmul.f32 %v2415, %v2513
      %v2612 = vmul.f32 %v2416, %v2514
      %v2613 = vmul.f32 %v2417, %v2515
      %v2614 = vmul.f32 %v2418, %v2516
      %v2615 = vmul.f32 %v2419, %v2517
      %v2616 = vmul.f32 %v2420, %v2518
      %v2617 = vmul.f32 %v2421, %v2519
      %v2618 = vmul.f32 %v2422, %v2520
      %v2619 = vmul.f32 %v2423, %v2521
      %v2620 = vmul.f32 %v2424, %v2522
      %v2621 = vmul.f32 %v2425, %v2523
      %v2622 = vmul.f32 %v2426, %v2524
      %v2623 = vmul.f32 %v2427, %v2525
      %v2624 = vld [vmem:[%s5] sm:$0xff]
      %v2625 = vld [vmem:[%s5 + $0x8] sm:$0xff]
      %v2626 = vld [vmem:[%s5 + $0x10] sm:$0xff]
      %v2627 = vld [vmem:[%s5 + $0x18] sm:$0xff]
      %v2628 = vld [vmem:[%s5 + $0x20] sm:$0xff]
      %v2629 = vld [vmem:[%s5 + $0x28] sm:$0xff]
      %v2630 = vld [vmem:[%s5 + $0x30] sm:$0xff]
      %v2631 = vld [vmem:[%s5 + $0x38] sm:$0xff]
      %v2632 = vld [vmem:[%s5 + $0x40] sm:$0xff]
      %v2633 = vld [vmem:[%s5 + $0x48] sm:$0xff]
      %v2634 = vld [vmem:[%s5 + $0x50] sm:$0xff]
      %v2635 = vld [vmem:[%s5 + $0x58] sm:$0xff]
      %v2636 = vld [vmem:[%s5 + $0x60] sm:$0xff]
      %v2637 = vld [vmem:[%s5 + $0x68] sm:$0xff]
      %vm2638 = vcmask 130048
      %v2640 = vsel %vm2638, %v2630, 0
      %v2643 = vsel %vm2638, %v2637, 0
      %2645 = vmatprep.subr.mxu0 0.0
      %2646 = vmatpush1.msra.mxu0 %v2526
      %2647 = vmatprep.subr.mxu0 0.0
      %2648 = vmatpush1.msra.mxu0 %v2527
      %2649 = vmatprep.subr.mxu0 0.0
      %2650 = vmatpush1.msra.mxu0 %v2528
      %2651 = vmatprep.subr.mxu0 0.0
      %2652 = vmatpush1.msra.mxu0 %v2529
      %2653 = vmatprep.subr.mxu0 0.0
      %2654 = vmatpush1.msra.mxu0 %v2530
      %2655 = vmatprep.subr.mxu0 0.0
      %2656 = vmatpush1.msra.mxu0 %v2531
      %2657 = vmatprep.subr.mxu0 0.0
      %2658 = vmatpush1.msra.mxu0 %v2532
      %2659 = vmatprep.subr.mxu0 0.0
      %2660 = vmatpush1.msra.mxu0 %v2533
      %2661 = vmatprep.subr.mxu0 0.0
      %2662 = vmatpush1.msra.mxu0 %v2534
      %2663 = vmatprep.subr.mxu0 0.0
      %2664 = vmatpush1.msra.mxu0 %v2535
      %2665 = vmatprep.subr.mxu0 0.0
      %2666 = vmatpush1.msra.mxu0 %v2536
      %2667 = vmatprep.subr.mxu0 0.0
      %2668 = vmatpush1.msra.mxu0 %v2537
      %2669 = vmatprep.subr.mxu0 0.0
      %2670 = vmatpush1.msra.mxu0 %v2538
      %2671 = vmatprep.subr.mxu0 0.0
      %2672 = vmatpush1.msra.mxu0 %v2539
      %2673 = vmatprep.subr.mxu0 0.0
      %2674 = vmatpush1.msra.mxu0 %v2540
      %2675 = vmatprep.subr.mxu0 0.0
      %2676 = vmatpush1.msra.mxu0 %v2541
      %2677 = vmatprep.subr.mxu0 0.0
      %2678 = vmatpush1.msra.mxu0 %v2542
      %2679 = vmatprep.subr.mxu0 0.0
      %2680 = vmatpush1.msra.mxu0 %v2543
      %2681 = vmatprep.subr.mxu0 0.0
      %2682 = vmatpush1.msra.mxu0 %v2544
      %2683 = vmatprep.subr.mxu0 0.0
      %2684 = vmatpush1.msra.mxu0 %v2545
      %2685 = vmatprep.subr.mxu0 0.0
      %2686 = vmatpush1.msra.mxu0 %v2546
      %2687 = vmatprep.subr.mxu0 0.0
      %2688 = vmatpush1.msra.mxu0 %v2547
      %2689 = vmatprep.subr.mxu0 0.0
      %2690 = vmatpush1.msra.mxu0 %v2548
      %2691 = vmatprep.subr.mxu0 0.0
      %2692 = vmatpush1.msra.mxu0 %v2549
      %2693 = vmatprep.subr.mxu0 0.0
      %2694 = vmatpush1.msra.mxu0 %v2550
      %2695 = vmatprep.subr.mxu0 0.0
      %2696 = vmatpush1.msra.mxu0 %v2551
      %2697 = vmatprep.subr.mxu0 0.0
      %2698 = vmatpush1.msra.mxu0 %v2552
      %2699 = vmatprep.subr.mxu0 0.0
      %2700 = vmatpush1.msra.mxu0 %v2553
      %2701 = vmatprep.subr.mxu0 0.0
      %2702 = vmatpush1.msra.mxu0 %v2554
      %2703 = vmatprep.subr.mxu0 0.0
      %2704 = vmatpush1.msra.mxu0 %v2555
      %2705 = vmatprep.subr.mxu0 0.0
      %2706 = vmatpush1.msra.mxu0 %v2556
      %2707 = vmatprep.subr.mxu0 0.0
      %2708 = vmatpush1.msra.mxu0 %v2557
      %2709 = vmatprep.mubr.f32.mxu0 %v2625
      %2710 = vmatmul.mubr.f32.gmra.mrb[0].mxu0 %v2624
      %v2711 = vpop.f32.mrb[0].mxu0
      %v2712 = vadd.f32 0.0, %v2711
      %v2713 = vpop.f32.mrb[0].mxu0
      %2714 = vmatprep.mubr.f32.mxu0 %v2632
      %2715 = vmatmul.mubr.f32.gmra.mrb[0].mxu0 %v2631
      %v2716 = vpop.f32.mrb[0].mxu0
      %v2717 = vadd.f32 0.0, %v2716
      %v2718 = vpop.f32.mrb[0].mxu0
      %2719 = vdwg.mxu0
      %2720 = vmatprep.subr.mxu0 0.0
      %2721 = vmatpush1.msra.mxu0 %v2558
      %2722 = vmatprep.subr.mxu0 0.0
      %2723 = vmatpush1.msra.mxu0 %v2559
      %2724 = vmatprep.subr.mxu0 0.0
      %2725 = vmatpush1.msra.mxu0 %v2560
      %2726 = vmatprep.subr.mxu0 0.0
      %2727 = vmatpush1.msra.mxu0 %v2561
      %2728 = vmatprep.subr.mxu0 0.0
      %2729 = vmatpush1.msra.mxu0 %v2562
      %2730 = vmatprep.subr.mxu0 0.0
      %2731 = vmatpush1.msra.mxu0 %v2563
      %2732 = vmatprep.subr.mxu0 0.0
      %2733 = vmatpush1.msra.mxu0 %v2564
      %2734 = vmatprep.subr.mxu0 0.0
      %2735 = vmatpush1.msra.mxu0 %v2565
      %2736 = vmatprep.subr.mxu0 0.0
      %2737 = vmatpush1.msra.mxu0 %v2566
      %2738 = vmatprep.subr.mxu0 0.0
      %2739 = vmatpush1.msra.mxu0 %v2567
      %2740 = vmatprep.subr.mxu0 0.0
      %2741 = vmatpush1.msra.mxu0 %v2568
      %2742 = vmatprep.subr.mxu0 0.0
      %2743 = vmatpush1.msra.mxu0 %v2569
      %2744 = vmatprep.subr.mxu0 0.0
      %2745 = vmatpush1.msra.mxu0 %v2570
      %2746 = vmatprep.subr.mxu0 0.0
      %2747 = vmatpush1.msra.mxu0 %v2571
      %2748 = vmatprep.subr.mxu0 0.0
      %2749 = vmatpush1.msra.mxu0 %v2572
      %2750 = vmatprep.subr.mxu0 0.0
      %2751 = vmatpush1.msra.mxu0 %v2573
      %2752 = vmatprep.subr.mxu0 0.0
      %2753 = vmatpush1.msra.mxu0 %v2574
      %2754 = vmatprep.subr.mxu0 0.0
      %2755 = vmatpush1.msra.mxu0 %v2575
      %2756 = vmatprep.subr.mxu0 0.0
      %2757 = vmatpush1.msra.mxu0 %v2576
      %2758 = vmatprep.subr.mxu0 0.0
      %2759 = vmatpush1.msra.mxu0 %v2577
      %2760 = vmatprep.subr.mxu0 0.0
      %2761 = vmatpush1.msra.mxu0 %v2578
      %2762 = vmatprep.subr.mxu0 0.0
      %2763 = vmatpush1.msra.mxu0 %v2579
      %2764 = vmatprep.subr.mxu0 0.0
      %2765 = vmatpush1.msra.mxu0 %v2580
      %2766 = vmatprep.subr.mxu0 0.0
      %2767 = vmatpush1.msra.mxu0 %v2581
      %2768 = vmatprep.subr.mxu0 0.0
      %2769 = vmatpush1.msra.mxu0 %v2582
      %2770 = vmatprep.subr.mxu0 0.0
      %2771 = vmatpush1.msra.mxu0 %v2583
      %2772 = vmatprep.subr.mxu0 0.0
      %2773 = vmatpush1.msra.mxu0 %v2584
      %2774 = vmatprep.subr.mxu0 0.0
      %2775 = vmatpush1.msra.mxu0 %v2585
      %2776 = vmatprep.subr.mxu0 0.0
      %2777 = vmatpush1.msra.mxu0 %v2586
      %2778 = vmatprep.subr.mxu0 0.0
      %2779 = vmatpush1.msra.mxu0 %v2587
      %2780 = vmatprep.subr.mxu0 0.0
      %2781 = vmatpush1.msra.mxu0 %v2588
      %2782 = vmatprep.subr.mxu0 0.0
      %2783 = vmatpush1.msra.mxu0 %v2589
      %2784 = vmatprep.mubr.f32.mxu0 %v2627
      %2785 = vmatmul.mubr.f32.gmra.mrb[0].mxu0 %v2626
      %v2786 = vpop.f32.mrb[0].mxu0
      %v2787 = vadd.f32 %v2712, %v2786
      %v2788 = vpop.f32.mrb[0].mxu0
      %2789 = vmatprep.mubr.f32.mxu0 %v2634
      %2790 = vmatmul.mubr.f32.gmra.mrb[0].mxu0 %v2633
      %v2791 = vpop.f32.mrb[0].mxu0
      %v2792 = vadd.f32 %v2717, %v2791
      %v2793 = vpop.f32.mrb[0].mxu0
      %2794 = vdwg.mxu0
      %2795 = vmatprep.subr.mxu0 0.0
      %2796 = vmatpush1.msra.mxu0 %v2590
      %2797 = vmatprep.subr.mxu0 0.0
      %2798 = vmatpush1.msra.mxu0 %v2591
      %2799 = vmatprep.subr.mxu0 0.0
      %2800 = vmatpush1.msra.mxu0 %v2592
      %2801 = vmatprep.subr.mxu0 0.0
      %2802 = vmatpush1.msra.mxu0 %v2593
      %2803 = vmatprep.subr.mxu0 0.0
      %2804 = vmatpush1.msra.mxu0 %v2594
      %2805 = vmatprep.subr.mxu0 0.0
      %2806 = vmatpush1.msra.mxu0 %v2595
      %2807 = vmatprep.subr.mxu0 0.0
      %2808 = vmatpush1.msra.mxu0 %v2596
      %2809 = vmatprep.subr.mxu0 0.0
      %2810 = vmatpush1.msra.mxu0 %v2597
      %2811 = vmatprep.subr.mxu0 0.0
      %2812 = vmatpush1.msra.mxu0 %v2598
      %2813 = vmatprep.subr.mxu0 0.0
      %2814 = vmatpush1.msra.mxu0 %v2599
      %2815 = vmatprep.subr.mxu0 0.0
      %2816 = vmatpush1.msra.mxu0 %v2600
      %2817 = vmatprep.subr.mxu0 0.0
      %2818 = vmatpush1.msra.mxu0 %v2601
      %2819 = vmatprep.subr.mxu0 0.0
      %2820 = vmatpush1.msra.mxu0 %v2602
      %2821 = vmatprep.subr.mxu0 0.0
      %2822 = vmatpush1.msra.mxu0 %v2603
      %2823 = vmatprep.subr.mxu0 0.0
      %2824 = vmatpush1.msra.mxu0 %v2604
      %2825 = vmatprep.subr.mxu0 0.0
      %2826 = vmatpush1.msra.mxu0 %v2605
      %2827 = vmatprep.subr.mxu0 0.0
      %2828 = vmatpush1.msra.mxu0 %v2606
      %2829 = vmatprep.subr.mxu0 0.0
      %2830 = vmatpush1.msra.mxu0 %v2607
      %2831 = vmatprep.subr.mxu0 0.0
      %2832 = vmatpush1.msra.mxu0 %v2608
      %2833 = vmatprep.subr.mxu0 0.0
      %2834 = vmatpush1.msra.mxu0 %v2609
      %2835 = vmatprep.subr.mxu0 0.0
      %2836 = vmatpush1.msra.mxu0 %v2610
      %2837 = vmatprep.subr.mxu0 0.0
      %2838 = vmatpush1.msra.mxu0 %v2611
      %2839 = vmatprep.subr.mxu0 0.0
      %2840 = vmatpush1.msra.mxu0 %v2612
      %2841 = vmatprep.subr.mxu0 0.0
      %2842 = vmatpush1.msra.mxu0 %v2613
      %2843 = vmatprep.subr.mxu0 0.0
      %2844 = vmatpush1.msra.mxu0 %v2614
      %2845 = vmatprep.subr.mxu0 0.0
      %2846 = vmatpush1.msra.mxu0 %v2615
      %2847 = vmatprep.subr.mxu0 0.0
      %2848 = vmatpush1.msra.mxu0 %v2616
      %2849 = vmatprep.subr.mxu0 0.0
      %2850 = vmatpush1.msra.mxu0 %v2617
      %2851 = vmatprep.subr.mxu0 0.0
      %2852 = vmatpush1.msra.mxu0 %v2618
      %2853 = vmatprep.subr.mxu0 0.0
      %2854 = vmatpush1.msra.mxu0 %v2619
      %2855 = vmatprep.subr.mxu0 0.0
      %2856 = vmatpush1.msra.mxu0 %v2620
      %2857 = vmatprep.subr.mxu0 0.0
      %2858 = vmatpush1.msra.mxu0 %v2621
      %2859 = vmatprep.mubr.f32.mxu0 %v2629
      %2860 = vmatmul.mubr.f32.gmra.mrb[0].mxu0 %v2628
      %v2861 = vpop.f32.mrb[0].mxu0
      %v2862 = vadd.f32 %v2787, %v2861
      %v2863 = vpop.f32.mrb[0].mxu0
      %2864 = vmatprep.mubr.f32.mxu0 %v2636
      %2865 = vmatmul.mubr.f32.gmra.mrb[0].mxu0 %v2635
      %v2866 = vpop.f32.mrb[0].mxu0
      %v2867 = vadd.f32 %v2792, %v2866
      %v2868 = vpop.f32.mrb[0].mxu0
      %2869 = vdwg.mxu0
      %2870 = vmatprep.subr.mxu0 0.0
      %2871 = vmatpush1.msra.mxu0 %v2622
      %2872 = vmatprep.subr.mxu0 0.0
      %2873 = vmatpush1.msra.mxu0 %v2623
      %2874 = vmatprep.subr.mxu0 0.0
      %2875 = vmatpush1.msra.mxu0 0.0
      %2876 = vmatprep.subr.mxu0 0.0
      %2877 = vmatpush1.msra.mxu0 0.0
      %2878 = vmatprep.subr.mxu0 0.0
      %2879 = vmatpush1.msra.mxu0 0.0
      %2880 = vmatprep.subr.mxu0 0.0
      %2881 = vmatpush1.msra.mxu0 0.0
      %2882 = vmatprep.subr.mxu0 0.0
      %2883 = vmatpush1.msra.mxu0 0.0
      %2884 = vmatprep.subr.mxu0 0.0
      %2885 = vmatpush1.msra.mxu0 0.0
      %2886 = vmatprep.subr.mxu0 0.0
      %2887 = vmatpush1.msra.mxu0 0.0
      %2888 = vmatprep.subr.mxu0 0.0
      %2889 = vmatpush1.msra.mxu0 0.0
      %2890 = vmatprep.subr.mxu0 0.0
      %2891 = vmatpush1.msra.mxu0 0.0
      %2892 = vmatprep.subr.mxu0 0.0
      %2893 = vmatpush1.msra.mxu0 0.0
      %2894 = vmatprep.subr.mxu0 0.0
      %2895 = vmatpush1.msra.mxu0 0.0
      %2896 = vmatprep.subr.mxu0 0.0
      %2897 = vmatpush1.msra.mxu0 0.0
      %2898 = vmatprep.subr.mxu0 0.0
      %2899 = vmatpush1.msra.mxu0 0.0
      %2900 = vmatprep.subr.mxu0 0.0
      %2901 = vmatpush1.msra.mxu0 0.0
      %2902 = vmatprep.subr.mxu0 0.0
      %2903 = vmatpush1.msra.mxu0 0.0
      %2904 = vmatprep.subr.mxu0 0.0
      %2905 = vmatpush1.msra.mxu0 0.0
      %2906 = vmatprep.subr.mxu0 0.0
      %2907 = vmatpush1.msra.mxu0 0.0
      %2908 = vmatprep.subr.mxu0 0.0
      %2909 = vmatpush1.msra.mxu0 0.0
      %2910 = vmatprep.subr.mxu0 0.0
      %2911 = vmatpush1.msra.mxu0 0.0
      %2912 = vmatprep.subr.mxu0 0.0
      %2913 = vmatpush1.msra.mxu0 0.0
      %2914 = vmatprep.subr.mxu0 0.0
      %2915 = vmatpush1.msra.mxu0 0.0
      %2916 = vmatprep.subr.mxu0 0.0
      %2917 = vmatpush1.msra.mxu0 0.0
      %2918 = vmatprep.subr.mxu0 0.0
      %2919 = vmatpush1.msra.mxu0 0.0
      %2920 = vmatprep.subr.mxu0 0.0
      %2921 = vmatpush1.msra.mxu0 0.0
      %2922 = vmatprep.subr.mxu0 0.0
      %2923 = vmatpush1.msra.mxu0 0.0
      %2924 = vmatprep.subr.mxu0 0.0
      %2925 = vmatpush1.msra.mxu0 0.0
      %2926 = vmatprep.subr.mxu0 0.0
      %2927 = vmatpush1.msra.mxu0 0.0
      %2928 = vmatprep.subr.mxu0 0.0
      %2929 = vmatpush1.msra.mxu0 0.0
      %2930 = vmatprep.subr.mxu0 0.0
      %2931 = vmatpush1.msra.mxu0 0.0
      %2932 = vmatprep.subr.mxu0 0.0
      %2933 = vmatpush1.msra.mxu0 0.0
      %2934 = vmatprep.mubr.f32.mxu0 0.0
      %2935 = vmatmul.mubr.f32.gmra.mrb[0].mxu0 %v2640
      %v2936 = vpop.f32.mrb[0].mxu0
      %v2937 = vadd.f32 %v2862, %v2936
      %v2938 = vpop.f32.mrb[0].mxu0
      %2939 = vmatprep.mubr.f32.mxu0 0.0
      %2940 = vmatmul.mubr.f32.gmra.mrb[0].mxu0 %v2643
      %v2941 = vpop.f32.mrb[0].mxu0
      %v2942 = vadd.f32 %v2867, %v2941
      %v2943 = vpop.f32.mrb[0].mxu0
      %2944 = vdwg.mxu0
      %2945 = vadd.xlane.f32.xlu0 %v2937
      %v2946 = vpop.xlane.xlu0 %2945
      %2947 = vadd.xlane.f32.xlu0 %v2942
      %v2948 = vpop.xlane.xlu0 %2947
      %v2949 = vld [vmem:[#allocation2] sm:$0x1]
      %v2951 = vlaneseq
      %v2952 = vshrl.u32 %v2951, 7
      %v2953 = vsub.s32 0, %v2952
      %v2954 = vrot.slane %v2949, %v2953
      %v2956 = vadd.f32 %v2946, %v2954
      %v2957 = vadd.f32 %v2948, %v2954
      %v2958 = vsub.f32 0.0, %v2956
      %v2959 = vsub.f32 0.0, %v2957
      %v2960 = vmul.f32 %v2958, 1.442695
      %v2961 = vpow.pop %v2960
      %v2962 = vmul.f32 %v2959, 1.442695
      %v2963 = vpow.pop %v2962
      %v2964 = vadd.f32 %v2961, 1.0
      %v2965 = vadd.f32 %v2963, 1.0
      %v2966 = vrcp.pop %v2964
      %v2967 = vmul.f32 1.0, %v2966
      %v2968 = vrcp.pop %v2965
      %v2969 = vmul.f32 1.0, %v2968
      %vm2970 = vcmask 7168
      %2971 = vst.msk [vmem:[%s285] sm:$0xff] %vm2970, %v2967
      %2972 = vst.msk [vmem:[%s285 + $0x8] sm:$0xff] %vm2970, %v2969
      %s2973 = smul.u32 2, %s20
      %p2974 = scmp.lt.s32.totalorder %s2973, 15
      %s2975 = scalar_select %p2974, %s2973, 15
      %s2976 = smul.addr %s2975, 8
      %s2977 = scalar_lea.vmem %s7, %s2976
      // Predicated region
      $region49: #{discriminator_forward.5} parent=47 // pred_check
        %p2978 = pneg %p190
      $region50: #{discriminator_forward.5} parent=47 // pred_check_branch
        %2980 = sbr.rel (%p2978) target = $region52
      $region51: #{discriminator_forward.5} parent=47 // pred_region
        %s2981 = smul.u32 2, %s20
      $region52: #{discriminator_forward.5} parent=47 // pred_fallthru
        _
    $region48: #{discriminator_forward.5} parent=5 // pred_fallthru
      _
    %p2982 = scmp.le.s32.totalorder 2, %s15
    // Predicated region
    $region53: #{discriminator_forward.5} parent=5 // pred_check
      %p2983 = pneg %p2982
    $region54: #{discriminator_forward.5} parent=5 // pred_check_branch
      %2985 = sbr.rel (%p2983) target = $region56
    $region55: #{discriminator_forward.5} parent=5 // pred_region
      %s2986 = ssub.s32 %s15, 2
      // Predicated region
      $region57: #{discriminator_forward.5} parent=55 // pred_check
        %p2987 = pneg %p196
      $region58: #{discriminator_forward.5} parent=55 // pred_check_branch
        %2989 = sbr.rel (%p2987) target = $region60
      $region59: #{discriminator_forward.5} parent=55 // pred_region
        %s2990 = smul.u32 2, %s21
        %p2991 = scmp.lt.s32.totalorder %s2990, 15
        %s2992 = scalar_select %p2991, %s2990, 15
        %s2993 = smul.addr %s2992, 8
        %s2994 = scalar_lea.vmem %s7, %s2993
      $region60: #{discriminator_forward.5} parent=55 // pred_fallthru
        _
    $region56: #{discriminator_forward.5} parent=5 // pred_fallthru
      _
  $region6: #{discriminator_forward.5} parent=0 // loop_footer
    %s19 = sadd.s32 1, %s15
  $region7: #{discriminator_forward.5} parent=0 // loop_footer_branch
    %14 = sbr.rel target = $region3
  $region8: #{discriminator_forward.5} parent=0 // loop_exit
    _

</llo_original>
